<compile_context>
chip_gen: v7x
topology: tpu7x:2x2x1
jax: 0.10.0
libtpu: 0.0.40
codegen_flags: <defaults>
</compile_context>

<pallas_src>
import functools

import jax
import jax.numpy as jnp
from jax.experimental import pallas as pl
from jax.experimental.pallas import tpu as pltpu


def _inverse_pixel_shuffle_kernel(x_ref, o_ref, *, k, H, W):
    # x_ref block: (TC, k*H, k*W)   o_ref block: (TC, k*k, H*W)
    tc = x_ref.shape[0]
    x = x_ref[...]                               # one full-tile load
    # Split rows into (H, k) and cols into (W, k): x5[t, h, dy, w, dx]
    x5 = x.reshape(tc, H, k, W, k)
    # Whole-tile deinterleave (done once, not per output plane):
    # y5[t, dy, dx, h, w] = in[t, h*k+dy, w*k+dx]
    y5 = jnp.transpose(x5, (0, 2, 4, 1, 3))
    # Lane-dense store: channel index dy*k + dx (y-major / x-minor), last dim H*W.
    o_ref[...] = y5.reshape(tc, k * k, H * W)


def inverse_pixel_shuffle(x, downscale_factor, *, vmem_budget_bytes=12 * 1024 * 1024):
    """x: (B, C, k*H, k*W) -> (B, k*k*C, H, W), matching torch pixel_unshuffle."""
    k = int(downscale_factor)
    B, C, kH, kW = x.shape
    assert kH % k == 0 and kW % k == 0, "spatial dims must be divisible by k"
    H, W = kH // k, kW // k
    BC = B * C

    # Glue: fold batch & channel into one grid axis (contiguous reshape, free).
    x_flat = x.reshape(BC, kH, kW)

    # Planes per grid step: keep 2 buffers x (in tile + out tile) under budget.
    # (budget fits v5e's 16 MiB default scoped VMEM; roughly halve budget if
    #  hand-tuning for v7x's smaller physical VMEM, raise it on v6e via
    #  pltpu.CompilerParams(vmem_limit_bytes=...) for even larger tiles.)
    plane_bytes = kH * kW * x.dtype.itemsize
    tc = max(1, min(BC, vmem_budget_bytes // (4 * plane_bytes)))
    while BC % tc:          # make blocks exact (no partial blocks)
        tc -= 1

    out_flat = pl.pallas_call(
        functools.partial(_inverse_pixel_shuffle_kernel, k=k, H=H, W=W),
        out_shape=jax.ShapeDtypeStruct((BC, k * k, H * W), x.dtype),
        grid=(BC // tc,),
        in_specs=[pl.BlockSpec((tc, kH, kW), lambda i: (i, 0, 0))],
        out_specs=pl.BlockSpec((tc, k * k, H * W), lambda i: (i, 0, 0)),
        compiler_params=pltpu.CompilerParams(dimension_semantics=("parallel",)),
    )(x_flat)

    # (BC, k*k, H*W) -> (B, C*k*k, H, W): contiguous reshape (free); channel
    # order is c*k*k + (y*k + x), identical to the grouped-conv construction.
    return out_flat.reshape(B, C * k * k, H, W)


def _reference(x, k):
    # Pure-JAX / XLA reference of the same semantics (also the baseline to
    # benchmark the Pallas kernel against for this zero-FLOP layout op).
    B, C, kH, kW = x.shape
    H, W = kH // k, kW // k
    x6 = x.reshape(B, C, H, k, W, k)
    return jnp.transpose(x6, (0, 1, 3, 5, 2, 4)).reshape(B, C * k * k, H, W)


if __name__ == "__main__":
    # InversePixelShuffle has no learnable parameters; only the downscale factor.
    downscale_factor = 2
    B, C, H, W = 2, 4, 8, 8  # input spatial = k*H x k*W = 16 x 16

    key = jax.random.PRNGKey(0)
    x = jax.random.normal(
        key, (B, C, H * downscale_factor, W * downscale_factor), dtype=jnp.float32
    )

    out = jax.block_until_ready(inverse_pixel_shuffle(x, downscale_factor))

    ref = _reference(x, downscale_factor)
    assert out.shape == (B, C * downscale_factor * downscale_factor, H, W), out.shape
    assert out.dtype == x.dtype
    assert bool(jnp.array_equal(out, ref)), "mismatch vs reference pixel_unshuffle"

    print("KERNEL_OK")
</pallas_src>

<mosaic_0001>
module attributes {stable_mosaic.version = 11 : i64} {
  func.func @_inverse_pixel_shuffle_kernel(%arg0: i32, %arg1: memref<8x16x16xf32, #tpu.memory_space<vmem>>, %arg2: memref<8x4x64xf32, #tpu.memory_space<vmem>>) attributes {dimension_semantics = [#tpu.dimension_semantics<parallel>], iteration_bounds = array<i64: 1>, scalar_prefetch = 0 : i64, scratch_operands = 0 : i64, tpu.core_type = #tpu.core_type<tc>, window_params = [{transform_indices = @transform_0, window_bounds = array<i64: 8, 16, 16>}, {transform_indices = @transform_1, window_bounds = array<i64: 8, 4, 64>}]} {
    %c0 = arith.constant 0 : index
    %c0_0 = arith.constant 0 : index
    %c0_1 = arith.constant 0 : index
    %0 = vector.load %arg1[%c0, %c0_0, %c0_1] : memref<8x16x16xf32, #tpu.memory_space<vmem>>, vector<8x16x16xf32>
    %1 = vector.shape_cast %0 : vector<8x16x16xf32> to vector<8x8x2x8x2xf32>
    %2 = tpu.transpose %1, [0, 2, 4, 1, 3] : vector<8x8x2x8x2xf32> -> vector<8x2x2x8x8xf32>
    %3 = vector.shape_cast %2 : vector<8x2x2x8x8xf32> to vector<8x4x64xf32>
    %c0_2 = arith.constant 0 : index
    %c0_3 = arith.constant 0 : index
    %c0_4 = arith.constant 0 : index
    %4 = vector.load %arg2[%c0_2, %c0_3, %c0_4] : memref<8x4x64xf32, #tpu.memory_space<vmem>>, vector<8x4x64xf32>
    tpu.vector_store %arg2[%c0_2, %c0_3, %c0_4], %3 {strides = array<i32>} : memref<8x4x64xf32, #tpu.memory_space<vmem>>, vector<8x4x64xf32>,
    return
  }
  func.func @transform_0(%arg0: i32) -> (i32, i32, i32) {
    %c0_i32 = arith.constant 0 : i32
    %c0_i32_0 = arith.constant 0 : i32
    %c0_i32_1 = arith.constant 0 : i32
    return %arg0, %c0_i32, %c0_i32_0 : i32, i32, i32
  }
  func.func @transform_1(%arg0: i32) -> (i32, i32, i32) {
    %c0_i32 = arith.constant 0 : i32
    %c0_i32_0 = arith.constant 0 : i32
    %c0_i32_1 = arith.constant 0 : i32
    return %arg0, %c0_i32, %c0_i32_0 : i32, i32, i32
  }
}

</mosaic_0001>

<llo_original>
// kernel: tpu_custom_call.1
$region0: #{tpu_custom_call.1}
  #allocation0 [shape = 'u32[]', space=smem, size = 0x4, offset = 0x4, fixed_abs, tag = 'smem constant byte address 0x4 - core index']
  #allocation1 [shape = 'u32[144,128]{1,0:T(1,128)}', space=vmem, size = 0x12000, scoped, tag = 'internal scratch']
  %s0 = inlined_call_operand.hbm [shape: f32[8,16,16], index: 0, kind: input, shape index: {}]
  %s1 = inlined_call_operand.hbm [shape: f32[8,4,64], index: 1, kind: output, shape index: {}]
  %s2 = sld [smem:[#allocation0]]
  $region18: #{tpu_custom_call.1} parent=0
    _
  %s4 = ssub.s32 1, %s2
  %s5 = scalar_select 0, %s4, %s2
  $region1: #{tpu_custom_call.1} parent=0
    #allocation2 [shape = 'u8[65536]{0}', space=vmem, size = 0x10000, scoped, tag = 'input window, operand 0, single buffered']
    #allocation3 [shape = 's32[1]{0}', space=sflag, size = 0x4, scoped, tag = 'scoped memory for tpu_custom_call.1']
    #allocation4 [shape = 's32[1]{0}', space=sflag, size = 0x4, scoped, tag = 'scoped memory for tpu_custom_call.1']
    #allocation5 [shape = 'u8[16384]{0}', space=vmem, size = 0x4000, scoped, tag = 'output window, operand 0, single buffered']
    %6 = vsyncpa [#allocation3], 0
    %7 = vsyncpa [#allocation4], 0
    // Predicated region
    $region2: #{tpu_custom_call.1} parent=1 // pred_check
      _
    $region3: #{tpu_custom_call.1} parent=1 // pred_check_branch
      %9 = sbr.rel (0) target = $region5
    $region4: #{tpu_custom_call.1} parent=1 // pred_region
      %s11 = ssub.s32 2048, 2048
      %12 = vsyncadd [#allocation3], %s11
      %s13 = sshll.u32 [#allocation2], 4
      %s14 = int_to_ptr.vmem [resolvable:$true] %s13
      %19 = dma.hbm_to_vmem [thread:$0]  %s0, 2048, %s14, [#allocation3], 128, 128, 8
    $region5: #{tpu_custom_call.1} parent=1 // pred_fallthru
      _
    // Predicated region
    $region6: #{tpu_custom_call.1} parent=1 // pred_check
      _
    $region7: #{tpu_custom_call.1} parent=1 // pred_check_branch
      %21 = sbr.rel (0) target = $region9
    $region8: #{tpu_custom_call.1} parent=1 // pred_region
      %22 = dma.done [#allocation3], 2048
    $region9: #{tpu_custom_call.1} parent=1 // pred_fallthru
      _
    %v23 = vld [vmem:[#allocation2] sm:$0xff]
    %v24 = vld [vmem:[#allocation2 + $0x8] sm:$0xff]
    %v25 = vld [vmem:[#allocation2 + $0x10] sm:$0xff]
    %v26 = vld [vmem:[#allocation2 + $0x18] sm:$0xff]
    %v27 = vld [vmem:[#allocation2 + $0x20] sm:$0xff]
    %v28 = vld [vmem:[#allocation2 + $0x28] sm:$0xff]
    %v29 = vld [vmem:[#allocation2 + $0x30] sm:$0xff]
    %v30 = vld [vmem:[#allocation2 + $0x38] sm:$0xff]
    %v31 = vld [vmem:[#allocation2 + $0x40] sm:$0xff]
    %v32 = vld [vmem:[#allocation2 + $0x48] sm:$0xff]
    %v33 = vld [vmem:[#allocation2 + $0x50] sm:$0xff]
    %v34 = vld [vmem:[#allocation2 + $0x58] sm:$0xff]
    %v35 = vld [vmem:[#allocation2 + $0x60] sm:$0xff]
    %v36 = vld [vmem:[#allocation2 + $0x68] sm:$0xff]
    %v37 = vld [vmem:[#allocation2 + $0x70] sm:$0xff]
    %v38 = vld [vmem:[#allocation2 + $0x78] sm:$0xff]
    %55 = vrot.lane.b32.xlu0 %v23, 126
    %v56 = vpop.permute.xlu0 %55
    %57 = vrot.lane.b32.xlu0 %v24, 126
    %v58 = vpop.permute.xlu0 %57
    %59 = vrot.lane.b32.xlu0 %v25, 126
    %v60 = vpop.permute.xlu0 %59
    %61 = vrot.lane.b32.xlu0 %v26, 126
    %v62 = vpop.permute.xlu0 %61
    %63 = vrot.lane.b32.xlu0 %v27, 126
    %v64 = vpop.permute.xlu0 %63
    %65 = vrot.lane.b32.xlu0 %v28, 126
    %v66 = vpop.permute.xlu0 %65
    %67 = vrot.lane.b32.xlu0 %v29, 126
    %v68 = vpop.permute.xlu0 %67
    %69 = vrot.lane.b32.xlu0 %v30, 126
    %v70 = vpop.permute.xlu0 %69
    %71 = vrot.lane.b32.xlu0 %v31, 126
    %v72 = vpop.permute.xlu0 %71
    %73 = vrot.lane.b32.xlu0 %v32, 126
    %v74 = vpop.permute.xlu0 %73
    %75 = vrot.lane.b32.xlu0 %v33, 126
    %v76 = vpop.permute.xlu0 %75
    %77 = vrot.lane.b32.xlu0 %v34, 126
    %v78 = vpop.permute.xlu0 %77
    %79 = vrot.lane.b32.xlu0 %v35, 126
    %v80 = vpop.permute.xlu0 %79
    %81 = vrot.lane.b32.xlu0 %v36, 126
    %v82 = vpop.permute.xlu0 %81
    %83 = vrot.lane.b32.xlu0 %v37, 126
    %v84 = vpop.permute.xlu0 %83
    %85 = vrot.lane.b32.xlu0 %v38, 126
    %v86 = vpop.permute.xlu0 %85
    %103 = vrot.lane.b32.xlu0 %v23, 124
    %v104 = vpop.permute.xlu0 %103
    %105 = vrot.lane.b32.xlu0 %v24, 124
    %v106 = vpop.permute.xlu0 %105
    %107 = vrot.lane.b32.xlu0 %v25, 124
    %v108 = vpop.permute.xlu0 %107
    %109 = vrot.lane.b32.xlu0 %v26, 124
    %v110 = vpop.permute.xlu0 %109
    %111 = vrot.lane.b32.xlu0 %v27, 124
    %v112 = vpop.permute.xlu0 %111
    %113 = vrot.lane.b32.xlu0 %v28, 124
    %v114 = vpop.permute.xlu0 %113
    %115 = vrot.lane.b32.xlu0 %v29, 124
    %v116 = vpop.permute.xlu0 %115
    %117 = vrot.lane.b32.xlu0 %v30, 124
    %v118 = vpop.permute.xlu0 %117
    %119 = vrot.lane.b32.xlu0 %v31, 124
    %v120 = vpop.permute.xlu0 %119
    %121 = vrot.lane.b32.xlu0 %v32, 124
    %v122 = vpop.permute.xlu0 %121
    %123 = vrot.lane.b32.xlu0 %v33, 124
    %v124 = vpop.permute.xlu0 %123
    %125 = vrot.lane.b32.xlu0 %v34, 124
    %v126 = vpop.permute.xlu0 %125
    %127 = vrot.lane.b32.xlu0 %v35, 124
    %v128 = vpop.permute.xlu0 %127
    %129 = vrot.lane.b32.xlu0 %v36, 124
    %v130 = vpop.permute.xlu0 %129
    %131 = vrot.lane.b32.xlu0 %v37, 124
    %v132 = vpop.permute.xlu0 %131
    %133 = vrot.lane.b32.xlu0 %v38, 124
    %v134 = vpop.permute.xlu0 %133
    %151 = vrot.lane.b32.xlu0 %v23, 122
    %v152 = vpop.permute.xlu0 %151
    %153 = vrot.lane.b32.xlu0 %v24, 122
    %v154 = vpop.permute.xlu0 %153
    %155 = vrot.lane.b32.xlu0 %v25, 122
    %v156 = vpop.permute.xlu0 %155
    %157 = vrot.lane.b32.xlu0 %v26, 122
    %v158 = vpop.permute.xlu0 %157
    %159 = vrot.lane.b32.xlu0 %v27, 122
    %v160 = vpop.permute.xlu0 %159
    %161 = vrot.lane.b32.xlu0 %v28, 122
    %v162 = vpop.permute.xlu0 %161
    %163 = vrot.lane.b32.xlu0 %v29, 122
    %v164 = vpop.permute.xlu0 %163
    %165 = vrot.lane.b32.xlu0 %v30, 122
    %v166 = vpop.permute.xlu0 %165
    %167 = vrot.lane.b32.xlu0 %v31, 122
    %v168 = vpop.permute.xlu0 %167
    %169 = vrot.lane.b32.xlu0 %v32, 122
    %v170 = vpop.permute.xlu0 %169
    %171 = vrot.lane.b32.xlu0 %v33, 122
    %v172 = vpop.permute.xlu0 %171
    %173 = vrot.lane.b32.xlu0 %v34, 122
    %v174 = vpop.permute.xlu0 %173
    %175 = vrot.lane.b32.xlu0 %v35, 122
    %v176 = vpop.permute.xlu0 %175
    %177 = vrot.lane.b32.xlu0 %v36, 122
    %v178 = vpop.permute.xlu0 %177
    %179 = vrot.lane.b32.xlu0 %v37, 122
    %v180 = vpop.permute.xlu0 %179
    %181 = vrot.lane.b32.xlu0 %v38, 122
    %v182 = vpop.permute.xlu0 %181
    %199 = vrot.lane.b32.xlu0 %v23, 120
    %v200 = vpop.permute.xlu0 %199
    %201 = vrot.lane.b32.xlu0 %v24, 120
    %v202 = vpop.permute.xlu0 %201
    %203 = vrot.lane.b32.xlu0 %v25, 120
    %v204 = vpop.permute.xlu0 %203
    %205 = vrot.lane.b32.xlu0 %v26, 120
    %v206 = vpop.permute.xlu0 %205
    %207 = vrot.lane.b32.xlu0 %v27, 120
    %v208 = vpop.permute.xlu0 %207
    %209 = vrot.lane.b32.xlu0 %v28, 120
    %v210 = vpop.permute.xlu0 %209
    %211 = vrot.lane.b32.xlu0 %v29, 120
    %v212 = vpop.permute.xlu0 %211
    %213 = vrot.lane.b32.xlu0 %v30, 120
    %v214 = vpop.permute.xlu0 %213
    %215 = vrot.lane.b32.xlu0 %v31, 120
    %v216 = vpop.permute.xlu0 %215
    %217 = vrot.lane.b32.xlu0 %v32, 120
    %v218 = vpop.permute.xlu0 %217
    %219 = vrot.lane.b32.xlu0 %v33, 120
    %v220 = vpop.permute.xlu0 %219
    %221 = vrot.lane.b32.xlu0 %v34, 120
    %v222 = vpop.permute.xlu0 %221
    %223 = vrot.lane.b32.xlu0 %v35, 120
    %v224 = vpop.permute.xlu0 %223
    %225 = vrot.lane.b32.xlu0 %v36, 120
    %v226 = vpop.permute.xlu0 %225
    %227 = vrot.lane.b32.xlu0 %v37, 120
    %v228 = vpop.permute.xlu0 %227
    %229 = vrot.lane.b32.xlu0 %v38, 120
    %v230 = vpop.permute.xlu0 %229
    %247 = vrot.lane.b32.xlu0 %v23, 118
    %v248 = vpop.permute.xlu0 %247
    %249 = vrot.lane.b32.xlu0 %v24, 118
    %v250 = vpop.permute.xlu0 %249
    %251 = vrot.lane.b32.xlu0 %v25, 118
    %v252 = vpop.permute.xlu0 %251
    %253 = vrot.lane.b32.xlu0 %v26, 118
    %v254 = vpop.permute.xlu0 %253
    %255 = vrot.lane.b32.xlu0 %v27, 118
    %v256 = vpop.permute.xlu0 %255
    %257 = vrot.lane.b32.xlu0 %v28, 118
    %v258 = vpop.permute.xlu0 %257
    %259 = vrot.lane.b32.xlu0 %v29, 118
    %v260 = vpop.permute.xlu0 %259
    %261 = vrot.lane.b32.xlu0 %v30, 118
    %v262 = vpop.permute.xlu0 %261
    %263 = vrot.lane.b32.xlu0 %v31, 118
    %v264 = vpop.permute.xlu0 %263
    %265 = vrot.lane.b32.xlu0 %v32, 118
    %v266 = vpop.permute.xlu0 %265
    %267 = vrot.lane.b32.xlu0 %v33, 118
    %v268 = vpop.permute.xlu0 %267
    %269 = vrot.lane.b32.xlu0 %v34, 118
    %v270 = vpop.permute.xlu0 %269
    %271 = vrot.lane.b32.xlu0 %v35, 118
    %v272 = vpop.permute.xlu0 %271
    %273 = vrot.lane.b32.xlu0 %v36, 118
    %v274 = vpop.permute.xlu0 %273
    %275 = vrot.lane.b32.xlu0 %v37, 118
    %v276 = vpop.permute.xlu0 %275
    %277 = vrot.lane.b32.xlu0 %v38, 118
    %v278 = vpop.permute.xlu0 %277
    %295 = vrot.lane.b32.xlu0 %v23, 116
    %v296 = vpop.permute.xlu0 %295
    %297 = vrot.lane.b32.xlu0 %v24, 116
    %v298 = vpop.permute.xlu0 %297
    %299 = vrot.lane.b32.xlu0 %v25, 116
    %v300 = vpop.permute.xlu0 %299
    %301 = vrot.lane.b32.xlu0 %v26, 116
    %v302 = vpop.permute.xlu0 %301
    %303 = vrot.lane.b32.xlu0 %v27, 116
    %v304 = vpop.permute.xlu0 %303
    %305 = vrot.lane.b32.xlu0 %v28, 116
    %v306 = vpop.permute.xlu0 %305
    %307 = vrot.lane.b32.xlu0 %v29, 116
    %v308 = vpop.permute.xlu0 %307
    %309 = vrot.lane.b32.xlu0 %v30, 116
    %v310 = vpop.permute.xlu0 %309
    %311 = vrot.lane.b32.xlu0 %v31, 116
    %v312 = vpop.permute.xlu0 %311
    %313 = vrot.lane.b32.xlu0 %v32, 116
    %v314 = vpop.permute.xlu0 %313
    %315 = vrot.lane.b32.xlu0 %v33, 116
    %v316 = vpop.permute.xlu0 %315
    %317 = vrot.lane.b32.xlu0 %v34, 116
    %v318 = vpop.permute.xlu0 %317
    %319 = vrot.lane.b32.xlu0 %v35, 116
    %v320 = vpop.permute.xlu0 %319
    %321 = vrot.lane.b32.xlu0 %v36, 116
    %v322 = vpop.permute.xlu0 %321
    %323 = vrot.lane.b32.xlu0 %v37, 116
    %v324 = vpop.permute.xlu0 %323
    %325 = vrot.lane.b32.xlu0 %v38, 116
    %v326 = vpop.permute.xlu0 %325
    %343 = vrot.lane.b32.xlu0 %v23, 114
    %v344 = vpop.permute.xlu0 %343
    %345 = vrot.lane.b32.xlu0 %v24, 114
    %v346 = vpop.permute.xlu0 %345
    %347 = vrot.lane.b32.xlu0 %v25, 114
    %v348 = vpop.permute.xlu0 %347
    %349 = vrot.lane.b32.xlu0 %v26, 114
    %v350 = vpop.permute.xlu0 %349
    %351 = vrot.lane.b32.xlu0 %v27, 114
    %v352 = vpop.permute.xlu0 %351
    %353 = vrot.lane.b32.xlu0 %v28, 114
    %v354 = vpop.permute.xlu0 %353
    %355 = vrot.lane.b32.xlu0 %v29, 114
    %v356 = vpop.permute.xlu0 %355
    %357 = vrot.lane.b32.xlu0 %v30, 114
    %v358 = vpop.permute.xlu0 %357
    %359 = vrot.lane.b32.xlu0 %v31, 114
    %v360 = vpop.permute.xlu0 %359
    %361 = vrot.lane.b32.xlu0 %v32, 114
    %v362 = vpop.permute.xlu0 %361
    %363 = vrot.lane.b32.xlu0 %v33, 114
    %v364 = vpop.permute.xlu0 %363
    %365 = vrot.lane.b32.xlu0 %v34, 114
    %v366 = vpop.permute.xlu0 %365
    %367 = vrot.lane.b32.xlu0 %v35, 114
    %v368 = vpop.permute.xlu0 %367
    %369 = vrot.lane.b32.xlu0 %v36, 114
    %v370 = vpop.permute.xlu0 %369
    %371 = vrot.lane.b32.xlu0 %v37, 114
    %v372 = vpop.permute.xlu0 %371
    %373 = vrot.lane.b32.xlu0 %v38, 114
    %v374 = vpop.permute.xlu0 %373
    %v391 = vcombine.low %v23, %v104
    %v392 = vcombine.high %v23, %v104
    %v394 = vunpack.c.l.s4 1983009808
    %v395 = vunpack.c.0.s8 %v394
    %v396 = vlaneseq
    %v397 = vshrl.u32 %v396, 7
    %v398 = vsub.s32 %v395, %v397
    %v399 = vrot.slane %v391, %v398
    %v401 = vunpack.c.l.s4 1983009808
    %v402 = vunpack.c.0.s8 %v401
    %v403 = vlaneseq
    %v404 = vshrl.u32 %v403, 7
    %v405 = vsub.s32 %v402, %v404
    %v406 = vrot.slane %v392, %v405
    %v407 = vcombine.low %v56, %v152
    %v408 = vcombine.high %v56, %v152
    %v410 = vunpack.c.l.s4 1983009808
    %v411 = vunpack.c.0.s8 %v410
    %v412 = vlaneseq
    %v413 = vshrl.u32 %v412, 7
    %v414 = vsub.s32 %v411, %v413
    %v415 = vrot.slane %v407, %v414
    %v417 = vunpack.c.l.s4 1983009808
    %v418 = vunpack.c.0.s8 %v417
    %v419 = vlaneseq
    %v420 = vshrl.u32 %v419, 7
    %v421 = vsub.s32 %v418, %v420
    %v422 = vrot.slane %v408, %v421
    %v423 = vcombine.low %v200, %v296
    %v424 = vcombine.high %v200, %v296
    %v426 = vunpack.c.l.s4 1983009808
    %v427 = vunpack.c.0.s8 %v426
    %v428 = vlaneseq
    %v429 = vshrl.u32 %v428, 7
    %v430 = vsub.s32 %v427, %v429
    %v431 = vrot.slane %v423, %v430
    %v433 = vunpack.c.l.s4 1983009808
    %v434 = vunpack.c.0.s8 %v433
    %v435 = vlaneseq
    %v436 = vshrl.u32 %v435, 7
    %v437 = vsub.s32 %v434, %v436
    %v438 = vrot.slane %v424, %v437
    %v439 = vcombine.low %v248, %v344
    %v440 = vcombine.high %v248, %v344
    %v442 = vunpack.c.l.s4 1983009808
    %v443 = vunpack.c.0.s8 %v442
    %v444 = vlaneseq
    %v445 = vshrl.u32 %v444, 7
    %v446 = vsub.s32 %v443, %v445
    %v447 = vrot.slane %v439, %v446
    %v449 = vunpack.c.l.s4 1983009808
    %v450 = vunpack.c.0.s8 %v449
    %v451 = vlaneseq
    %v452 = vshrl.u32 %v451, 7
    %v453 = vsub.s32 %v450, %v452
    %v454 = vrot.slane %v440, %v453
    %v455 = vcombine.low %v399, %v415
    %v456 = vcombine.high %v399, %v415
    %v458 = vunpack.c.l.s4 1934713408
    %v459 = vunpack.c.0.s8 %v458
    %v460 = vlaneseq
    %v461 = vshrl.u32 %v460, 7
    %v462 = vsub.s32 %v459, %v461
    %v463 = vrot.slane %v455, %v462
    %v465 = vunpack.c.l.s4 1934713408
    %v466 = vunpack.c.0.s8 %v465
    %v467 = vlaneseq
    %v468 = vshrl.u32 %v467, 7
    %v469 = vsub.s32 %v466, %v468
    %v470 = vrot.slane %v456, %v469
    %v471 = vcombine.low %v406, %v422
    %v472 = vcombine.high %v406, %v422
    %v474 = vunpack.c.l.s4 1934713408
    %v475 = vunpack.c.0.s8 %v474
    %v476 = vlaneseq
    %v477 = vshrl.u32 %v476, 7
    %v478 = vsub.s32 %v475, %v477
    %v479 = vrot.slane %v471, %v478
    %v481 = vunpack.c.l.s4 1934713408
    %v482 = vunpack.c.0.s8 %v481
    %v483 = vlaneseq
    %v484 = vshrl.u32 %v483, 7
    %v485 = vsub.s32 %v482, %v484
    %v486 = vrot.slane %v472, %v485
    %v487 = vcombine.low %v431, %v447
    %v488 = vcombine.high %v431, %v447
    %v490 = vunpack.c.l.s4 1934713408
    %v491 = vunpack.c.0.s8 %v490
    %v492 = vlaneseq
    %v493 = vshrl.u32 %v492, 7
    %v494 = vsub.s32 %v491, %v493
    %v495 = vrot.slane %v487, %v494
    %v497 = vunpack.c.l.s4 1934713408
    %v498 = vunpack.c.0.s8 %v497
    %v499 = vlaneseq
    %v500 = vshrl.u32 %v499, 7
    %v501 = vsub.s32 %v498, %v500
    %v502 = vrot.slane %v488, %v501
    %v503 = vcombine.low %v438, %v454
    %v504 = vcombine.high %v438, %v454
    %v506 = vunpack.c.l.s4 1934713408
    %v507 = vunpack.c.0.s8 %v506
    %v508 = vlaneseq
    %v509 = vshrl.u32 %v508, 7
    %v510 = vsub.s32 %v507, %v509
    %v511 = vrot.slane %v503, %v510
    %v513 = vunpack.c.l.s4 1934713408
    %v514 = vunpack.c.0.s8 %v513
    %v515 = vlaneseq
    %v516 = vshrl.u32 %v515, 7
    %v517 = vsub.s32 %v514, %v516
    %v518 = vrot.slane %v504, %v517
    %v519 = vcombine.low %v463, %v495
    %v520 = vcombine.high %v463, %v495
    %v521 = vcombine.low %v470, %v502
    %v522 = vcombine.high %v470, %v502
    %v523 = vcombine.low %v479, %v511
    %v524 = vcombine.high %v479, %v511
    %v525 = vcombine.low %v486, %v518
    %v526 = vcombine.high %v486, %v518
    %v527 = vcombine.low %v24, %v106
    %v528 = vcombine.high %v24, %v106
    %v530 = vunpack.c.l.s4 1983009808
    %v531 = vunpack.c.0.s8 %v530
    %v532 = vlaneseq
    %v533 = vshrl.u32 %v532, 7
    %v534 = vsub.s32 %v531, %v533
    %v535 = vrot.slane %v527, %v534
    %v537 = vunpack.c.l.s4 1983009808
    %v538 = vunpack.c.0.s8 %v537
    %v539 = vlaneseq
    %v540 = vshrl.u32 %v539, 7
    %v541 = vsub.s32 %v538, %v540
    %v542 = vrot.slane %v528, %v541
    %v543 = vcombine.low %v58, %v154
    %v544 = vcombine.high %v58, %v154
    %v546 = vunpack.c.l.s4 1983009808
    %v547 = vunpack.c.0.s8 %v546
    %v548 = vlaneseq
    %v549 = vshrl.u32 %v548, 7
    %v550 = vsub.s32 %v547, %v549
    %v551 = vrot.slane %v543, %v550
    %v553 = vunpack.c.l.s4 1983009808
    %v554 = vunpack.c.0.s8 %v553
    %v555 = vlaneseq
    %v556 = vshrl.u32 %v555, 7
    %v557 = vsub.s32 %v554, %v556
    %v558 = vrot.slane %v544, %v557
    %v559 = vcombine.low %v202, %v298
    %v560 = vcombine.high %v202, %v298
    %v562 = vunpack.c.l.s4 1983009808
    %v563 = vunpack.c.0.s8 %v562
    %v564 = vlaneseq
    %v565 = vshrl.u32 %v564, 7
    %v566 = vsub.s32 %v563, %v565
    %v567 = vrot.slane %v559, %v566
    %v569 = vunpack.c.l.s4 1983009808
    %v570 = vunpack.c.0.s8 %v569
    %v571 = vlaneseq
    %v572 = vshrl.u32 %v571, 7
    %v573 = vsub.s32 %v570, %v572
    %v574 = vrot.slane %v560, %v573
    %v575 = vcombine.low %v250, %v346
    %v576 = vcombine.high %v250, %v346
    %v578 = vunpack.c.l.s4 1983009808
    %v579 = vunpack.c.0.s8 %v578
    %v580 = vlaneseq
    %v581 = vshrl.u32 %v580, 7
    %v582 = vsub.s32 %v579, %v581
    %v583 = vrot.slane %v575, %v582
    %v585 = vunpack.c.l.s4 1983009808
    %v586 = vunpack.c.0.s8 %v585
    %v587 = vlaneseq
    %v588 = vshrl.u32 %v587, 7
    %v589 = vsub.s32 %v586, %v588
    %v590 = vrot.slane %v576, %v589
    %v591 = vcombine.low %v535, %v551
    %v592 = vcombine.high %v535, %v551
    %v594 = vunpack.c.l.s4 1934713408
    %v595 = vunpack.c.0.s8 %v594
    %v596 = vlaneseq
    %v597 = vshrl.u32 %v596, 7
    %v598 = vsub.s32 %v595, %v597
    %v599 = vrot.slane %v591, %v598
    %v601 = vunpack.c.l.s4 1934713408
    %v602 = vunpack.c.0.s8 %v601
    %v603 = vlaneseq
    %v604 = vshrl.u32 %v603, 7
    %v605 = vsub.s32 %v602, %v604
    %v606 = vrot.slane %v592, %v605
    %v607 = vcombine.low %v542, %v558
    %v608 = vcombine.high %v542, %v558
    %v610 = vunpack.c.l.s4 1934713408
    %v611 = vunpack.c.0.s8 %v610
    %v612 = vlaneseq
    %v613 = vshrl.u32 %v612, 7
    %v614 = vsub.s32 %v611, %v613
    %v615 = vrot.slane %v607, %v614
    %v617 = vunpack.c.l.s4 1934713408
    %v618 = vunpack.c.0.s8 %v617
    %v619 = vlaneseq
    %v620 = vshrl.u32 %v619, 7
    %v621 = vsub.s32 %v618, %v620
    %v622 = vrot.slane %v608, %v621
    %v623 = vcombine.low %v567, %v583
    %v624 = vcombine.high %v567, %v583
    %v626 = vunpack.c.l.s4 1934713408
    %v627 = vunpack.c.0.s8 %v626
    %v628 = vlaneseq
    %v629 = vshrl.u32 %v628, 7
    %v630 = vsub.s32 %v627, %v629
    %v631 = vrot.slane %v623, %v630
    %v633 = vunpack.c.l.s4 1934713408
    %v634 = vunpack.c.0.s8 %v633
    %v635 = vlaneseq
    %v636 = vshrl.u32 %v635, 7
    %v637 = vsub.s32 %v634, %v636
    %v638 = vrot.slane %v624, %v637
    %v639 = vcombine.low %v574, %v590
    %v640 = vcombine.high %v574, %v590
    %v642 = vunpack.c.l.s4 1934713408
    %v643 = vunpack.c.0.s8 %v642
    %v644 = vlaneseq
    %v645 = vshrl.u32 %v644, 7
    %v646 = vsub.s32 %v643, %v645
    %v647 = vrot.slane %v639, %v646
    %v649 = vunpack.c.l.s4 1934713408
    %v650 = vunpack.c.0.s8 %v649
    %v651 = vlaneseq
    %v652 = vshrl.u32 %v651, 7
    %v653 = vsub.s32 %v650, %v652
    %v654 = vrot.slane %v640, %v653
    %v655 = vcombine.low %v599, %v631
    %v656 = vcombine.high %v599, %v631
    %v657 = vcombine.low %v606, %v638
    %v658 = vcombine.high %v606, %v638
    %v659 = vcombine.low %v615, %v647
    %v660 = vcombine.high %v615, %v647
    %v661 = vcombine.low %v622, %v654
    %v662 = vcombine.high %v622, %v654
    %v663 = vcombine.low %v25, %v108
    %v664 = vcombine.high %v25, %v108
    %v666 = vunpack.c.l.s4 1983009808
    %v667 = vunpack.c.0.s8 %v666
    %v668 = vlaneseq
    %v669 = vshrl.u32 %v668, 7
    %v670 = vsub.s32 %v667, %v669
    %v671 = vrot.slane %v663, %v670
    %v673 = vunpack.c.l.s4 1983009808
    %v674 = vunpack.c.0.s8 %v673
    %v675 = vlaneseq
    %v676 = vshrl.u32 %v675, 7
    %v677 = vsub.s32 %v674, %v676
    %v678 = vrot.slane %v664, %v677
    %v679 = vcombine.low %v60, %v156
    %v680 = vcombine.high %v60, %v156
    %v682 = vunpack.c.l.s4 1983009808
    %v683 = vunpack.c.0.s8 %v682
    %v684 = vlaneseq
    %v685 = vshrl.u32 %v684, 7
    %v686 = vsub.s32 %v683, %v685
    %v687 = vrot.slane %v679, %v686
    %v689 = vunpack.c.l.s4 1983009808
    %v690 = vunpack.c.0.s8 %v689
    %v691 = vlaneseq
    %v692 = vshrl.u32 %v691, 7
    %v693 = vsub.s32 %v690, %v692
    %v694 = vrot.slane %v680, %v693
    %v695 = vcombine.low %v204, %v300
    %v696 = vcombine.high %v204, %v300
    %v698 = vunpack.c.l.s4 1983009808
    %v699 = vunpack.c.0.s8 %v698
    %v700 = vlaneseq
    %v701 = vshrl.u32 %v700, 7
    %v702 = vsub.s32 %v699, %v701
    %v703 = vrot.slane %v695, %v702
    %v705 = vunpack.c.l.s4 1983009808
    %v706 = vunpack.c.0.s8 %v705
    %v707 = vlaneseq
    %v708 = vshrl.u32 %v707, 7
    %v709 = vsub.s32 %v706, %v708
    %v710 = vrot.slane %v696, %v709
    %v711 = vcombine.low %v252, %v348
    %v712 = vcombine.high %v252, %v348
    %v714 = vunpack.c.l.s4 1983009808
    %v715 = vunpack.c.0.s8 %v714
    %v716 = vlaneseq
    %v717 = vshrl.u32 %v716, 7
    %v718 = vsub.s32 %v715, %v717
    %v719 = vrot.slane %v711, %v718
    %v721 = vunpack.c.l.s4 1983009808
    %v722 = vunpack.c.0.s8 %v721
    %v723 = vlaneseq
    %v724 = vshrl.u32 %v723, 7
    %v725 = vsub.s32 %v722, %v724
    %v726 = vrot.slane %v712, %v725
    %v727 = vcombine.low %v671, %v687
    %v728 = vcombine.high %v671, %v687
    %v730 = vunpack.c.l.s4 1934713408
    %v731 = vunpack.c.0.s8 %v730
    %v732 = vlaneseq
    %v733 = vshrl.u32 %v732, 7
    %v734 = vsub.s32 %v731, %v733
    %v735 = vrot.slane %v727, %v734
    %v737 = vunpack.c.l.s4 1934713408
    %v738 = vunpack.c.0.s8 %v737
    %v739 = vlaneseq
    %v740 = vshrl.u32 %v739, 7
    %v741 = vsub.s32 %v738, %v740
    %v742 = vrot.slane %v728, %v741
    %v743 = vcombine.low %v678, %v694
    %v744 = vcombine.high %v678, %v694
    %v746 = vunpack.c.l.s4 1934713408
    %v747 = vunpack.c.0.s8 %v746
    %v748 = vlaneseq
    %v749 = vshrl.u32 %v748, 7
    %v750 = vsub.s32 %v747, %v749
    %v751 = vrot.slane %v743, %v750
    %v753 = vunpack.c.l.s4 1934713408
    %v754 = vunpack.c.0.s8 %v753
    %v755 = vlaneseq
    %v756 = vshrl.u32 %v755, 7
    %v757 = vsub.s32 %v754, %v756
    %v758 = vrot.slane %v744, %v757
    %v759 = vcombine.low %v703, %v719
    %v760 = vcombine.high %v703, %v719
    %v762 = vunpack.c.l.s4 1934713408
    %v763 = vunpack.c.0.s8 %v762
    %v764 = vlaneseq
    %v765 = vshrl.u32 %v764, 7
    %v766 = vsub.s32 %v763, %v765
    %v767 = vrot.slane %v759, %v766
    %v769 = vunpack.c.l.s4 1934713408
    %v770 = vunpack.c.0.s8 %v769
    %v771 = vlaneseq
    %v772 = vshrl.u32 %v771, 7
    %v773 = vsub.s32 %v770, %v772
    %v774 = vrot.slane %v760, %v773
    %v775 = vcombine.low %v710, %v726
    %v776 = vcombine.high %v710, %v726
    %v778 = vunpack.c.l.s4 1934713408
    %v779 = vunpack.c.0.s8 %v778
    %v780 = vlaneseq
    %v781 = vshrl.u32 %v780, 7
    %v782 = vsub.s32 %v779, %v781
    %v783 = vrot.slane %v775, %v782
    %v785 = vunpack.c.l.s4 1934713408
    %v786 = vunpack.c.0.s8 %v785
    %v787 = vlaneseq
    %v788 = vshrl.u32 %v787, 7
    %v789 = vsub.s32 %v786, %v788
    %v790 = vrot.slane %v776, %v789
    %v791 = vcombine.low %v735, %v767
    %v792 = vcombine.high %v735, %v767
    %v793 = vcombine.low %v742, %v774
    %v794 = vcombine.high %v742, %v774
    %v795 = vcombine.low %v751, %v783
    %v796 = vcombine.high %v751, %v783
    %v797 = vcombine.low %v758, %v790
    %v798 = vcombine.high %v758, %v790
    %v799 = vcombine.low %v26, %v110
    %v800 = vcombine.high %v26, %v110
    %v802 = vunpack.c.l.s4 1983009808
    %v803 = vunpack.c.0.s8 %v802
    %v804 = vlaneseq
    %v805 = vshrl.u32 %v804, 7
    %v806 = vsub.s32 %v803, %v805
    %v807 = vrot.slane %v799, %v806
    %v809 = vunpack.c.l.s4 1983009808
    %v810 = vunpack.c.0.s8 %v809
    %v811 = vlaneseq
    %v812 = vshrl.u32 %v811, 7
    %v813 = vsub.s32 %v810, %v812
    %v814 = vrot.slane %v800, %v813
    %v815 = vcombine.low %v62, %v158
    %v816 = vcombine.high %v62, %v158
    %v818 = vunpack.c.l.s4 1983009808
    %v819 = vunpack.c.0.s8 %v818
    %v820 = vlaneseq
    %v821 = vshrl.u32 %v820, 7
    %v822 = vsub.s32 %v819, %v821
    %v823 = vrot.slane %v815, %v822
    %v825 = vunpack.c.l.s4 1983009808
    %v826 = vunpack.c.0.s8 %v825
    %v827 = vlaneseq
    %v828 = vshrl.u32 %v827, 7
    %v829 = vsub.s32 %v826, %v828
    %v830 = vrot.slane %v816, %v829
    %v831 = vcombine.low %v206, %v302
    %v832 = vcombine.high %v206, %v302
    %v834 = vunpack.c.l.s4 1983009808
    %v835 = vunpack.c.0.s8 %v834
    %v836 = vlaneseq
    %v837 = vshrl.u32 %v836, 7
    %v838 = vsub.s32 %v835, %v837
    %v839 = vrot.slane %v831, %v838
    %v841 = vunpack.c.l.s4 1983009808
    %v842 = vunpack.c.0.s8 %v841
    %v843 = vlaneseq
    %v844 = vshrl.u32 %v843, 7
    %v845 = vsub.s32 %v842, %v844
    %v846 = vrot.slane %v832, %v845
    %v847 = vcombine.low %v254, %v350
    %v848 = vcombine.high %v254, %v350
    %v850 = vunpack.c.l.s4 1983009808
    %v851 = vunpack.c.0.s8 %v850
    %v852 = vlaneseq
    %v853 = vshrl.u32 %v852, 7
    %v854 = vsub.s32 %v851, %v853
    %v855 = vrot.slane %v847, %v854
    %v857 = vunpack.c.l.s4 1983009808
    %v858 = vunpack.c.0.s8 %v857
    %v859 = vlaneseq
    %v860 = vshrl.u32 %v859, 7
    %v861 = vsub.s32 %v858, %v860
    %v862 = vrot.slane %v848, %v861
    %v863 = vcombine.low %v807, %v823
    %v864 = vcombine.high %v807, %v823
    %v866 = vunpack.c.l.s4 1934713408
    %v867 = vunpack.c.0.s8 %v866
    %v868 = vlaneseq
    %v869 = vshrl.u32 %v868, 7
    %v870 = vsub.s32 %v867, %v869
    %v871 = vrot.slane %v863, %v870
    %v873 = vunpack.c.l.s4 1934713408
    %v874 = vunpack.c.0.s8 %v873
    %v875 = vlaneseq
    %v876 = vshrl.u32 %v875, 7
    %v877 = vsub.s32 %v874, %v876
    %v878 = vrot.slane %v864, %v877
    %v879 = vcombine.low %v814, %v830
    %v880 = vcombine.high %v814, %v830
    %v882 = vunpack.c.l.s4 1934713408
    %v883 = vunpack.c.0.s8 %v882
    %v884 = vlaneseq
    %v885 = vshrl.u32 %v884, 7
    %v886 = vsub.s32 %v883, %v885
    %v887 = vrot.slane %v879, %v886
    %v889 = vunpack.c.l.s4 1934713408
    %v890 = vunpack.c.0.s8 %v889
    %v891 = vlaneseq
    %v892 = vshrl.u32 %v891, 7
    %v893 = vsub.s32 %v890, %v892
    %v894 = vrot.slane %v880, %v893
    %v895 = vcombine.low %v839, %v855
    %v896 = vcombine.high %v839, %v855
    %v898 = vunpack.c.l.s4 1934713408
    %v899 = vunpack.c.0.s8 %v898
    %v900 = vlaneseq
    %v901 = vshrl.u32 %v900, 7
    %v902 = vsub.s32 %v899, %v901
    %v903 = vrot.slane %v895, %v902
    %v905 = vunpack.c.l.s4 1934713408
    %v906 = vunpack.c.0.s8 %v905
    %v907 = vlaneseq
    %v908 = vshrl.u32 %v907, 7
    %v909 = vsub.s32 %v906, %v908
    %v910 = vrot.slane %v896, %v909
    %v911 = vcombine.low %v846, %v862
    %v912 = vcombine.high %v846, %v862
    %v914 = vunpack.c.l.s4 1934713408
    %v915 = vunpack.c.0.s8 %v914
    %v916 = vlaneseq
    %v917 = vshrl.u32 %v916, 7
    %v918 = vsub.s32 %v915, %v917
    %v919 = vrot.slane %v911, %v918
    %v921 = vunpack.c.l.s4 1934713408
    %v922 = vunpack.c.0.s8 %v921
    %v923 = vlaneseq
    %v924 = vshrl.u32 %v923, 7
    %v925 = vsub.s32 %v922, %v924
    %v926 = vrot.slane %v912, %v925
    %v927 = vcombine.low %v871, %v903
    %v928 = vcombine.high %v871, %v903
    %v929 = vcombine.low %v878, %v910
    %v930 = vcombine.high %v878, %v910
    %v931 = vcombine.low %v887, %v919
    %v932 = vcombine.high %v887, %v919
    %v933 = vcombine.low %v894, %v926
    %v934 = vcombine.high %v894, %v926
    %v935 = vcombine.low %v27, %v112
    %v936 = vcombine.high %v27, %v112
    %v938 = vunpack.c.l.s4 1983009808
    %v939 = vunpack.c.0.s8 %v938
    %v940 = vlaneseq
    %v941 = vshrl.u32 %v940, 7
    %v942 = vsub.s32 %v939, %v941
    %v943 = vrot.slane %v935, %v942
    %v945 = vunpack.c.l.s4 1983009808
    %v946 = vunpack.c.0.s8 %v945
    %v947 = vlaneseq
    %v948 = vshrl.u32 %v947, 7
    %v949 = vsub.s32 %v946, %v948
    %v950 = vrot.slane %v936, %v949
    %v951 = vcombine.low %v64, %v160
    %v952 = vcombine.high %v64, %v160
    %v954 = vunpack.c.l.s4 1983009808
    %v955 = vunpack.c.0.s8 %v954
    %v956 = vlaneseq
    %v957 = vshrl.u32 %v956, 7
    %v958 = vsub.s32 %v955, %v957
    %v959 = vrot.slane %v951, %v958
    %v961 = vunpack.c.l.s4 1983009808
    %v962 = vunpack.c.0.s8 %v961
    %v963 = vlaneseq
    %v964 = vshrl.u32 %v963, 7
    %v965 = vsub.s32 %v962, %v964
    %v966 = vrot.slane %v952, %v965
    %v967 = vcombine.low %v208, %v304
    %v968 = vcombine.high %v208, %v304
    %v970 = vunpack.c.l.s4 1983009808
    %v971 = vunpack.c.0.s8 %v970
    %v972 = vlaneseq
    %v973 = vshrl.u32 %v972, 7
    %v974 = vsub.s32 %v971, %v973
    %v975 = vrot.slane %v967, %v974
    %v977 = vunpack.c.l.s4 1983009808
    %v978 = vunpack.c.0.s8 %v977
    %v979 = vlaneseq
    %v980 = vshrl.u32 %v979, 7
    %v981 = vsub.s32 %v978, %v980
    %v982 = vrot.slane %v968, %v981
    %v983 = vcombine.low %v256, %v352
    %v984 = vcombine.high %v256, %v352
    %v986 = vunpack.c.l.s4 1983009808
    %v987 = vunpack.c.0.s8 %v986
    %v988 = vlaneseq
    %v989 = vshrl.u32 %v988, 7
    %v990 = vsub.s32 %v987, %v989
    %v991 = vrot.slane %v983, %v990
    %v993 = vunpack.c.l.s4 1983009808
    %v994 = vunpack.c.0.s8 %v993
    %v995 = vlaneseq
    %v996 = vshrl.u32 %v995, 7
    %v997 = vsub.s32 %v994, %v996
    %v998 = vrot.slane %v984, %v997
    %v999 = vcombine.low %v943, %v959
    %v1000 = vcombine.high %v943, %v959
    %v1002 = vunpack.c.l.s4 1934713408
    %v1003 = vunpack.c.0.s8 %v1002
    %v1004 = vlaneseq
    %v1005 = vshrl.u32 %v1004, 7
    %v1006 = vsub.s32 %v1003, %v1005
    %v1007 = vrot.slane %v999, %v1006
    %v1009 = vunpack.c.l.s4 1934713408
    %v1010 = vunpack.c.0.s8 %v1009
    %v1011 = vlaneseq
    %v1012 = vshrl.u32 %v1011, 7
    %v1013 = vsub.s32 %v1010, %v1012
    %v1014 = vrot.slane %v1000, %v1013
    %v1015 = vcombine.low %v950, %v966
    %v1016 = vcombine.high %v950, %v966
    %v1018 = vunpack.c.l.s4 1934713408
    %v1019 = vunpack.c.0.s8 %v1018
    %v1020 = vlaneseq
    %v1021 = vshrl.u32 %v1020, 7
    %v1022 = vsub.s32 %v1019, %v1021
    %v1023 = vrot.slane %v1015, %v1022
    %v1025 = vunpack.c.l.s4 1934713408
    %v1026 = vunpack.c.0.s8 %v1025
    %v1027 = vlaneseq
    %v1028 = vshrl.u32 %v1027, 7
    %v1029 = vsub.s32 %v1026, %v1028
    %v1030 = vrot.slane %v1016, %v1029
    %v1031 = vcombine.low %v975, %v991
    %v1032 = vcombine.high %v975, %v991
    %v1034 = vunpack.c.l.s4 1934713408
    %v1035 = vunpack.c.0.s8 %v1034
    %v1036 = vlaneseq
    %v1037 = vshrl.u32 %v1036, 7
    %v1038 = vsub.s32 %v1035, %v1037
    %v1039 = vrot.slane %v1031, %v1038
    %v1041 = vunpack.c.l.s4 1934713408
    %v1042 = vunpack.c.0.s8 %v1041
    %v1043 = vlaneseq
    %v1044 = vshrl.u32 %v1043, 7
    %v1045 = vsub.s32 %v1042, %v1044
    %v1046 = vrot.slane %v1032, %v1045
    %v1047 = vcombine.low %v982, %v998
    %v1048 = vcombine.high %v982, %v998
    %v1050 = vunpack.c.l.s4 1934713408
    %v1051 = vunpack.c.0.s8 %v1050
    %v1052 = vlaneseq
    %v1053 = vshrl.u32 %v1052, 7
    %v1054 = vsub.s32 %v1051, %v1053
    %v1055 = vrot.slane %v1047, %v1054
    %v1057 = vunpack.c.l.s4 1934713408
    %v1058 = vunpack.c.0.s8 %v1057
    %v1059 = vlaneseq
    %v1060 = vshrl.u32 %v1059, 7
    %v1061 = vsub.s32 %v1058, %v1060
    %v1062 = vrot.slane %v1048, %v1061
    %v1063 = vcombine.low %v1007, %v1039
    %v1064 = vcombine.high %v1007, %v1039
    %v1065 = vcombine.low %v1014, %v1046
    %v1066 = vcombine.high %v1014, %v1046
    %v1067 = vcombine.low %v1023, %v1055
    %v1068 = vcombine.high %v1023, %v1055
    %v1069 = vcombine.low %v1030, %v1062
    %v1070 = vcombine.high %v1030, %v1062
    %v1071 = vcombine.low %v28, %v114
    %v1072 = vcombine.high %v28, %v114
    %v1074 = vunpack.c.l.s4 1983009808
    %v1075 = vunpack.c.0.s8 %v1074
    %v1076 = vlaneseq
    %v1077 = vshrl.u32 %v1076, 7
    %v1078 = vsub.s32 %v1075, %v1077
    %v1079 = vrot.slane %v1071, %v1078
    %v1081 = vunpack.c.l.s4 1983009808
    %v1082 = vunpack.c.0.s8 %v1081
    %v1083 = vlaneseq
    %v1084 = vshrl.u32 %v1083, 7
    %v1085 = vsub.s32 %v1082, %v1084
    %v1086 = vrot.slane %v1072, %v1085
    %v1087 = vcombine.low %v66, %v162
    %v1088 = vcombine.high %v66, %v162
    %v1090 = vunpack.c.l.s4 1983009808
    %v1091 = vunpack.c.0.s8 %v1090
    %v1092 = vlaneseq
    %v1093 = vshrl.u32 %v1092, 7
    %v1094 = vsub.s32 %v1091, %v1093
    %v1095 = vrot.slane %v1087, %v1094
    %v1097 = vunpack.c.l.s4 1983009808
    %v1098 = vunpack.c.0.s8 %v1097
    %v1099 = vlaneseq
    %v1100 = vshrl.u32 %v1099, 7
    %v1101 = vsub.s32 %v1098, %v1100
    %v1102 = vrot.slane %v1088, %v1101
    %v1103 = vcombine.low %v210, %v306
    %v1104 = vcombine.high %v210, %v306
    %v1106 = vunpack.c.l.s4 1983009808
    %v1107 = vunpack.c.0.s8 %v1106
    %v1108 = vlaneseq
    %v1109 = vshrl.u32 %v1108, 7
    %v1110 = vsub.s32 %v1107, %v1109
    %v1111 = vrot.slane %v1103, %v1110
    %v1113 = vunpack.c.l.s4 1983009808
    %v1114 = vunpack.c.0.s8 %v1113
    %v1115 = vlaneseq
    %v1116 = vshrl.u32 %v1115, 7
    %v1117 = vsub.s32 %v1114, %v1116
    %v1118 = vrot.slane %v1104, %v1117
    %v1119 = vcombine.low %v258, %v354
    %v1120 = vcombine.high %v258, %v354
    %v1122 = vunpack.c.l.s4 1983009808
    %v1123 = vunpack.c.0.s8 %v1122
    %v1124 = vlaneseq
    %v1125 = vshrl.u32 %v1124, 7
    %v1126 = vsub.s32 %v1123, %v1125
    %v1127 = vrot.slane %v1119, %v1126
    %v1129 = vunpack.c.l.s4 1983009808
    %v1130 = vunpack.c.0.s8 %v1129
    %v1131 = vlaneseq
    %v1132 = vshrl.u32 %v1131, 7
    %v1133 = vsub.s32 %v1130, %v1132
    %v1134 = vrot.slane %v1120, %v1133
    %v1135 = vcombine.low %v1079, %v1095
    %v1136 = vcombine.high %v1079, %v1095
    %v1138 = vunpack.c.l.s4 1934713408
    %v1139 = vunpack.c.0.s8 %v1138
    %v1140 = vlaneseq
    %v1141 = vshrl.u32 %v1140, 7
    %v1142 = vsub.s32 %v1139, %v1141
    %v1143 = vrot.slane %v1135, %v1142
    %v1145 = vunpack.c.l.s4 1934713408
    %v1146 = vunpack.c.0.s8 %v1145
    %v1147 = vlaneseq
    %v1148 = vshrl.u32 %v1147, 7
    %v1149 = vsub.s32 %v1146, %v1148
    %v1150 = vrot.slane %v1136, %v1149
    %v1151 = vcombine.low %v1086, %v1102
    %v1152 = vcombine.high %v1086, %v1102
    %v1154 = vunpack.c.l.s4 1934713408
    %v1155 = vunpack.c.0.s8 %v1154
    %v1156 = vlaneseq
    %v1157 = vshrl.u32 %v1156, 7
    %v1158 = vsub.s32 %v1155, %v1157
    %v1159 = vrot.slane %v1151, %v1158
    %v1161 = vunpack.c.l.s4 1934713408
    %v1162 = vunpack.c.0.s8 %v1161
    %v1163 = vlaneseq
    %v1164 = vshrl.u32 %v1163, 7
    %v1165 = vsub.s32 %v1162, %v1164
    %v1166 = vrot.slane %v1152, %v1165
    %v1167 = vcombine.low %v1111, %v1127
    %v1168 = vcombine.high %v1111, %v1127
    %v1170 = vunpack.c.l.s4 1934713408
    %v1171 = vunpack.c.0.s8 %v1170
    %v1172 = vlaneseq
    %v1173 = vshrl.u32 %v1172, 7
    %v1174 = vsub.s32 %v1171, %v1173
    %v1175 = vrot.slane %v1167, %v1174
    %v1177 = vunpack.c.l.s4 1934713408
    %v1178 = vunpack.c.0.s8 %v1177
    %v1179 = vlaneseq
    %v1180 = vshrl.u32 %v1179, 7
    %v1181 = vsub.s32 %v1178, %v1180
    %v1182 = vrot.slane %v1168, %v1181
    %v1183 = vcombine.low %v1118, %v1134
    %v1184 = vcombine.high %v1118, %v1134
    %v1186 = vunpack.c.l.s4 1934713408
    %v1187 = vunpack.c.0.s8 %v1186
    %v1188 = vlaneseq
    %v1189 = vshrl.u32 %v1188, 7
    %v1190 = vsub.s32 %v1187, %v1189
    %v1191 = vrot.slane %v1183, %v1190
    %v1193 = vunpack.c.l.s4 1934713408
    %v1194 = vunpack.c.0.s8 %v1193
    %v1195 = vlaneseq
    %v1196 = vshrl.u32 %v1195, 7
    %v1197 = vsub.s32 %v1194, %v1196
    %v1198 = vrot.slane %v1184, %v1197
    %v1199 = vcombine.low %v1143, %v1175
    %v1200 = vcombine.high %v1143, %v1175
    %v1201 = vcombine.low %v1150, %v1182
    %v1202 = vcombine.high %v1150, %v1182
    %v1203 = vcombine.low %v1159, %v1191
    %v1204 = vcombine.high %v1159, %v1191
    %v1205 = vcombine.low %v1166, %v1198
    %v1206 = vcombine.high %v1166, %v1198
    %v1207 = vcombine.low %v29, %v116
    %v1208 = vcombine.high %v29, %v116
    %v1210 = vunpack.c.l.s4 1983009808
    %v1211 = vunpack.c.0.s8 %v1210
    %v1212 = vlaneseq
    %v1213 = vshrl.u32 %v1212, 7
    %v1214 = vsub.s32 %v1211, %v1213
    %v1215 = vrot.slane %v1207, %v1214
    %v1217 = vunpack.c.l.s4 1983009808
    %v1218 = vunpack.c.0.s8 %v1217
    %v1219 = vlaneseq
    %v1220 = vshrl.u32 %v1219, 7
    %v1221 = vsub.s32 %v1218, %v1220
    %v1222 = vrot.slane %v1208, %v1221
    %v1223 = vcombine.low %v68, %v164
    %v1224 = vcombine.high %v68, %v164
    %v1226 = vunpack.c.l.s4 1983009808
    %v1227 = vunpack.c.0.s8 %v1226
    %v1228 = vlaneseq
    %v1229 = vshrl.u32 %v1228, 7
    %v1230 = vsub.s32 %v1227, %v1229
    %v1231 = vrot.slane %v1223, %v1230
    %v1233 = vunpack.c.l.s4 1983009808
    %v1234 = vunpack.c.0.s8 %v1233
    %v1235 = vlaneseq
    %v1236 = vshrl.u32 %v1235, 7
    %v1237 = vsub.s32 %v1234, %v1236
    %v1238 = vrot.slane %v1224, %v1237
    %v1239 = vcombine.low %v212, %v308
    %v1240 = vcombine.high %v212, %v308
    %v1242 = vunpack.c.l.s4 1983009808
    %v1243 = vunpack.c.0.s8 %v1242
    %v1244 = vlaneseq
    %v1245 = vshrl.u32 %v1244, 7
    %v1246 = vsub.s32 %v1243, %v1245
    %v1247 = vrot.slane %v1239, %v1246
    %v1249 = vunpack.c.l.s4 1983009808
    %v1250 = vunpack.c.0.s8 %v1249
    %v1251 = vlaneseq
    %v1252 = vshrl.u32 %v1251, 7
    %v1253 = vsub.s32 %v1250, %v1252
    %v1254 = vrot.slane %v1240, %v1253
    %v1255 = vcombine.low %v260, %v356
    %v1256 = vcombine.high %v260, %v356
    %v1258 = vunpack.c.l.s4 1983009808
    %v1259 = vunpack.c.0.s8 %v1258
    %v1260 = vlaneseq
    %v1261 = vshrl.u32 %v1260, 7
    %v1262 = vsub.s32 %v1259, %v1261
    %v1263 = vrot.slane %v1255, %v1262
    %v1265 = vunpack.c.l.s4 1983009808
    %v1266 = vunpack.c.0.s8 %v1265
    %v1267 = vlaneseq
    %v1268 = vshrl.u32 %v1267, 7
    %v1269 = vsub.s32 %v1266, %v1268
    %v1270 = vrot.slane %v1256, %v1269
    %v1271 = vcombine.low %v1215, %v1231
    %v1272 = vcombine.high %v1215, %v1231
    %v1274 = vunpack.c.l.s4 1934713408
    %v1275 = vunpack.c.0.s8 %v1274
    %v1276 = vlaneseq
    %v1277 = vshrl.u32 %v1276, 7
    %v1278 = vsub.s32 %v1275, %v1277
    %v1279 = vrot.slane %v1271, %v1278
    %v1281 = vunpack.c.l.s4 1934713408
    %v1282 = vunpack.c.0.s8 %v1281
    %v1283 = vlaneseq
    %v1284 = vshrl.u32 %v1283, 7
    %v1285 = vsub.s32 %v1282, %v1284
    %v1286 = vrot.slane %v1272, %v1285
    %v1287 = vcombine.low %v1222, %v1238
    %v1288 = vcombine.high %v1222, %v1238
    %v1290 = vunpack.c.l.s4 1934713408
    %v1291 = vunpack.c.0.s8 %v1290
    %v1292 = vlaneseq
    %v1293 = vshrl.u32 %v1292, 7
    %v1294 = vsub.s32 %v1291, %v1293
    %v1295 = vrot.slane %v1287, %v1294
    %v1297 = vunpack.c.l.s4 1934713408
    %v1298 = vunpack.c.0.s8 %v1297
    %v1299 = vlaneseq
    %v1300 = vshrl.u32 %v1299, 7
    %v1301 = vsub.s32 %v1298, %v1300
    %v1302 = vrot.slane %v1288, %v1301
    %v1303 = vcombine.low %v1247, %v1263
    %v1304 = vcombine.high %v1247, %v1263
    %v1306 = vunpack.c.l.s4 1934713408
    %v1307 = vunpack.c.0.s8 %v1306
    %v1308 = vlaneseq
    %v1309 = vshrl.u32 %v1308, 7
    %v1310 = vsub.s32 %v1307, %v1309
    %v1311 = vrot.slane %v1303, %v1310
    %v1313 = vunpack.c.l.s4 1934713408
    %v1314 = vunpack.c.0.s8 %v1313
    %v1315 = vlaneseq
    %v1316 = vshrl.u32 %v1315, 7
    %v1317 = vsub.s32 %v1314, %v1316
    %v1318 = vrot.slane %v1304, %v1317
    %v1319 = vcombine.low %v1254, %v1270
    %v1320 = vcombine.high %v1254, %v1270
    %v1322 = vunpack.c.l.s4 1934713408
    %v1323 = vunpack.c.0.s8 %v1322
    %v1324 = vlaneseq
    %v1325 = vshrl.u32 %v1324, 7
    %v1326 = vsub.s32 %v1323, %v1325
    %v1327 = vrot.slane %v1319, %v1326
    %v1329 = vunpack.c.l.s4 1934713408
    %v1330 = vunpack.c.0.s8 %v1329
    %v1331 = vlaneseq
    %v1332 = vshrl.u32 %v1331, 7
    %v1333 = vsub.s32 %v1330, %v1332
    %v1334 = vrot.slane %v1320, %v1333
    %v1335 = vcombine.low %v1279, %v1311
    %v1336 = vcombine.high %v1279, %v1311
    %v1337 = vcombine.low %v1286, %v1318
    %v1338 = vcombine.high %v1286, %v1318
    %v1339 = vcombine.low %v1295, %v1327
    %v1340 = vcombine.high %v1295, %v1327
    %v1341 = vcombine.low %v1302, %v1334
    %v1342 = vcombine.high %v1302, %v1334
    %v1343 = vcombine.low %v30, %v118
    %v1344 = vcombine.high %v30, %v118
    %v1346 = vunpack.c.l.s4 1983009808
    %v1347 = vunpack.c.0.s8 %v1346
    %v1348 = vlaneseq
    %v1349 = vshrl.u32 %v1348, 7
    %v1350 = vsub.s32 %v1347, %v1349
    %v1351 = vrot.slane %v1343, %v1350
    %v1353 = vunpack.c.l.s4 1983009808
    %v1354 = vunpack.c.0.s8 %v1353
    %v1355 = vlaneseq
    %v1356 = vshrl.u32 %v1355, 7
    %v1357 = vsub.s32 %v1354, %v1356
    %v1358 = vrot.slane %v1344, %v1357
    %v1359 = vcombine.low %v70, %v166
    %v1360 = vcombine.high %v70, %v166
    %v1362 = vunpack.c.l.s4 1983009808
    %v1363 = vunpack.c.0.s8 %v1362
    %v1364 = vlaneseq
    %v1365 = vshrl.u32 %v1364, 7
    %v1366 = vsub.s32 %v1363, %v1365
    %v1367 = vrot.slane %v1359, %v1366
    %v1369 = vunpack.c.l.s4 1983009808
    %v1370 = vunpack.c.0.s8 %v1369
    %v1371 = vlaneseq
    %v1372 = vshrl.u32 %v1371, 7
    %v1373 = vsub.s32 %v1370, %v1372
    %v1374 = vrot.slane %v1360, %v1373
    %v1375 = vcombine.low %v214, %v310
    %v1376 = vcombine.high %v214, %v310
    %v1378 = vunpack.c.l.s4 1983009808
    %v1379 = vunpack.c.0.s8 %v1378
    %v1380 = vlaneseq
    %v1381 = vshrl.u32 %v1380, 7
    %v1382 = vsub.s32 %v1379, %v1381
    %v1383 = vrot.slane %v1375, %v1382
    %v1385 = vunpack.c.l.s4 1983009808
    %v1386 = vunpack.c.0.s8 %v1385
    %v1387 = vlaneseq
    %v1388 = vshrl.u32 %v1387, 7
    %v1389 = vsub.s32 %v1386, %v1388
    %v1390 = vrot.slane %v1376, %v1389
    %v1391 = vcombine.low %v262, %v358
    %v1392 = vcombine.high %v262, %v358
    %v1394 = vunpack.c.l.s4 1983009808
    %v1395 = vunpack.c.0.s8 %v1394
    %v1396 = vlaneseq
    %v1397 = vshrl.u32 %v1396, 7
    %v1398 = vsub.s32 %v1395, %v1397
    %v1399 = vrot.slane %v1391, %v1398
    %v1401 = vunpack.c.l.s4 1983009808
    %v1402 = vunpack.c.0.s8 %v1401
    %v1403 = vlaneseq
    %v1404 = vshrl.u32 %v1403, 7
    %v1405 = vsub.s32 %v1402, %v1404
    %v1406 = vrot.slane %v1392, %v1405
    %v1407 = vcombine.low %v1351, %v1367
    %v1408 = vcombine.high %v1351, %v1367
    %v1410 = vunpack.c.l.s4 1934713408
    %v1411 = vunpack.c.0.s8 %v1410
    %v1412 = vlaneseq
    %v1413 = vshrl.u32 %v1412, 7
    %v1414 = vsub.s32 %v1411, %v1413
    %v1415 = vrot.slane %v1407, %v1414
    %v1417 = vunpack.c.l.s4 1934713408
    %v1418 = vunpack.c.0.s8 %v1417
    %v1419 = vlaneseq
    %v1420 = vshrl.u32 %v1419, 7
    %v1421 = vsub.s32 %v1418, %v1420
    %v1422 = vrot.slane %v1408, %v1421
    %v1423 = vcombine.low %v1358, %v1374
    %v1424 = vcombine.high %v1358, %v1374
    %v1426 = vunpack.c.l.s4 1934713408
    %v1427 = vunpack.c.0.s8 %v1426
    %v1428 = vlaneseq
    %v1429 = vshrl.u32 %v1428, 7
    %v1430 = vsub.s32 %v1427, %v1429
    %v1431 = vrot.slane %v1423, %v1430
    %v1433 = vunpack.c.l.s4 1934713408
    %v1434 = vunpack.c.0.s8 %v1433
    %v1435 = vlaneseq
    %v1436 = vshrl.u32 %v1435, 7
    %v1437 = vsub.s32 %v1434, %v1436
    %v1438 = vrot.slane %v1424, %v1437
    %v1439 = vcombine.low %v1383, %v1399
    %v1440 = vcombine.high %v1383, %v1399
    %v1442 = vunpack.c.l.s4 1934713408
    %v1443 = vunpack.c.0.s8 %v1442
    %v1444 = vlaneseq
    %v1445 = vshrl.u32 %v1444, 7
    %v1446 = vsub.s32 %v1443, %v1445
    %v1447 = vrot.slane %v1439, %v1446
    %v1449 = vunpack.c.l.s4 1934713408
    %v1450 = vunpack.c.0.s8 %v1449
    %v1451 = vlaneseq
    %v1452 = vshrl.u32 %v1451, 7
    %v1453 = vsub.s32 %v1450, %v1452
    %v1454 = vrot.slane %v1440, %v1453
    %v1455 = vcombine.low %v1390, %v1406
    %v1456 = vcombine.high %v1390, %v1406
    %v1458 = vunpack.c.l.s4 1934713408
    %v1459 = vunpack.c.0.s8 %v1458
    %v1460 = vlaneseq
    %v1461 = vshrl.u32 %v1460, 7
    %v1462 = vsub.s32 %v1459, %v1461
    %v1463 = vrot.slane %v1455, %v1462
    %v1465 = vunpack.c.l.s4 1934713408
    %v1466 = vunpack.c.0.s8 %v1465
    %v1467 = vlaneseq
    %v1468 = vshrl.u32 %v1467, 7
    %v1469 = vsub.s32 %v1466, %v1468
    %v1470 = vrot.slane %v1456, %v1469
    %v1471 = vcombine.low %v1415, %v1447
    %v1472 = vcombine.high %v1415, %v1447
    %v1473 = vcombine.low %v1422, %v1454
    %v1474 = vcombine.high %v1422, %v1454
    %v1475 = vcombine.low %v1431, %v1463
    %v1476 = vcombine.high %v1431, %v1463
    %v1477 = vcombine.low %v1438, %v1470
    %v1478 = vcombine.high %v1438, %v1470
    %v1479 = vcombine.low %v31, %v120
    %v1480 = vcombine.high %v31, %v120
    %v1482 = vunpack.c.l.s4 1983009808
    %v1483 = vunpack.c.0.s8 %v1482
    %v1484 = vlaneseq
    %v1485 = vshrl.u32 %v1484, 7
    %v1486 = vsub.s32 %v1483, %v1485
    %v1487 = vrot.slane %v1479, %v1486
    %v1489 = vunpack.c.l.s4 1983009808
    %v1490 = vunpack.c.0.s8 %v1489
    %v1491 = vlaneseq
    %v1492 = vshrl.u32 %v1491, 7
    %v1493 = vsub.s32 %v1490, %v1492
    %v1494 = vrot.slane %v1480, %v1493
    %v1495 = vcombine.low %v72, %v168
    %v1496 = vcombine.high %v72, %v168
    %v1498 = vunpack.c.l.s4 1983009808
    %v1499 = vunpack.c.0.s8 %v1498
    %v1500 = vlaneseq
    %v1501 = vshrl.u32 %v1500, 7
    %v1502 = vsub.s32 %v1499, %v1501
    %v1503 = vrot.slane %v1495, %v1502
    %v1505 = vunpack.c.l.s4 1983009808
    %v1506 = vunpack.c.0.s8 %v1505
    %v1507 = vlaneseq
    %v1508 = vshrl.u32 %v1507, 7
    %v1509 = vsub.s32 %v1506, %v1508
    %v1510 = vrot.slane %v1496, %v1509
    %v1511 = vcombine.low %v216, %v312
    %v1512 = vcombine.high %v216, %v312
    %v1514 = vunpack.c.l.s4 1983009808
    %v1515 = vunpack.c.0.s8 %v1514
    %v1516 = vlaneseq
    %v1517 = vshrl.u32 %v1516, 7
    %v1518 = vsub.s32 %v1515, %v1517
    %v1519 = vrot.slane %v1511, %v1518
    %v1521 = vunpack.c.l.s4 1983009808
    %v1522 = vunpack.c.0.s8 %v1521
    %v1523 = vlaneseq
    %v1524 = vshrl.u32 %v1523, 7
    %v1525 = vsub.s32 %v1522, %v1524
    %v1526 = vrot.slane %v1512, %v1525
    %v1527 = vcombine.low %v264, %v360
    %v1528 = vcombine.high %v264, %v360
    %v1530 = vunpack.c.l.s4 1983009808
    %v1531 = vunpack.c.0.s8 %v1530
    %v1532 = vlaneseq
    %v1533 = vshrl.u32 %v1532, 7
    %v1534 = vsub.s32 %v1531, %v1533
    %v1535 = vrot.slane %v1527, %v1534
    %v1537 = vunpack.c.l.s4 1983009808
    %v1538 = vunpack.c.0.s8 %v1537
    %v1539 = vlaneseq
    %v1540 = vshrl.u32 %v1539, 7
    %v1541 = vsub.s32 %v1538, %v1540
    %v1542 = vrot.slane %v1528, %v1541
    %v1543 = vcombine.low %v1487, %v1503
    %v1544 = vcombine.high %v1487, %v1503
    %v1546 = vunpack.c.l.s4 1934713408
    %v1547 = vunpack.c.0.s8 %v1546
    %v1548 = vlaneseq
    %v1549 = vshrl.u32 %v1548, 7
    %v1550 = vsub.s32 %v1547, %v1549
    %v1551 = vrot.slane %v1543, %v1550
    %v1553 = vunpack.c.l.s4 1934713408
    %v1554 = vunpack.c.0.s8 %v1553
    %v1555 = vlaneseq
    %v1556 = vshrl.u32 %v1555, 7
    %v1557 = vsub.s32 %v1554, %v1556
    %v1558 = vrot.slane %v1544, %v1557
    %v1559 = vcombine.low %v1494, %v1510
    %v1560 = vcombine.high %v1494, %v1510
    %v1562 = vunpack.c.l.s4 1934713408
    %v1563 = vunpack.c.0.s8 %v1562
    %v1564 = vlaneseq
    %v1565 = vshrl.u32 %v1564, 7
    %v1566 = vsub.s32 %v1563, %v1565
    %v1567 = vrot.slane %v1559, %v1566
    %v1569 = vunpack.c.l.s4 1934713408
    %v1570 = vunpack.c.0.s8 %v1569
    %v1571 = vlaneseq
    %v1572 = vshrl.u32 %v1571, 7
    %v1573 = vsub.s32 %v1570, %v1572
    %v1574 = vrot.slane %v1560, %v1573
    %v1575 = vcombine.low %v1519, %v1535
    %v1576 = vcombine.high %v1519, %v1535
    %v1578 = vunpack.c.l.s4 1934713408
    %v1579 = vunpack.c.0.s8 %v1578
    %v1580 = vlaneseq
    %v1581 = vshrl.u32 %v1580, 7
    %v1582 = vsub.s32 %v1579, %v1581
    %v1583 = vrot.slane %v1575, %v1582
    %v1585 = vunpack.c.l.s4 1934713408
    %v1586 = vunpack.c.0.s8 %v1585
    %v1587 = vlaneseq
    %v1588 = vshrl.u32 %v1587, 7
    %v1589 = vsub.s32 %v1586, %v1588
    %v1590 = vrot.slane %v1576, %v1589
    %v1591 = vcombine.low %v1526, %v1542
    %v1592 = vcombine.high %v1526, %v1542
    %v1594 = vunpack.c.l.s4 1934713408
    %v1595 = vunpack.c.0.s8 %v1594
    %v1596 = vlaneseq
    %v1597 = vshrl.u32 %v1596, 7
    %v1598 = vsub.s32 %v1595, %v1597
    %v1599 = vrot.slane %v1591, %v1598
    %v1601 = vunpack.c.l.s4 1934713408
    %v1602 = vunpack.c.0.s8 %v1601
    %v1603 = vlaneseq
    %v1604 = vshrl.u32 %v1603, 7
    %v1605 = vsub.s32 %v1602, %v1604
    %v1606 = vrot.slane %v1592, %v1605
    %v1607 = vcombine.low %v1551, %v1583
    %v1608 = vcombine.high %v1551, %v1583
    %v1609 = vcombine.low %v1558, %v1590
    %v1610 = vcombine.high %v1558, %v1590
    %v1611 = vcombine.low %v1567, %v1599
    %v1612 = vcombine.high %v1567, %v1599
    %v1613 = vcombine.low %v1574, %v1606
    %v1614 = vcombine.high %v1574, %v1606
    %v1615 = vcombine.low %v32, %v122
    %v1616 = vcombine.high %v32, %v122
    %v1618 = vunpack.c.l.s4 1983009808
    %v1619 = vunpack.c.0.s8 %v1618
    %v1620 = vlaneseq
    %v1621 = vshrl.u32 %v1620, 7
    %v1622 = vsub.s32 %v1619, %v1621
    %v1623 = vrot.slane %v1615, %v1622
    %v1625 = vunpack.c.l.s4 1983009808
    %v1626 = vunpack.c.0.s8 %v1625
    %v1627 = vlaneseq
    %v1628 = vshrl.u32 %v1627, 7
    %v1629 = vsub.s32 %v1626, %v1628
    %v1630 = vrot.slane %v1616, %v1629
    %v1631 = vcombine.low %v74, %v170
    %v1632 = vcombine.high %v74, %v170
    %v1634 = vunpack.c.l.s4 1983009808
    %v1635 = vunpack.c.0.s8 %v1634
    %v1636 = vlaneseq
    %v1637 = vshrl.u32 %v1636, 7
    %v1638 = vsub.s32 %v1635, %v1637
    %v1639 = vrot.slane %v1631, %v1638
    %v1641 = vunpack.c.l.s4 1983009808
    %v1642 = vunpack.c.0.s8 %v1641
    %v1643 = vlaneseq
    %v1644 = vshrl.u32 %v1643, 7
    %v1645 = vsub.s32 %v1642, %v1644
    %v1646 = vrot.slane %v1632, %v1645
    %v1647 = vcombine.low %v218, %v314
    %v1648 = vcombine.high %v218, %v314
    %v1650 = vunpack.c.l.s4 1983009808
    %v1651 = vunpack.c.0.s8 %v1650
    %v1652 = vlaneseq
    %v1653 = vshrl.u32 %v1652, 7
    %v1654 = vsub.s32 %v1651, %v1653
    %v1655 = vrot.slane %v1647, %v1654
    %v1657 = vunpack.c.l.s4 1983009808
    %v1658 = vunpack.c.0.s8 %v1657
    %v1659 = vlaneseq
    %v1660 = vshrl.u32 %v1659, 7
    %v1661 = vsub.s32 %v1658, %v1660
    %v1662 = vrot.slane %v1648, %v1661
    %v1663 = vcombine.low %v266, %v362
    %v1664 = vcombine.high %v266, %v362
    %v1666 = vunpack.c.l.s4 1983009808
    %v1667 = vunpack.c.0.s8 %v1666
    %v1668 = vlaneseq
    %v1669 = vshrl.u32 %v1668, 7
    %v1670 = vsub.s32 %v1667, %v1669
    %v1671 = vrot.slane %v1663, %v1670
    %v1673 = vunpack.c.l.s4 1983009808
    %v1674 = vunpack.c.0.s8 %v1673
    %v1675 = vlaneseq
    %v1676 = vshrl.u32 %v1675, 7
    %v1677 = vsub.s32 %v1674, %v1676
    %v1678 = vrot.slane %v1664, %v1677
    %v1679 = vcombine.low %v1623, %v1639
    %v1680 = vcombine.high %v1623, %v1639
    %v1682 = vunpack.c.l.s4 1934713408
    %v1683 = vunpack.c.0.s8 %v1682
    %v1684 = vlaneseq
    %v1685 = vshrl.u32 %v1684, 7
    %v1686 = vsub.s32 %v1683, %v1685
    %v1687 = vrot.slane %v1679, %v1686
    %v1689 = vunpack.c.l.s4 1934713408
    %v1690 = vunpack.c.0.s8 %v1689
    %v1691 = vlaneseq
    %v1692 = vshrl.u32 %v1691, 7
    %v1693 = vsub.s32 %v1690, %v1692
    %v1694 = vrot.slane %v1680, %v1693
    %v1695 = vcombine.low %v1630, %v1646
    %v1696 = vcombine.high %v1630, %v1646
    %v1698 = vunpack.c.l.s4 1934713408
    %v1699 = vunpack.c.0.s8 %v1698
    %v1700 = vlaneseq
    %v1701 = vshrl.u32 %v1700, 7
    %v1702 = vsub.s32 %v1699, %v1701
    %v1703 = vrot.slane %v1695, %v1702
    %v1705 = vunpack.c.l.s4 1934713408
    %v1706 = vunpack.c.0.s8 %v1705
    %v1707 = vlaneseq
    %v1708 = vshrl.u32 %v1707, 7
    %v1709 = vsub.s32 %v1706, %v1708
    %v1710 = vrot.slane %v1696, %v1709
    %v1711 = vcombine.low %v1655, %v1671
    %v1712 = vcombine.high %v1655, %v1671
    %v1714 = vunpack.c.l.s4 1934713408
    %v1715 = vunpack.c.0.s8 %v1714
    %v1716 = vlaneseq
    %v1717 = vshrl.u32 %v1716, 7
    %v1718 = vsub.s32 %v1715, %v1717
    %v1719 = vrot.slane %v1711, %v1718
    %v1721 = vunpack.c.l.s4 1934713408
    %v1722 = vunpack.c.0.s8 %v1721
    %v1723 = vlaneseq
    %v1724 = vshrl.u32 %v1723, 7
    %v1725 = vsub.s32 %v1722, %v1724
    %v1726 = vrot.slane %v1712, %v1725
    %v1727 = vcombine.low %v1662, %v1678
    %v1728 = vcombine.high %v1662, %v1678
    %v1730 = vunpack.c.l.s4 1934713408
    %v1731 = vunpack.c.0.s8 %v1730
    %v1732 = vlaneseq
    %v1733 = vshrl.u32 %v1732, 7
    %v1734 = vsub.s32 %v1731, %v1733
    %v1735 = vrot.slane %v1727, %v1734
    %v1737 = vunpack.c.l.s4 1934713408
    %v1738 = vunpack.c.0.s8 %v1737
    %v1739 = vlaneseq
    %v1740 = vshrl.u32 %v1739, 7
    %v1741 = vsub.s32 %v1738, %v1740
    %v1742 = vrot.slane %v1728, %v1741
    %v1743 = vcombine.low %v1687, %v1719
    %v1744 = vcombine.high %v1687, %v1719
    %v1745 = vcombine.low %v1694, %v1726
    %v1746 = vcombine.high %v1694, %v1726
    %v1747 = vcombine.low %v1703, %v1735
    %v1748 = vcombine.high %v1703, %v1735
    %v1749 = vcombine.low %v1710, %v1742
    %v1750 = vcombine.high %v1710, %v1742
    %v1751 = vcombine.low %v33, %v124
    %v1752 = vcombine.high %v33, %v124
    %v1754 = vunpack.c.l.s4 1983009808
    %v1755 = vunpack.c.0.s8 %v1754
    %v1756 = vlaneseq
    %v1757 = vshrl.u32 %v1756, 7
    %v1758 = vsub.s32 %v1755, %v1757
    %v1759 = vrot.slane %v1751, %v1758
    %v1761 = vunpack.c.l.s4 1983009808
    %v1762 = vunpack.c.0.s8 %v1761
    %v1763 = vlaneseq
    %v1764 = vshrl.u32 %v1763, 7
    %v1765 = vsub.s32 %v1762, %v1764
    %v1766 = vrot.slane %v1752, %v1765
    %v1767 = vcombine.low %v76, %v172
    %v1768 = vcombine.high %v76, %v172
    %v1770 = vunpack.c.l.s4 1983009808
    %v1771 = vunpack.c.0.s8 %v1770
    %v1772 = vlaneseq
    %v1773 = vshrl.u32 %v1772, 7
    %v1774 = vsub.s32 %v1771, %v1773
    %v1775 = vrot.slane %v1767, %v1774
    %v1777 = vunpack.c.l.s4 1983009808
    %v1778 = vunpack.c.0.s8 %v1777
    %v1779 = vlaneseq
    %v1780 = vshrl.u32 %v1779, 7
    %v1781 = vsub.s32 %v1778, %v1780
    %v1782 = vrot.slane %v1768, %v1781
    %v1783 = vcombine.low %v220, %v316
    %v1784 = vcombine.high %v220, %v316
    %v1786 = vunpack.c.l.s4 1983009808
    %v1787 = vunpack.c.0.s8 %v1786
    %v1788 = vlaneseq
    %v1789 = vshrl.u32 %v1788, 7
    %v1790 = vsub.s32 %v1787, %v1789
    %v1791 = vrot.slane %v1783, %v1790
    %v1793 = vunpack.c.l.s4 1983009808
    %v1794 = vunpack.c.0.s8 %v1793
    %v1795 = vlaneseq
    %v1796 = vshrl.u32 %v1795, 7
    %v1797 = vsub.s32 %v1794, %v1796
    %v1798 = vrot.slane %v1784, %v1797
    %v1799 = vcombine.low %v268, %v364
    %v1800 = vcombine.high %v268, %v364
    %v1802 = vunpack.c.l.s4 1983009808
    %v1803 = vunpack.c.0.s8 %v1802
    %v1804 = vlaneseq
    %v1805 = vshrl.u32 %v1804, 7
    %v1806 = vsub.s32 %v1803, %v1805
    %v1807 = vrot.slane %v1799, %v1806
    %v1809 = vunpack.c.l.s4 1983009808
    %v1810 = vunpack.c.0.s8 %v1809
    %v1811 = vlaneseq
    %v1812 = vshrl.u32 %v1811, 7
    %v1813 = vsub.s32 %v1810, %v1812
    %v1814 = vrot.slane %v1800, %v1813
    %v1815 = vcombine.low %v1759, %v1775
    %v1816 = vcombine.high %v1759, %v1775
    %v1818 = vunpack.c.l.s4 1934713408
    %v1819 = vunpack.c.0.s8 %v1818
    %v1820 = vlaneseq
    %v1821 = vshrl.u32 %v1820, 7
    %v1822 = vsub.s32 %v1819, %v1821
    %v1823 = vrot.slane %v1815, %v1822
    %v1825 = vunpack.c.l.s4 1934713408
    %v1826 = vunpack.c.0.s8 %v1825
    %v1827 = vlaneseq
    %v1828 = vshrl.u32 %v1827, 7
    %v1829 = vsub.s32 %v1826, %v1828
    %v1830 = vrot.slane %v1816, %v1829
    %v1831 = vcombine.low %v1766, %v1782
    %v1832 = vcombine.high %v1766, %v1782
    %v1834 = vunpack.c.l.s4 1934713408
    %v1835 = vunpack.c.0.s8 %v1834
    %v1836 = vlaneseq
    %v1837 = vshrl.u32 %v1836, 7
    %v1838 = vsub.s32 %v1835, %v1837
    %v1839 = vrot.slane %v1831, %v1838
    %v1841 = vunpack.c.l.s4 1934713408
    %v1842 = vunpack.c.0.s8 %v1841
    %v1843 = vlaneseq
    %v1844 = vshrl.u32 %v1843, 7
    %v1845 = vsub.s32 %v1842, %v1844
    %v1846 = vrot.slane %v1832, %v1845
    %v1847 = vcombine.low %v1791, %v1807
    %v1848 = vcombine.high %v1791, %v1807
    %v1850 = vunpack.c.l.s4 1934713408
    %v1851 = vunpack.c.0.s8 %v1850
    %v1852 = vlaneseq
    %v1853 = vshrl.u32 %v1852, 7
    %v1854 = vsub.s32 %v1851, %v1853
    %v1855 = vrot.slane %v1847, %v1854
    %v1857 = vunpack.c.l.s4 1934713408
    %v1858 = vunpack.c.0.s8 %v1857
    %v1859 = vlaneseq
    %v1860 = vshrl.u32 %v1859, 7
    %v1861 = vsub.s32 %v1858, %v1860
    %v1862 = vrot.slane %v1848, %v1861
    %v1863 = vcombine.low %v1798, %v1814
    %v1864 = vcombine.high %v1798, %v1814
    %v1866 = vunpack.c.l.s4 1934713408
    %v1867 = vunpack.c.0.s8 %v1866
    %v1868 = vlaneseq
    %v1869 = vshrl.u32 %v1868, 7
    %v1870 = vsub.s32 %v1867, %v1869
    %v1871 = vrot.slane %v1863, %v1870
    %v1873 = vunpack.c.l.s4 1934713408
    %v1874 = vunpack.c.0.s8 %v1873
    %v1875 = vlaneseq
    %v1876 = vshrl.u32 %v1875, 7
    %v1877 = vsub.s32 %v1874, %v1876
    %v1878 = vrot.slane %v1864, %v1877
    %v1879 = vcombine.low %v1823, %v1855
    %v1880 = vcombine.high %v1823, %v1855
    %v1881 = vcombine.low %v1830, %v1862
    %v1882 = vcombine.high %v1830, %v1862
    %v1883 = vcombine.low %v1839, %v1871
    %v1884 = vcombine.high %v1839, %v1871
    %v1885 = vcombine.low %v1846, %v1878
    %v1886 = vcombine.high %v1846, %v1878
    %v1887 = vcombine.low %v34, %v126
    %v1888 = vcombine.high %v34, %v126
    %v1890 = vunpack.c.l.s4 1983009808
    %v1891 = vunpack.c.0.s8 %v1890
    %v1892 = vlaneseq
    %v1893 = vshrl.u32 %v1892, 7
    %v1894 = vsub.s32 %v1891, %v1893
    %v1895 = vrot.slane %v1887, %v1894
    %v1897 = vunpack.c.l.s4 1983009808
    %v1898 = vunpack.c.0.s8 %v1897
    %v1899 = vlaneseq
    %v1900 = vshrl.u32 %v1899, 7
    %v1901 = vsub.s32 %v1898, %v1900
    %v1902 = vrot.slane %v1888, %v1901
    %v1903 = vcombine.low %v78, %v174
    %v1904 = vcombine.high %v78, %v174
    %v1906 = vunpack.c.l.s4 1983009808
    %v1907 = vunpack.c.0.s8 %v1906
    %v1908 = vlaneseq
    %v1909 = vshrl.u32 %v1908, 7
    %v1910 = vsub.s32 %v1907, %v1909
    %v1911 = vrot.slane %v1903, %v1910
    %v1913 = vunpack.c.l.s4 1983009808
    %v1914 = vunpack.c.0.s8 %v1913
    %v1915 = vlaneseq
    %v1916 = vshrl.u32 %v1915, 7
    %v1917 = vsub.s32 %v1914, %v1916
    %v1918 = vrot.slane %v1904, %v1917
    %v1919 = vcombine.low %v222, %v318
    %v1920 = vcombine.high %v222, %v318
    %v1922 = vunpack.c.l.s4 1983009808
    %v1923 = vunpack.c.0.s8 %v1922
    %v1924 = vlaneseq
    %v1925 = vshrl.u32 %v1924, 7
    %v1926 = vsub.s32 %v1923, %v1925
    %v1927 = vrot.slane %v1919, %v1926
    %v1929 = vunpack.c.l.s4 1983009808
    %v1930 = vunpack.c.0.s8 %v1929
    %v1931 = vlaneseq
    %v1932 = vshrl.u32 %v1931, 7
    %v1933 = vsub.s32 %v1930, %v1932
    %v1934 = vrot.slane %v1920, %v1933
    %v1935 = vcombine.low %v270, %v366
    %v1936 = vcombine.high %v270, %v366
    %v1938 = vunpack.c.l.s4 1983009808
    %v1939 = vunpack.c.0.s8 %v1938
    %v1940 = vlaneseq
    %v1941 = vshrl.u32 %v1940, 7
    %v1942 = vsub.s32 %v1939, %v1941
    %v1943 = vrot.slane %v1935, %v1942
    %v1945 = vunpack.c.l.s4 1983009808
    %v1946 = vunpack.c.0.s8 %v1945
    %v1947 = vlaneseq
    %v1948 = vshrl.u32 %v1947, 7
    %v1949 = vsub.s32 %v1946, %v1948
    %v1950 = vrot.slane %v1936, %v1949
    %v1951 = vcombine.low %v1895, %v1911
    %v1952 = vcombine.high %v1895, %v1911
    %v1954 = vunpack.c.l.s4 1934713408
    %v1955 = vunpack.c.0.s8 %v1954
    %v1956 = vlaneseq
    %v1957 = vshrl.u32 %v1956, 7
    %v1958 = vsub.s32 %v1955, %v1957
    %v1959 = vrot.slane %v1951, %v1958
    %v1961 = vunpack.c.l.s4 1934713408
    %v1962 = vunpack.c.0.s8 %v1961
    %v1963 = vlaneseq
    %v1964 = vshrl.u32 %v1963, 7
    %v1965 = vsub.s32 %v1962, %v1964
    %v1966 = vrot.slane %v1952, %v1965
    %v1967 = vcombine.low %v1902, %v1918
    %v1968 = vcombine.high %v1902, %v1918
    %v1970 = vunpack.c.l.s4 1934713408
    %v1971 = vunpack.c.0.s8 %v1970
    %v1972 = vlaneseq
    %v1973 = vshrl.u32 %v1972, 7
    %v1974 = vsub.s32 %v1971, %v1973
    %v1975 = vrot.slane %v1967, %v1974
    %v1977 = vunpack.c.l.s4 1934713408
    %v1978 = vunpack.c.0.s8 %v1977
    %v1979 = vlaneseq
    %v1980 = vshrl.u32 %v1979, 7
    %v1981 = vsub.s32 %v1978, %v1980
    %v1982 = vrot.slane %v1968, %v1981
    %v1983 = vcombine.low %v1927, %v1943
    %v1984 = vcombine.high %v1927, %v1943
    %v1986 = vunpack.c.l.s4 1934713408
    %v1987 = vunpack.c.0.s8 %v1986
    %v1988 = vlaneseq
    %v1989 = vshrl.u32 %v1988, 7
    %v1990 = vsub.s32 %v1987, %v1989
    %v1991 = vrot.slane %v1983, %v1990
    %v1993 = vunpack.c.l.s4 1934713408
    %v1994 = vunpack.c.0.s8 %v1993
    %v1995 = vlaneseq
    %v1996 = vshrl.u32 %v1995, 7
    %v1997 = vsub.s32 %v1994, %v1996
    %v1998 = vrot.slane %v1984, %v1997
    %v1999 = vcombine.low %v1934, %v1950
    %v2000 = vcombine.high %v1934, %v1950
    %v2002 = vunpack.c.l.s4 1934713408
    %v2003 = vunpack.c.0.s8 %v2002
    %v2004 = vlaneseq
    %v2005 = vshrl.u32 %v2004, 7
    %v2006 = vsub.s32 %v2003, %v2005
    %v2007 = vrot.slane %v1999, %v2006
    %v2009 = vunpack.c.l.s4 1934713408
    %v2010 = vunpack.c.0.s8 %v2009
    %v2011 = vlaneseq
    %v2012 = vshrl.u32 %v2011, 7
    %v2013 = vsub.s32 %v2010, %v2012
    %v2014 = vrot.slane %v2000, %v2013
    %v2015 = vcombine.low %v1959, %v1991
    %v2016 = vcombine.high %v1959, %v1991
    %v2017 = vcombine.low %v1966, %v1998
    %v2018 = vcombine.high %v1966, %v1998
    %v2019 = vcombine.low %v1975, %v2007
    %v2020 = vcombine.high %v1975, %v2007
    %v2021 = vcombine.low %v1982, %v2014
    %v2022 = vcombine.high %v1982, %v2014
    %v2023 = vcombine.low %v35, %v128
    %v2024 = vcombine.high %v35, %v128
    %v2026 = vunpack.c.l.s4 1983009808
    %v2027 = vunpack.c.0.s8 %v2026
    %v2028 = vlaneseq
    %v2029 = vshrl.u32 %v2028, 7
    %v2030 = vsub.s32 %v2027, %v2029
    %v2031 = vrot.slane %v2023, %v2030
    %v2033 = vunpack.c.l.s4 1983009808
    %v2034 = vunpack.c.0.s8 %v2033
    %v2035 = vlaneseq
    %v2036 = vshrl.u32 %v2035, 7
    %v2037 = vsub.s32 %v2034, %v2036
    %v2038 = vrot.slane %v2024, %v2037
    %v2039 = vcombine.low %v80, %v176
    %v2040 = vcombine.high %v80, %v176
    %v2042 = vunpack.c.l.s4 1983009808
    %v2043 = vunpack.c.0.s8 %v2042
    %v2044 = vlaneseq
    %v2045 = vshrl.u32 %v2044, 7
    %v2046 = vsub.s32 %v2043, %v2045
    %v2047 = vrot.slane %v2039, %v2046
    %v2049 = vunpack.c.l.s4 1983009808
    %v2050 = vunpack.c.0.s8 %v2049
    %v2051 = vlaneseq
    %v2052 = vshrl.u32 %v2051, 7
    %v2053 = vsub.s32 %v2050, %v2052
    %v2054 = vrot.slane %v2040, %v2053
    %v2055 = vcombine.low %v224, %v320
    %v2056 = vcombine.high %v224, %v320
    %v2058 = vunpack.c.l.s4 1983009808
    %v2059 = vunpack.c.0.s8 %v2058
    %v2060 = vlaneseq
    %v2061 = vshrl.u32 %v2060, 7
    %v2062 = vsub.s32 %v2059, %v2061
    %v2063 = vrot.slane %v2055, %v2062
    %v2065 = vunpack.c.l.s4 1983009808
    %v2066 = vunpack.c.0.s8 %v2065
    %v2067 = vlaneseq
    %v2068 = vshrl.u32 %v2067, 7
    %v2069 = vsub.s32 %v2066, %v2068
    %v2070 = vrot.slane %v2056, %v2069
    %v2071 = vcombine.low %v272, %v368
    %v2072 = vcombine.high %v272, %v368
    %v2074 = vunpack.c.l.s4 1983009808
    %v2075 = vunpack.c.0.s8 %v2074
    %v2076 = vlaneseq
    %v2077 = vshrl.u32 %v2076, 7
    %v2078 = vsub.s32 %v2075, %v2077
    %v2079 = vrot.slane %v2071, %v2078
    %v2081 = vunpack.c.l.s4 1983009808
    %v2082 = vunpack.c.0.s8 %v2081
    %v2083 = vlaneseq
    %v2084 = vshrl.u32 %v2083, 7
    %v2085 = vsub.s32 %v2082, %v2084
    %v2086 = vrot.slane %v2072, %v2085
    %v2087 = vcombine.low %v2031, %v2047
    %v2088 = vcombine.high %v2031, %v2047
    %v2090 = vunpack.c.l.s4 1934713408
    %v2091 = vunpack.c.0.s8 %v2090
    %v2092 = vlaneseq
    %v2093 = vshrl.u32 %v2092, 7
    %v2094 = vsub.s32 %v2091, %v2093
    %v2095 = vrot.slane %v2087, %v2094
    %v2097 = vunpack.c.l.s4 1934713408
    %v2098 = vunpack.c.0.s8 %v2097
    %v2099 = vlaneseq
    %v2100 = vshrl.u32 %v2099, 7
    %v2101 = vsub.s32 %v2098, %v2100
    %v2102 = vrot.slane %v2088, %v2101
    %v2103 = vcombine.low %v2038, %v2054
    %v2104 = vcombine.high %v2038, %v2054
    %v2106 = vunpack.c.l.s4 1934713408
    %v2107 = vunpack.c.0.s8 %v2106
    %v2108 = vlaneseq
    %v2109 = vshrl.u32 %v2108, 7
    %v2110 = vsub.s32 %v2107, %v2109
    %v2111 = vrot.slane %v2103, %v2110
    %v2113 = vunpack.c.l.s4 1934713408
    %v2114 = vunpack.c.0.s8 %v2113
    %v2115 = vlaneseq
    %v2116 = vshrl.u32 %v2115, 7
    %v2117 = vsub.s32 %v2114, %v2116
    %v2118 = vrot.slane %v2104, %v2117
    %v2119 = vcombine.low %v2063, %v2079
    %v2120 = vcombine.high %v2063, %v2079
    %v2122 = vunpack.c.l.s4 1934713408
    %v2123 = vunpack.c.0.s8 %v2122
    %v2124 = vlaneseq
    %v2125 = vshrl.u32 %v2124, 7
    %v2126 = vsub.s32 %v2123, %v2125
    %v2127 = vrot.slane %v2119, %v2126
    %v2129 = vunpack.c.l.s4 1934713408
    %v2130 = vunpack.c.0.s8 %v2129
    %v2131 = vlaneseq
    %v2132 = vshrl.u32 %v2131, 7
    %v2133 = vsub.s32 %v2130, %v2132
    %v2134 = vrot.slane %v2120, %v2133
    %v2135 = vcombine.low %v2070, %v2086
    %v2136 = vcombine.high %v2070, %v2086
    %v2138 = vunpack.c.l.s4 1934713408
    %v2139 = vunpack.c.0.s8 %v2138
    %v2140 = vlaneseq
    %v2141 = vshrl.u32 %v2140, 7
    %v2142 = vsub.s32 %v2139, %v2141
    %v2143 = vrot.slane %v2135, %v2142
    %v2145 = vunpack.c.l.s4 1934713408
    %v2146 = vunpack.c.0.s8 %v2145
    %v2147 = vlaneseq
    %v2148 = vshrl.u32 %v2147, 7
    %v2149 = vsub.s32 %v2146, %v2148
    %v2150 = vrot.slane %v2136, %v2149
    %v2151 = vcombine.low %v2095, %v2127
    %v2152 = vcombine.high %v2095, %v2127
    %v2153 = vcombine.low %v2102, %v2134
    %v2154 = vcombine.high %v2102, %v2134
    %v2155 = vcombine.low %v2111, %v2143
    %v2156 = vcombine.high %v2111, %v2143
    %v2157 = vcombine.low %v2118, %v2150
    %v2158 = vcombine.high %v2118, %v2150
    %v2159 = vcombine.low %v36, %v130
    %v2160 = vcombine.high %v36, %v130
    %v2162 = vunpack.c.l.s4 1983009808
    %v2163 = vunpack.c.0.s8 %v2162
    %v2164 = vlaneseq
    %v2165 = vshrl.u32 %v2164, 7
    %v2166 = vsub.s32 %v2163, %v2165
    %v2167 = vrot.slane %v2159, %v2166
    %v2169 = vunpack.c.l.s4 1983009808
    %v2170 = vunpack.c.0.s8 %v2169
    %v2171 = vlaneseq
    %v2172 = vshrl.u32 %v2171, 7
    %v2173 = vsub.s32 %v2170, %v2172
    %v2174 = vrot.slane %v2160, %v2173
    %v2175 = vcombine.low %v82, %v178
    %v2176 = vcombine.high %v82, %v178
    %v2178 = vunpack.c.l.s4 1983009808
    %v2179 = vunpack.c.0.s8 %v2178
    %v2180 = vlaneseq
    %v2181 = vshrl.u32 %v2180, 7
    %v2182 = vsub.s32 %v2179, %v2181
    %v2183 = vrot.slane %v2175, %v2182
    %v2185 = vunpack.c.l.s4 1983009808
    %v2186 = vunpack.c.0.s8 %v2185
    %v2187 = vlaneseq
    %v2188 = vshrl.u32 %v2187, 7
    %v2189 = vsub.s32 %v2186, %v2188
    %v2190 = vrot.slane %v2176, %v2189
    %v2191 = vcombine.low %v226, %v322
    %v2192 = vcombine.high %v226, %v322
    %v2194 = vunpack.c.l.s4 1983009808
    %v2195 = vunpack.c.0.s8 %v2194
    %v2196 = vlaneseq
    %v2197 = vshrl.u32 %v2196, 7
    %v2198 = vsub.s32 %v2195, %v2197
    %v2199 = vrot.slane %v2191, %v2198
    %v2201 = vunpack.c.l.s4 1983009808
    %v2202 = vunpack.c.0.s8 %v2201
    %v2203 = vlaneseq
    %v2204 = vshrl.u32 %v2203, 7
    %v2205 = vsub.s32 %v2202, %v2204
    %v2206 = vrot.slane %v2192, %v2205
    %v2207 = vcombine.low %v274, %v370
    %v2208 = vcombine.high %v274, %v370
    %v2210 = vunpack.c.l.s4 1983009808
    %v2211 = vunpack.c.0.s8 %v2210
    %v2212 = vlaneseq
    %v2213 = vshrl.u32 %v2212, 7
    %v2214 = vsub.s32 %v2211, %v2213
    %v2215 = vrot.slane %v2207, %v2214
    %v2217 = vunpack.c.l.s4 1983009808
    %v2218 = vunpack.c.0.s8 %v2217
    %v2219 = vlaneseq
    %v2220 = vshrl.u32 %v2219, 7
    %v2221 = vsub.s32 %v2218, %v2220
    %v2222 = vrot.slane %v2208, %v2221
    %v2223 = vcombine.low %v2167, %v2183
    %v2224 = vcombine.high %v2167, %v2183
    %v2226 = vunpack.c.l.s4 1934713408
    %v2227 = vunpack.c.0.s8 %v2226
    %v2228 = vlaneseq
    %v2229 = vshrl.u32 %v2228, 7
    %v2230 = vsub.s32 %v2227, %v2229
    %v2231 = vrot.slane %v2223, %v2230
    %v2233 = vunpack.c.l.s4 1934713408
    %v2234 = vunpack.c.0.s8 %v2233
    %v2235 = vlaneseq
    %v2236 = vshrl.u32 %v2235, 7
    %v2237 = vsub.s32 %v2234, %v2236
    %v2238 = vrot.slane %v2224, %v2237
    %v2239 = vcombine.low %v2174, %v2190
    %v2240 = vcombine.high %v2174, %v2190
    %v2242 = vunpack.c.l.s4 1934713408
    %v2243 = vunpack.c.0.s8 %v2242
    %v2244 = vlaneseq
    %v2245 = vshrl.u32 %v2244, 7
    %v2246 = vsub.s32 %v2243, %v2245
    %v2247 = vrot.slane %v2239, %v2246
    %v2249 = vunpack.c.l.s4 1934713408
    %v2250 = vunpack.c.0.s8 %v2249
    %v2251 = vlaneseq
    %v2252 = vshrl.u32 %v2251, 7
    %v2253 = vsub.s32 %v2250, %v2252
    %v2254 = vrot.slane %v2240, %v2253
    %v2255 = vcombine.low %v2199, %v2215
    %v2256 = vcombine.high %v2199, %v2215
    %v2258 = vunpack.c.l.s4 1934713408
    %v2259 = vunpack.c.0.s8 %v2258
    %v2260 = vlaneseq
    %v2261 = vshrl.u32 %v2260, 7
    %v2262 = vsub.s32 %v2259, %v2261
    %v2263 = vrot.slane %v2255, %v2262
    %v2265 = vunpack.c.l.s4 1934713408
    %v2266 = vunpack.c.0.s8 %v2265
    %v2267 = vlaneseq
    %v2268 = vshrl.u32 %v2267, 7
    %v2269 = vsub.s32 %v2266, %v2268
    %v2270 = vrot.slane %v2256, %v2269
    %v2271 = vcombine.low %v2206, %v2222
    %v2272 = vcombine.high %v2206, %v2222
    %v2274 = vunpack.c.l.s4 1934713408
    %v2275 = vunpack.c.0.s8 %v2274
    %v2276 = vlaneseq
    %v2277 = vshrl.u32 %v2276, 7
    %v2278 = vsub.s32 %v2275, %v2277
    %v2279 = vrot.slane %v2271, %v2278
    %v2281 = vunpack.c.l.s4 1934713408
    %v2282 = vunpack.c.0.s8 %v2281
    %v2283 = vlaneseq
    %v2284 = vshrl.u32 %v2283, 7
    %v2285 = vsub.s32 %v2282, %v2284
    %v2286 = vrot.slane %v2272, %v2285
    %v2287 = vcombine.low %v2231, %v2263
    %v2288 = vcombine.high %v2231, %v2263
    %v2289 = vcombine.low %v2238, %v2270
    %v2290 = vcombine.high %v2238, %v2270
    %v2291 = vcombine.low %v2247, %v2279
    %v2292 = vcombine.high %v2247, %v2279
    %v2293 = vcombine.low %v2254, %v2286
    %v2294 = vcombine.high %v2254, %v2286
    %v2295 = vcombine.low %v37, %v132
    %v2296 = vcombine.high %v37, %v132
    %v2298 = vunpack.c.l.s4 1983009808
    %v2299 = vunpack.c.0.s8 %v2298
    %v2300 = vlaneseq
    %v2301 = vshrl.u32 %v2300, 7
    %v2302 = vsub.s32 %v2299, %v2301
    %v2303 = vrot.slane %v2295, %v2302
    %v2305 = vunpack.c.l.s4 1983009808
    %v2306 = vunpack.c.0.s8 %v2305
    %v2307 = vlaneseq
    %v2308 = vshrl.u32 %v2307, 7
    %v2309 = vsub.s32 %v2306, %v2308
    %v2310 = vrot.slane %v2296, %v2309
    %v2311 = vcombine.low %v84, %v180
    %v2312 = vcombine.high %v84, %v180
    %v2314 = vunpack.c.l.s4 1983009808
    %v2315 = vunpack.c.0.s8 %v2314
    %v2316 = vlaneseq
    %v2317 = vshrl.u32 %v2316, 7
    %v2318 = vsub.s32 %v2315, %v2317
    %v2319 = vrot.slane %v2311, %v2318
    %v2321 = vunpack.c.l.s4 1983009808
    %v2322 = vunpack.c.0.s8 %v2321
    %v2323 = vlaneseq
    %v2324 = vshrl.u32 %v2323, 7
    %v2325 = vsub.s32 %v2322, %v2324
    %v2326 = vrot.slane %v2312, %v2325
    %v2327 = vcombine.low %v228, %v324
    %v2328 = vcombine.high %v228, %v324
    %v2330 = vunpack.c.l.s4 1983009808
    %v2331 = vunpack.c.0.s8 %v2330
    %v2332 = vlaneseq
    %v2333 = vshrl.u32 %v2332, 7
    %v2334 = vsub.s32 %v2331, %v2333
    %v2335 = vrot.slane %v2327, %v2334
    %v2337 = vunpack.c.l.s4 1983009808
    %v2338 = vunpack.c.0.s8 %v2337
    %v2339 = vlaneseq
    %v2340 = vshrl.u32 %v2339, 7
    %v2341 = vsub.s32 %v2338, %v2340
    %v2342 = vrot.slane %v2328, %v2341
    %v2343 = vcombine.low %v276, %v372
    %v2344 = vcombine.high %v276, %v372
    %v2346 = vunpack.c.l.s4 1983009808
    %v2347 = vunpack.c.0.s8 %v2346
    %v2348 = vlaneseq
    %v2349 = vshrl.u32 %v2348, 7
    %v2350 = vsub.s32 %v2347, %v2349
    %v2351 = vrot.slane %v2343, %v2350
    %v2353 = vunpack.c.l.s4 1983009808
    %v2354 = vunpack.c.0.s8 %v2353
    %v2355 = vlaneseq
    %v2356 = vshrl.u32 %v2355, 7
    %v2357 = vsub.s32 %v2354, %v2356
    %v2358 = vrot.slane %v2344, %v2357
    %v2359 = vcombine.low %v2303, %v2319
    %v2360 = vcombine.high %v2303, %v2319
    %v2362 = vunpack.c.l.s4 1934713408
    %v2363 = vunpack.c.0.s8 %v2362
    %v2364 = vlaneseq
    %v2365 = vshrl.u32 %v2364, 7
    %v2366 = vsub.s32 %v2363, %v2365
    %v2367 = vrot.slane %v2359, %v2366
    %v2369 = vunpack.c.l.s4 1934713408
    %v2370 = vunpack.c.0.s8 %v2369
    %v2371 = vlaneseq
    %v2372 = vshrl.u32 %v2371, 7
    %v2373 = vsub.s32 %v2370, %v2372
    %v2374 = vrot.slane %v2360, %v2373
    %v2375 = vcombine.low %v2310, %v2326
    %v2376 = vcombine.high %v2310, %v2326
    %v2378 = vunpack.c.l.s4 1934713408
    %v2379 = vunpack.c.0.s8 %v2378
    %v2380 = vlaneseq
    %v2381 = vshrl.u32 %v2380, 7
    %v2382 = vsub.s32 %v2379, %v2381
    %v2383 = vrot.slane %v2375, %v2382
    %v2385 = vunpack.c.l.s4 1934713408
    %v2386 = vunpack.c.0.s8 %v2385
    %v2387 = vlaneseq
    %v2388 = vshrl.u32 %v2387, 7
    %v2389 = vsub.s32 %v2386, %v2388
    %v2390 = vrot.slane %v2376, %v2389
    %v2391 = vcombine.low %v2335, %v2351
    %v2392 = vcombine.high %v2335, %v2351
    %v2394 = vunpack.c.l.s4 1934713408
    %v2395 = vunpack.c.0.s8 %v2394
    %v2396 = vlaneseq
    %v2397 = vshrl.u32 %v2396, 7
    %v2398 = vsub.s32 %v2395, %v2397
    %v2399 = vrot.slane %v2391, %v2398
    %v2401 = vunpack.c.l.s4 1934713408
    %v2402 = vunpack.c.0.s8 %v2401
    %v2403 = vlaneseq
    %v2404 = vshrl.u32 %v2403, 7
    %v2405 = vsub.s32 %v2402, %v2404
    %v2406 = vrot.slane %v2392, %v2405
    %v2407 = vcombine.low %v2342, %v2358
    %v2408 = vcombine.high %v2342, %v2358
    %v2410 = vunpack.c.l.s4 1934713408
    %v2411 = vunpack.c.0.s8 %v2410
    %v2412 = vlaneseq
    %v2413 = vshrl.u32 %v2412, 7
    %v2414 = vsub.s32 %v2411, %v2413
    %v2415 = vrot.slane %v2407, %v2414
    %v2417 = vunpack.c.l.s4 1934713408
    %v2418 = vunpack.c.0.s8 %v2417
    %v2419 = vlaneseq
    %v2420 = vshrl.u32 %v2419, 7
    %v2421 = vsub.s32 %v2418, %v2420
    %v2422 = vrot.slane %v2408, %v2421
    %v2423 = vcombine.low %v2367, %v2399
    %v2424 = vcombine.high %v2367, %v2399
    %v2425 = vcombine.low %v2374, %v2406
    %v2426 = vcombine.high %v2374, %v2406
    %v2427 = vcombine.low %v2383, %v2415
    %v2428 = vcombine.high %v2383, %v2415
    %v2429 = vcombine.low %v2390, %v2422
    %v2430 = vcombine.high %v2390, %v2422
    %v2431 = vcombine.low %v38, %v134
    %v2432 = vcombine.high %v38, %v134
    %v2434 = vunpack.c.l.s4 1983009808
    %v2435 = vunpack.c.0.s8 %v2434
    %v2436 = vlaneseq
    %v2437 = vshrl.u32 %v2436, 7
    %v2438 = vsub.s32 %v2435, %v2437
    %v2439 = vrot.slane %v2431, %v2438
    %v2441 = vunpack.c.l.s4 1983009808
    %v2442 = vunpack.c.0.s8 %v2441
    %v2443 = vlaneseq
    %v2444 = vshrl.u32 %v2443, 7
    %v2445 = vsub.s32 %v2442, %v2444
    %v2446 = vrot.slane %v2432, %v2445
    %v2447 = vcombine.low %v86, %v182
    %v2448 = vcombine.high %v86, %v182
    %v2450 = vunpack.c.l.s4 1983009808
    %v2451 = vunpack.c.0.s8 %v2450
    %v2452 = vlaneseq
    %v2453 = vshrl.u32 %v2452, 7
    %v2454 = vsub.s32 %v2451, %v2453
    %v2455 = vrot.slane %v2447, %v2454
    %v2457 = vunpack.c.l.s4 1983009808
    %v2458 = vunpack.c.0.s8 %v2457
    %v2459 = vlaneseq
    %v2460 = vshrl.u32 %v2459, 7
    %v2461 = vsub.s32 %v2458, %v2460
    %v2462 = vrot.slane %v2448, %v2461
    %v2463 = vcombine.low %v230, %v326
    %v2464 = vcombine.high %v230, %v326
    %v2466 = vunpack.c.l.s4 1983009808
    %v2467 = vunpack.c.0.s8 %v2466
    %v2468 = vlaneseq
    %v2469 = vshrl.u32 %v2468, 7
    %v2470 = vsub.s32 %v2467, %v2469
    %v2471 = vrot.slane %v2463, %v2470
    %v2473 = vunpack.c.l.s4 1983009808
    %v2474 = vunpack.c.0.s8 %v2473
    %v2475 = vlaneseq
    %v2476 = vshrl.u32 %v2475, 7
    %v2477 = vsub.s32 %v2474, %v2476
    %v2478 = vrot.slane %v2464, %v2477
    %v2479 = vcombine.low %v278, %v374
    %v2480 = vcombine.high %v278, %v374
    %v2482 = vunpack.c.l.s4 1983009808
    %v2483 = vunpack.c.0.s8 %v2482
    %v2484 = vlaneseq
    %v2485 = vshrl.u32 %v2484, 7
    %v2486 = vsub.s32 %v2483, %v2485
    %v2487 = vrot.slane %v2479, %v2486
    %v2489 = vunpack.c.l.s4 1983009808
    %v2490 = vunpack.c.0.s8 %v2489
    %v2491 = vlaneseq
    %v2492 = vshrl.u32 %v2491, 7
    %v2493 = vsub.s32 %v2490, %v2492
    %v2494 = vrot.slane %v2480, %v2493
    %v2495 = vcombine.low %v2439, %v2455
    %v2496 = vcombine.high %v2439, %v2455
    %v2498 = vunpack.c.l.s4 1934713408
    %v2499 = vunpack.c.0.s8 %v2498
    %v2500 = vlaneseq
    %v2501 = vshrl.u32 %v2500, 7
    %v2502 = vsub.s32 %v2499, %v2501
    %v2503 = vrot.slane %v2495, %v2502
    %v2505 = vunpack.c.l.s4 1934713408
    %v2506 = vunpack.c.0.s8 %v2505
    %v2507 = vlaneseq
    %v2508 = vshrl.u32 %v2507, 7
    %v2509 = vsub.s32 %v2506, %v2508
    %v2510 = vrot.slane %v2496, %v2509
    %v2511 = vcombine.low %v2446, %v2462
    %v2512 = vcombine.high %v2446, %v2462
    %v2514 = vunpack.c.l.s4 1934713408
    %v2515 = vunpack.c.0.s8 %v2514
    %v2516 = vlaneseq
    %v2517 = vshrl.u32 %v2516, 7
    %v2518 = vsub.s32 %v2515, %v2517
    %v2519 = vrot.slane %v2511, %v2518
    %v2521 = vunpack.c.l.s4 1934713408
    %v2522 = vunpack.c.0.s8 %v2521
    %v2523 = vlaneseq
    %v2524 = vshrl.u32 %v2523, 7
    %v2525 = vsub.s32 %v2522, %v2524
    %v2526 = vrot.slane %v2512, %v2525
    %v2527 = vcombine.low %v2471, %v2487
    %v2528 = vcombine.high %v2471, %v2487
    %v2530 = vunpack.c.l.s4 1934713408
    %v2531 = vunpack.c.0.s8 %v2530
    %v2532 = vlaneseq
    %v2533 = vshrl.u32 %v2532, 7
    %v2534 = vsub.s32 %v2531, %v2533
    %v2535 = vrot.slane %v2527, %v2534
    %v2537 = vunpack.c.l.s4 1934713408
    %v2538 = vunpack.c.0.s8 %v2537
    %v2539 = vlaneseq
    %v2540 = vshrl.u32 %v2539, 7
    %v2541 = vsub.s32 %v2538, %v2540
    %v2542 = vrot.slane %v2528, %v2541
    %v2543 = vcombine.low %v2478, %v2494
    %v2544 = vcombine.high %v2478, %v2494
    %v2546 = vunpack.c.l.s4 1934713408
    %v2547 = vunpack.c.0.s8 %v2546
    %v2548 = vlaneseq
    %v2549 = vshrl.u32 %v2548, 7
    %v2550 = vsub.s32 %v2547, %v2549
    %v2551 = vrot.slane %v2543, %v2550
    %v2553 = vunpack.c.l.s4 1934713408
    %v2554 = vunpack.c.0.s8 %v2553
    %v2555 = vlaneseq
    %v2556 = vshrl.u32 %v2555, 7
    %v2557 = vsub.s32 %v2554, %v2556
    %v2558 = vrot.slane %v2544, %v2557
    %v2559 = vcombine.low %v2503, %v2535
    %v2560 = vcombine.high %v2503, %v2535
    %v2561 = vcombine.low %v2510, %v2542
    %v2562 = vcombine.high %v2510, %v2542
    %v2563 = vcombine.low %v2519, %v2551
    %v2564 = vcombine.high %v2519, %v2551
    %v2565 = vcombine.low %v2526, %v2558
    %v2566 = vcombine.high %v2526, %v2558
    %2567 = vxpose.xlu0.b32.start [1/16] %v519, 128
    %2568 = vxpose.xlu0.b32.cont [2/16] 0.0, 128
    %2569 = vxpose.xlu0.b32.cont [3/16] 0.0, 128
    %2570 = vxpose.xlu0.b32.cont [4/16] 0.0, 128
    %2571 = vxpose.xlu0.b32.cont [5/16] 0.0, 128
    %2572 = vxpose.xlu0.b32.cont [6/16] 0.0, 128
    %2573 = vxpose.xlu0.b32.cont [7/16] 0.0, 128
    %2574 = vxpose.xlu0.b32.cont [8/16] 0.0, 128
    %2575 = vxpose.xlu0.b32.cont [9/16] 0.0, 128
    %2576 = vxpose.xlu0.b32.cont [10/16] 0.0, 128
    %2577 = vxpose.xlu0.b32.cont [11/16] 0.0, 128
    %2578 = vxpose.xlu0.b32.cont [12/16] 0.0, 128
    %2579 = vxpose.xlu0.b32.cont [13/16] 0.0, 128
    %2580 = vxpose.xlu0.b32.cont [14/16] 0.0, 128
    %2581 = vxpose.xlu0.b32.cont [15/16] 0.0, 128
    %2582 = vxpose.xlu0.b32.end [16/16] 0.0, 128
    %v2583 = vpop.trf.xlu0
    %v2584 = vpop.trf.xlu0
    %v2585 = vpop.trf.xlu0
    %v2586 = vpop.trf.xlu0
    %v2587 = vpop.trf.xlu0
    %v2588 = vpop.trf.xlu0
    %v2589 = vpop.trf.xlu0
    %v2590 = vpop.trf.xlu0
    %v2591 = vpop.trf.xlu0
    %v2592 = vpop.trf.xlu0
    %v2593 = vpop.trf.xlu0
    %v2594 = vpop.trf.xlu0
    %v2595 = vpop.trf.xlu0
    %v2596 = vpop.trf.xlu0
    %v2597 = vpop.trf.xlu0
    %v2598 = vpop.trf.xlu0
    %2599 = vxpose.xlu0.b32.start [1/16] %v520, 128
    %2600 = vxpose.xlu0.b32.cont [2/16] 0.0, 128
    %2601 = vxpose.xlu0.b32.cont [3/16] 0.0, 128
    %2602 = vxpose.xlu0.b32.cont [4/16] 0.0, 128
    %2603 = vxpose.xlu0.b32.cont [5/16] 0.0, 128
    %2604 = vxpose.xlu0.b32.cont [6/16] 0.0, 128
    %2605 = vxpose.xlu0.b32.cont [7/16] 0.0, 128
    %2606 = vxpose.xlu0.b32.cont [8/16] 0.0, 128
    %2607 = vxpose.xlu0.b32.cont [9/16] 0.0, 128
    %2608 = vxpose.xlu0.b32.cont [10/16] 0.0, 128
    %2609 = vxpose.xlu0.b32.cont [11/16] 0.0, 128
    %2610 = vxpose.xlu0.b32.cont [12/16] 0.0, 128
    %2611 = vxpose.xlu0.b32.cont [13/16] 0.0, 128
    %2612 = vxpose.xlu0.b32.cont [14/16] 0.0, 128
    %2613 = vxpose.xlu0.b32.cont [15/16] 0.0, 128
    %2614 = vxpose.xlu0.b32.end [16/16] 0.0, 128
    %v2615 = vpop.trf.xlu0
    %v2616 = vpop.trf.xlu0
    %v2617 = vpop.trf.xlu0
    %v2618 = vpop.trf.xlu0
    %v2619 = vpop.trf.xlu0
    %v2620 = vpop.trf.xlu0
    %v2621 = vpop.trf.xlu0
    %v2622 = vpop.trf.xlu0
    %v2623 = vpop.trf.xlu0
    %v2624 = vpop.trf.xlu0
    %v2625 = vpop.trf.xlu0
    %v2626 = vpop.trf.xlu0
    %v2627 = vpop.trf.xlu0
    %v2628 = vpop.trf.xlu0
    %v2629 = vpop.trf.xlu0
    %v2630 = vpop.trf.xlu0
    %2631 = vxpose.xlu0.b32.start [1/16] %v521, 128
    %2632 = vxpose.xlu0.b32.cont [2/16] 0.0, 128
    %2633 = vxpose.xlu0.b32.cont [3/16] 0.0, 128
    %2634 = vxpose.xlu0.b32.cont [4/16] 0.0, 128
    %2635 = vxpose.xlu0.b32.cont [5/16] 0.0, 128
    %2636 = vxpose.xlu0.b32.cont [6/16] 0.0, 128
    %2637 = vxpose.xlu0.b32.cont [7/16] 0.0, 128
    %2638 = vxpose.xlu0.b32.cont [8/16] 0.0, 128
    %2639 = vxpose.xlu0.b32.cont [9/16] 0.0, 128
    %2640 = vxpose.xlu0.b32.cont [10/16] 0.0, 128
    %2641 = vxpose.xlu0.b32.cont [11/16] 0.0, 128
    %2642 = vxpose.xlu0.b32.cont [12/16] 0.0, 128
    %2643 = vxpose.xlu0.b32.cont [13/16] 0.0, 128
    %2644 = vxpose.xlu0.b32.cont [14/16] 0.0, 128
    %2645 = vxpose.xlu0.b32.cont [15/16] 0.0, 128
    %2646 = vxpose.xlu0.b32.end [16/16] 0.0, 128
    %v2647 = vpop.trf.xlu0
    %v2648 = vpop.trf.xlu0
    %v2649 = vpop.trf.xlu0
    %v2650 = vpop.trf.xlu0
    %v2651 = vpop.trf.xlu0
    %v2652 = vpop.trf.xlu0
    %v2653 = vpop.trf.xlu0
    %v2654 = vpop.trf.xlu0
    %v2655 = vpop.trf.xlu0
    %v2656 = vpop.trf.xlu0
    %v2657 = vpop.trf.xlu0
    %v2658 = vpop.trf.xlu0
    %v2659 = vpop.trf.xlu0
    %v2660 = vpop.trf.xlu0
    %v2661 = vpop.trf.xlu0
    %v2662 = vpop.trf.xlu0
    %2663 = vxpose.xlu0.b32.start [1/16] %v522, 128
    %2664 = vxpose.xlu0.b32.cont [2/16] 0.0, 128
    %2665 = vxpose.xlu0.b32.cont [3/16] 0.0, 128
    %2666 = vxpose.xlu0.b32.cont [4/16] 0.0, 128
    %2667 = vxpose.xlu0.b32.cont [5/16] 0.0, 128
    %2668 = vxpose.xlu0.b32.cont [6/16] 0.0, 128
    %2669 = vxpose.xlu0.b32.cont [7/16] 0.0, 128
    %2670 = vxpose.xlu0.b32.cont [8/16] 0.0, 128
    %2671 = vxpose.xlu0.b32.cont [9/16] 0.0, 128
    %2672 = vxpose.xlu0.b32.cont [10/16] 0.0, 128
    %2673 = vxpose.xlu0.b32.cont [11/16] 0.0, 128
    %2674 = vxpose.xlu0.b32.cont [12/16] 0.0, 128
    %2675 = vxpose.xlu0.b32.cont [13/16] 0.0, 128
    %2676 = vxpose.xlu0.b32.cont [14/16] 0.0, 128
    %2677 = vxpose.xlu0.b32.cont [15/16] 0.0, 128
    %2678 = vxpose.xlu0.b32.end [16/16] 0.0, 128
    %v2679 = vpop.trf.xlu0
    %v2680 = vpop.trf.xlu0
    %v2681 = vpop.trf.xlu0
    %v2682 = vpop.trf.xlu0
    %v2683 = vpop.trf.xlu0
    %v2684 = vpop.trf.xlu0
    %v2685 = vpop.trf.xlu0
    %v2686 = vpop.trf.xlu0
    %v2687 = vpop.trf.xlu0
    %v2688 = vpop.trf.xlu0
    %v2689 = vpop.trf.xlu0
    %v2690 = vpop.trf.xlu0
    %v2691 = vpop.trf.xlu0
    %v2692 = vpop.trf.xlu0
    %v2693 = vpop.trf.xlu0
    %v2694 = vpop.trf.xlu0
    %2695 = vxpose.xlu0.b32.start [1/16] %v523, 128
    %2696 = vxpose.xlu0.b32.cont [2/16] 0.0, 128
    %2697 = vxpose.xlu0.b32.cont [3/16] 0.0, 128
    %2698 = vxpose.xlu0.b32.cont [4/16] 0.0, 128
    %2699 = vxpose.xlu0.b32.cont [5/16] 0.0, 128
    %2700 = vxpose.xlu0.b32.cont [6/16] 0.0, 128
    %2701 = vxpose.xlu0.b32.cont [7/16] 0.0, 128
    %2702 = vxpose.xlu0.b32.cont [8/16] 0.0, 128
    %2703 = vxpose.xlu0.b32.cont [9/16] 0.0, 128
    %2704 = vxpose.xlu0.b32.cont [10/16] 0.0, 128
    %2705 = vxpose.xlu0.b32.cont [11/16] 0.0, 128
    %2706 = vxpose.xlu0.b32.cont [12/16] 0.0, 128
    %2707 = vxpose.xlu0.b32.cont [13/16] 0.0, 128
    %2708 = vxpose.xlu0.b32.cont [14/16] 0.0, 128
    %2709 = vxpose.xlu0.b32.cont [15/16] 0.0, 128
    %2710 = vxpose.xlu0.b32.end [16/16] 0.0, 128
    %v2711 = vpop.trf.xlu0
    %v2712 = vpop.trf.xlu0
    %v2713 = vpop.trf.xlu0
    %v2714 = vpop.trf.xlu0
    %v2715 = vpop.trf.xlu0
    %v2716 = vpop.trf.xlu0
    %v2717 = vpop.trf.xlu0
    %v2718 = vpop.trf.xlu0
    %v2719 = vpop.trf.xlu0
    %v2720 = vpop.trf.xlu0
    %v2721 = vpop.trf.xlu0
    %v2722 = vpop.trf.xlu0
    %v2723 = vpop.trf.xlu0
    %v2724 = vpop.trf.xlu0
    %v2725 = vpop.trf.xlu0
    %v2726 = vpop.trf.xlu0
    %2727 = vxpose.xlu0.b32.start [1/16] %v524, 128
    %2728 = vxpose.xlu0.b32.cont [2/16] 0.0, 128
    %2729 = vxpose.xlu0.b32.cont [3/16] 0.0, 128
    %2730 = vxpose.xlu0.b32.cont [4/16] 0.0, 128
    %2731 = vxpose.xlu0.b32.cont [5/16] 0.0, 128
    %2732 = vxpose.xlu0.b32.cont [6/16] 0.0, 128
    %2733 = vxpose.xlu0.b32.cont [7/16] 0.0, 128
    %2734 = vxpose.xlu0.b32.cont [8/16] 0.0, 128
    %2735 = vxpose.xlu0.b32.cont [9/16] 0.0, 128
    %2736 = vxpose.xlu0.b32.cont [10/16] 0.0, 128
    %2737 = vxpose.xlu0.b32.cont [11/16] 0.0, 128
    %2738 = vxpose.xlu0.b32.cont [12/16] 0.0, 128
    %2739 = vxpose.xlu0.b32.cont [13/16] 0.0, 128
    %2740 = vxpose.xlu0.b32.cont [14/16] 0.0, 128
    %2741 = vxpose.xlu0.b32.cont [15/16] 0.0, 128
    %2742 = vxpose.xlu0.b32.end [16/16] 0.0, 128
    %v2743 = vpop.trf.xlu0
    %v2744 = vpop.trf.xlu0
    %v2745 = vpop.trf.xlu0
    %v2746 = vpop.trf.xlu0
    %v2747 = vpop.trf.xlu0
    %v2748 = vpop.trf.xlu0
    %v2749 = vpop.trf.xlu0
    %v2750 = vpop.trf.xlu0
    %v2751 = vpop.trf.xlu0
    %v2752 = vpop.trf.xlu0
    %v2753 = vpop.trf.xlu0
    %v2754 = vpop.trf.xlu0
    %v2755 = vpop.trf.xlu0
    %v2756 = vpop.trf.xlu0
    %v2757 = vpop.trf.xlu0
    %v2758 = vpop.trf.xlu0
    %2759 = vxpose.xlu0.b32.start [1/16] %v525, 128
    %2760 = vxpose.xlu0.b32.cont [2/16] 0.0, 128
    %2761 = vxpose.xlu0.b32.cont [3/16] 0.0, 128
    %2762 = vxpose.xlu0.b32.cont [4/16] 0.0, 128
    %2763 = vxpose.xlu0.b32.cont [5/16] 0.0, 128
    %2764 = vxpose.xlu0.b32.cont [6/16] 0.0, 128
    %2765 = vxpose.xlu0.b32.cont [7/16] 0.0, 128
    %2766 = vxpose.xlu0.b32.cont [8/16] 0.0, 128
    %2767 = vxpose.xlu0.b32.cont [9/16] 0.0, 128
    %2768 = vxpose.xlu0.b32.cont [10/16] 0.0, 128
    %2769 = vxpose.xlu0.b32.cont [11/16] 0.0, 128
    %2770 = vxpose.xlu0.b32.cont [12/16] 0.0, 128
    %2771 = vxpose.xlu0.b32.cont [13/16] 0.0, 128
    %2772 = vxpose.xlu0.b32.cont [14/16] 0.0, 128
    %2773 = vxpose.xlu0.b32.cont [15/16] 0.0, 128
    %2774 = vxpose.xlu0.b32.end [16/16] 0.0, 128
    %v2775 = vpop.trf.xlu0
    %v2776 = vpop.trf.xlu0
    %v2777 = vpop.trf.xlu0
    %v2778 = vpop.trf.xlu0
    %v2779 = vpop.trf.xlu0
    %v2780 = vpop.trf.xlu0
    %v2781 = vpop.trf.xlu0
    %v2782 = vpop.trf.xlu0
    %v2783 = vpop.trf.xlu0
    %v2784 = vpop.trf.xlu0
    %v2785 = vpop.trf.xlu0
    %v2786 = vpop.trf.xlu0
    %v2787 = vpop.trf.xlu0
    %v2788 = vpop.trf.xlu0
    %v2789 = vpop.trf.xlu0
    %v2790 = vpop.trf.xlu0
    %2791 = vxpose.xlu0.b32.start [1/16] %v526, 128
    %2792 = vxpose.xlu0.b32.cont [2/16] 0.0, 128
    %2793 = vxpose.xlu0.b32.cont [3/16] 0.0, 128
    %2794 = vxpose.xlu0.b32.cont [4/16] 0.0, 128
    %2795 = vxpose.xlu0.b32.cont [5/16] 0.0, 128
    %2796 = vxpose.xlu0.b32.cont [6/16] 0.0, 128
    %2797 = vxpose.xlu0.b32.cont [7/16] 0.0, 128
    %2798 = vxpose.xlu0.b32.cont [8/16] 0.0, 128
    %2799 = vxpose.xlu0.b32.cont [9/16] 0.0, 128
    %2800 = vxpose.xlu0.b32.cont [10/16] 0.0, 128
    %2801 = vxpose.xlu0.b32.cont [11/16] 0.0, 128
    %2802 = vxpose.xlu0.b32.cont [12/16] 0.0, 128
    %2803 = vxpose.xlu0.b32.cont [13/16] 0.0, 128
    %2804 = vxpose.xlu0.b32.cont [14/16] 0.0, 128
    %2805 = vxpose.xlu0.b32.cont [15/16] 0.0, 128
    %2806 = vxpose.xlu0.b32.end [16/16] 0.0, 128
    %v2807 = vpop.trf.xlu0
    %v2808 = vpop.trf.xlu0
    %v2809 = vpop.trf.xlu0
    %v2810 = vpop.trf.xlu0
    %v2811 = vpop.trf.xlu0
    %v2812 = vpop.trf.xlu0
    %v2813 = vpop.trf.xlu0
    %v2814 = vpop.trf.xlu0
    %v2815 = vpop.trf.xlu0
    %v2816 = vpop.trf.xlu0
    %v2817 = vpop.trf.xlu0
    %v2818 = vpop.trf.xlu0
    %v2819 = vpop.trf.xlu0
    %v2820 = vpop.trf.xlu0
    %v2821 = vpop.trf.xlu0
    %v2822 = vpop.trf.xlu0
    %2823 = vxpose.xlu0.b32.start [1/16] %v655, 128
    %2824 = vxpose.xlu0.b32.cont [2/16] 0.0, 128
    %2825 = vxpose.xlu0.b32.cont [3/16] 0.0, 128
    %2826 = vxpose.xlu0.b32.cont [4/16] 0.0, 128
    %2827 = vxpose.xlu0.b32.cont [5/16] 0.0, 128
    %2828 = vxpose.xlu0.b32.cont [6/16] 0.0, 128
    %2829 = vxpose.xlu0.b32.cont [7/16] 0.0, 128
    %2830 = vxpose.xlu0.b32.cont [8/16] 0.0, 128
    %2831 = vxpose.xlu0.b32.cont [9/16] 0.0, 128
    %2832 = vxpose.xlu0.b32.cont [10/16] 0.0, 128
    %2833 = vxpose.xlu0.b32.cont [11/16] 0.0, 128
    %2834 = vxpose.xlu0.b32.cont [12/16] 0.0, 128
    %2835 = vxpose.xlu0.b32.cont [13/16] 0.0, 128
    %2836 = vxpose.xlu0.b32.cont [14/16] 0.0, 128
    %2837 = vxpose.xlu0.b32.cont [15/16] 0.0, 128
    %2838 = vxpose.xlu0.b32.end [16/16] 0.0, 128
    %v2839 = vpop.trf.xlu0
    %v2840 = vpop.trf.xlu0
    %v2841 = vpop.trf.xlu0
    %v2842 = vpop.trf.xlu0
    %v2843 = vpop.trf.xlu0
    %v2844 = vpop.trf.xlu0
    %v2845 = vpop.trf.xlu0
    %v2846 = vpop.trf.xlu0
    %v2847 = vpop.trf.xlu0
    %v2848 = vpop.trf.xlu0
    %v2849 = vpop.trf.xlu0
    %v2850 = vpop.trf.xlu0
    %v2851 = vpop.trf.xlu0
    %v2852 = vpop.trf.xlu0
    %v2853 = vpop.trf.xlu0
    %v2854 = vpop.trf.xlu0
    %2855 = vxpose.xlu0.b32.start [1/16] %v656, 128
    %2856 = vxpose.xlu0.b32.cont [2/16] 0.0, 128
    %2857 = vxpose.xlu0.b32.cont [3/16] 0.0, 128
    %2858 = vxpose.xlu0.b32.cont [4/16] 0.0, 128
    %2859 = vxpose.xlu0.b32.cont [5/16] 0.0, 128
    %2860 = vxpose.xlu0.b32.cont [6/16] 0.0, 128
    %2861 = vxpose.xlu0.b32.cont [7/16] 0.0, 128
    %2862 = vxpose.xlu0.b32.cont [8/16] 0.0, 128
    %2863 = vxpose.xlu0.b32.cont [9/16] 0.0, 128
    %2864 = vxpose.xlu0.b32.cont [10/16] 0.0, 128
    %2865 = vxpose.xlu0.b32.cont [11/16] 0.0, 128
    %2866 = vxpose.xlu0.b32.cont [12/16] 0.0, 128
    %2867 = vxpose.xlu0.b32.cont [13/16] 0.0, 128
    %2868 = vxpose.xlu0.b32.cont [14/16] 0.0, 128
    %2869 = vxpose.xlu0.b32.cont [15/16] 0.0, 128
    %2870 = vxpose.xlu0.b32.end [16/16] 0.0, 128
    %v2871 = vpop.trf.xlu0
    %v2872 = vpop.trf.xlu0
    %v2873 = vpop.trf.xlu0
    %v2874 = vpop.trf.xlu0
    %v2875 = vpop.trf.xlu0
    %v2876 = vpop.trf.xlu0
    %v2877 = vpop.trf.xlu0
    %v2878 = vpop.trf.xlu0
    %v2879 = vpop.trf.xlu0
    %v2880 = vpop.trf.xlu0
    %v2881 = vpop.trf.xlu0
    %v2882 = vpop.trf.xlu0
    %v2883 = vpop.trf.xlu0
    %v2884 = vpop.trf.xlu0
    %v2885 = vpop.trf.xlu0
    %v2886 = vpop.trf.xlu0
    %2887 = vxpose.xlu0.b32.start [1/16] %v657, 128
    %2888 = vxpose.xlu0.b32.cont [2/16] 0.0, 128
    %2889 = vxpose.xlu0.b32.cont [3/16] 0.0, 128
    %2890 = vxpose.xlu0.b32.cont [4/16] 0.0, 128
    %2891 = vxpose.xlu0.b32.cont [5/16] 0.0, 128
    %2892 = vxpose.xlu0.b32.cont [6/16] 0.0, 128
    %2893 = vxpose.xlu0.b32.cont [7/16] 0.0, 128
    %2894 = vxpose.xlu0.b32.cont [8/16] 0.0, 128
    %2895 = vxpose.xlu0.b32.cont [9/16] 0.0, 128
    %2896 = vxpose.xlu0.b32.cont [10/16] 0.0, 128
    %2897 = vxpose.xlu0.b32.cont [11/16] 0.0, 128
    %2898 = vxpose.xlu0.b32.cont [12/16] 0.0, 128
    %2899 = vxpose.xlu0.b32.cont [13/16] 0.0, 128
    %2900 = vxpose.xlu0.b32.cont [14/16] 0.0, 128
    %2901 = vxpose.xlu0.b32.cont [15/16] 0.0, 128
    %2902 = vxpose.xlu0.b32.end [16/16] 0.0, 128
    %v2903 = vpop.trf.xlu0
    %v2904 = vpop.trf.xlu0
    %v2905 = vpop.trf.xlu0
    %v2906 = vpop.trf.xlu0
    %v2907 = vpop.trf.xlu0
    %v2908 = vpop.trf.xlu0
    %v2909 = vpop.trf.xlu0
    %v2910 = vpop.trf.xlu0
    %v2911 = vpop.trf.xlu0
    %v2912 = vpop.trf.xlu0
    %v2913 = vpop.trf.xlu0
    %v2914 = vpop.trf.xlu0
    %v2915 = vpop.trf.xlu0
    %v2916 = vpop.trf.xlu0
    %v2917 = vpop.trf.xlu0
    %v2918 = vpop.trf.xlu0
    %2919 = vxpose.xlu0.b32.start [1/16] %v658, 128
    %2920 = vxpose.xlu0.b32.cont [2/16] 0.0, 128
    %2921 = vxpose.xlu0.b32.cont [3/16] 0.0, 128
    %2922 = vxpose.xlu0.b32.cont [4/16] 0.0, 128
    %2923 = vxpose.xlu0.b32.cont [5/16] 0.0, 128
    %2924 = vxpose.xlu0.b32.cont [6/16] 0.0, 128
    %2925 = vxpose.xlu0.b32.cont [7/16] 0.0, 128
    %2926 = vxpose.xlu0.b32.cont [8/16] 0.0, 128
    %2927 = vxpose.xlu0.b32.cont [9/16] 0.0, 128
    %2928 = vxpose.xlu0.b32.cont [10/16] 0.0, 128
    %2929 = vxpose.xlu0.b32.cont [11/16] 0.0, 128
    %2930 = vxpose.xlu0.b32.cont [12/16] 0.0, 128
    %2931 = vxpose.xlu0.b32.cont [13/16] 0.0, 128
    %2932 = vxpose.xlu0.b32.cont [14/16] 0.0, 128
    %2933 = vxpose.xlu0.b32.cont [15/16] 0.0, 128
    %2934 = vxpose.xlu0.b32.end [16/16] 0.0, 128
    %v2935 = vpop.trf.xlu0
    %v2936 = vpop.trf.xlu0
    %v2937 = vpop.trf.xlu0
    %v2938 = vpop.trf.xlu0
    %v2939 = vpop.trf.xlu0
    %v2940 = vpop.trf.xlu0
    %v2941 = vpop.trf.xlu0
    %v2942 = vpop.trf.xlu0
    %v2943 = vpop.trf.xlu0
    %v2944 = vpop.trf.xlu0
    %v2945 = vpop.trf.xlu0
    %v2946 = vpop.trf.xlu0
    %v2947 = vpop.trf.xlu0
    %v2948 = vpop.trf.xlu0
    %v2949 = vpop.trf.xlu0
    %v2950 = vpop.trf.xlu0
    %2951 = vxpose.xlu0.b32.start [1/16] %v659, 128
    %2952 = vxpose.xlu0.b32.cont [2/16] 0.0, 128
    %2953 = vxpose.xlu0.b32.cont [3/16] 0.0, 128
    %2954 = vxpose.xlu0.b32.cont [4/16] 0.0, 128
    %2955 = vxpose.xlu0.b32.cont [5/16] 0.0, 128
    %2956 = vxpose.xlu0.b32.cont [6/16] 0.0, 128
    %2957 = vxpose.xlu0.b32.cont [7/16] 0.0, 128
    %2958 = vxpose.xlu0.b32.cont [8/16] 0.0, 128
    %2959 = vxpose.xlu0.b32.cont [9/16] 0.0, 128
    %2960 = vxpose.xlu0.b32.cont [10/16] 0.0, 128
    %2961 = vxpose.xlu0.b32.cont [11/16] 0.0, 128
    %2962 = vxpose.xlu0.b32.cont [12/16] 0.0, 128
    %2963 = vxpose.xlu0.b32.cont [13/16] 0.0, 128
    %2964 = vxpose.xlu0.b32.cont [14/16] 0.0, 128
    %2965 = vxpose.xlu0.b32.cont [15/16] 0.0, 128
    %2966 = vxpose.xlu0.b32.end [16/16] 0.0, 128
    %v2967 = vpop.trf.xlu0
    %v2968 = vpop.trf.xlu0
    %v2969 = vpop.trf.xlu0
    %v2970 = vpop.trf.xlu0
    %v2971 = vpop.trf.xlu0
    %v2972 = vpop.trf.xlu0
    %v2973 = vpop.trf.xlu0
    %v2974 = vpop.trf.xlu0
    %v2975 = vpop.trf.xlu0
    %v2976 = vpop.trf.xlu0
    %v2977 = vpop.trf.xlu0
    %v2978 = vpop.trf.xlu0
    %v2979 = vpop.trf.xlu0
    %v2980 = vpop.trf.xlu0
    %v2981 = vpop.trf.xlu0
    %v2982 = vpop.trf.xlu0
    %2983 = vxpose.xlu0.b32.start [1/16] %v660, 128
    %2984 = vxpose.xlu0.b32.cont [2/16] 0.0, 128
    %2985 = vxpose.xlu0.b32.cont [3/16] 0.0, 128
    %2986 = vxpose.xlu0.b32.cont [4/16] 0.0, 128
    %2987 = vxpose.xlu0.b32.cont [5/16] 0.0, 128
    %2988 = vxpose.xlu0.b32.cont [6/16] 0.0, 128
    %2989 = vxpose.xlu0.b32.cont [7/16] 0.0, 128
    %2990 = vxpose.xlu0.b32.cont [8/16] 0.0, 128
    %2991 = vxpose.xlu0.b32.cont [9/16] 0.0, 128
    %2992 = vxpose.xlu0.b32.cont [10/16] 0.0, 128
    %2993 = vxpose.xlu0.b32.cont [11/16] 0.0, 128
    %2994 = vxpose.xlu0.b32.cont [12/16] 0.0, 128
    %2995 = vxpose.xlu0.b32.cont [13/16] 0.0, 128
    %2996 = vxpose.xlu0.b32.cont [14/16] 0.0, 128
    %2997 = vxpose.xlu0.b32.cont [15/16] 0.0, 128
    %2998 = vxpose.xlu0.b32.end [16/16] 0.0, 128
    %v2999 = vpop.trf.xlu0
    %v3000 = vpop.trf.xlu0
    %v3001 = vpop.trf.xlu0
    %v3002 = vpop.trf.xlu0
    %v3003 = vpop.trf.xlu0
    %v3004 = vpop.trf.xlu0
    %v3005 = vpop.trf.xlu0
    %v3006 = vpop.trf.xlu0
    %v3007 = vpop.trf.xlu0
    %v3008 = vpop.trf.xlu0
    %v3009 = vpop.trf.xlu0
    %v3010 = vpop.trf.xlu0
    %v3011 = vpop.trf.xlu0
    %v3012 = vpop.trf.xlu0
    %v3013 = vpop.trf.xlu0
    %v3014 = vpop.trf.xlu0
    %3015 = vxpose.xlu0.b32.start [1/16] %v661, 128
    %3016 = vxpose.xlu0.b32.cont [2/16] 0.0, 128
    %3017 = vxpose.xlu0.b32.cont [3/16] 0.0, 128
    %3018 = vxpose.xlu0.b32.cont [4/16] 0.0, 128
    %3019 = vxpose.xlu0.b32.cont [5/16] 0.0, 128
    %3020 = vxpose.xlu0.b32.cont [6/16] 0.0, 128
    %3021 = vxpose.xlu0.b32.cont [7/16] 0.0, 128
    %3022 = vxpose.xlu0.b32.cont [8/16] 0.0, 128
    %3023 = vxpose.xlu0.b32.cont [9/16] 0.0, 128
    %3024 = vxpose.xlu0.b32.cont [10/16] 0.0, 128
    %3025 = vxpose.xlu0.b32.cont [11/16] 0.0, 128
    %3026 = vxpose.xlu0.b32.cont [12/16] 0.0, 128
    %3027 = vxpose.xlu0.b32.cont [13/16] 0.0, 128
    %3028 = vxpose.xlu0.b32.cont [14/16] 0.0, 128
    %3029 = vxpose.xlu0.b32.cont [15/16] 0.0, 128
    %3030 = vxpose.xlu0.b32.end [16/16] 0.0, 128
    %v3031 = vpop.trf.xlu0
    %v3032 = vpop.trf.xlu0
    %v3033 = vpop.trf.xlu0
    %v3034 = vpop.trf.xlu0
    %v3035 = vpop.trf.xlu0
    %v3036 = vpop.trf.xlu0
    %v3037 = vpop.trf.xlu0
    %v3038 = vpop.trf.xlu0
    %v3039 = vpop.trf.xlu0
    %v3040 = vpop.trf.xlu0
    %v3041 = vpop.trf.xlu0
    %v3042 = vpop.trf.xlu0
    %v3043 = vpop.trf.xlu0
    %v3044 = vpop.trf.xlu0
    %v3045 = vpop.trf.xlu0
    %v3046 = vpop.trf.xlu0
    %3047 = vxpose.xlu0.b32.start [1/16] %v662, 128
    %3048 = vxpose.xlu0.b32.cont [2/16] 0.0, 128
    %3049 = vxpose.xlu0.b32.cont [3/16] 0.0, 128
    %3050 = vxpose.xlu0.b32.cont [4/16] 0.0, 128
    %3051 = vxpose.xlu0.b32.cont [5/16] 0.0, 128
    %3052 = vxpose.xlu0.b32.cont [6/16] 0.0, 128
    %3053 = vxpose.xlu0.b32.cont [7/16] 0.0, 128
    %3054 = vxpose.xlu0.b32.cont [8/16] 0.0, 128
    %3055 = vxpose.xlu0.b32.cont [9/16] 0.0, 128
    %3056 = vxpose.xlu0.b32.cont [10/16] 0.0, 128
    %3057 = vxpose.xlu0.b32.cont [11/16] 0.0, 128
    %3058 = vxpose.xlu0.b32.cont [12/16] 0.0, 128
    %3059 = vxpose.xlu0.b32.cont [13/16] 0.0, 128
    %3060 = vxpose.xlu0.b32.cont [14/16] 0.0, 128
    %3061 = vxpose.xlu0.b32.cont [15/16] 0.0, 128
    %3062 = vxpose.xlu0.b32.end [16/16] 0.0, 128
    %v3063 = vpop.trf.xlu0
    %v3064 = vpop.trf.xlu0
    %v3065 = vpop.trf.xlu0
    %v3066 = vpop.trf.xlu0
    %v3067 = vpop.trf.xlu0
    %v3068 = vpop.trf.xlu0
    %v3069 = vpop.trf.xlu0
    %v3070 = vpop.trf.xlu0
    %v3071 = vpop.trf.xlu0
    %v3072 = vpop.trf.xlu0
    %v3073 = vpop.trf.xlu0
    %v3074 = vpop.trf.xlu0
    %v3075 = vpop.trf.xlu0
    %v3076 = vpop.trf.xlu0
    %v3077 = vpop.trf.xlu0
    %v3078 = vpop.trf.xlu0
    %3079 = vxpose.xlu0.b32.start [1/16] %v791, 128
    %3080 = vxpose.xlu0.b32.cont [2/16] 0.0, 128
    %3081 = vxpose.xlu0.b32.cont [3/16] 0.0, 128
    %3082 = vxpose.xlu0.b32.cont [4/16] 0.0, 128
    %3083 = vxpose.xlu0.b32.cont [5/16] 0.0, 128
    %3084 = vxpose.xlu0.b32.cont [6/16] 0.0, 128
    %3085 = vxpose.xlu0.b32.cont [7/16] 0.0, 128
    %3086 = vxpose.xlu0.b32.cont [8/16] 0.0, 128
    %3087 = vxpose.xlu0.b32.cont [9/16] 0.0, 128
    %3088 = vxpose.xlu0.b32.cont [10/16] 0.0, 128
    %3089 = vxpose.xlu0.b32.cont [11/16] 0.0, 128
    %3090 = vxpose.xlu0.b32.cont [12/16] 0.0, 128
    %3091 = vxpose.xlu0.b32.cont [13/16] 0.0, 128
    %3092 = vxpose.xlu0.b32.cont [14/16] 0.0, 128
    %3093 = vxpose.xlu0.b32.cont [15/16] 0.0, 128
    %3094 = vxpose.xlu0.b32.end [16/16] 0.0, 128
    %v3095 = vpop.trf.xlu0
    %v3096 = vpop.trf.xlu0
    %v3097 = vpop.trf.xlu0
    %v3098 = vpop.trf.xlu0
    %v3099 = vpop.trf.xlu0
    %v3100 = vpop.trf.xlu0
    %v3101 = vpop.trf.xlu0
    %v3102 = vpop.trf.xlu0
    %v3103 = vpop.trf.xlu0
    %v3104 = vpop.trf.xlu0
    %v3105 = vpop.trf.xlu0
    %v3106 = vpop.trf.xlu0
    %v3107 = vpop.trf.xlu0
    %v3108 = vpop.trf.xlu0
    %v3109 = vpop.trf.xlu0
    %v3110 = vpop.trf.xlu0
    %3111 = vxpose.xlu0.b32.start [1/16] %v792, 128
    %3112 = vxpose.xlu0.b32.cont [2/16] 0.0, 128
    %3113 = vxpose.xlu0.b32.cont [3/16] 0.0, 128
    %3114 = vxpose.xlu0.b32.cont [4/16] 0.0, 128
    %3115 = vxpose.xlu0.b32.cont [5/16] 0.0, 128
    %3116 = vxpose.xlu0.b32.cont [6/16] 0.0, 128
    %3117 = vxpose.xlu0.b32.cont [7/16] 0.0, 128
    %3118 = vxpose.xlu0.b32.cont [8/16] 0.0, 128
    %3119 = vxpose.xlu0.b32.cont [9/16] 0.0, 128
    %3120 = vxpose.xlu0.b32.cont [10/16] 0.0, 128
    %3121 = vxpose.xlu0.b32.cont [11/16] 0.0, 128
    %3122 = vxpose.xlu0.b32.cont [12/16] 0.0, 128
    %3123 = vxpose.xlu0.b32.cont [13/16] 0.0, 128
    %3124 = vxpose.xlu0.b32.cont [14/16] 0.0, 128
    %3125 = vxpose.xlu0.b32.cont [15/16] 0.0, 128
    %3126 = vxpose.xlu0.b32.end [16/16] 0.0, 128
    %v3127 = vpop.trf.xlu0
    %v3128 = vpop.trf.xlu0
    %v3129 = vpop.trf.xlu0
    %v3130 = vpop.trf.xlu0
    %v3131 = vpop.trf.xlu0
    %v3132 = vpop.trf.xlu0
    %v3133 = vpop.trf.xlu0
    %v3134 = vpop.trf.xlu0
    %v3135 = vpop.trf.xlu0
    %v3136 = vpop.trf.xlu0
    %v3137 = vpop.trf.xlu0
    %v3138 = vpop.trf.xlu0
    %v3139 = vpop.trf.xlu0
    %v3140 = vpop.trf.xlu0
    %v3141 = vpop.trf.xlu0
    %v3142 = vpop.trf.xlu0
    %3143 = vxpose.xlu0.b32.start [1/16] %v793, 128
    %3144 = vxpose.xlu0.b32.cont [2/16] 0.0, 128
    %3145 = vxpose.xlu0.b32.cont [3/16] 0.0, 128
    %3146 = vxpose.xlu0.b32.cont [4/16] 0.0, 128
    %3147 = vxpose.xlu0.b32.cont [5/16] 0.0, 128
    %3148 = vxpose.xlu0.b32.cont [6/16] 0.0, 128
    %3149 = vxpose.xlu0.b32.cont [7/16] 0.0, 128
    %3150 = vxpose.xlu0.b32.cont [8/16] 0.0, 128
    %3151 = vxpose.xlu0.b32.cont [9/16] 0.0, 128
    %3152 = vxpose.xlu0.b32.cont [10/16] 0.0, 128
    %3153 = vxpose.xlu0.b32.cont [11/16] 0.0, 128
    %3154 = vxpose.xlu0.b32.cont [12/16] 0.0, 128
    %3155 = vxpose.xlu0.b32.cont [13/16] 0.0, 128
    %3156 = vxpose.xlu0.b32.cont [14/16] 0.0, 128
    %3157 = vxpose.xlu0.b32.cont [15/16] 0.0, 128
    %3158 = vxpose.xlu0.b32.end [16/16] 0.0, 128
    %v3159 = vpop.trf.xlu0
    %v3160 = vpop.trf.xlu0
    %v3161 = vpop.trf.xlu0
    %v3162 = vpop.trf.xlu0
    %v3163 = vpop.trf.xlu0
    %v3164 = vpop.trf.xlu0
    %v3165 = vpop.trf.xlu0
    %v3166 = vpop.trf.xlu0
    %v3167 = vpop.trf.xlu0
    %v3168 = vpop.trf.xlu0
    %v3169 = vpop.trf.xlu0
    %v3170 = vpop.trf.xlu0
    %v3171 = vpop.trf.xlu0
    %v3172 = vpop.trf.xlu0
    %v3173 = vpop.trf.xlu0
    %v3174 = vpop.trf.xlu0
    %3175 = vxpose.xlu0.b32.start [1/16] %v794, 128
    %3176 = vxpose.xlu0.b32.cont [2/16] 0.0, 128
    %3177 = vxpose.xlu0.b32.cont [3/16] 0.0, 128
    %3178 = vxpose.xlu0.b32.cont [4/16] 0.0, 128
    %3179 = vxpose.xlu0.b32.cont [5/16] 0.0, 128
    %3180 = vxpose.xlu0.b32.cont [6/16] 0.0, 128
    %3181 = vxpose.xlu0.b32.cont [7/16] 0.0, 128
    %3182 = vxpose.xlu0.b32.cont [8/16] 0.0, 128
    %3183 = vxpose.xlu0.b32.cont [9/16] 0.0, 128
    %3184 = vxpose.xlu0.b32.cont [10/16] 0.0, 128
    %3185 = vxpose.xlu0.b32.cont [11/16] 0.0, 128
    %3186 = vxpose.xlu0.b32.cont [12/16] 0.0, 128
    %3187 = vxpose.xlu0.b32.cont [13/16] 0.0, 128
    %3188 = vxpose.xlu0.b32.cont [14/16] 0.0, 128
    %3189 = vxpose.xlu0.b32.cont [15/16] 0.0, 128
    %3190 = vxpose.xlu0.b32.end [16/16] 0.0, 128
    %v3191 = vpop.trf.xlu0
    %v3192 = vpop.trf.xlu0
    %v3193 = vpop.trf.xlu0
    %v3194 = vpop.trf.xlu0
    %v3195 = vpop.trf.xlu0
    %v3196 = vpop.trf.xlu0
    %v3197 = vpop.trf.xlu0
    %v3198 = vpop.trf.xlu0
    %v3199 = vpop.trf.xlu0
    %v3200 = vpop.trf.xlu0
    %v3201 = vpop.trf.xlu0
    %v3202 = vpop.trf.xlu0
    %v3203 = vpop.trf.xlu0
    %v3204 = vpop.trf.xlu0
    %v3205 = vpop.trf.xlu0
    %v3206 = vpop.trf.xlu0
    %3207 = vxpose.xlu0.b32.start [1/16] %v795, 128
    %3208 = vxpose.xlu0.b32.cont [2/16] 0.0, 128
    %3209 = vxpose.xlu0.b32.cont [3/16] 0.0, 128
    %3210 = vxpose.xlu0.b32.cont [4/16] 0.0, 128
    %3211 = vxpose.xlu0.b32.cont [5/16] 0.0, 128
    %3212 = vxpose.xlu0.b32.cont [6/16] 0.0, 128
    %3213 = vxpose.xlu0.b32.cont [7/16] 0.0, 128
    %3214 = vxpose.xlu0.b32.cont [8/16] 0.0, 128
    %3215 = vxpose.xlu0.b32.cont [9/16] 0.0, 128
    %3216 = vxpose.xlu0.b32.cont [10/16] 0.0, 128
    %3217 = vxpose.xlu0.b32.cont [11/16] 0.0, 128
    %3218 = vxpose.xlu0.b32.cont [12/16] 0.0, 128
    %3219 = vxpose.xlu0.b32.cont [13/16] 0.0, 128
    %3220 = vxpose.xlu0.b32.cont [14/16] 0.0, 128
    %3221 = vxpose.xlu0.b32.cont [15/16] 0.0, 128
    %3222 = vxpose.xlu0.b32.end [16/16] 0.0, 128
    %v3223 = vpop.trf.xlu0
    %v3224 = vpop.trf.xlu0
    %v3225 = vpop.trf.xlu0
    %v3226 = vpop.trf.xlu0
    %v3227 = vpop.trf.xlu0
    %v3228 = vpop.trf.xlu0
    %v3229 = vpop.trf.xlu0
    %v3230 = vpop.trf.xlu0
    %v3231 = vpop.trf.xlu0
    %v3232 = vpop.trf.xlu0
    %v3233 = vpop.trf.xlu0
    %v3234 = vpop.trf.xlu0
    %v3235 = vpop.trf.xlu0
    %v3236 = vpop.trf.xlu0
    %v3237 = vpop.trf.xlu0
    %v3238 = vpop.trf.xlu0
    %3239 = vxpose.xlu0.b32.start [1/16] %v796, 128
    %3240 = vxpose.xlu0.b32.cont [2/16] 0.0, 128
    %3241 = vxpose.xlu0.b32.cont [3/16] 0.0, 128
    %3242 = vxpose.xlu0.b32.cont [4/16] 0.0, 128
    %3243 = vxpose.xlu0.b32.cont [5/16] 0.0, 128
    %3244 = vxpose.xlu0.b32.cont [6/16] 0.0, 128
    %3245 = vxpose.xlu0.b32.cont [7/16] 0.0, 128
    %3246 = vxpose.xlu0.b32.cont [8/16] 0.0, 128
    %3247 = vxpose.xlu0.b32.cont [9/16] 0.0, 128
    %3248 = vxpose.xlu0.b32.cont [10/16] 0.0, 128
    %3249 = vxpose.xlu0.b32.cont [11/16] 0.0, 128
    %3250 = vxpose.xlu0.b32.cont [12/16] 0.0, 128
    %3251 = vxpose.xlu0.b32.cont [13/16] 0.0, 128
    %3252 = vxpose.xlu0.b32.cont [14/16] 0.0, 128
    %3253 = vxpose.xlu0.b32.cont [15/16] 0.0, 128
    %3254 = vxpose.xlu0.b32.end [16/16] 0.0, 128
    %v3255 = vpop.trf.xlu0
    %v3256 = vpop.trf.xlu0
    %v3257 = vpop.trf.xlu0
    %v3258 = vpop.trf.xlu0
    %v3259 = vpop.trf.xlu0
    %v3260 = vpop.trf.xlu0
    %v3261 = vpop.trf.xlu0
    %v3262 = vpop.trf.xlu0
    %v3263 = vpop.trf.xlu0
    %v3264 = vpop.trf.xlu0
    %v3265 = vpop.trf.xlu0
    %v3266 = vpop.trf.xlu0
    %v3267 = vpop.trf.xlu0
    %v3268 = vpop.trf.xlu0
    %v3269 = vpop.trf.xlu0
    %v3270 = vpop.trf.xlu0
    %3271 = vxpose.xlu0.b32.start [1/16] %v797, 128
    %3272 = vxpose.xlu0.b32.cont [2/16] 0.0, 128
    %3273 = vxpose.xlu0.b32.cont [3/16] 0.0, 128
    %3274 = vxpose.xlu0.b32.cont [4/16] 0.0, 128
    %3275 = vxpose.xlu0.b32.cont [5/16] 0.0, 128
    %3276 = vxpose.xlu0.b32.cont [6/16] 0.0, 128
    %3277 = vxpose.xlu0.b32.cont [7/16] 0.0, 128
    %3278 = vxpose.xlu0.b32.cont [8/16] 0.0, 128
    %3279 = vxpose.xlu0.b32.cont [9/16] 0.0, 128
    %3280 = vxpose.xlu0.b32.cont [10/16] 0.0, 128
    %3281 = vxpose.xlu0.b32.cont [11/16] 0.0, 128
    %3282 = vxpose.xlu0.b32.cont [12/16] 0.0, 128
    %3283 = vxpose.xlu0.b32.cont [13/16] 0.0, 128
    %3284 = vxpose.xlu0.b32.cont [14/16] 0.0, 128
    %3285 = vxpose.xlu0.b32.cont [15/16] 0.0, 128
    %3286 = vxpose.xlu0.b32.end [16/16] 0.0, 128
    %v3287 = vpop.trf.xlu0
    %v3288 = vpop.trf.xlu0
    %v3289 = vpop.trf.xlu0
    %v3290 = vpop.trf.xlu0
    %v3291 = vpop.trf.xlu0
    %v3292 = vpop.trf.xlu0
    %v3293 = vpop.trf.xlu0
    %v3294 = vpop.trf.xlu0
    %v3295 = vpop.trf.xlu0
    %v3296 = vpop.trf.xlu0
    %v3297 = vpop.trf.xlu0
    %v3298 = vpop.trf.xlu0
    %v3299 = vpop.trf.xlu0
    %v3300 = vpop.trf.xlu0
    %v3301 = vpop.trf.xlu0
    %v3302 = vpop.trf.xlu0
    %3303 = vxpose.xlu0.b32.start [1/16] %v798, 128
    %3304 = vxpose.xlu0.b32.cont [2/16] 0.0, 128
    %3305 = vxpose.xlu0.b32.cont [3/16] 0.0, 128
    %3306 = vxpose.xlu0.b32.cont [4/16] 0.0, 128
    %3307 = vxpose.xlu0.b32.cont [5/16] 0.0, 128
    %3308 = vxpose.xlu0.b32.cont [6/16] 0.0, 128
    %3309 = vxpose.xlu0.b32.cont [7/16] 0.0, 128
    %3310 = vxpose.xlu0.b32.cont [8/16] 0.0, 128
    %3311 = vxpose.xlu0.b32.cont [9/16] 0.0, 128
    %3312 = vxpose.xlu0.b32.cont [10/16] 0.0, 128
    %3313 = vxpose.xlu0.b32.cont [11/16] 0.0, 128
    %3314 = vxpose.xlu0.b32.cont [12/16] 0.0, 128
    %3315 = vxpose.xlu0.b32.cont [13/16] 0.0, 128
    %3316 = vxpose.xlu0.b32.cont [14/16] 0.0, 128
    %3317 = vxpose.xlu0.b32.cont [15/16] 0.0, 128
    %3318 = vxpose.xlu0.b32.end [16/16] 0.0, 128
    %v3319 = vpop.trf.xlu0
    %v3320 = vpop.trf.xlu0
    %v3321 = vpop.trf.xlu0
    %v3322 = vpop.trf.xlu0
    %v3323 = vpop.trf.xlu0
    %v3324 = vpop.trf.xlu0
    %v3325 = vpop.trf.xlu0
    %v3326 = vpop.trf.xlu0
    %v3327 = vpop.trf.xlu0
    %v3328 = vpop.trf.xlu0
    %v3329 = vpop.trf.xlu0
    %v3330 = vpop.trf.xlu0
    %v3331 = vpop.trf.xlu0
    %v3332 = vpop.trf.xlu0
    %v3333 = vpop.trf.xlu0
    %v3334 = vpop.trf.xlu0
    %3335 = vxpose.xlu0.b32.start [1/16] %v927, 128
    %3336 = vxpose.xlu0.b32.cont [2/16] 0.0, 128
    %3337 = vxpose.xlu0.b32.cont [3/16] 0.0, 128
    %3338 = vxpose.xlu0.b32.cont [4/16] 0.0, 128
    %3339 = vxpose.xlu0.b32.cont [5/16] 0.0, 128
    %3340 = vxpose.xlu0.b32.cont [6/16] 0.0, 128
    %3341 = vxpose.xlu0.b32.cont [7/16] 0.0, 128
    %3342 = vxpose.xlu0.b32.cont [8/16] 0.0, 128
    %3343 = vxpose.xlu0.b32.cont [9/16] 0.0, 128
    %3344 = vxpose.xlu0.b32.cont [10/16] 0.0, 128
    %3345 = vxpose.xlu0.b32.cont [11/16] 0.0, 128
    %3346 = vxpose.xlu0.b32.cont [12/16] 0.0, 128
    %3347 = vxpose.xlu0.b32.cont [13/16] 0.0, 128
    %3348 = vxpose.xlu0.b32.cont [14/16] 0.0, 128
    %3349 = vxpose.xlu0.b32.cont [15/16] 0.0, 128
    %3350 = vxpose.xlu0.b32.end [16/16] 0.0, 128
    %v3351 = vpop.trf.xlu0
    %v3352 = vpop.trf.xlu0
    %v3353 = vpop.trf.xlu0
    %v3354 = vpop.trf.xlu0
    %v3355 = vpop.trf.xlu0
    %v3356 = vpop.trf.xlu0
    %v3357 = vpop.trf.xlu0
    %v3358 = vpop.trf.xlu0
    %v3359 = vpop.trf.xlu0
    %v3360 = vpop.trf.xlu0
    %v3361 = vpop.trf.xlu0
    %v3362 = vpop.trf.xlu0
    %v3363 = vpop.trf.xlu0
    %v3364 = vpop.trf.xlu0
    %v3365 = vpop.trf.xlu0
    %v3366 = vpop.trf.xlu0
    %3367 = vxpose.xlu0.b32.start [1/16] %v928, 128
    %3368 = vxpose.xlu0.b32.cont [2/16] 0.0, 128
    %3369 = vxpose.xlu0.b32.cont [3/16] 0.0, 128
    %3370 = vxpose.xlu0.b32.cont [4/16] 0.0, 128
    %3371 = vxpose.xlu0.b32.cont [5/16] 0.0, 128
    %3372 = vxpose.xlu0.b32.cont [6/16] 0.0, 128
    %3373 = vxpose.xlu0.b32.cont [7/16] 0.0, 128
    %3374 = vxpose.xlu0.b32.cont [8/16] 0.0, 128
    %3375 = vxpose.xlu0.b32.cont [9/16] 0.0, 128
    %3376 = vxpose.xlu0.b32.cont [10/16] 0.0, 128
    %3377 = vxpose.xlu0.b32.cont [11/16] 0.0, 128
    %3378 = vxpose.xlu0.b32.cont [12/16] 0.0, 128
    %3379 = vxpose.xlu0.b32.cont [13/16] 0.0, 128
    %3380 = vxpose.xlu0.b32.cont [14/16] 0.0, 128
    %3381 = vxpose.xlu0.b32.cont [15/16] 0.0, 128
    %3382 = vxpose.xlu0.b32.end [16/16] 0.0, 128
    %v3383 = vpop.trf.xlu0
    %v3384 = vpop.trf.xlu0
    %v3385 = vpop.trf.xlu0
    %v3386 = vpop.trf.xlu0
    %v3387 = vpop.trf.xlu0
    %v3388 = vpop.trf.xlu0
    %v3389 = vpop.trf.xlu0
    %v3390 = vpop.trf.xlu0
    %v3391 = vpop.trf.xlu0
    %v3392 = vpop.trf.xlu0
    %v3393 = vpop.trf.xlu0
    %v3394 = vpop.trf.xlu0
    %v3395 = vpop.trf.xlu0
    %v3396 = vpop.trf.xlu0
    %v3397 = vpop.trf.xlu0
    %v3398 = vpop.trf.xlu0
    %3399 = vxpose.xlu0.b32.start [1/16] %v929, 128
    %3400 = vxpose.xlu0.b32.cont [2/16] 0.0, 128
    %3401 = vxpose.xlu0.b32.cont [3/16] 0.0, 128
    %3402 = vxpose.xlu0.b32.cont [4/16] 0.0, 128
    %3403 = vxpose.xlu0.b32.cont [5/16] 0.0, 128
    %3404 = vxpose.xlu0.b32.cont [6/16] 0.0, 128
    %3405 = vxpose.xlu0.b32.cont [7/16] 0.0, 128
    %3406 = vxpose.xlu0.b32.cont [8/16] 0.0, 128
    %3407 = vxpose.xlu0.b32.cont [9/16] 0.0, 128
    %3408 = vxpose.xlu0.b32.cont [10/16] 0.0, 128
    %3409 = vxpose.xlu0.b32.cont [11/16] 0.0, 128
    %3410 = vxpose.xlu0.b32.cont [12/16] 0.0, 128
    %3411 = vxpose.xlu0.b32.cont [13/16] 0.0, 128
    %3412 = vxpose.xlu0.b32.cont [14/16] 0.0, 128
    %3413 = vxpose.xlu0.b32.cont [15/16] 0.0, 128
    %3414 = vxpose.xlu0.b32.end [16/16] 0.0, 128
    %v3415 = vpop.trf.xlu0
    %v3416 = vpop.trf.xlu0
    %v3417 = vpop.trf.xlu0
    %v3418 = vpop.trf.xlu0
    %v3419 = vpop.trf.xlu0
    %v3420 = vpop.trf.xlu0
    %v3421 = vpop.trf.xlu0
    %v3422 = vpop.trf.xlu0
    %v3423 = vpop.trf.xlu0
    %v3424 = vpop.trf.xlu0
    %v3425 = vpop.trf.xlu0
    %v3426 = vpop.trf.xlu0
    %v3427 = vpop.trf.xlu0
    %v3428 = vpop.trf.xlu0
    %v3429 = vpop.trf.xlu0
    %v3430 = vpop.trf.xlu0
    %3431 = vxpose.xlu0.b32.start [1/16] %v930, 128
    %3432 = vxpose.xlu0.b32.cont [2/16] 0.0, 128
    %3433 = vxpose.xlu0.b32.cont [3/16] 0.0, 128
    %3434 = vxpose.xlu0.b32.cont [4/16] 0.0, 128
    %3435 = vxpose.xlu0.b32.cont [5/16] 0.0, 128
    %3436 = vxpose.xlu0.b32.cont [6/16] 0.0, 128
    %3437 = vxpose.xlu0.b32.cont [7/16] 0.0, 128
    %3438 = vxpose.xlu0.b32.cont [8/16] 0.0, 128
    %3439 = vxpose.xlu0.b32.cont [9/16] 0.0, 128
    %3440 = vxpose.xlu0.b32.cont [10/16] 0.0, 128
    %3441 = vxpose.xlu0.b32.cont [11/16] 0.0, 128
    %3442 = vxpose.xlu0.b32.cont [12/16] 0.0, 128
    %3443 = vxpose.xlu0.b32.cont [13/16] 0.0, 128
    %3444 = vxpose.xlu0.b32.cont [14/16] 0.0, 128
    %3445 = vxpose.xlu0.b32.cont [15/16] 0.0, 128
    %3446 = vxpose.xlu0.b32.end [16/16] 0.0, 128
    %v3447 = vpop.trf.xlu0
    %v3448 = vpop.trf.xlu0
    %v3449 = vpop.trf.xlu0
    %v3450 = vpop.trf.xlu0
    %v3451 = vpop.trf.xlu0
    %v3452 = vpop.trf.xlu0
    %v3453 = vpop.trf.xlu0
    %v3454 = vpop.trf.xlu0
    %v3455 = vpop.trf.xlu0
    %v3456 = vpop.trf.xlu0
    %v3457 = vpop.trf.xlu0
    %v3458 = vpop.trf.xlu0
    %v3459 = vpop.trf.xlu0
    %v3460 = vpop.trf.xlu0
    %v3461 = vpop.trf.xlu0
    %v3462 = vpop.trf.xlu0
    %3463 = vxpose.xlu0.b32.start [1/16] %v931, 128
    %3464 = vxpose.xlu0.b32.cont [2/16] 0.0, 128
    %3465 = vxpose.xlu0.b32.cont [3/16] 0.0, 128
    %3466 = vxpose.xlu0.b32.cont [4/16] 0.0, 128
    %3467 = vxpose.xlu0.b32.cont [5/16] 0.0, 128
    %3468 = vxpose.xlu0.b32.cont [6/16] 0.0, 128
    %3469 = vxpose.xlu0.b32.cont [7/16] 0.0, 128
    %3470 = vxpose.xlu0.b32.cont [8/16] 0.0, 128
    %3471 = vxpose.xlu0.b32.cont [9/16] 0.0, 128
    %3472 = vxpose.xlu0.b32.cont [10/16] 0.0, 128
    %3473 = vxpose.xlu0.b32.cont [11/16] 0.0, 128
    %3474 = vxpose.xlu0.b32.cont [12/16] 0.0, 128
    %3475 = vxpose.xlu0.b32.cont [13/16] 0.0, 128
    %3476 = vxpose.xlu0.b32.cont [14/16] 0.0, 128
    %3477 = vxpose.xlu0.b32.cont [15/16] 0.0, 128
    %3478 = vxpose.xlu0.b32.end [16/16] 0.0, 128
    %v3479 = vpop.trf.xlu0
    %v3480 = vpop.trf.xlu0
    %v3481 = vpop.trf.xlu0
    %v3482 = vpop.trf.xlu0
    %v3483 = vpop.trf.xlu0
    %v3484 = vpop.trf.xlu0
    %v3485 = vpop.trf.xlu0
    %v3486 = vpop.trf.xlu0
    %v3487 = vpop.trf.xlu0
    %v3488 = vpop.trf.xlu0
    %v3489 = vpop.trf.xlu0
    %v3490 = vpop.trf.xlu0
    %v3491 = vpop.trf.xlu0
    %v3492 = vpop.trf.xlu0
    %v3493 = vpop.trf.xlu0
    %v3494 = vpop.trf.xlu0
    %3495 = vxpose.xlu0.b32.start [1/16] %v932, 128
    %3496 = vxpose.xlu0.b32.cont [2/16] 0.0, 128
    %3497 = vxpose.xlu0.b32.cont [3/16] 0.0, 128
    %3498 = vxpose.xlu0.b32.cont [4/16] 0.0, 128
    %3499 = vxpose.xlu0.b32.cont [5/16] 0.0, 128
    %3500 = vxpose.xlu0.b32.cont [6/16] 0.0, 128
    %3501 = vxpose.xlu0.b32.cont [7/16] 0.0, 128
    %3502 = vxpose.xlu0.b32.cont [8/16] 0.0, 128
    %3503 = vxpose.xlu0.b32.cont [9/16] 0.0, 128
    %3504 = vxpose.xlu0.b32.cont [10/16] 0.0, 128
    %3505 = vxpose.xlu0.b32.cont [11/16] 0.0, 128
    %3506 = vxpose.xlu0.b32.cont [12/16] 0.0, 128
    %3507 = vxpose.xlu0.b32.cont [13/16] 0.0, 128
    %3508 = vxpose.xlu0.b32.cont [14/16] 0.0, 128
    %3509 = vxpose.xlu0.b32.cont [15/16] 0.0, 128
    %3510 = vxpose.xlu0.b32.end [16/16] 0.0, 128
    %v3511 = vpop.trf.xlu0
    %v3512 = vpop.trf.xlu0
    %v3513 = vpop.trf.xlu0
    %v3514 = vpop.trf.xlu0
    %v3515 = vpop.trf.xlu0
    %v3516 = vpop.trf.xlu0
    %v3517 = vpop.trf.xlu0
    %v3518 = vpop.trf.xlu0
    %v3519 = vpop.trf.xlu0
    %v3520 = vpop.trf.xlu0
    %v3521 = vpop.trf.xlu0
    %v3522 = vpop.trf.xlu0
    %v3523 = vpop.trf.xlu0
    %v3524 = vpop.trf.xlu0
    %v3525 = vpop.trf.xlu0
    %v3526 = vpop.trf.xlu0
    %3527 = vxpose.xlu0.b32.start [1/16] %v933, 128
    %3528 = vxpose.xlu0.b32.cont [2/16] 0.0, 128
    %3529 = vxpose.xlu0.b32.cont [3/16] 0.0, 128
    %3530 = vxpose.xlu0.b32.cont [4/16] 0.0, 128
    %3531 = vxpose.xlu0.b32.cont [5/16] 0.0, 128
    %3532 = vxpose.xlu0.b32.cont [6/16] 0.0, 128
    %3533 = vxpose.xlu0.b32.cont [7/16] 0.0, 128
    %3534 = vxpose.xlu0.b32.cont [8/16] 0.0, 128
    %3535 = vxpose.xlu0.b32.cont [9/16] 0.0, 128
    %3536 = vxpose.xlu0.b32.cont [10/16] 0.0, 128
    %3537 = vxpose.xlu0.b32.cont [11/16] 0.0, 128
    %3538 = vxpose.xlu0.b32.cont [12/16] 0.0, 128
    %3539 = vxpose.xlu0.b32.cont [13/16] 0.0, 128
    %3540 = vxpose.xlu0.b32.cont [14/16] 0.0, 128
    %3541 = vxpose.xlu0.b32.cont [15/16] 0.0, 128
    %3542 = vxpose.xlu0.b32.end [16/16] 0.0, 128
    %v3543 = vpop.trf.xlu0
    %v3544 = vpop.trf.xlu0
    %v3545 = vpop.trf.xlu0
    %v3546 = vpop.trf.xlu0
    %v3547 = vpop.trf.xlu0
    %v3548 = vpop.trf.xlu0
    %v3549 = vpop.trf.xlu0
    %v3550 = vpop.trf.xlu0
    %v3551 = vpop.trf.xlu0
    %v3552 = vpop.trf.xlu0
    %v3553 = vpop.trf.xlu0
    %v3554 = vpop.trf.xlu0
    %v3555 = vpop.trf.xlu0
    %v3556 = vpop.trf.xlu0
    %v3557 = vpop.trf.xlu0
    %v3558 = vpop.trf.xlu0
    %3559 = vxpose.xlu0.b32.start [1/16] %v934, 128
    %3560 = vxpose.xlu0.b32.cont [2/16] 0.0, 128
    %3561 = vxpose.xlu0.b32.cont [3/16] 0.0, 128
    %3562 = vxpose.xlu0.b32.cont [4/16] 0.0, 128
    %3563 = vxpose.xlu0.b32.cont [5/16] 0.0, 128
    %3564 = vxpose.xlu0.b32.cont [6/16] 0.0, 128
    %3565 = vxpose.xlu0.b32.cont [7/16] 0.0, 128
    %3566 = vxpose.xlu0.b32.cont [8/16] 0.0, 128
    %3567 = vxpose.xlu0.b32.cont [9/16] 0.0, 128
    %3568 = vxpose.xlu0.b32.cont [10/16] 0.0, 128
    %3569 = vxpose.xlu0.b32.cont [11/16] 0.0, 128
    %3570 = vxpose.xlu0.b32.cont [12/16] 0.0, 128
    %3571 = vxpose.xlu0.b32.cont [13/16] 0.0, 128
    %3572 = vxpose.xlu0.b32.cont [14/16] 0.0, 128
    %3573 = vxpose.xlu0.b32.cont [15/16] 0.0, 128
    %3574 = vxpose.xlu0.b32.end [16/16] 0.0, 128
    %v3575 = vpop.trf.xlu0
    %v3576 = vpop.trf.xlu0
    %v3577 = vpop.trf.xlu0
    %v3578 = vpop.trf.xlu0
    %v3579 = vpop.trf.xlu0
    %v3580 = vpop.trf.xlu0
    %v3581 = vpop.trf.xlu0
    %v3582 = vpop.trf.xlu0
    %v3583 = vpop.trf.xlu0
    %v3584 = vpop.trf.xlu0
    %v3585 = vpop.trf.xlu0
    %v3586 = vpop.trf.xlu0
    %v3587 = vpop.trf.xlu0
    %v3588 = vpop.trf.xlu0
    %v3589 = vpop.trf.xlu0
    %v3590 = vpop.trf.xlu0
    %3591 = vxpose.xlu0.b32.start [1/16] %v1063, 128
    %3592 = vxpose.xlu0.b32.cont [2/16] 0.0, 128
    %3593 = vxpose.xlu0.b32.cont [3/16] 0.0, 128
    %3594 = vxpose.xlu0.b32.cont [4/16] 0.0, 128
    %3595 = vxpose.xlu0.b32.cont [5/16] 0.0, 128
    %3596 = vxpose.xlu0.b32.cont [6/16] 0.0, 128
    %3597 = vxpose.xlu0.b32.cont [7/16] 0.0, 128
    %3598 = vxpose.xlu0.b32.cont [8/16] 0.0, 128
    %3599 = vxpose.xlu0.b32.cont [9/16] 0.0, 128
    %3600 = vxpose.xlu0.b32.cont [10/16] 0.0, 128
    %3601 = vxpose.xlu0.b32.cont [11/16] 0.0, 128
    %3602 = vxpose.xlu0.b32.cont [12/16] 0.0, 128
    %3603 = vxpose.xlu0.b32.cont [13/16] 0.0, 128
    %3604 = vxpose.xlu0.b32.cont [14/16] 0.0, 128
    %3605 = vxpose.xlu0.b32.cont [15/16] 0.0, 128
    %3606 = vxpose.xlu0.b32.end [16/16] 0.0, 128
    %v3607 = vpop.trf.xlu0
    %v3608 = vpop.trf.xlu0
    %v3609 = vpop.trf.xlu0
    %v3610 = vpop.trf.xlu0
    %v3611 = vpop.trf.xlu0
    %v3612 = vpop.trf.xlu0
    %v3613 = vpop.trf.xlu0
    %v3614 = vpop.trf.xlu0
    %v3615 = vpop.trf.xlu0
    %v3616 = vpop.trf.xlu0
    %v3617 = vpop.trf.xlu0
    %v3618 = vpop.trf.xlu0
    %v3619 = vpop.trf.xlu0
    %v3620 = vpop.trf.xlu0
    %v3621 = vpop.trf.xlu0
    %v3622 = vpop.trf.xlu0
    %3623 = vxpose.xlu0.b32.start [1/16] %v1064, 128
    %3624 = vxpose.xlu0.b32.cont [2/16] 0.0, 128
    %3625 = vxpose.xlu0.b32.cont [3/16] 0.0, 128
    %3626 = vxpose.xlu0.b32.cont [4/16] 0.0, 128
    %3627 = vxpose.xlu0.b32.cont [5/16] 0.0, 128
    %3628 = vxpose.xlu0.b32.cont [6/16] 0.0, 128
    %3629 = vxpose.xlu0.b32.cont [7/16] 0.0, 128
    %3630 = vxpose.xlu0.b32.cont [8/16] 0.0, 128
    %3631 = vxpose.xlu0.b32.cont [9/16] 0.0, 128
    %3632 = vxpose.xlu0.b32.cont [10/16] 0.0, 128
    %3633 = vxpose.xlu0.b32.cont [11/16] 0.0, 128
    %3634 = vxpose.xlu0.b32.cont [12/16] 0.0, 128
    %3635 = vxpose.xlu0.b32.cont [13/16] 0.0, 128
    %3636 = vxpose.xlu0.b32.cont [14/16] 0.0, 128
    %3637 = vxpose.xlu0.b32.cont [15/16] 0.0, 128
    %3638 = vxpose.xlu0.b32.end [16/16] 0.0, 128
    %v3639 = vpop.trf.xlu0
    %v3640 = vpop.trf.xlu0
    %v3641 = vpop.trf.xlu0
    %v3642 = vpop.trf.xlu0
    %v3643 = vpop.trf.xlu0
    %v3644 = vpop.trf.xlu0
    %v3645 = vpop.trf.xlu0
    %v3646 = vpop.trf.xlu0
    %v3647 = vpop.trf.xlu0
    %v3648 = vpop.trf.xlu0
    %v3649 = vpop.trf.xlu0
    %v3650 = vpop.trf.xlu0
    %v3651 = vpop.trf.xlu0
    %v3652 = vpop.trf.xlu0
    %v3653 = vpop.trf.xlu0
    %v3654 = vpop.trf.xlu0
    %3655 = vxpose.xlu0.b32.start [1/16] %v1065, 128
    %3656 = vxpose.xlu0.b32.cont [2/16] 0.0, 128
    %3657 = vxpose.xlu0.b32.cont [3/16] 0.0, 128
    %3658 = vxpose.xlu0.b32.cont [4/16] 0.0, 128
    %3659 = vxpose.xlu0.b32.cont [5/16] 0.0, 128
    %3660 = vxpose.xlu0.b32.cont [6/16] 0.0, 128
    %3661 = vxpose.xlu0.b32.cont [7/16] 0.0, 128
    %3662 = vxpose.xlu0.b32.cont [8/16] 0.0, 128
    %3663 = vxpose.xlu0.b32.cont [9/16] 0.0, 128
    %3664 = vxpose.xlu0.b32.cont [10/16] 0.0, 128
    %3665 = vxpose.xlu0.b32.cont [11/16] 0.0, 128
    %3666 = vxpose.xlu0.b32.cont [12/16] 0.0, 128
    %3667 = vxpose.xlu0.b32.cont [13/16] 0.0, 128
    %3668 = vxpose.xlu0.b32.cont [14/16] 0.0, 128
    %3669 = vxpose.xlu0.b32.cont [15/16] 0.0, 128
    %3670 = vxpose.xlu0.b32.end [16/16] 0.0, 128
    %v3671 = vpop.trf.xlu0
    %v3672 = vpop.trf.xlu0
    %v3673 = vpop.trf.xlu0
    %v3674 = vpop.trf.xlu0
    %v3675 = vpop.trf.xlu0
    %v3676 = vpop.trf.xlu0
    %v3677 = vpop.trf.xlu0
    %v3678 = vpop.trf.xlu0
    %v3679 = vpop.trf.xlu0
    %v3680 = vpop.trf.xlu0
    %v3681 = vpop.trf.xlu0
    %v3682 = vpop.trf.xlu0
    %v3683 = vpop.trf.xlu0
    %v3684 = vpop.trf.xlu0
    %v3685 = vpop.trf.xlu0
    %v3686 = vpop.trf.xlu0
    %3687 = vxpose.xlu0.b32.start [1/16] %v1066, 128
    %3688 = vxpose.xlu0.b32.cont [2/16] 0.0, 128
    %3689 = vxpose.xlu0.b32.cont [3/16] 0.0, 128
    %3690 = vxpose.xlu0.b32.cont [4/16] 0.0, 128
    %3691 = vxpose.xlu0.b32.cont [5/16] 0.0, 128
    %3692 = vxpose.xlu0.b32.cont [6/16] 0.0, 128
    %3693 = vxpose.xlu0.b32.cont [7/16] 0.0, 128
    %3694 = vxpose.xlu0.b32.cont [8/16] 0.0, 128
    %3695 = vxpose.xlu0.b32.cont [9/16] 0.0, 128
    %3696 = vxpose.xlu0.b32.cont [10/16] 0.0, 128
    %3697 = vxpose.xlu0.b32.cont [11/16] 0.0, 128
    %3698 = vxpose.xlu0.b32.cont [12/16] 0.0, 128
    %3699 = vxpose.xlu0.b32.cont [13/16] 0.0, 128
    %3700 = vxpose.xlu0.b32.cont [14/16] 0.0, 128
    %3701 = vxpose.xlu0.b32.cont [15/16] 0.0, 128
    %3702 = vxpose.xlu0.b32.end [16/16] 0.0, 128
    %v3703 = vpop.trf.xlu0
    %v3704 = vpop.trf.xlu0
    %v3705 = vpop.trf.xlu0
    %v3706 = vpop.trf.xlu0
    %v3707 = vpop.trf.xlu0
    %v3708 = vpop.trf.xlu0
    %v3709 = vpop.trf.xlu0
    %v3710 = vpop.trf.xlu0
    %v3711 = vpop.trf.xlu0
    %v3712 = vpop.trf.xlu0
    %v3713 = vpop.trf.xlu0
    %v3714 = vpop.trf.xlu0
    %v3715 = vpop.trf.xlu0
    %v3716 = vpop.trf.xlu0
    %v3717 = vpop.trf.xlu0
    %v3718 = vpop.trf.xlu0
    %3719 = vxpose.xlu0.b32.start [1/16] %v1067, 128
    %3720 = vxpose.xlu0.b32.cont [2/16] 0.0, 128
    %3721 = vxpose.xlu0.b32.cont [3/16] 0.0, 128
    %3722 = vxpose.xlu0.b32.cont [4/16] 0.0, 128
    %3723 = vxpose.xlu0.b32.cont [5/16] 0.0, 128
    %3724 = vxpose.xlu0.b32.cont [6/16] 0.0, 128
    %3725 = vxpose.xlu0.b32.cont [7/16] 0.0, 128
    %3726 = vxpose.xlu0.b32.cont [8/16] 0.0, 128
    %3727 = vxpose.xlu0.b32.cont [9/16] 0.0, 128
    %3728 = vxpose.xlu0.b32.cont [10/16] 0.0, 128
    %3729 = vxpose.xlu0.b32.cont [11/16] 0.0, 128
    %3730 = vxpose.xlu0.b32.cont [12/16] 0.0, 128
    %3731 = vxpose.xlu0.b32.cont [13/16] 0.0, 128
    %3732 = vxpose.xlu0.b32.cont [14/16] 0.0, 128
    %3733 = vxpose.xlu0.b32.cont [15/16] 0.0, 128
    %3734 = vxpose.xlu0.b32.end [16/16] 0.0, 128
    %v3735 = vpop.trf.xlu0
    %v3736 = vpop.trf.xlu0
    %v3737 = vpop.trf.xlu0
    %v3738 = vpop.trf.xlu0
    %v3739 = vpop.trf.xlu0
    %v3740 = vpop.trf.xlu0
    %v3741 = vpop.trf.xlu0
    %v3742 = vpop.trf.xlu0
    %v3743 = vpop.trf.xlu0
    %v3744 = vpop.trf.xlu0
    %v3745 = vpop.trf.xlu0
    %v3746 = vpop.trf.xlu0
    %v3747 = vpop.trf.xlu0
    %v3748 = vpop.trf.xlu0
    %v3749 = vpop.trf.xlu0
    %v3750 = vpop.trf.xlu0
    %3751 = vxpose.xlu0.b32.start [1/16] %v1068, 128
    %3752 = vxpose.xlu0.b32.cont [2/16] 0.0, 128
    %3753 = vxpose.xlu0.b32.cont [3/16] 0.0, 128
    %3754 = vxpose.xlu0.b32.cont [4/16] 0.0, 128
    %3755 = vxpose.xlu0.b32.cont [5/16] 0.0, 128
    %3756 = vxpose.xlu0.b32.cont [6/16] 0.0, 128
    %3757 = vxpose.xlu0.b32.cont [7/16] 0.0, 128
    %3758 = vxpose.xlu0.b32.cont [8/16] 0.0, 128
    %3759 = vxpose.xlu0.b32.cont [9/16] 0.0, 128
    %3760 = vxpose.xlu0.b32.cont [10/16] 0.0, 128
    %3761 = vxpose.xlu0.b32.cont [11/16] 0.0, 128
    %3762 = vxpose.xlu0.b32.cont [12/16] 0.0, 128
    %3763 = vxpose.xlu0.b32.cont [13/16] 0.0, 128
    %3764 = vxpose.xlu0.b32.cont [14/16] 0.0, 128
    %3765 = vxpose.xlu0.b32.cont [15/16] 0.0, 128
    %3766 = vxpose.xlu0.b32.end [16/16] 0.0, 128
    %v3767 = vpop.trf.xlu0
    %v3768 = vpop.trf.xlu0
    %v3769 = vpop.trf.xlu0
    %v3770 = vpop.trf.xlu0
    %v3771 = vpop.trf.xlu0
    %v3772 = vpop.trf.xlu0
    %v3773 = vpop.trf.xlu0
    %v3774 = vpop.trf.xlu0
    %v3775 = vpop.trf.xlu0
    %v3776 = vpop.trf.xlu0
    %v3777 = vpop.trf.xlu0
    %v3778 = vpop.trf.xlu0
    %v3779 = vpop.trf.xlu0
    %v3780 = vpop.trf.xlu0
    %v3781 = vpop.trf.xlu0
    %v3782 = vpop.trf.xlu0
    %3783 = vxpose.xlu0.b32.start [1/16] %v1069, 128
    %3784 = vxpose.xlu0.b32.cont [2/16] 0.0, 128
    %3785 = vxpose.xlu0.b32.cont [3/16] 0.0, 128
    %3786 = vxpose.xlu0.b32.cont [4/16] 0.0, 128
    %3787 = vxpose.xlu0.b32.cont [5/16] 0.0, 128
    %3788 = vxpose.xlu0.b32.cont [6/16] 0.0, 128
    %3789 = vxpose.xlu0.b32.cont [7/16] 0.0, 128
    %3790 = vxpose.xlu0.b32.cont [8/16] 0.0, 128
    %3791 = vxpose.xlu0.b32.cont [9/16] 0.0, 128
    %3792 = vxpose.xlu0.b32.cont [10/16] 0.0, 128
    %3793 = vxpose.xlu0.b32.cont [11/16] 0.0, 128
    %3794 = vxpose.xlu0.b32.cont [12/16] 0.0, 128
    %3795 = vxpose.xlu0.b32.cont [13/16] 0.0, 128
    %3796 = vxpose.xlu0.b32.cont [14/16] 0.0, 128
    %3797 = vxpose.xlu0.b32.cont [15/16] 0.0, 128
    %3798 = vxpose.xlu0.b32.end [16/16] 0.0, 128
    %v3799 = vpop.trf.xlu0
    %v3800 = vpop.trf.xlu0
    %v3801 = vpop.trf.xlu0
    %v3802 = vpop.trf.xlu0
    %v3803 = vpop.trf.xlu0
    %v3804 = vpop.trf.xlu0
    %v3805 = vpop.trf.xlu0
    %v3806 = vpop.trf.xlu0
    %v3807 = vpop.trf.xlu0
    %v3808 = vpop.trf.xlu0
    %v3809 = vpop.trf.xlu0
    %v3810 = vpop.trf.xlu0
    %v3811 = vpop.trf.xlu0
    %v3812 = vpop.trf.xlu0
    %v3813 = vpop.trf.xlu0
    %v3814 = vpop.trf.xlu0
    %3815 = vxpose.xlu0.b32.start [1/16] %v1070, 128
    %3816 = vxpose.xlu0.b32.cont [2/16] 0.0, 128
    %3817 = vxpose.xlu0.b32.cont [3/16] 0.0, 128
    %3818 = vxpose.xlu0.b32.cont [4/16] 0.0, 128
    %3819 = vxpose.xlu0.b32.cont [5/16] 0.0, 128
    %3820 = vxpose.xlu0.b32.cont [6/16] 0.0, 128
    %3821 = vxpose.xlu0.b32.cont [7/16] 0.0, 128
    %3822 = vxpose.xlu0.b32.cont [8/16] 0.0, 128
    %3823 = vxpose.xlu0.b32.cont [9/16] 0.0, 128
    %3824 = vxpose.xlu0.b32.cont [10/16] 0.0, 128
    %3825 = vxpose.xlu0.b32.cont [11/16] 0.0, 128
    %3826 = vxpose.xlu0.b32.cont [12/16] 0.0, 128
    %3827 = vxpose.xlu0.b32.cont [13/16] 0.0, 128
    %3828 = vxpose.xlu0.b32.cont [14/16] 0.0, 128
    %3829 = vxpose.xlu0.b32.cont [15/16] 0.0, 128
    %3830 = vxpose.xlu0.b32.end [16/16] 0.0, 128
    %v3831 = vpop.trf.xlu0
    %v3832 = vpop.trf.xlu0
    %v3833 = vpop.trf.xlu0
    %v3834 = vpop.trf.xlu0
    %v3835 = vpop.trf.xlu0
    %v3836 = vpop.trf.xlu0
    %v3837 = vpop.trf.xlu0
    %v3838 = vpop.trf.xlu0
    %v3839 = vpop.trf.xlu0
    %v3840 = vpop.trf.xlu0
    %v3841 = vpop.trf.xlu0
    %v3842 = vpop.trf.xlu0
    %v3843 = vpop.trf.xlu0
    %v3844 = vpop.trf.xlu0
    %v3845 = vpop.trf.xlu0
    %v3846 = vpop.trf.xlu0
    %3847 = vxpose.xlu0.b32.start [1/16] %v1199, 128
    %3848 = vxpose.xlu0.b32.cont [2/16] 0.0, 128
    %3849 = vxpose.xlu0.b32.cont [3/16] 0.0, 128
    %3850 = vxpose.xlu0.b32.cont [4/16] 0.0, 128
    %3851 = vxpose.xlu0.b32.cont [5/16] 0.0, 128
    %3852 = vxpose.xlu0.b32.cont [6/16] 0.0, 128
    %3853 = vxpose.xlu0.b32.cont [7/16] 0.0, 128
    %3854 = vxpose.xlu0.b32.cont [8/16] 0.0, 128
    %3855 = vxpose.xlu0.b32.cont [9/16] 0.0, 128
    %3856 = vxpose.xlu0.b32.cont [10/16] 0.0, 128
    %3857 = vxpose.xlu0.b32.cont [11/16] 0.0, 128
    %3858 = vxpose.xlu0.b32.cont [12/16] 0.0, 128
    %3859 = vxpose.xlu0.b32.cont [13/16] 0.0, 128
    %3860 = vxpose.xlu0.b32.cont [14/16] 0.0, 128
    %3861 = vxpose.xlu0.b32.cont [15/16] 0.0, 128
    %3862 = vxpose.xlu0.b32.end [16/16] 0.0, 128
    %v3863 = vpop.trf.xlu0
    %v3864 = vpop.trf.xlu0
    %v3865 = vpop.trf.xlu0
    %v3866 = vpop.trf.xlu0
    %v3867 = vpop.trf.xlu0
    %v3868 = vpop.trf.xlu0
    %v3869 = vpop.trf.xlu0
    %v3870 = vpop.trf.xlu0
    %v3871 = vpop.trf.xlu0
    %v3872 = vpop.trf.xlu0
    %v3873 = vpop.trf.xlu0
    %v3874 = vpop.trf.xlu0
    %v3875 = vpop.trf.xlu0
    %v3876 = vpop.trf.xlu0
    %v3877 = vpop.trf.xlu0
    %v3878 = vpop.trf.xlu0
    %3879 = vxpose.xlu0.b32.start [1/16] %v1200, 128
    %3880 = vxpose.xlu0.b32.cont [2/16] 0.0, 128
    %3881 = vxpose.xlu0.b32.cont [3/16] 0.0, 128
    %3882 = vxpose.xlu0.b32.cont [4/16] 0.0, 128
    %3883 = vxpose.xlu0.b32.cont [5/16] 0.0, 128
    %3884 = vxpose.xlu0.b32.cont [6/16] 0.0, 128
    %3885 = vxpose.xlu0.b32.cont [7/16] 0.0, 128
    %3886 = vxpose.xlu0.b32.cont [8/16] 0.0, 128
    %3887 = vxpose.xlu0.b32.cont [9/16] 0.0, 128
    %3888 = vxpose.xlu0.b32.cont [10/16] 0.0, 128
    %3889 = vxpose.xlu0.b32.cont [11/16] 0.0, 128
    %3890 = vxpose.xlu0.b32.cont [12/16] 0.0, 128
    %3891 = vxpose.xlu0.b32.cont [13/16] 0.0, 128
    %3892 = vxpose.xlu0.b32.cont [14/16] 0.0, 128
    %3893 = vxpose.xlu0.b32.cont [15/16] 0.0, 128
    %3894 = vxpose.xlu0.b32.end [16/16] 0.0, 128
    %v3895 = vpop.trf.xlu0
    %v3896 = vpop.trf.xlu0
    %v3897 = vpop.trf.xlu0
    %v3898 = vpop.trf.xlu0
    %v3899 = vpop.trf.xlu0
    %v3900 = vpop.trf.xlu0
    %v3901 = vpop.trf.xlu0
    %v3902 = vpop.trf.xlu0
    %v3903 = vpop.trf.xlu0
    %v3904 = vpop.trf.xlu0
    %v3905 = vpop.trf.xlu0
    %v3906 = vpop.trf.xlu0
    %v3907 = vpop.trf.xlu0
    %v3908 = vpop.trf.xlu0
    %v3909 = vpop.trf.xlu0
    %v3910 = vpop.trf.xlu0
    %3911 = vxpose.xlu0.b32.start [1/16] %v1201, 128
    %3912 = vxpose.xlu0.b32.cont [2/16] 0.0, 128
    %3913 = vxpose.xlu0.b32.cont [3/16] 0.0, 128
    %3914 = vxpose.xlu0.b32.cont [4/16] 0.0, 128
    %3915 = vxpose.xlu0.b32.cont [5/16] 0.0, 128
    %3916 = vxpose.xlu0.b32.cont [6/16] 0.0, 128
    %3917 = vxpose.xlu0.b32.cont [7/16] 0.0, 128
    %3918 = vxpose.xlu0.b32.cont [8/16] 0.0, 128
    %3919 = vxpose.xlu0.b32.cont [9/16] 0.0, 128
    %3920 = vxpose.xlu0.b32.cont [10/16] 0.0, 128
    %3921 = vxpose.xlu0.b32.cont [11/16] 0.0, 128
    %3922 = vxpose.xlu0.b32.cont [12/16] 0.0, 128
    %3923 = vxpose.xlu0.b32.cont [13/16] 0.0, 128
    %3924 = vxpose.xlu0.b32.cont [14/16] 0.0, 128
    %3925 = vxpose.xlu0.b32.cont [15/16] 0.0, 128
    %3926 = vxpose.xlu0.b32.end [16/16] 0.0, 128
    %v3927 = vpop.trf.xlu0
    %v3928 = vpop.trf.xlu0
    %v3929 = vpop.trf.xlu0
    %v3930 = vpop.trf.xlu0
    %v3931 = vpop.trf.xlu0
    %v3932 = vpop.trf.xlu0
    %v3933 = vpop.trf.xlu0
    %v3934 = vpop.trf.xlu0
    %v3935 = vpop.trf.xlu0
    %v3936 = vpop.trf.xlu0
    %v3937 = vpop.trf.xlu0
    %v3938 = vpop.trf.xlu0
    %v3939 = vpop.trf.xlu0
    %v3940 = vpop.trf.xlu0
    %v3941 = vpop.trf.xlu0
    %v3942 = vpop.trf.xlu0
    %3943 = vxpose.xlu0.b32.start [1/16] %v1202, 128
    %3944 = vxpose.xlu0.b32.cont [2/16] 0.0, 128
    %3945 = vxpose.xlu0.b32.cont [3/16] 0.0, 128
    %3946 = vxpose.xlu0.b32.cont [4/16] 0.0, 128
    %3947 = vxpose.xlu0.b32.cont [5/16] 0.0, 128
    %3948 = vxpose.xlu0.b32.cont [6/16] 0.0, 128
    %3949 = vxpose.xlu0.b32.cont [7/16] 0.0, 128
    %3950 = vxpose.xlu0.b32.cont [8/16] 0.0, 128
    %3951 = vxpose.xlu0.b32.cont [9/16] 0.0, 128
    %3952 = vxpose.xlu0.b32.cont [10/16] 0.0, 128
    %3953 = vxpose.xlu0.b32.cont [11/16] 0.0, 128
    %3954 = vxpose.xlu0.b32.cont [12/16] 0.0, 128
    %3955 = vxpose.xlu0.b32.cont [13/16] 0.0, 128
    %3956 = vxpose.xlu0.b32.cont [14/16] 0.0, 128
    %3957 = vxpose.xlu0.b32.cont [15/16] 0.0, 128
    %3958 = vxpose.xlu0.b32.end [16/16] 0.0, 128
    %v3959 = vpop.trf.xlu0
    %v3960 = vpop.trf.xlu0
    %v3961 = vpop.trf.xlu0
    %v3962 = vpop.trf.xlu0
    %v3963 = vpop.trf.xlu0
    %v3964 = vpop.trf.xlu0
    %v3965 = vpop.trf.xlu0
    %v3966 = vpop.trf.xlu0
    %v3967 = vpop.trf.xlu0
    %v3968 = vpop.trf.xlu0
    %v3969 = vpop.trf.xlu0
    %v3970 = vpop.trf.xlu0
    %v3971 = vpop.trf.xlu0
    %v3972 = vpop.trf.xlu0
    %v3973 = vpop.trf.xlu0
    %v3974 = vpop.trf.xlu0
    %3975 = vxpose.xlu0.b32.start [1/16] %v1203, 128
    %3976 = vxpose.xlu0.b32.cont [2/16] 0.0, 128
    %3977 = vxpose.xlu0.b32.cont [3/16] 0.0, 128
    %3978 = vxpose.xlu0.b32.cont [4/16] 0.0, 128
    %3979 = vxpose.xlu0.b32.cont [5/16] 0.0, 128
    %3980 = vxpose.xlu0.b32.cont [6/16] 0.0, 128
    %3981 = vxpose.xlu0.b32.cont [7/16] 0.0, 128
    %3982 = vxpose.xlu0.b32.cont [8/16] 0.0, 128
    %3983 = vxpose.xlu0.b32.cont [9/16] 0.0, 128
    %3984 = vxpose.xlu0.b32.cont [10/16] 0.0, 128
    %3985 = vxpose.xlu0.b32.cont [11/16] 0.0, 128
    %3986 = vxpose.xlu0.b32.cont [12/16] 0.0, 128
    %3987 = vxpose.xlu0.b32.cont [13/16] 0.0, 128
    %3988 = vxpose.xlu0.b32.cont [14/16] 0.0, 128
    %3989 = vxpose.xlu0.b32.cont [15/16] 0.0, 128
    %3990 = vxpose.xlu0.b32.end [16/16] 0.0, 128
    %v3991 = vpop.trf.xlu0
    %v3992 = vpop.trf.xlu0
    %v3993 = vpop.trf.xlu0
    %v3994 = vpop.trf.xlu0
    %v3995 = vpop.trf.xlu0
    %v3996 = vpop.trf.xlu0
    %v3997 = vpop.trf.xlu0
    %v3998 = vpop.trf.xlu0
    %v3999 = vpop.trf.xlu0
    %v4000 = vpop.trf.xlu0
    %v4001 = vpop.trf.xlu0
    %v4002 = vpop.trf.xlu0
    %v4003 = vpop.trf.xlu0
    %v4004 = vpop.trf.xlu0
    %v4005 = vpop.trf.xlu0
    %v4006 = vpop.trf.xlu0
    %4007 = vxpose.xlu0.b32.start [1/16] %v1204, 128
    %4008 = vxpose.xlu0.b32.cont [2/16] 0.0, 128
    %4009 = vxpose.xlu0.b32.cont [3/16] 0.0, 128
    %4010 = vxpose.xlu0.b32.cont [4/16] 0.0, 128
    %4011 = vxpose.xlu0.b32.cont [5/16] 0.0, 128
    %4012 = vxpose.xlu0.b32.cont [6/16] 0.0, 128
    %4013 = vxpose.xlu0.b32.cont [7/16] 0.0, 128
    %4014 = vxpose.xlu0.b32.cont [8/16] 0.0, 128
    %4015 = vxpose.xlu0.b32.cont [9/16] 0.0, 128
    %4016 = vxpose.xlu0.b32.cont [10/16] 0.0, 128
    %4017 = vxpose.xlu0.b32.cont [11/16] 0.0, 128
    %4018 = vxpose.xlu0.b32.cont [12/16] 0.0, 128
    %4019 = vxpose.xlu0.b32.cont [13/16] 0.0, 128
    %4020 = vxpose.xlu0.b32.cont [14/16] 0.0, 128
    %4021 = vxpose.xlu0.b32.cont [15/16] 0.0, 128
    %4022 = vxpose.xlu0.b32.end [16/16] 0.0, 128
    %v4023 = vpop.trf.xlu0
    %v4024 = vpop.trf.xlu0
    %v4025 = vpop.trf.xlu0
    %v4026 = vpop.trf.xlu0
    %v4027 = vpop.trf.xlu0
    %v4028 = vpop.trf.xlu0
    %v4029 = vpop.trf.xlu0
    %v4030 = vpop.trf.xlu0
    %v4031 = vpop.trf.xlu0
    %v4032 = vpop.trf.xlu0
    %v4033 = vpop.trf.xlu0
    %v4034 = vpop.trf.xlu0
    %v4035 = vpop.trf.xlu0
    %v4036 = vpop.trf.xlu0
    %v4037 = vpop.trf.xlu0
    %v4038 = vpop.trf.xlu0
    %4039 = vxpose.xlu0.b32.start [1/16] %v1205, 128
    %4040 = vxpose.xlu0.b32.cont [2/16] 0.0, 128
    %4041 = vxpose.xlu0.b32.cont [3/16] 0.0, 128
    %4042 = vxpose.xlu0.b32.cont [4/16] 0.0, 128
    %4043 = vxpose.xlu0.b32.cont [5/16] 0.0, 128
    %4044 = vxpose.xlu0.b32.cont [6/16] 0.0, 128
    %4045 = vxpose.xlu0.b32.cont [7/16] 0.0, 128
    %4046 = vxpose.xlu0.b32.cont [8/16] 0.0, 128
    %4047 = vxpose.xlu0.b32.cont [9/16] 0.0, 128
    %4048 = vxpose.xlu0.b32.cont [10/16] 0.0, 128
    %4049 = vxpose.xlu0.b32.cont [11/16] 0.0, 128
    %4050 = vxpose.xlu0.b32.cont [12/16] 0.0, 128
    %4051 = vxpose.xlu0.b32.cont [13/16] 0.0, 128
    %4052 = vxpose.xlu0.b32.cont [14/16] 0.0, 128
    %4053 = vxpose.xlu0.b32.cont [15/16] 0.0, 128
    %4054 = vxpose.xlu0.b32.end [16/16] 0.0, 128
    %v4055 = vpop.trf.xlu0
    %v4056 = vpop.trf.xlu0
    %v4057 = vpop.trf.xlu0
    %v4058 = vpop.trf.xlu0
    %v4059 = vpop.trf.xlu0
    %v4060 = vpop.trf.xlu0
    %v4061 = vpop.trf.xlu0
    %v4062 = vpop.trf.xlu0
    %v4063 = vpop.trf.xlu0
    %v4064 = vpop.trf.xlu0
    %v4065 = vpop.trf.xlu0
    %v4066 = vpop.trf.xlu0
    %v4067 = vpop.trf.xlu0
    %v4068 = vpop.trf.xlu0
    %v4069 = vpop.trf.xlu0
    %v4070 = vpop.trf.xlu0
    %4071 = vxpose.xlu0.b32.start [1/16] %v1206, 128
    %4072 = vxpose.xlu0.b32.cont [2/16] 0.0, 128
    %4073 = vxpose.xlu0.b32.cont [3/16] 0.0, 128
    %4074 = vxpose.xlu0.b32.cont [4/16] 0.0, 128
    %4075 = vxpose.xlu0.b32.cont [5/16] 0.0, 128
    %4076 = vxpose.xlu0.b32.cont [6/16] 0.0, 128
    %4077 = vxpose.xlu0.b32.cont [7/16] 0.0, 128
    %4078 = vxpose.xlu0.b32.cont [8/16] 0.0, 128
    %4079 = vxpose.xlu0.b32.cont [9/16] 0.0, 128
    %4080 = vxpose.xlu0.b32.cont [10/16] 0.0, 128
    %4081 = vxpose.xlu0.b32.cont [11/16] 0.0, 128
    %4082 = vxpose.xlu0.b32.cont [12/16] 0.0, 128
    %4083 = vxpose.xlu0.b32.cont [13/16] 0.0, 128
    %4084 = vxpose.xlu0.b32.cont [14/16] 0.0, 128
    %4085 = vxpose.xlu0.b32.cont [15/16] 0.0, 128
    %4086 = vxpose.xlu0.b32.end [16/16] 0.0, 128
    %v4087 = vpop.trf.xlu0
    %v4088 = vpop.trf.xlu0
    %v4089 = vpop.trf.xlu0
    %v4090 = vpop.trf.xlu0
    %v4091 = vpop.trf.xlu0
    %v4092 = vpop.trf.xlu0
    %v4093 = vpop.trf.xlu0
    %v4094 = vpop.trf.xlu0
    %v4095 = vpop.trf.xlu0
    %v4096 = vpop.trf.xlu0
    %v4097 = vpop.trf.xlu0
    %v4098 = vpop.trf.xlu0
    %v4099 = vpop.trf.xlu0
    %v4100 = vpop.trf.xlu0
    %v4101 = vpop.trf.xlu0
    %v4102 = vpop.trf.xlu0
    %4103 = vxpose.xlu0.b32.start [1/16] %v1335, 128
    %4104 = vxpose.xlu0.b32.cont [2/16] 0.0, 128
    %4105 = vxpose.xlu0.b32.cont [3/16] 0.0, 128
    %4106 = vxpose.xlu0.b32.cont [4/16] 0.0, 128
    %4107 = vxpose.xlu0.b32.cont [5/16] 0.0, 128
    %4108 = vxpose.xlu0.b32.cont [6/16] 0.0, 128
    %4109 = vxpose.xlu0.b32.cont [7/16] 0.0, 128
    %4110 = vxpose.xlu0.b32.cont [8/16] 0.0, 128
    %4111 = vxpose.xlu0.b32.cont [9/16] 0.0, 128
    %4112 = vxpose.xlu0.b32.cont [10/16] 0.0, 128
    %4113 = vxpose.xlu0.b32.cont [11/16] 0.0, 128
    %4114 = vxpose.xlu0.b32.cont [12/16] 0.0, 128
    %4115 = vxpose.xlu0.b32.cont [13/16] 0.0, 128
    %4116 = vxpose.xlu0.b32.cont [14/16] 0.0, 128
    %4117 = vxpose.xlu0.b32.cont [15/16] 0.0, 128
    %4118 = vxpose.xlu0.b32.end [16/16] 0.0, 128
    %v4119 = vpop.trf.xlu0
    %v4120 = vpop.trf.xlu0
    %v4121 = vpop.trf.xlu0
    %v4122 = vpop.trf.xlu0
    %v4123 = vpop.trf.xlu0
    %v4124 = vpop.trf.xlu0
    %v4125 = vpop.trf.xlu0
    %v4126 = vpop.trf.xlu0
    %v4127 = vpop.trf.xlu0
    %v4128 = vpop.trf.xlu0
    %v4129 = vpop.trf.xlu0
    %v4130 = vpop.trf.xlu0
    %v4131 = vpop.trf.xlu0
    %v4132 = vpop.trf.xlu0
    %v4133 = vpop.trf.xlu0
    %v4134 = vpop.trf.xlu0
    %4135 = vxpose.xlu0.b32.start [1/16] %v1336, 128
    %4136 = vxpose.xlu0.b32.cont [2/16] 0.0, 128
    %4137 = vxpose.xlu0.b32.cont [3/16] 0.0, 128
    %4138 = vxpose.xlu0.b32.cont [4/16] 0.0, 128
    %4139 = vxpose.xlu0.b32.cont [5/16] 0.0, 128
    %4140 = vxpose.xlu0.b32.cont [6/16] 0.0, 128
    %4141 = vxpose.xlu0.b32.cont [7/16] 0.0, 128
    %4142 = vxpose.xlu0.b32.cont [8/16] 0.0, 128
    %4143 = vxpose.xlu0.b32.cont [9/16] 0.0, 128
    %4144 = vxpose.xlu0.b32.cont [10/16] 0.0, 128
    %4145 = vxpose.xlu0.b32.cont [11/16] 0.0, 128
    %4146 = vxpose.xlu0.b32.cont [12/16] 0.0, 128
    %4147 = vxpose.xlu0.b32.cont [13/16] 0.0, 128
    %4148 = vxpose.xlu0.b32.cont [14/16] 0.0, 128
    %4149 = vxpose.xlu0.b32.cont [15/16] 0.0, 128
    %4150 = vxpose.xlu0.b32.end [16/16] 0.0, 128
    %v4151 = vpop.trf.xlu0
    %v4152 = vpop.trf.xlu0
    %v4153 = vpop.trf.xlu0
    %v4154 = vpop.trf.xlu0
    %v4155 = vpop.trf.xlu0
    %v4156 = vpop.trf.xlu0
    %v4157 = vpop.trf.xlu0
    %v4158 = vpop.trf.xlu0
    %v4159 = vpop.trf.xlu0
    %v4160 = vpop.trf.xlu0
    %v4161 = vpop.trf.xlu0
    %v4162 = vpop.trf.xlu0
    %v4163 = vpop.trf.xlu0
    %v4164 = vpop.trf.xlu0
    %v4165 = vpop.trf.xlu0
    %v4166 = vpop.trf.xlu0
    %4167 = vxpose.xlu0.b32.start [1/16] %v1337, 128
    %4168 = vxpose.xlu0.b32.cont [2/16] 0.0, 128
    %4169 = vxpose.xlu0.b32.cont [3/16] 0.0, 128
    %4170 = vxpose.xlu0.b32.cont [4/16] 0.0, 128
    %4171 = vxpose.xlu0.b32.cont [5/16] 0.0, 128
    %4172 = vxpose.xlu0.b32.cont [6/16] 0.0, 128
    %4173 = vxpose.xlu0.b32.cont [7/16] 0.0, 128
    %4174 = vxpose.xlu0.b32.cont [8/16] 0.0, 128
    %4175 = vxpose.xlu0.b32.cont [9/16] 0.0, 128
    %4176 = vxpose.xlu0.b32.cont [10/16] 0.0, 128
    %4177 = vxpose.xlu0.b32.cont [11/16] 0.0, 128
    %4178 = vxpose.xlu0.b32.cont [12/16] 0.0, 128
    %4179 = vxpose.xlu0.b32.cont [13/16] 0.0, 128
    %4180 = vxpose.xlu0.b32.cont [14/16] 0.0, 128
    %4181 = vxpose.xlu0.b32.cont [15/16] 0.0, 128
    %4182 = vxpose.xlu0.b32.end [16/16] 0.0, 128
    %v4183 = vpop.trf.xlu0
    %v4184 = vpop.trf.xlu0
    %v4185 = vpop.trf.xlu0
    %v4186 = vpop.trf.xlu0
    %v4187 = vpop.trf.xlu0
    %v4188 = vpop.trf.xlu0
    %v4189 = vpop.trf.xlu0
    %v4190 = vpop.trf.xlu0
    %v4191 = vpop.trf.xlu0
    %v4192 = vpop.trf.xlu0
    %v4193 = vpop.trf.xlu0
    %v4194 = vpop.trf.xlu0
    %v4195 = vpop.trf.xlu0
    %v4196 = vpop.trf.xlu0
    %v4197 = vpop.trf.xlu0
    %v4198 = vpop.trf.xlu0
    %4199 = vxpose.xlu0.b32.start [1/16] %v1338, 128
    %4200 = vxpose.xlu0.b32.cont [2/16] 0.0, 128
    %4201 = vxpose.xlu0.b32.cont [3/16] 0.0, 128
    %4202 = vxpose.xlu0.b32.cont [4/16] 0.0, 128
    %4203 = vxpose.xlu0.b32.cont [5/16] 0.0, 128
    %4204 = vxpose.xlu0.b32.cont [6/16] 0.0, 128
    %4205 = vxpose.xlu0.b32.cont [7/16] 0.0, 128
    %4206 = vxpose.xlu0.b32.cont [8/16] 0.0, 128
    %4207 = vxpose.xlu0.b32.cont [9/16] 0.0, 128
    %4208 = vxpose.xlu0.b32.cont [10/16] 0.0, 128
    %4209 = vxpose.xlu0.b32.cont [11/16] 0.0, 128
    %4210 = vxpose.xlu0.b32.cont [12/16] 0.0, 128
    %4211 = vxpose.xlu0.b32.cont [13/16] 0.0, 128
    %4212 = vxpose.xlu0.b32.cont [14/16] 0.0, 128
    %4213 = vxpose.xlu0.b32.cont [15/16] 0.0, 128
    %4214 = vxpose.xlu0.b32.end [16/16] 0.0, 128
    %v4215 = vpop.trf.xlu0
    %v4216 = vpop.trf.xlu0
    %v4217 = vpop.trf.xlu0
    %v4218 = vpop.trf.xlu0
    %v4219 = vpop.trf.xlu0
    %v4220 = vpop.trf.xlu0
    %v4221 = vpop.trf.xlu0
    %v4222 = vpop.trf.xlu0
    %v4223 = vpop.trf.xlu0
    %v4224 = vpop.trf.xlu0
    %v4225 = vpop.trf.xlu0
    %v4226 = vpop.trf.xlu0
    %v4227 = vpop.trf.xlu0
    %v4228 = vpop.trf.xlu0
    %v4229 = vpop.trf.xlu0
    %v4230 = vpop.trf.xlu0
    %4231 = vxpose.xlu0.b32.start [1/16] %v1339, 128
    %4232 = vxpose.xlu0.b32.cont [2/16] 0.0, 128
    %4233 = vxpose.xlu0.b32.cont [3/16] 0.0, 128
    %4234 = vxpose.xlu0.b32.cont [4/16] 0.0, 128
    %4235 = vxpose.xlu0.b32.cont [5/16] 0.0, 128
    %4236 = vxpose.xlu0.b32.cont [6/16] 0.0, 128
    %4237 = vxpose.xlu0.b32.cont [7/16] 0.0, 128
    %4238 = vxpose.xlu0.b32.cont [8/16] 0.0, 128
    %4239 = vxpose.xlu0.b32.cont [9/16] 0.0, 128
    %4240 = vxpose.xlu0.b32.cont [10/16] 0.0, 128
    %4241 = vxpose.xlu0.b32.cont [11/16] 0.0, 128
    %4242 = vxpose.xlu0.b32.cont [12/16] 0.0, 128
    %4243 = vxpose.xlu0.b32.cont [13/16] 0.0, 128
    %4244 = vxpose.xlu0.b32.cont [14/16] 0.0, 128
    %4245 = vxpose.xlu0.b32.cont [15/16] 0.0, 128
    %4246 = vxpose.xlu0.b32.end [16/16] 0.0, 128
    %v4247 = vpop.trf.xlu0
    %v4248 = vpop.trf.xlu0
    %v4249 = vpop.trf.xlu0
    %v4250 = vpop.trf.xlu0
    %v4251 = vpop.trf.xlu0
    %v4252 = vpop.trf.xlu0
    %v4253 = vpop.trf.xlu0
    %v4254 = vpop.trf.xlu0
    %v4255 = vpop.trf.xlu0
    %v4256 = vpop.trf.xlu0
    %v4257 = vpop.trf.xlu0
    %v4258 = vpop.trf.xlu0
    %v4259 = vpop.trf.xlu0
    %v4260 = vpop.trf.xlu0
    %v4261 = vpop.trf.xlu0
    %v4262 = vpop.trf.xlu0
    %4263 = vxpose.xlu0.b32.start [1/16] %v1340, 128
    %4264 = vxpose.xlu0.b32.cont [2/16] 0.0, 128
    %4265 = vxpose.xlu0.b32.cont [3/16] 0.0, 128
    %4266 = vxpose.xlu0.b32.cont [4/16] 0.0, 128
    %4267 = vxpose.xlu0.b32.cont [5/16] 0.0, 128
    %4268 = vxpose.xlu0.b32.cont [6/16] 0.0, 128
    %4269 = vxpose.xlu0.b32.cont [7/16] 0.0, 128
    %4270 = vxpose.xlu0.b32.cont [8/16] 0.0, 128
    %4271 = vxpose.xlu0.b32.cont [9/16] 0.0, 128
    %4272 = vxpose.xlu0.b32.cont [10/16] 0.0, 128
    %4273 = vxpose.xlu0.b32.cont [11/16] 0.0, 128
    %4274 = vxpose.xlu0.b32.cont [12/16] 0.0, 128
    %4275 = vxpose.xlu0.b32.cont [13/16] 0.0, 128
    %4276 = vxpose.xlu0.b32.cont [14/16] 0.0, 128
    %4277 = vxpose.xlu0.b32.cont [15/16] 0.0, 128
    %4278 = vxpose.xlu0.b32.end [16/16] 0.0, 128
    %v4279 = vpop.trf.xlu0
    %v4280 = vpop.trf.xlu0
    %v4281 = vpop.trf.xlu0
    %v4282 = vpop.trf.xlu0
    %v4283 = vpop.trf.xlu0
    %v4284 = vpop.trf.xlu0
    %v4285 = vpop.trf.xlu0
    %v4286 = vpop.trf.xlu0
    %v4287 = vpop.trf.xlu0
    %v4288 = vpop.trf.xlu0
    %v4289 = vpop.trf.xlu0
    %v4290 = vpop.trf.xlu0
    %v4291 = vpop.trf.xlu0
    %v4292 = vpop.trf.xlu0
    %v4293 = vpop.trf.xlu0
    %v4294 = vpop.trf.xlu0
    %4295 = vxpose.xlu0.b32.start [1/16] %v1341, 128
    %4296 = vxpose.xlu0.b32.cont [2/16] 0.0, 128
    %4297 = vxpose.xlu0.b32.cont [3/16] 0.0, 128
    %4298 = vxpose.xlu0.b32.cont [4/16] 0.0, 128
    %4299 = vxpose.xlu0.b32.cont [5/16] 0.0, 128
    %4300 = vxpose.xlu0.b32.cont [6/16] 0.0, 128
    %4301 = vxpose.xlu0.b32.cont [7/16] 0.0, 128
    %4302 = vxpose.xlu0.b32.cont [8/16] 0.0, 128
    %4303 = vxpose.xlu0.b32.cont [9/16] 0.0, 128
    %4304 = vxpose.xlu0.b32.cont [10/16] 0.0, 128
    %4305 = vxpose.xlu0.b32.cont [11/16] 0.0, 128
    %4306 = vxpose.xlu0.b32.cont [12/16] 0.0, 128
    %4307 = vxpose.xlu0.b32.cont [13/16] 0.0, 128
    %4308 = vxpose.xlu0.b32.cont [14/16] 0.0, 128
    %4309 = vxpose.xlu0.b32.cont [15/16] 0.0, 128
    %4310 = vxpose.xlu0.b32.end [16/16] 0.0, 128
    %v4311 = vpop.trf.xlu0
    %v4312 = vpop.trf.xlu0
    %v4313 = vpop.trf.xlu0
    %v4314 = vpop.trf.xlu0
    %v4315 = vpop.trf.xlu0
    %v4316 = vpop.trf.xlu0
    %v4317 = vpop.trf.xlu0
    %v4318 = vpop.trf.xlu0
    %v4319 = vpop.trf.xlu0
    %v4320 = vpop.trf.xlu0
    %v4321 = vpop.trf.xlu0
    %v4322 = vpop.trf.xlu0
    %v4323 = vpop.trf.xlu0
    %v4324 = vpop.trf.xlu0
    %v4325 = vpop.trf.xlu0
    %v4326 = vpop.trf.xlu0
    %4327 = vxpose.xlu0.b32.start [1/16] %v1342, 128
    %4328 = vxpose.xlu0.b32.cont [2/16] 0.0, 128
    %4329 = vxpose.xlu0.b32.cont [3/16] 0.0, 128
    %4330 = vxpose.xlu0.b32.cont [4/16] 0.0, 128
    %4331 = vxpose.xlu0.b32.cont [5/16] 0.0, 128
    %4332 = vxpose.xlu0.b32.cont [6/16] 0.0, 128
    %4333 = vxpose.xlu0.b32.cont [7/16] 0.0, 128
    %4334 = vxpose.xlu0.b32.cont [8/16] 0.0, 128
    %4335 = vxpose.xlu0.b32.cont [9/16] 0.0, 128
    %4336 = vxpose.xlu0.b32.cont [10/16] 0.0, 128
    %4337 = vxpose.xlu0.b32.cont [11/16] 0.0, 128
    %4338 = vxpose.xlu0.b32.cont [12/16] 0.0, 128
    %4339 = vxpose.xlu0.b32.cont [13/16] 0.0, 128
    %4340 = vxpose.xlu0.b32.cont [14/16] 0.0, 128
    %4341 = vxpose.xlu0.b32.cont [15/16] 0.0, 128
    %4342 = vxpose.xlu0.b32.end [16/16] 0.0, 128
    %v4343 = vpop.trf.xlu0
    %v4344 = vpop.trf.xlu0
    %v4345 = vpop.trf.xlu0
    %v4346 = vpop.trf.xlu0
    %v4347 = vpop.trf.xlu0
    %v4348 = vpop.trf.xlu0
    %v4349 = vpop.trf.xlu0
    %v4350 = vpop.trf.xlu0
    %v4351 = vpop.trf.xlu0
    %v4352 = vpop.trf.xlu0
    %v4353 = vpop.trf.xlu0
    %v4354 = vpop.trf.xlu0
    %v4355 = vpop.trf.xlu0
    %v4356 = vpop.trf.xlu0
    %v4357 = vpop.trf.xlu0
    %v4358 = vpop.trf.xlu0
    %4359 = vxpose.xlu0.b32.start [1/16] %v1471, 128
    %4360 = vxpose.xlu0.b32.cont [2/16] 0.0, 128
    %4361 = vxpose.xlu0.b32.cont [3/16] 0.0, 128
    %4362 = vxpose.xlu0.b32.cont [4/16] 0.0, 128
    %4363 = vxpose.xlu0.b32.cont [5/16] 0.0, 128
    %4364 = vxpose.xlu0.b32.cont [6/16] 0.0, 128
    %4365 = vxpose.xlu0.b32.cont [7/16] 0.0, 128
    %4366 = vxpose.xlu0.b32.cont [8/16] 0.0, 128
    %4367 = vxpose.xlu0.b32.cont [9/16] 0.0, 128
    %4368 = vxpose.xlu0.b32.cont [10/16] 0.0, 128
    %4369 = vxpose.xlu0.b32.cont [11/16] 0.0, 128
    %4370 = vxpose.xlu0.b32.cont [12/16] 0.0, 128
    %4371 = vxpose.xlu0.b32.cont [13/16] 0.0, 128
    %4372 = vxpose.xlu0.b32.cont [14/16] 0.0, 128
    %4373 = vxpose.xlu0.b32.cont [15/16] 0.0, 128
    %4374 = vxpose.xlu0.b32.end [16/16] 0.0, 128
    %v4375 = vpop.trf.xlu0
    %v4376 = vpop.trf.xlu0
    %v4377 = vpop.trf.xlu0
    %v4378 = vpop.trf.xlu0
    %v4379 = vpop.trf.xlu0
    %v4380 = vpop.trf.xlu0
    %v4381 = vpop.trf.xlu0
    %v4382 = vpop.trf.xlu0
    %v4383 = vpop.trf.xlu0
    %v4384 = vpop.trf.xlu0
    %v4385 = vpop.trf.xlu0
    %v4386 = vpop.trf.xlu0
    %v4387 = vpop.trf.xlu0
    %v4388 = vpop.trf.xlu0
    %v4389 = vpop.trf.xlu0
    %v4390 = vpop.trf.xlu0
    %4391 = vxpose.xlu0.b32.start [1/16] %v1472, 128
    %4392 = vxpose.xlu0.b32.cont [2/16] 0.0, 128
    %4393 = vxpose.xlu0.b32.cont [3/16] 0.0, 128
    %4394 = vxpose.xlu0.b32.cont [4/16] 0.0, 128
    %4395 = vxpose.xlu0.b32.cont [5/16] 0.0, 128
    %4396 = vxpose.xlu0.b32.cont [6/16] 0.0, 128
    %4397 = vxpose.xlu0.b32.cont [7/16] 0.0, 128
    %4398 = vxpose.xlu0.b32.cont [8/16] 0.0, 128
    %4399 = vxpose.xlu0.b32.cont [9/16] 0.0, 128
    %4400 = vxpose.xlu0.b32.cont [10/16] 0.0, 128
    %4401 = vxpose.xlu0.b32.cont [11/16] 0.0, 128
    %4402 = vxpose.xlu0.b32.cont [12/16] 0.0, 128
    %4403 = vxpose.xlu0.b32.cont [13/16] 0.0, 128
    %4404 = vxpose.xlu0.b32.cont [14/16] 0.0, 128
    %4405 = vxpose.xlu0.b32.cont [15/16] 0.0, 128
    %4406 = vxpose.xlu0.b32.end [16/16] 0.0, 128
    %v4407 = vpop.trf.xlu0
    %v4408 = vpop.trf.xlu0
    %v4409 = vpop.trf.xlu0
    %v4410 = vpop.trf.xlu0
    %v4411 = vpop.trf.xlu0
    %v4412 = vpop.trf.xlu0
    %v4413 = vpop.trf.xlu0
    %v4414 = vpop.trf.xlu0
    %v4415 = vpop.trf.xlu0
    %v4416 = vpop.trf.xlu0
    %v4417 = vpop.trf.xlu0
    %v4418 = vpop.trf.xlu0
    %v4419 = vpop.trf.xlu0
    %v4420 = vpop.trf.xlu0
    %v4421 = vpop.trf.xlu0
    %v4422 = vpop.trf.xlu0
    %4423 = vxpose.xlu0.b32.start [1/16] %v1473, 128
    %4424 = vxpose.xlu0.b32.cont [2/16] 0.0, 128
    %4425 = vxpose.xlu0.b32.cont [3/16] 0.0, 128
    %4426 = vxpose.xlu0.b32.cont [4/16] 0.0, 128
    %4427 = vxpose.xlu0.b32.cont [5/16] 0.0, 128
    %4428 = vxpose.xlu0.b32.cont [6/16] 0.0, 128
    %4429 = vxpose.xlu0.b32.cont [7/16] 0.0, 128
    %4430 = vxpose.xlu0.b32.cont [8/16] 0.0, 128
    %4431 = vxpose.xlu0.b32.cont [9/16] 0.0, 128
    %4432 = vxpose.xlu0.b32.cont [10/16] 0.0, 128
    %4433 = vxpose.xlu0.b32.cont [11/16] 0.0, 128
    %4434 = vxpose.xlu0.b32.cont [12/16] 0.0, 128
    %4435 = vxpose.xlu0.b32.cont [13/16] 0.0, 128
    %4436 = vxpose.xlu0.b32.cont [14/16] 0.0, 128
    %4437 = vxpose.xlu0.b32.cont [15/16] 0.0, 128
    %4438 = vxpose.xlu0.b32.end [16/16] 0.0, 128
    %v4439 = vpop.trf.xlu0
    %v4440 = vpop.trf.xlu0
    %v4441 = vpop.trf.xlu0
    %v4442 = vpop.trf.xlu0
    %v4443 = vpop.trf.xlu0
    %v4444 = vpop.trf.xlu0
    %v4445 = vpop.trf.xlu0
    %v4446 = vpop.trf.xlu0
    %v4447 = vpop.trf.xlu0
    %v4448 = vpop.trf.xlu0
    %v4449 = vpop.trf.xlu0
    %v4450 = vpop.trf.xlu0
    %v4451 = vpop.trf.xlu0
    %v4452 = vpop.trf.xlu0
    %v4453 = vpop.trf.xlu0
    %v4454 = vpop.trf.xlu0
    %4455 = vxpose.xlu0.b32.start [1/16] %v1474, 128
    %4456 = vxpose.xlu0.b32.cont [2/16] 0.0, 128
    %4457 = vxpose.xlu0.b32.cont [3/16] 0.0, 128
    %4458 = vxpose.xlu0.b32.cont [4/16] 0.0, 128
    %4459 = vxpose.xlu0.b32.cont [5/16] 0.0, 128
    %4460 = vxpose.xlu0.b32.cont [6/16] 0.0, 128
    %4461 = vxpose.xlu0.b32.cont [7/16] 0.0, 128
    %4462 = vxpose.xlu0.b32.cont [8/16] 0.0, 128
    %4463 = vxpose.xlu0.b32.cont [9/16] 0.0, 128
    %4464 = vxpose.xlu0.b32.cont [10/16] 0.0, 128
    %4465 = vxpose.xlu0.b32.cont [11/16] 0.0, 128
    %4466 = vxpose.xlu0.b32.cont [12/16] 0.0, 128
    %4467 = vxpose.xlu0.b32.cont [13/16] 0.0, 128
    %4468 = vxpose.xlu0.b32.cont [14/16] 0.0, 128
    %4469 = vxpose.xlu0.b32.cont [15/16] 0.0, 128
    %4470 = vxpose.xlu0.b32.end [16/16] 0.0, 128
    %v4471 = vpop.trf.xlu0
    %v4472 = vpop.trf.xlu0
    %v4473 = vpop.trf.xlu0
    %v4474 = vpop.trf.xlu0
    %v4475 = vpop.trf.xlu0
    %v4476 = vpop.trf.xlu0
    %v4477 = vpop.trf.xlu0
    %v4478 = vpop.trf.xlu0
    %v4479 = vpop.trf.xlu0
    %v4480 = vpop.trf.xlu0
    %v4481 = vpop.trf.xlu0
    %v4482 = vpop.trf.xlu0
    %v4483 = vpop.trf.xlu0
    %v4484 = vpop.trf.xlu0
    %v4485 = vpop.trf.xlu0
    %v4486 = vpop.trf.xlu0
    %4487 = vxpose.xlu0.b32.start [1/16] %v1475, 128
    %4488 = vxpose.xlu0.b32.cont [2/16] 0.0, 128
    %4489 = vxpose.xlu0.b32.cont [3/16] 0.0, 128
    %4490 = vxpose.xlu0.b32.cont [4/16] 0.0, 128
    %4491 = vxpose.xlu0.b32.cont [5/16] 0.0, 128
    %4492 = vxpose.xlu0.b32.cont [6/16] 0.0, 128
    %4493 = vxpose.xlu0.b32.cont [7/16] 0.0, 128
    %4494 = vxpose.xlu0.b32.cont [8/16] 0.0, 128
    %4495 = vxpose.xlu0.b32.cont [9/16] 0.0, 128
    %4496 = vxpose.xlu0.b32.cont [10/16] 0.0, 128
    %4497 = vxpose.xlu0.b32.cont [11/16] 0.0, 128
    %4498 = vxpose.xlu0.b32.cont [12/16] 0.0, 128
    %4499 = vxpose.xlu0.b32.cont [13/16] 0.0, 128
    %4500 = vxpose.xlu0.b32.cont [14/16] 0.0, 128
    %4501 = vxpose.xlu0.b32.cont [15/16] 0.0, 128
    %4502 = vxpose.xlu0.b32.end [16/16] 0.0, 128
    %v4503 = vpop.trf.xlu0
    %v4504 = vpop.trf.xlu0
    %v4505 = vpop.trf.xlu0
    %v4506 = vpop.trf.xlu0
    %v4507 = vpop.trf.xlu0
    %v4508 = vpop.trf.xlu0
    %v4509 = vpop.trf.xlu0
    %v4510 = vpop.trf.xlu0
    %v4511 = vpop.trf.xlu0
    %v4512 = vpop.trf.xlu0
    %v4513 = vpop.trf.xlu0
    %v4514 = vpop.trf.xlu0
    %v4515 = vpop.trf.xlu0
    %v4516 = vpop.trf.xlu0
    %v4517 = vpop.trf.xlu0
    %v4518 = vpop.trf.xlu0
    %4519 = vxpose.xlu0.b32.start [1/16] %v1476, 128
    %4520 = vxpose.xlu0.b32.cont [2/16] 0.0, 128
    %4521 = vxpose.xlu0.b32.cont [3/16] 0.0, 128
    %4522 = vxpose.xlu0.b32.cont [4/16] 0.0, 128
    %4523 = vxpose.xlu0.b32.cont [5/16] 0.0, 128
    %4524 = vxpose.xlu0.b32.cont [6/16] 0.0, 128
    %4525 = vxpose.xlu0.b32.cont [7/16] 0.0, 128
    %4526 = vxpose.xlu0.b32.cont [8/16] 0.0, 128
    %4527 = vxpose.xlu0.b32.cont [9/16] 0.0, 128
    %4528 = vxpose.xlu0.b32.cont [10/16] 0.0, 128
    %4529 = vxpose.xlu0.b32.cont [11/16] 0.0, 128
    %4530 = vxpose.xlu0.b32.cont [12/16] 0.0, 128
    %4531 = vxpose.xlu0.b32.cont [13/16] 0.0, 128
    %4532 = vxpose.xlu0.b32.cont [14/16] 0.0, 128
    %4533 = vxpose.xlu0.b32.cont [15/16] 0.0, 128
    %4534 = vxpose.xlu0.b32.end [16/16] 0.0, 128
    %v4535 = vpop.trf.xlu0
    %v4536 = vpop.trf.xlu0
    %v4537 = vpop.trf.xlu0
    %v4538 = vpop.trf.xlu0
    %v4539 = vpop.trf.xlu0
    %v4540 = vpop.trf.xlu0
    %v4541 = vpop.trf.xlu0
    %v4542 = vpop.trf.xlu0
    %v4543 = vpop.trf.xlu0
    %v4544 = vpop.trf.xlu0
    %v4545 = vpop.trf.xlu0
    %v4546 = vpop.trf.xlu0
    %v4547 = vpop.trf.xlu0
    %v4548 = vpop.trf.xlu0
    %v4549 = vpop.trf.xlu0
    %v4550 = vpop.trf.xlu0
    %4551 = vxpose.xlu0.b32.start [1/16] %v1477, 128
    %4552 = vxpose.xlu0.b32.cont [2/16] 0.0, 128
    %4553 = vxpose.xlu0.b32.cont [3/16] 0.0, 128
    %4554 = vxpose.xlu0.b32.cont [4/16] 0.0, 128
    %4555 = vxpose.xlu0.b32.cont [5/16] 0.0, 128
    %4556 = vxpose.xlu0.b32.cont [6/16] 0.0, 128
    %4557 = vxpose.xlu0.b32.cont [7/16] 0.0, 128
    %4558 = vxpose.xlu0.b32.cont [8/16] 0.0, 128
    %4559 = vxpose.xlu0.b32.cont [9/16] 0.0, 128
    %4560 = vxpose.xlu0.b32.cont [10/16] 0.0, 128
    %4561 = vxpose.xlu0.b32.cont [11/16] 0.0, 128
    %4562 = vxpose.xlu0.b32.cont [12/16] 0.0, 128
    %4563 = vxpose.xlu0.b32.cont [13/16] 0.0, 128
    %4564 = vxpose.xlu0.b32.cont [14/16] 0.0, 128
    %4565 = vxpose.xlu0.b32.cont [15/16] 0.0, 128
    %4566 = vxpose.xlu0.b32.end [16/16] 0.0, 128
    %v4567 = vpop.trf.xlu0
    %v4568 = vpop.trf.xlu0
    %v4569 = vpop.trf.xlu0
    %v4570 = vpop.trf.xlu0
    %v4571 = vpop.trf.xlu0
    %v4572 = vpop.trf.xlu0
    %v4573 = vpop.trf.xlu0
    %v4574 = vpop.trf.xlu0
    %v4575 = vpop.trf.xlu0
    %v4576 = vpop.trf.xlu0
    %v4577 = vpop.trf.xlu0
    %v4578 = vpop.trf.xlu0
    %v4579 = vpop.trf.xlu0
    %v4580 = vpop.trf.xlu0
    %v4581 = vpop.trf.xlu0
    %v4582 = vpop.trf.xlu0
    %4583 = vxpose.xlu0.b32.start [1/16] %v1478, 128
    %4584 = vxpose.xlu0.b32.cont [2/16] 0.0, 128
    %4585 = vxpose.xlu0.b32.cont [3/16] 0.0, 128
    %4586 = vxpose.xlu0.b32.cont [4/16] 0.0, 128
    %4587 = vxpose.xlu0.b32.cont [5/16] 0.0, 128
    %4588 = vxpose.xlu0.b32.cont [6/16] 0.0, 128
    %4589 = vxpose.xlu0.b32.cont [7/16] 0.0, 128
    %4590 = vxpose.xlu0.b32.cont [8/16] 0.0, 128
    %4591 = vxpose.xlu0.b32.cont [9/16] 0.0, 128
    %4592 = vxpose.xlu0.b32.cont [10/16] 0.0, 128
    %4593 = vxpose.xlu0.b32.cont [11/16] 0.0, 128
    %4594 = vxpose.xlu0.b32.cont [12/16] 0.0, 128
    %4595 = vxpose.xlu0.b32.cont [13/16] 0.0, 128
    %4596 = vxpose.xlu0.b32.cont [14/16] 0.0, 128
    %4597 = vxpose.xlu0.b32.cont [15/16] 0.0, 128
    %4598 = vxpose.xlu0.b32.end [16/16] 0.0, 128
    %v4599 = vpop.trf.xlu0
    %v4600 = vpop.trf.xlu0
    %v4601 = vpop.trf.xlu0
    %v4602 = vpop.trf.xlu0
    %v4603 = vpop.trf.xlu0
    %v4604 = vpop.trf.xlu0
    %v4605 = vpop.trf.xlu0
    %v4606 = vpop.trf.xlu0
    %v4607 = vpop.trf.xlu0
    %v4608 = vpop.trf.xlu0
    %v4609 = vpop.trf.xlu0
    %v4610 = vpop.trf.xlu0
    %v4611 = vpop.trf.xlu0
    %v4612 = vpop.trf.xlu0
    %v4613 = vpop.trf.xlu0
    %v4614 = vpop.trf.xlu0
    %4615 = vxpose.xlu0.b32.start [1/16] %v1607, 128
    %4616 = vxpose.xlu0.b32.cont [2/16] 0.0, 128
    %4617 = vxpose.xlu0.b32.cont [3/16] 0.0, 128
    %4618 = vxpose.xlu0.b32.cont [4/16] 0.0, 128
    %4619 = vxpose.xlu0.b32.cont [5/16] 0.0, 128
    %4620 = vxpose.xlu0.b32.cont [6/16] 0.0, 128
    %4621 = vxpose.xlu0.b32.cont [7/16] 0.0, 128
    %4622 = vxpose.xlu0.b32.cont [8/16] 0.0, 128
    %4623 = vxpose.xlu0.b32.cont [9/16] 0.0, 128
    %4624 = vxpose.xlu0.b32.cont [10/16] 0.0, 128
    %4625 = vxpose.xlu0.b32.cont [11/16] 0.0, 128
    %4626 = vxpose.xlu0.b32.cont [12/16] 0.0, 128
    %4627 = vxpose.xlu0.b32.cont [13/16] 0.0, 128
    %4628 = vxpose.xlu0.b32.cont [14/16] 0.0, 128
    %4629 = vxpose.xlu0.b32.cont [15/16] 0.0, 128
    %4630 = vxpose.xlu0.b32.end [16/16] 0.0, 128
    %v4631 = vpop.trf.xlu0
    %v4632 = vpop.trf.xlu0
    %v4633 = vpop.trf.xlu0
    %v4634 = vpop.trf.xlu0
    %v4635 = vpop.trf.xlu0
    %v4636 = vpop.trf.xlu0
    %v4637 = vpop.trf.xlu0
    %v4638 = vpop.trf.xlu0
    %v4639 = vpop.trf.xlu0
    %v4640 = vpop.trf.xlu0
    %v4641 = vpop.trf.xlu0
    %v4642 = vpop.trf.xlu0
    %v4643 = vpop.trf.xlu0
    %v4644 = vpop.trf.xlu0
    %v4645 = vpop.trf.xlu0
    %v4646 = vpop.trf.xlu0
    %4647 = vxpose.xlu0.b32.start [1/16] %v1608, 128
    %4648 = vxpose.xlu0.b32.cont [2/16] 0.0, 128
    %4649 = vxpose.xlu0.b32.cont [3/16] 0.0, 128
    %4650 = vxpose.xlu0.b32.cont [4/16] 0.0, 128
    %4651 = vxpose.xlu0.b32.cont [5/16] 0.0, 128
    %4652 = vxpose.xlu0.b32.cont [6/16] 0.0, 128
    %4653 = vxpose.xlu0.b32.cont [7/16] 0.0, 128
    %4654 = vxpose.xlu0.b32.cont [8/16] 0.0, 128
    %4655 = vxpose.xlu0.b32.cont [9/16] 0.0, 128
    %4656 = vxpose.xlu0.b32.cont [10/16] 0.0, 128
    %4657 = vxpose.xlu0.b32.cont [11/16] 0.0, 128
    %4658 = vxpose.xlu0.b32.cont [12/16] 0.0, 128
    %4659 = vxpose.xlu0.b32.cont [13/16] 0.0, 128
    %4660 = vxpose.xlu0.b32.cont [14/16] 0.0, 128
    %4661 = vxpose.xlu0.b32.cont [15/16] 0.0, 128
    %4662 = vxpose.xlu0.b32.end [16/16] 0.0, 128
    %v4663 = vpop.trf.xlu0
    %v4664 = vpop.trf.xlu0
    %v4665 = vpop.trf.xlu0
    %v4666 = vpop.trf.xlu0
    %v4667 = vpop.trf.xlu0
    %v4668 = vpop.trf.xlu0
    %v4669 = vpop.trf.xlu0
    %v4670 = vpop.trf.xlu0
    %v4671 = vpop.trf.xlu0
    %v4672 = vpop.trf.xlu0
    %v4673 = vpop.trf.xlu0
    %v4674 = vpop.trf.xlu0
    %v4675 = vpop.trf.xlu0
    %v4676 = vpop.trf.xlu0
    %v4677 = vpop.trf.xlu0
    %v4678 = vpop.trf.xlu0
    %4679 = vxpose.xlu0.b32.start [1/16] %v1609, 128
    %4680 = vxpose.xlu0.b32.cont [2/16] 0.0, 128
    %4681 = vxpose.xlu0.b32.cont [3/16] 0.0, 128
    %4682 = vxpose.xlu0.b32.cont [4/16] 0.0, 128
    %4683 = vxpose.xlu0.b32.cont [5/16] 0.0, 128
    %4684 = vxpose.xlu0.b32.cont [6/16] 0.0, 128
    %4685 = vxpose.xlu0.b32.cont [7/16] 0.0, 128
    %4686 = vxpose.xlu0.b32.cont [8/16] 0.0, 128
    %4687 = vxpose.xlu0.b32.cont [9/16] 0.0, 128
    %4688 = vxpose.xlu0.b32.cont [10/16] 0.0, 128
    %4689 = vxpose.xlu0.b32.cont [11/16] 0.0, 128
    %4690 = vxpose.xlu0.b32.cont [12/16] 0.0, 128
    %4691 = vxpose.xlu0.b32.cont [13/16] 0.0, 128
    %4692 = vxpose.xlu0.b32.cont [14/16] 0.0, 128
    %4693 = vxpose.xlu0.b32.cont [15/16] 0.0, 128
    %4694 = vxpose.xlu0.b32.end [16/16] 0.0, 128
    %v4695 = vpop.trf.xlu0
    %v4696 = vpop.trf.xlu0
    %v4697 = vpop.trf.xlu0
    %v4698 = vpop.trf.xlu0
    %v4699 = vpop.trf.xlu0
    %v4700 = vpop.trf.xlu0
    %v4701 = vpop.trf.xlu0
    %v4702 = vpop.trf.xlu0
    %v4703 = vpop.trf.xlu0
    %v4704 = vpop.trf.xlu0
    %v4705 = vpop.trf.xlu0
    %v4706 = vpop.trf.xlu0
    %v4707 = vpop.trf.xlu0
    %v4708 = vpop.trf.xlu0
    %v4709 = vpop.trf.xlu0
    %v4710 = vpop.trf.xlu0
    %4711 = vxpose.xlu0.b32.start [1/16] %v1610, 128
    %4712 = vxpose.xlu0.b32.cont [2/16] 0.0, 128
    %4713 = vxpose.xlu0.b32.cont [3/16] 0.0, 128
    %4714 = vxpose.xlu0.b32.cont [4/16] 0.0, 128
    %4715 = vxpose.xlu0.b32.cont [5/16] 0.0, 128
    %4716 = vxpose.xlu0.b32.cont [6/16] 0.0, 128
    %4717 = vxpose.xlu0.b32.cont [7/16] 0.0, 128
    %4718 = vxpose.xlu0.b32.cont [8/16] 0.0, 128
    %4719 = vxpose.xlu0.b32.cont [9/16] 0.0, 128
    %4720 = vxpose.xlu0.b32.cont [10/16] 0.0, 128
    %4721 = vxpose.xlu0.b32.cont [11/16] 0.0, 128
    %4722 = vxpose.xlu0.b32.cont [12/16] 0.0, 128
    %4723 = vxpose.xlu0.b32.cont [13/16] 0.0, 128
    %4724 = vxpose.xlu0.b32.cont [14/16] 0.0, 128
    %4725 = vxpose.xlu0.b32.cont [15/16] 0.0, 128
    %4726 = vxpose.xlu0.b32.end [16/16] 0.0, 128
    %v4727 = vpop.trf.xlu0
    %v4728 = vpop.trf.xlu0
    %v4729 = vpop.trf.xlu0
    %v4730 = vpop.trf.xlu0
    %v4731 = vpop.trf.xlu0
    %v4732 = vpop.trf.xlu0
    %v4733 = vpop.trf.xlu0
    %v4734 = vpop.trf.xlu0
    %v4735 = vpop.trf.xlu0
    %v4736 = vpop.trf.xlu0
    %v4737 = vpop.trf.xlu0
    %v4738 = vpop.trf.xlu0
    %v4739 = vpop.trf.xlu0
    %v4740 = vpop.trf.xlu0
    %v4741 = vpop.trf.xlu0
    %v4742 = vpop.trf.xlu0
    %4743 = vxpose.xlu0.b32.start [1/16] %v1611, 128
    %4744 = vxpose.xlu0.b32.cont [2/16] 0.0, 128
    %4745 = vxpose.xlu0.b32.cont [3/16] 0.0, 128
    %4746 = vxpose.xlu0.b32.cont [4/16] 0.0, 128
    %4747 = vxpose.xlu0.b32.cont [5/16] 0.0, 128
    %4748 = vxpose.xlu0.b32.cont [6/16] 0.0, 128
    %4749 = vxpose.xlu0.b32.cont [7/16] 0.0, 128
    %4750 = vxpose.xlu0.b32.cont [8/16] 0.0, 128
    %4751 = vxpose.xlu0.b32.cont [9/16] 0.0, 128
    %4752 = vxpose.xlu0.b32.cont [10/16] 0.0, 128
    %4753 = vxpose.xlu0.b32.cont [11/16] 0.0, 128
    %4754 = vxpose.xlu0.b32.cont [12/16] 0.0, 128
    %4755 = vxpose.xlu0.b32.cont [13/16] 0.0, 128
    %4756 = vxpose.xlu0.b32.cont [14/16] 0.0, 128
    %4757 = vxpose.xlu0.b32.cont [15/16] 0.0, 128
    %4758 = vxpose.xlu0.b32.end [16/16] 0.0, 128
    %v4759 = vpop.trf.xlu0
    %v4760 = vpop.trf.xlu0
    %v4761 = vpop.trf.xlu0
    %v4762 = vpop.trf.xlu0
    %v4763 = vpop.trf.xlu0
    %v4764 = vpop.trf.xlu0
    %v4765 = vpop.trf.xlu0
    %v4766 = vpop.trf.xlu0
    %v4767 = vpop.trf.xlu0
    %v4768 = vpop.trf.xlu0
    %v4769 = vpop.trf.xlu0
    %v4770 = vpop.trf.xlu0
    %v4771 = vpop.trf.xlu0
    %v4772 = vpop.trf.xlu0
    %v4773 = vpop.trf.xlu0
    %v4774 = vpop.trf.xlu0
    %4775 = vxpose.xlu0.b32.start [1/16] %v1612, 128
    %4776 = vxpose.xlu0.b32.cont [2/16] 0.0, 128
    %4777 = vxpose.xlu0.b32.cont [3/16] 0.0, 128
    %4778 = vxpose.xlu0.b32.cont [4/16] 0.0, 128
    %4779 = vxpose.xlu0.b32.cont [5/16] 0.0, 128
    %4780 = vxpose.xlu0.b32.cont [6/16] 0.0, 128
    %4781 = vxpose.xlu0.b32.cont [7/16] 0.0, 128
    %4782 = vxpose.xlu0.b32.cont [8/16] 0.0, 128
    %4783 = vxpose.xlu0.b32.cont [9/16] 0.0, 128
    %4784 = vxpose.xlu0.b32.cont [10/16] 0.0, 128
    %4785 = vxpose.xlu0.b32.cont [11/16] 0.0, 128
    %4786 = vxpose.xlu0.b32.cont [12/16] 0.0, 128
    %4787 = vxpose.xlu0.b32.cont [13/16] 0.0, 128
    %4788 = vxpose.xlu0.b32.cont [14/16] 0.0, 128
    %4789 = vxpose.xlu0.b32.cont [15/16] 0.0, 128
    %4790 = vxpose.xlu0.b32.end [16/16] 0.0, 128
    %v4791 = vpop.trf.xlu0
    %v4792 = vpop.trf.xlu0
    %v4793 = vpop.trf.xlu0
    %v4794 = vpop.trf.xlu0
    %v4795 = vpop.trf.xlu0
    %v4796 = vpop.trf.xlu0
    %v4797 = vpop.trf.xlu0
    %v4798 = vpop.trf.xlu0
    %v4799 = vpop.trf.xlu0
    %v4800 = vpop.trf.xlu0
    %v4801 = vpop.trf.xlu0
    %v4802 = vpop.trf.xlu0
    %v4803 = vpop.trf.xlu0
    %v4804 = vpop.trf.xlu0
    %v4805 = vpop.trf.xlu0
    %v4806 = vpop.trf.xlu0
    %4807 = vxpose.xlu0.b32.start [1/16] %v1613, 128
    %4808 = vxpose.xlu0.b32.cont [2/16] 0.0, 128
    %4809 = vxpose.xlu0.b32.cont [3/16] 0.0, 128
    %4810 = vxpose.xlu0.b32.cont [4/16] 0.0, 128
    %4811 = vxpose.xlu0.b32.cont [5/16] 0.0, 128
    %4812 = vxpose.xlu0.b32.cont [6/16] 0.0, 128
    %4813 = vxpose.xlu0.b32.cont [7/16] 0.0, 128
    %4814 = vxpose.xlu0.b32.cont [8/16] 0.0, 128
    %4815 = vxpose.xlu0.b32.cont [9/16] 0.0, 128
    %4816 = vxpose.xlu0.b32.cont [10/16] 0.0, 128
    %4817 = vxpose.xlu0.b32.cont [11/16] 0.0, 128
    %4818 = vxpose.xlu0.b32.cont [12/16] 0.0, 128
    %4819 = vxpose.xlu0.b32.cont [13/16] 0.0, 128
    %4820 = vxpose.xlu0.b32.cont [14/16] 0.0, 128
    %4821 = vxpose.xlu0.b32.cont [15/16] 0.0, 128
    %4822 = vxpose.xlu0.b32.end [16/16] 0.0, 128
    %v4823 = vpop.trf.xlu0
    %v4824 = vpop.trf.xlu0
    %v4825 = vpop.trf.xlu0
    %v4826 = vpop.trf.xlu0
    %v4827 = vpop.trf.xlu0
    %v4828 = vpop.trf.xlu0
    %v4829 = vpop.trf.xlu0
    %v4830 = vpop.trf.xlu0
    %v4831 = vpop.trf.xlu0
    %v4832 = vpop.trf.xlu0
    %v4833 = vpop.trf.xlu0
    %v4834 = vpop.trf.xlu0
    %v4835 = vpop.trf.xlu0
    %v4836 = vpop.trf.xlu0
    %v4837 = vpop.trf.xlu0
    %v4838 = vpop.trf.xlu0
    %4839 = vxpose.xlu0.b32.start [1/16] %v1614, 128
    %4840 = vxpose.xlu0.b32.cont [2/16] 0.0, 128
    %4841 = vxpose.xlu0.b32.cont [3/16] 0.0, 128
    %4842 = vxpose.xlu0.b32.cont [4/16] 0.0, 128
    %4843 = vxpose.xlu0.b32.cont [5/16] 0.0, 128
    %4844 = vxpose.xlu0.b32.cont [6/16] 0.0, 128
    %4845 = vxpose.xlu0.b32.cont [7/16] 0.0, 128
    %4846 = vxpose.xlu0.b32.cont [8/16] 0.0, 128
    %4847 = vxpose.xlu0.b32.cont [9/16] 0.0, 128
    %4848 = vxpose.xlu0.b32.cont [10/16] 0.0, 128
    %4849 = vxpose.xlu0.b32.cont [11/16] 0.0, 128
    %4850 = vxpose.xlu0.b32.cont [12/16] 0.0, 128
    %4851 = vxpose.xlu0.b32.cont [13/16] 0.0, 128
    %4852 = vxpose.xlu0.b32.cont [14/16] 0.0, 128
    %4853 = vxpose.xlu0.b32.cont [15/16] 0.0, 128
    %4854 = vxpose.xlu0.b32.end [16/16] 0.0, 128
    %v4855 = vpop.trf.xlu0
    %v4856 = vpop.trf.xlu0
    %v4857 = vpop.trf.xlu0
    %v4858 = vpop.trf.xlu0
    %v4859 = vpop.trf.xlu0
    %v4860 = vpop.trf.xlu0
    %v4861 = vpop.trf.xlu0
    %v4862 = vpop.trf.xlu0
    %v4863 = vpop.trf.xlu0
    %v4864 = vpop.trf.xlu0
    %v4865 = vpop.trf.xlu0
    %v4866 = vpop.trf.xlu0
    %v4867 = vpop.trf.xlu0
    %v4868 = vpop.trf.xlu0
    %v4869 = vpop.trf.xlu0
    %v4870 = vpop.trf.xlu0
    %4871 = vxpose.xlu0.b32.start [1/16] %v1743, 128
    %4872 = vxpose.xlu0.b32.cont [2/16] 0.0, 128
    %4873 = vxpose.xlu0.b32.cont [3/16] 0.0, 128
    %4874 = vxpose.xlu0.b32.cont [4/16] 0.0, 128
    %4875 = vxpose.xlu0.b32.cont [5/16] 0.0, 128
    %4876 = vxpose.xlu0.b32.cont [6/16] 0.0, 128
    %4877 = vxpose.xlu0.b32.cont [7/16] 0.0, 128
    %4878 = vxpose.xlu0.b32.cont [8/16] 0.0, 128
    %4879 = vxpose.xlu0.b32.cont [9/16] 0.0, 128
    %4880 = vxpose.xlu0.b32.cont [10/16] 0.0, 128
    %4881 = vxpose.xlu0.b32.cont [11/16] 0.0, 128
    %4882 = vxpose.xlu0.b32.cont [12/16] 0.0, 128
    %4883 = vxpose.xlu0.b32.cont [13/16] 0.0, 128
    %4884 = vxpose.xlu0.b32.cont [14/16] 0.0, 128
    %4885 = vxpose.xlu0.b32.cont [15/16] 0.0, 128
    %4886 = vxpose.xlu0.b32.end [16/16] 0.0, 128
    %v4887 = vpop.trf.xlu0
    %v4888 = vpop.trf.xlu0
    %v4889 = vpop.trf.xlu0
    %v4890 = vpop.trf.xlu0
    %v4891 = vpop.trf.xlu0
    %v4892 = vpop.trf.xlu0
    %v4893 = vpop.trf.xlu0
    %v4894 = vpop.trf.xlu0
    %v4895 = vpop.trf.xlu0
    %v4896 = vpop.trf.xlu0
    %v4897 = vpop.trf.xlu0
    %v4898 = vpop.trf.xlu0
    %v4899 = vpop.trf.xlu0
    %v4900 = vpop.trf.xlu0
    %v4901 = vpop.trf.xlu0
    %v4902 = vpop.trf.xlu0
    %4903 = vxpose.xlu0.b32.start [1/16] %v1744, 128
    %4904 = vxpose.xlu0.b32.cont [2/16] 0.0, 128
    %4905 = vxpose.xlu0.b32.cont [3/16] 0.0, 128
    %4906 = vxpose.xlu0.b32.cont [4/16] 0.0, 128
    %4907 = vxpose.xlu0.b32.cont [5/16] 0.0, 128
    %4908 = vxpose.xlu0.b32.cont [6/16] 0.0, 128
    %4909 = vxpose.xlu0.b32.cont [7/16] 0.0, 128
    %4910 = vxpose.xlu0.b32.cont [8/16] 0.0, 128
    %4911 = vxpose.xlu0.b32.cont [9/16] 0.0, 128
    %4912 = vxpose.xlu0.b32.cont [10/16] 0.0, 128
    %4913 = vxpose.xlu0.b32.cont [11/16] 0.0, 128
    %4914 = vxpose.xlu0.b32.cont [12/16] 0.0, 128
    %4915 = vxpose.xlu0.b32.cont [13/16] 0.0, 128
    %4916 = vxpose.xlu0.b32.cont [14/16] 0.0, 128
    %4917 = vxpose.xlu0.b32.cont [15/16] 0.0, 128
    %4918 = vxpose.xlu0.b32.end [16/16] 0.0, 128
    %v4919 = vpop.trf.xlu0
    %v4920 = vpop.trf.xlu0
    %v4921 = vpop.trf.xlu0
    %v4922 = vpop.trf.xlu0
    %v4923 = vpop.trf.xlu0
    %v4924 = vpop.trf.xlu0
    %v4925 = vpop.trf.xlu0
    %v4926 = vpop.trf.xlu0
    %v4927 = vpop.trf.xlu0
    %v4928 = vpop.trf.xlu0
    %v4929 = vpop.trf.xlu0
    %v4930 = vpop.trf.xlu0
    %v4931 = vpop.trf.xlu0
    %v4932 = vpop.trf.xlu0
    %v4933 = vpop.trf.xlu0
    %v4934 = vpop.trf.xlu0
    %4935 = vxpose.xlu0.b32.start [1/16] %v1745, 128
    %4936 = vxpose.xlu0.b32.cont [2/16] 0.0, 128
    %4937 = vxpose.xlu0.b32.cont [3/16] 0.0, 128
    %4938 = vxpose.xlu0.b32.cont [4/16] 0.0, 128
    %4939 = vxpose.xlu0.b32.cont [5/16] 0.0, 128
    %4940 = vxpose.xlu0.b32.cont [6/16] 0.0, 128
    %4941 = vxpose.xlu0.b32.cont [7/16] 0.0, 128
    %4942 = vxpose.xlu0.b32.cont [8/16] 0.0, 128
    %4943 = vxpose.xlu0.b32.cont [9/16] 0.0, 128
    %4944 = vxpose.xlu0.b32.cont [10/16] 0.0, 128
    %4945 = vxpose.xlu0.b32.cont [11/16] 0.0, 128
    %4946 = vxpose.xlu0.b32.cont [12/16] 0.0, 128
    %4947 = vxpose.xlu0.b32.cont [13/16] 0.0, 128
    %4948 = vxpose.xlu0.b32.cont [14/16] 0.0, 128
    %4949 = vxpose.xlu0.b32.cont [15/16] 0.0, 128
    %4950 = vxpose.xlu0.b32.end [16/16] 0.0, 128
    %v4951 = vpop.trf.xlu0
    %v4952 = vpop.trf.xlu0
    %v4953 = vpop.trf.xlu0
    %v4954 = vpop.trf.xlu0
    %v4955 = vpop.trf.xlu0
    %v4956 = vpop.trf.xlu0
    %v4957 = vpop.trf.xlu0
    %v4958 = vpop.trf.xlu0
    %v4959 = vpop.trf.xlu0
    %v4960 = vpop.trf.xlu0
    %v4961 = vpop.trf.xlu0
    %v4962 = vpop.trf.xlu0
    %v4963 = vpop.trf.xlu0
    %v4964 = vpop.trf.xlu0
    %v4965 = vpop.trf.xlu0
    %v4966 = vpop.trf.xlu0
    %4967 = vxpose.xlu0.b32.start [1/16] %v1746, 128
    %4968 = vxpose.xlu0.b32.cont [2/16] 0.0, 128
    %4969 = vxpose.xlu0.b32.cont [3/16] 0.0, 128
    %4970 = vxpose.xlu0.b32.cont [4/16] 0.0, 128
    %4971 = vxpose.xlu0.b32.cont [5/16] 0.0, 128
    %4972 = vxpose.xlu0.b32.cont [6/16] 0.0, 128
    %4973 = vxpose.xlu0.b32.cont [7/16] 0.0, 128
    %4974 = vxpose.xlu0.b32.cont [8/16] 0.0, 128
    %4975 = vxpose.xlu0.b32.cont [9/16] 0.0, 128
    %4976 = vxpose.xlu0.b32.cont [10/16] 0.0, 128
    %4977 = vxpose.xlu0.b32.cont [11/16] 0.0, 128
    %4978 = vxpose.xlu0.b32.cont [12/16] 0.0, 128
    %4979 = vxpose.xlu0.b32.cont [13/16] 0.0, 128
    %4980 = vxpose.xlu0.b32.cont [14/16] 0.0, 128
    %4981 = vxpose.xlu0.b32.cont [15/16] 0.0, 128
    %4982 = vxpose.xlu0.b32.end [16/16] 0.0, 128
    %v4983 = vpop.trf.xlu0
    %v4984 = vpop.trf.xlu0
    %v4985 = vpop.trf.xlu0
    %v4986 = vpop.trf.xlu0
    %v4987 = vpop.trf.xlu0
    %v4988 = vpop.trf.xlu0
    %v4989 = vpop.trf.xlu0
    %v4990 = vpop.trf.xlu0
    %v4991 = vpop.trf.xlu0
    %v4992 = vpop.trf.xlu0
    %v4993 = vpop.trf.xlu0
    %v4994 = vpop.trf.xlu0
    %v4995 = vpop.trf.xlu0
    %v4996 = vpop.trf.xlu0
    %v4997 = vpop.trf.xlu0
    %v4998 = vpop.trf.xlu0
    %4999 = vxpose.xlu0.b32.start [1/16] %v1747, 128
    %5000 = vxpose.xlu0.b32.cont [2/16] 0.0, 128
    %5001 = vxpose.xlu0.b32.cont [3/16] 0.0, 128
    %5002 = vxpose.xlu0.b32.cont [4/16] 0.0, 128
    %5003 = vxpose.xlu0.b32.cont [5/16] 0.0, 128
    %5004 = vxpose.xlu0.b32.cont [6/16] 0.0, 128
    %5005 = vxpose.xlu0.b32.cont [7/16] 0.0, 128
    %5006 = vxpose.xlu0.b32.cont [8/16] 0.0, 128
    %5007 = vxpose.xlu0.b32.cont [9/16] 0.0, 128
    %5008 = vxpose.xlu0.b32.cont [10/16] 0.0, 128
    %5009 = vxpose.xlu0.b32.cont [11/16] 0.0, 128
    %5010 = vxpose.xlu0.b32.cont [12/16] 0.0, 128
    %5011 = vxpose.xlu0.b32.cont [13/16] 0.0, 128
    %5012 = vxpose.xlu0.b32.cont [14/16] 0.0, 128
    %5013 = vxpose.xlu0.b32.cont [15/16] 0.0, 128
    %5014 = vxpose.xlu0.b32.end [16/16] 0.0, 128
    %v5015 = vpop.trf.xlu0
    %v5016 = vpop.trf.xlu0
    %v5017 = vpop.trf.xlu0
    %v5018 = vpop.trf.xlu0
    %v5019 = vpop.trf.xlu0
    %v5020 = vpop.trf.xlu0
    %v5021 = vpop.trf.xlu0
    %v5022 = vpop.trf.xlu0
    %v5023 = vpop.trf.xlu0
    %v5024 = vpop.trf.xlu0
    %v5025 = vpop.trf.xlu0
    %v5026 = vpop.trf.xlu0
    %v5027 = vpop.trf.xlu0
    %v5028 = vpop.trf.xlu0
    %v5029 = vpop.trf.xlu0
    %v5030 = vpop.trf.xlu0
    %5031 = vxpose.xlu0.b32.start [1/16] %v1748, 128
    %5032 = vxpose.xlu0.b32.cont [2/16] 0.0, 128
    %5033 = vxpose.xlu0.b32.cont [3/16] 0.0, 128
    %5034 = vxpose.xlu0.b32.cont [4/16] 0.0, 128
    %5035 = vxpose.xlu0.b32.cont [5/16] 0.0, 128
    %5036 = vxpose.xlu0.b32.cont [6/16] 0.0, 128
    %5037 = vxpose.xlu0.b32.cont [7/16] 0.0, 128
    %5038 = vxpose.xlu0.b32.cont [8/16] 0.0, 128
    %5039 = vxpose.xlu0.b32.cont [9/16] 0.0, 128
    %5040 = vxpose.xlu0.b32.cont [10/16] 0.0, 128
    %5041 = vxpose.xlu0.b32.cont [11/16] 0.0, 128
    %5042 = vxpose.xlu0.b32.cont [12/16] 0.0, 128
    %5043 = vxpose.xlu0.b32.cont [13/16] 0.0, 128
    %5044 = vxpose.xlu0.b32.cont [14/16] 0.0, 128
    %5045 = vxpose.xlu0.b32.cont [15/16] 0.0, 128
    %5046 = vxpose.xlu0.b32.end [16/16] 0.0, 128
    %v5047 = vpop.trf.xlu0
    %v5048 = vpop.trf.xlu0
    %v5049 = vpop.trf.xlu0
    %v5050 = vpop.trf.xlu0
    %v5051 = vpop.trf.xlu0
    %v5052 = vpop.trf.xlu0
    %v5053 = vpop.trf.xlu0
    %v5054 = vpop.trf.xlu0
    %v5055 = vpop.trf.xlu0
    %v5056 = vpop.trf.xlu0
    %v5057 = vpop.trf.xlu0
    %v5058 = vpop.trf.xlu0
    %v5059 = vpop.trf.xlu0
    %v5060 = vpop.trf.xlu0
    %v5061 = vpop.trf.xlu0
    %v5062 = vpop.trf.xlu0
    %5063 = vxpose.xlu0.b32.start [1/16] %v1749, 128
    %5064 = vxpose.xlu0.b32.cont [2/16] 0.0, 128
    %5065 = vxpose.xlu0.b32.cont [3/16] 0.0, 128
    %5066 = vxpose.xlu0.b32.cont [4/16] 0.0, 128
    %5067 = vxpose.xlu0.b32.cont [5/16] 0.0, 128
    %5068 = vxpose.xlu0.b32.cont [6/16] 0.0, 128
    %5069 = vxpose.xlu0.b32.cont [7/16] 0.0, 128
    %5070 = vxpose.xlu0.b32.cont [8/16] 0.0, 128
    %5071 = vxpose.xlu0.b32.cont [9/16] 0.0, 128
    %5072 = vxpose.xlu0.b32.cont [10/16] 0.0, 128
    %5073 = vxpose.xlu0.b32.cont [11/16] 0.0, 128
    %5074 = vxpose.xlu0.b32.cont [12/16] 0.0, 128
    %5075 = vxpose.xlu0.b32.cont [13/16] 0.0, 128
    %5076 = vxpose.xlu0.b32.cont [14/16] 0.0, 128
    %5077 = vxpose.xlu0.b32.cont [15/16] 0.0, 128
    %5078 = vxpose.xlu0.b32.end [16/16] 0.0, 128
    %v5079 = vpop.trf.xlu0
    %v5080 = vpop.trf.xlu0
    %v5081 = vpop.trf.xlu0
    %v5082 = vpop.trf.xlu0
    %v5083 = vpop.trf.xlu0
    %v5084 = vpop.trf.xlu0
    %v5085 = vpop.trf.xlu0
    %v5086 = vpop.trf.xlu0
    %v5087 = vpop.trf.xlu0
    %v5088 = vpop.trf.xlu0
    %v5089 = vpop.trf.xlu0
    %v5090 = vpop.trf.xlu0
    %v5091 = vpop.trf.xlu0
    %v5092 = vpop.trf.xlu0
    %v5093 = vpop.trf.xlu0
    %v5094 = vpop.trf.xlu0
    %5095 = vxpose.xlu0.b32.start [1/16] %v1750, 128
    %5096 = vxpose.xlu0.b32.cont [2/16] 0.0, 128
    %5097 = vxpose.xlu0.b32.cont [3/16] 0.0, 128
    %5098 = vxpose.xlu0.b32.cont [4/16] 0.0, 128
    %5099 = vxpose.xlu0.b32.cont [5/16] 0.0, 128
    %5100 = vxpose.xlu0.b32.cont [6/16] 0.0, 128
    %5101 = vxpose.xlu0.b32.cont [7/16] 0.0, 128
    %5102 = vxpose.xlu0.b32.cont [8/16] 0.0, 128
    %5103 = vxpose.xlu0.b32.cont [9/16] 0.0, 128
    %5104 = vxpose.xlu0.b32.cont [10/16] 0.0, 128
    %5105 = vxpose.xlu0.b32.cont [11/16] 0.0, 128
    %5106 = vxpose.xlu0.b32.cont [12/16] 0.0, 128
    %5107 = vxpose.xlu0.b32.cont [13/16] 0.0, 128
    %5108 = vxpose.xlu0.b32.cont [14/16] 0.0, 128
    %5109 = vxpose.xlu0.b32.cont [15/16] 0.0, 128
    %5110 = vxpose.xlu0.b32.end [16/16] 0.0, 128
    %v5111 = vpop.trf.xlu0
    %v5112 = vpop.trf.xlu0
    %v5113 = vpop.trf.xlu0
    %v5114 = vpop.trf.xlu0
    %v5115 = vpop.trf.xlu0
    %v5116 = vpop.trf.xlu0
    %v5117 = vpop.trf.xlu0
    %v5118 = vpop.trf.xlu0
    %v5119 = vpop.trf.xlu0
    %v5120 = vpop.trf.xlu0
    %v5121 = vpop.trf.xlu0
    %v5122 = vpop.trf.xlu0
    %v5123 = vpop.trf.xlu0
    %v5124 = vpop.trf.xlu0
    %v5125 = vpop.trf.xlu0
    %v5126 = vpop.trf.xlu0
    %5127 = vxpose.xlu0.b32.start [1/16] %v1879, 128
    %5128 = vxpose.xlu0.b32.cont [2/16] 0.0, 128
    %5129 = vxpose.xlu0.b32.cont [3/16] 0.0, 128
    %5130 = vxpose.xlu0.b32.cont [4/16] 0.0, 128
    %5131 = vxpose.xlu0.b32.cont [5/16] 0.0, 128
    %5132 = vxpose.xlu0.b32.cont [6/16] 0.0, 128
    %5133 = vxpose.xlu0.b32.cont [7/16] 0.0, 128
    %5134 = vxpose.xlu0.b32.cont [8/16] 0.0, 128
    %5135 = vxpose.xlu0.b32.cont [9/16] 0.0, 128
    %5136 = vxpose.xlu0.b32.cont [10/16] 0.0, 128
    %5137 = vxpose.xlu0.b32.cont [11/16] 0.0, 128
    %5138 = vxpose.xlu0.b32.cont [12/16] 0.0, 128
    %5139 = vxpose.xlu0.b32.cont [13/16] 0.0, 128
    %5140 = vxpose.xlu0.b32.cont [14/16] 0.0, 128
    %5141 = vxpose.xlu0.b32.cont [15/16] 0.0, 128
    %5142 = vxpose.xlu0.b32.end [16/16] 0.0, 128
    %v5143 = vpop.trf.xlu0
    %v5144 = vpop.trf.xlu0
    %v5145 = vpop.trf.xlu0
    %v5146 = vpop.trf.xlu0
    %v5147 = vpop.trf.xlu0
    %v5148 = vpop.trf.xlu0
    %v5149 = vpop.trf.xlu0
    %v5150 = vpop.trf.xlu0
    %v5151 = vpop.trf.xlu0
    %v5152 = vpop.trf.xlu0
    %v5153 = vpop.trf.xlu0
    %v5154 = vpop.trf.xlu0
    %v5155 = vpop.trf.xlu0
    %v5156 = vpop.trf.xlu0
    %v5157 = vpop.trf.xlu0
    %v5158 = vpop.trf.xlu0
    %5159 = vxpose.xlu0.b32.start [1/16] %v1880, 128
    %5160 = vxpose.xlu0.b32.cont [2/16] 0.0, 128
    %5161 = vxpose.xlu0.b32.cont [3/16] 0.0, 128
    %5162 = vxpose.xlu0.b32.cont [4/16] 0.0, 128
    %5163 = vxpose.xlu0.b32.cont [5/16] 0.0, 128
    %5164 = vxpose.xlu0.b32.cont [6/16] 0.0, 128
    %5165 = vxpose.xlu0.b32.cont [7/16] 0.0, 128
    %5166 = vxpose.xlu0.b32.cont [8/16] 0.0, 128
    %5167 = vxpose.xlu0.b32.cont [9/16] 0.0, 128
    %5168 = vxpose.xlu0.b32.cont [10/16] 0.0, 128
    %5169 = vxpose.xlu0.b32.cont [11/16] 0.0, 128
    %5170 = vxpose.xlu0.b32.cont [12/16] 0.0, 128
    %5171 = vxpose.xlu0.b32.cont [13/16] 0.0, 128
    %5172 = vxpose.xlu0.b32.cont [14/16] 0.0, 128
    %5173 = vxpose.xlu0.b32.cont [15/16] 0.0, 128
    %5174 = vxpose.xlu0.b32.end [16/16] 0.0, 128
    %v5175 = vpop.trf.xlu0
    %v5176 = vpop.trf.xlu0
    %v5177 = vpop.trf.xlu0
    %v5178 = vpop.trf.xlu0
    %v5179 = vpop.trf.xlu0
    %v5180 = vpop.trf.xlu0
    %v5181 = vpop.trf.xlu0
    %v5182 = vpop.trf.xlu0
    %v5183 = vpop.trf.xlu0
    %v5184 = vpop.trf.xlu0
    %v5185 = vpop.trf.xlu0
    %v5186 = vpop.trf.xlu0
    %v5187 = vpop.trf.xlu0
    %v5188 = vpop.trf.xlu0
    %v5189 = vpop.trf.xlu0
    %v5190 = vpop.trf.xlu0
    %5191 = vxpose.xlu0.b32.start [1/16] %v1881, 128
    %5192 = vxpose.xlu0.b32.cont [2/16] 0.0, 128
    %5193 = vxpose.xlu0.b32.cont [3/16] 0.0, 128
    %5194 = vxpose.xlu0.b32.cont [4/16] 0.0, 128
    %5195 = vxpose.xlu0.b32.cont [5/16] 0.0, 128
    %5196 = vxpose.xlu0.b32.cont [6/16] 0.0, 128
    %5197 = vxpose.xlu0.b32.cont [7/16] 0.0, 128
    %5198 = vxpose.xlu0.b32.cont [8/16] 0.0, 128
    %5199 = vxpose.xlu0.b32.cont [9/16] 0.0, 128
    %5200 = vxpose.xlu0.b32.cont [10/16] 0.0, 128
    %5201 = vxpose.xlu0.b32.cont [11/16] 0.0, 128
    %5202 = vxpose.xlu0.b32.cont [12/16] 0.0, 128
    %5203 = vxpose.xlu0.b32.cont [13/16] 0.0, 128
    %5204 = vxpose.xlu0.b32.cont [14/16] 0.0, 128
    %5205 = vxpose.xlu0.b32.cont [15/16] 0.0, 128
    %5206 = vxpose.xlu0.b32.end [16/16] 0.0, 128
    %v5207 = vpop.trf.xlu0
    %v5208 = vpop.trf.xlu0
    %v5209 = vpop.trf.xlu0
    %v5210 = vpop.trf.xlu0
    %v5211 = vpop.trf.xlu0
    %v5212 = vpop.trf.xlu0
    %v5213 = vpop.trf.xlu0
    %v5214 = vpop.trf.xlu0
    %v5215 = vpop.trf.xlu0
    %v5216 = vpop.trf.xlu0
    %v5217 = vpop.trf.xlu0
    %v5218 = vpop.trf.xlu0
    %v5219 = vpop.trf.xlu0
    %v5220 = vpop.trf.xlu0
    %v5221 = vpop.trf.xlu0
    %v5222 = vpop.trf.xlu0
    %5223 = vxpose.xlu0.b32.start [1/16] %v1882, 128
    %5224 = vxpose.xlu0.b32.cont [2/16] 0.0, 128
    %5225 = vxpose.xlu0.b32.cont [3/16] 0.0, 128
    %5226 = vxpose.xlu0.b32.cont [4/16] 0.0, 128
    %5227 = vxpose.xlu0.b32.cont [5/16] 0.0, 128
    %5228 = vxpose.xlu0.b32.cont [6/16] 0.0, 128
    %5229 = vxpose.xlu0.b32.cont [7/16] 0.0, 128
    %5230 = vxpose.xlu0.b32.cont [8/16] 0.0, 128
    %5231 = vxpose.xlu0.b32.cont [9/16] 0.0, 128
    %5232 = vxpose.xlu0.b32.cont [10/16] 0.0, 128
    %5233 = vxpose.xlu0.b32.cont [11/16] 0.0, 128
    %5234 = vxpose.xlu0.b32.cont [12/16] 0.0, 128
    %5235 = vxpose.xlu0.b32.cont [13/16] 0.0, 128
    %5236 = vxpose.xlu0.b32.cont [14/16] 0.0, 128
    %5237 = vxpose.xlu0.b32.cont [15/16] 0.0, 128
    %5238 = vxpose.xlu0.b32.end [16/16] 0.0, 128
    %v5239 = vpop.trf.xlu0
    %v5240 = vpop.trf.xlu0
    %v5241 = vpop.trf.xlu0
    %v5242 = vpop.trf.xlu0
    %v5243 = vpop.trf.xlu0
    %v5244 = vpop.trf.xlu0
    %v5245 = vpop.trf.xlu0
    %v5246 = vpop.trf.xlu0
    %v5247 = vpop.trf.xlu0
    %v5248 = vpop.trf.xlu0
    %v5249 = vpop.trf.xlu0
    %v5250 = vpop.trf.xlu0
    %v5251 = vpop.trf.xlu0
    %v5252 = vpop.trf.xlu0
    %v5253 = vpop.trf.xlu0
    %v5254 = vpop.trf.xlu0
    %5255 = vxpose.xlu0.b32.start [1/16] %v1883, 128
    %5256 = vxpose.xlu0.b32.cont [2/16] 0.0, 128
    %5257 = vxpose.xlu0.b32.cont [3/16] 0.0, 128
    %5258 = vxpose.xlu0.b32.cont [4/16] 0.0, 128
    %5259 = vxpose.xlu0.b32.cont [5/16] 0.0, 128
    %5260 = vxpose.xlu0.b32.cont [6/16] 0.0, 128
    %5261 = vxpose.xlu0.b32.cont [7/16] 0.0, 128
    %5262 = vxpose.xlu0.b32.cont [8/16] 0.0, 128
    %5263 = vxpose.xlu0.b32.cont [9/16] 0.0, 128
    %5264 = vxpose.xlu0.b32.cont [10/16] 0.0, 128
    %5265 = vxpose.xlu0.b32.cont [11/16] 0.0, 128
    %5266 = vxpose.xlu0.b32.cont [12/16] 0.0, 128
    %5267 = vxpose.xlu0.b32.cont [13/16] 0.0, 128
    %5268 = vxpose.xlu0.b32.cont [14/16] 0.0, 128
    %5269 = vxpose.xlu0.b32.cont [15/16] 0.0, 128
    %5270 = vxpose.xlu0.b32.end [16/16] 0.0, 128
    %v5271 = vpop.trf.xlu0
    %v5272 = vpop.trf.xlu0
    %v5273 = vpop.trf.xlu0
    %v5274 = vpop.trf.xlu0
    %v5275 = vpop.trf.xlu0
    %v5276 = vpop.trf.xlu0
    %v5277 = vpop.trf.xlu0
    %v5278 = vpop.trf.xlu0
    %v5279 = vpop.trf.xlu0
    %v5280 = vpop.trf.xlu0
    %v5281 = vpop.trf.xlu0
    %v5282 = vpop.trf.xlu0
    %v5283 = vpop.trf.xlu0
    %v5284 = vpop.trf.xlu0
    %v5285 = vpop.trf.xlu0
    %v5286 = vpop.trf.xlu0
    %5287 = vxpose.xlu0.b32.start [1/16] %v1884, 128
    %5288 = vxpose.xlu0.b32.cont [2/16] 0.0, 128
    %5289 = vxpose.xlu0.b32.cont [3/16] 0.0, 128
    %5290 = vxpose.xlu0.b32.cont [4/16] 0.0, 128
    %5291 = vxpose.xlu0.b32.cont [5/16] 0.0, 128
    %5292 = vxpose.xlu0.b32.cont [6/16] 0.0, 128
    %5293 = vxpose.xlu0.b32.cont [7/16] 0.0, 128
    %5294 = vxpose.xlu0.b32.cont [8/16] 0.0, 128
    %5295 = vxpose.xlu0.b32.cont [9/16] 0.0, 128
    %5296 = vxpose.xlu0.b32.cont [10/16] 0.0, 128
    %5297 = vxpose.xlu0.b32.cont [11/16] 0.0, 128
    %5298 = vxpose.xlu0.b32.cont [12/16] 0.0, 128
    %5299 = vxpose.xlu0.b32.cont [13/16] 0.0, 128
    %5300 = vxpose.xlu0.b32.cont [14/16] 0.0, 128
    %5301 = vxpose.xlu0.b32.cont [15/16] 0.0, 128
    %5302 = vxpose.xlu0.b32.end [16/16] 0.0, 128
    %v5303 = vpop.trf.xlu0
    %v5304 = vpop.trf.xlu0
    %v5305 = vpop.trf.xlu0
    %v5306 = vpop.trf.xlu0
    %v5307 = vpop.trf.xlu0
    %v5308 = vpop.trf.xlu0
    %v5309 = vpop.trf.xlu0
    %v5310 = vpop.trf.xlu0
    %v5311 = vpop.trf.xlu0
    %v5312 = vpop.trf.xlu0
    %v5313 = vpop.trf.xlu0
    %v5314 = vpop.trf.xlu0
    %v5315 = vpop.trf.xlu0
    %v5316 = vpop.trf.xlu0
    %v5317 = vpop.trf.xlu0
    %v5318 = vpop.trf.xlu0
    %5319 = vxpose.xlu0.b32.start [1/16] %v1885, 128
    %5320 = vxpose.xlu0.b32.cont [2/16] 0.0, 128
    %5321 = vxpose.xlu0.b32.cont [3/16] 0.0, 128
    %5322 = vxpose.xlu0.b32.cont [4/16] 0.0, 128
    %5323 = vxpose.xlu0.b32.cont [5/16] 0.0, 128
    %5324 = vxpose.xlu0.b32.cont [6/16] 0.0, 128
    %5325 = vxpose.xlu0.b32.cont [7/16] 0.0, 128
    %5326 = vxpose.xlu0.b32.cont [8/16] 0.0, 128
    %5327 = vxpose.xlu0.b32.cont [9/16] 0.0, 128
    %5328 = vxpose.xlu0.b32.cont [10/16] 0.0, 128
    %5329 = vxpose.xlu0.b32.cont [11/16] 0.0, 128
    %5330 = vxpose.xlu0.b32.cont [12/16] 0.0, 128
    %5331 = vxpose.xlu0.b32.cont [13/16] 0.0, 128
    %5332 = vxpose.xlu0.b32.cont [14/16] 0.0, 128
    %5333 = vxpose.xlu0.b32.cont [15/16] 0.0, 128
    %5334 = vxpose.xlu0.b32.end [16/16] 0.0, 128
    %v5335 = vpop.trf.xlu0
    %v5336 = vpop.trf.xlu0
    %v5337 = vpop.trf.xlu0
    %v5338 = vpop.trf.xlu0
    %v5339 = vpop.trf.xlu0
    %v5340 = vpop.trf.xlu0
    %v5341 = vpop.trf.xlu0
    %v5342 = vpop.trf.xlu0
    %v5343 = vpop.trf.xlu0
    %v5344 = vpop.trf.xlu0
    %v5345 = vpop.trf.xlu0
    %v5346 = vpop.trf.xlu0
    %v5347 = vpop.trf.xlu0
    %v5348 = vpop.trf.xlu0
    %v5349 = vpop.trf.xlu0
    %v5350 = vpop.trf.xlu0
    %5351 = vxpose.xlu0.b32.start [1/16] %v1886, 128
    %5352 = vxpose.xlu0.b32.cont [2/16] 0.0, 128
    %5353 = vxpose.xlu0.b32.cont [3/16] 0.0, 128
    %5354 = vxpose.xlu0.b32.cont [4/16] 0.0, 128
    %5355 = vxpose.xlu0.b32.cont [5/16] 0.0, 128
    %5356 = vxpose.xlu0.b32.cont [6/16] 0.0, 128
    %5357 = vxpose.xlu0.b32.cont [7/16] 0.0, 128
    %5358 = vxpose.xlu0.b32.cont [8/16] 0.0, 128
    %5359 = vxpose.xlu0.b32.cont [9/16] 0.0, 128
    %5360 = vxpose.xlu0.b32.cont [10/16] 0.0, 128
    %5361 = vxpose.xlu0.b32.cont [11/16] 0.0, 128
    %5362 = vxpose.xlu0.b32.cont [12/16] 0.0, 128
    %5363 = vxpose.xlu0.b32.cont [13/16] 0.0, 128
    %5364 = vxpose.xlu0.b32.cont [14/16] 0.0, 128
    %5365 = vxpose.xlu0.b32.cont [15/16] 0.0, 128
    %5366 = vxpose.xlu0.b32.end [16/16] 0.0, 128
    %v5367 = vpop.trf.xlu0
    %v5368 = vpop.trf.xlu0
    %v5369 = vpop.trf.xlu0
    %v5370 = vpop.trf.xlu0
    %v5371 = vpop.trf.xlu0
    %v5372 = vpop.trf.xlu0
    %v5373 = vpop.trf.xlu0
    %v5374 = vpop.trf.xlu0
    %v5375 = vpop.trf.xlu0
    %v5376 = vpop.trf.xlu0
    %v5377 = vpop.trf.xlu0
    %v5378 = vpop.trf.xlu0
    %v5379 = vpop.trf.xlu0
    %v5380 = vpop.trf.xlu0
    %v5381 = vpop.trf.xlu0
    %v5382 = vpop.trf.xlu0
    %5383 = vxpose.xlu0.b32.start [1/16] %v2015, 128
    %5384 = vxpose.xlu0.b32.cont [2/16] 0.0, 128
    %5385 = vxpose.xlu0.b32.cont [3/16] 0.0, 128
    %5386 = vxpose.xlu0.b32.cont [4/16] 0.0, 128
    %5387 = vxpose.xlu0.b32.cont [5/16] 0.0, 128
    %5388 = vxpose.xlu0.b32.cont [6/16] 0.0, 128
    %5389 = vxpose.xlu0.b32.cont [7/16] 0.0, 128
    %5390 = vxpose.xlu0.b32.cont [8/16] 0.0, 128
    %5391 = vxpose.xlu0.b32.cont [9/16] 0.0, 128
    %5392 = vxpose.xlu0.b32.cont [10/16] 0.0, 128
    %5393 = vxpose.xlu0.b32.cont [11/16] 0.0, 128
    %5394 = vxpose.xlu0.b32.cont [12/16] 0.0, 128
    %5395 = vxpose.xlu0.b32.cont [13/16] 0.0, 128
    %5396 = vxpose.xlu0.b32.cont [14/16] 0.0, 128
    %5397 = vxpose.xlu0.b32.cont [15/16] 0.0, 128
    %5398 = vxpose.xlu0.b32.end [16/16] 0.0, 128
    %v5399 = vpop.trf.xlu0
    %v5400 = vpop.trf.xlu0
    %v5401 = vpop.trf.xlu0
    %v5402 = vpop.trf.xlu0
    %v5403 = vpop.trf.xlu0
    %v5404 = vpop.trf.xlu0
    %v5405 = vpop.trf.xlu0
    %v5406 = vpop.trf.xlu0
    %v5407 = vpop.trf.xlu0
    %v5408 = vpop.trf.xlu0
    %v5409 = vpop.trf.xlu0
    %v5410 = vpop.trf.xlu0
    %v5411 = vpop.trf.xlu0
    %v5412 = vpop.trf.xlu0
    %v5413 = vpop.trf.xlu0
    %v5414 = vpop.trf.xlu0
    %5415 = vxpose.xlu0.b32.start [1/16] %v2016, 128
    %5416 = vxpose.xlu0.b32.cont [2/16] 0.0, 128
    %5417 = vxpose.xlu0.b32.cont [3/16] 0.0, 128
    %5418 = vxpose.xlu0.b32.cont [4/16] 0.0, 128
    %5419 = vxpose.xlu0.b32.cont [5/16] 0.0, 128
    %5420 = vxpose.xlu0.b32.cont [6/16] 0.0, 128
    %5421 = vxpose.xlu0.b32.cont [7/16] 0.0, 128
    %5422 = vxpose.xlu0.b32.cont [8/16] 0.0, 128
    %5423 = vxpose.xlu0.b32.cont [9/16] 0.0, 128
    %5424 = vxpose.xlu0.b32.cont [10/16] 0.0, 128
    %5425 = vxpose.xlu0.b32.cont [11/16] 0.0, 128
    %5426 = vxpose.xlu0.b32.cont [12/16] 0.0, 128
    %5427 = vxpose.xlu0.b32.cont [13/16] 0.0, 128
    %5428 = vxpose.xlu0.b32.cont [14/16] 0.0, 128
    %5429 = vxpose.xlu0.b32.cont [15/16] 0.0, 128
    %5430 = vxpose.xlu0.b32.end [16/16] 0.0, 128
    %v5431 = vpop.trf.xlu0
    %v5432 = vpop.trf.xlu0
    %v5433 = vpop.trf.xlu0
    %v5434 = vpop.trf.xlu0
    %v5435 = vpop.trf.xlu0
    %v5436 = vpop.trf.xlu0
    %v5437 = vpop.trf.xlu0
    %v5438 = vpop.trf.xlu0
    %v5439 = vpop.trf.xlu0
    %v5440 = vpop.trf.xlu0
    %v5441 = vpop.trf.xlu0
    %v5442 = vpop.trf.xlu0
    %v5443 = vpop.trf.xlu0
    %v5444 = vpop.trf.xlu0
    %v5445 = vpop.trf.xlu0
    %v5446 = vpop.trf.xlu0
    %5447 = vxpose.xlu0.b32.start [1/16] %v2017, 128
    %5448 = vxpose.xlu0.b32.cont [2/16] 0.0, 128
    %5449 = vxpose.xlu0.b32.cont [3/16] 0.0, 128
    %5450 = vxpose.xlu0.b32.cont [4/16] 0.0, 128
    %5451 = vxpose.xlu0.b32.cont [5/16] 0.0, 128
    %5452 = vxpose.xlu0.b32.cont [6/16] 0.0, 128
    %5453 = vxpose.xlu0.b32.cont [7/16] 0.0, 128
    %5454 = vxpose.xlu0.b32.cont [8/16] 0.0, 128
    %5455 = vxpose.xlu0.b32.cont [9/16] 0.0, 128
    %5456 = vxpose.xlu0.b32.cont [10/16] 0.0, 128
    %5457 = vxpose.xlu0.b32.cont [11/16] 0.0, 128
    %5458 = vxpose.xlu0.b32.cont [12/16] 0.0, 128
    %5459 = vxpose.xlu0.b32.cont [13/16] 0.0, 128
    %5460 = vxpose.xlu0.b32.cont [14/16] 0.0, 128
    %5461 = vxpose.xlu0.b32.cont [15/16] 0.0, 128
    %5462 = vxpose.xlu0.b32.end [16/16] 0.0, 128
    %v5463 = vpop.trf.xlu0
    %v5464 = vpop.trf.xlu0
    %v5465 = vpop.trf.xlu0
    %v5466 = vpop.trf.xlu0
    %v5467 = vpop.trf.xlu0
    %v5468 = vpop.trf.xlu0
    %v5469 = vpop.trf.xlu0
    %v5470 = vpop.trf.xlu0
    %v5471 = vpop.trf.xlu0
    %v5472 = vpop.trf.xlu0
    %v5473 = vpop.trf.xlu0
    %v5474 = vpop.trf.xlu0
    %v5475 = vpop.trf.xlu0
    %v5476 = vpop.trf.xlu0
    %v5477 = vpop.trf.xlu0
    %v5478 = vpop.trf.xlu0
    %5479 = vxpose.xlu0.b32.start [1/16] %v2018, 128
    %5480 = vxpose.xlu0.b32.cont [2/16] 0.0, 128
    %5481 = vxpose.xlu0.b32.cont [3/16] 0.0, 128
    %5482 = vxpose.xlu0.b32.cont [4/16] 0.0, 128
    %5483 = vxpose.xlu0.b32.cont [5/16] 0.0, 128
    %5484 = vxpose.xlu0.b32.cont [6/16] 0.0, 128
    %5485 = vxpose.xlu0.b32.cont [7/16] 0.0, 128
    %5486 = vxpose.xlu0.b32.cont [8/16] 0.0, 128
    %5487 = vxpose.xlu0.b32.cont [9/16] 0.0, 128
    %5488 = vxpose.xlu0.b32.cont [10/16] 0.0, 128
    %5489 = vxpose.xlu0.b32.cont [11/16] 0.0, 128
    %5490 = vxpose.xlu0.b32.cont [12/16] 0.0, 128
    %5491 = vxpose.xlu0.b32.cont [13/16] 0.0, 128
    %5492 = vxpose.xlu0.b32.cont [14/16] 0.0, 128
    %5493 = vxpose.xlu0.b32.cont [15/16] 0.0, 128
    %5494 = vxpose.xlu0.b32.end [16/16] 0.0, 128
    %v5495 = vpop.trf.xlu0
    %v5496 = vpop.trf.xlu0
    %v5497 = vpop.trf.xlu0
    %v5498 = vpop.trf.xlu0
    %v5499 = vpop.trf.xlu0
    %v5500 = vpop.trf.xlu0
    %v5501 = vpop.trf.xlu0
    %v5502 = vpop.trf.xlu0
    %v5503 = vpop.trf.xlu0
    %v5504 = vpop.trf.xlu0
    %v5505 = vpop.trf.xlu0
    %v5506 = vpop.trf.xlu0
    %v5507 = vpop.trf.xlu0
    %v5508 = vpop.trf.xlu0
    %v5509 = vpop.trf.xlu0
    %v5510 = vpop.trf.xlu0
    %5511 = vxpose.xlu0.b32.start [1/16] %v2019, 128
    %5512 = vxpose.xlu0.b32.cont [2/16] 0.0, 128
    %5513 = vxpose.xlu0.b32.cont [3/16] 0.0, 128
    %5514 = vxpose.xlu0.b32.cont [4/16] 0.0, 128
    %5515 = vxpose.xlu0.b32.cont [5/16] 0.0, 128
    %5516 = vxpose.xlu0.b32.cont [6/16] 0.0, 128
    %5517 = vxpose.xlu0.b32.cont [7/16] 0.0, 128
    %5518 = vxpose.xlu0.b32.cont [8/16] 0.0, 128
    %5519 = vxpose.xlu0.b32.cont [9/16] 0.0, 128
    %5520 = vxpose.xlu0.b32.cont [10/16] 0.0, 128
    %5521 = vxpose.xlu0.b32.cont [11/16] 0.0, 128
    %5522 = vxpose.xlu0.b32.cont [12/16] 0.0, 128
    %5523 = vxpose.xlu0.b32.cont [13/16] 0.0, 128
    %5524 = vxpose.xlu0.b32.cont [14/16] 0.0, 128
    %5525 = vxpose.xlu0.b32.cont [15/16] 0.0, 128
    %5526 = vxpose.xlu0.b32.end [16/16] 0.0, 128
    %v5527 = vpop.trf.xlu0
    %v5528 = vpop.trf.xlu0
    %v5529 = vpop.trf.xlu0
    %v5530 = vpop.trf.xlu0
    %v5531 = vpop.trf.xlu0
    %v5532 = vpop.trf.xlu0
    %v5533 = vpop.trf.xlu0
    %v5534 = vpop.trf.xlu0
    %v5535 = vpop.trf.xlu0
    %v5536 = vpop.trf.xlu0
    %v5537 = vpop.trf.xlu0
    %v5538 = vpop.trf.xlu0
    %v5539 = vpop.trf.xlu0
    %v5540 = vpop.trf.xlu0
    %v5541 = vpop.trf.xlu0
    %v5542 = vpop.trf.xlu0
    %5543 = vxpose.xlu0.b32.start [1/16] %v2020, 128
    %5544 = vxpose.xlu0.b32.cont [2/16] 0.0, 128
    %5545 = vxpose.xlu0.b32.cont [3/16] 0.0, 128
    %5546 = vxpose.xlu0.b32.cont [4/16] 0.0, 128
    %5547 = vxpose.xlu0.b32.cont [5/16] 0.0, 128
    %5548 = vxpose.xlu0.b32.cont [6/16] 0.0, 128
    %5549 = vxpose.xlu0.b32.cont [7/16] 0.0, 128
    %5550 = vxpose.xlu0.b32.cont [8/16] 0.0, 128
    %5551 = vxpose.xlu0.b32.cont [9/16] 0.0, 128
    %5552 = vxpose.xlu0.b32.cont [10/16] 0.0, 128
    %5553 = vxpose.xlu0.b32.cont [11/16] 0.0, 128
    %5554 = vxpose.xlu0.b32.cont [12/16] 0.0, 128
    %5555 = vxpose.xlu0.b32.cont [13/16] 0.0, 128
    %5556 = vxpose.xlu0.b32.cont [14/16] 0.0, 128
    %5557 = vxpose.xlu0.b32.cont [15/16] 0.0, 128
    %5558 = vxpose.xlu0.b32.end [16/16] 0.0, 128
    %v5559 = vpop.trf.xlu0
    %v5560 = vpop.trf.xlu0
    %v5561 = vpop.trf.xlu0
    %v5562 = vpop.trf.xlu0
    %v5563 = vpop.trf.xlu0
    %v5564 = vpop.trf.xlu0
    %v5565 = vpop.trf.xlu0
    %v5566 = vpop.trf.xlu0
    %v5567 = vpop.trf.xlu0
    %v5568 = vpop.trf.xlu0
    %v5569 = vpop.trf.xlu0
    %v5570 = vpop.trf.xlu0
    %v5571 = vpop.trf.xlu0
    %v5572 = vpop.trf.xlu0
    %v5573 = vpop.trf.xlu0
    %v5574 = vpop.trf.xlu0
    %5575 = vxpose.xlu0.b32.start [1/16] %v2021, 128
    %5576 = vxpose.xlu0.b32.cont [2/16] 0.0, 128
    %5577 = vxpose.xlu0.b32.cont [3/16] 0.0, 128
    %5578 = vxpose.xlu0.b32.cont [4/16] 0.0, 128
    %5579 = vxpose.xlu0.b32.cont [5/16] 0.0, 128
    %5580 = vxpose.xlu0.b32.cont [6/16] 0.0, 128
    %5581 = vxpose.xlu0.b32.cont [7/16] 0.0, 128
    %5582 = vxpose.xlu0.b32.cont [8/16] 0.0, 128
    %5583 = vxpose.xlu0.b32.cont [9/16] 0.0, 128
    %5584 = vxpose.xlu0.b32.cont [10/16] 0.0, 128
    %5585 = vxpose.xlu0.b32.cont [11/16] 0.0, 128
    %5586 = vxpose.xlu0.b32.cont [12/16] 0.0, 128
    %5587 = vxpose.xlu0.b32.cont [13/16] 0.0, 128
    %5588 = vxpose.xlu0.b32.cont [14/16] 0.0, 128
    %5589 = vxpose.xlu0.b32.cont [15/16] 0.0, 128
    %5590 = vxpose.xlu0.b32.end [16/16] 0.0, 128
    %v5591 = vpop.trf.xlu0
    %v5592 = vpop.trf.xlu0
    %v5593 = vpop.trf.xlu0
    %v5594 = vpop.trf.xlu0
    %v5595 = vpop.trf.xlu0
    %v5596 = vpop.trf.xlu0
    %v5597 = vpop.trf.xlu0
    %v5598 = vpop.trf.xlu0
    %v5599 = vpop.trf.xlu0
    %v5600 = vpop.trf.xlu0
    %v5601 = vpop.trf.xlu0
    %v5602 = vpop.trf.xlu0
    %v5603 = vpop.trf.xlu0
    %v5604 = vpop.trf.xlu0
    %v5605 = vpop.trf.xlu0
    %v5606 = vpop.trf.xlu0
    %5607 = vxpose.xlu0.b32.start [1/16] %v2022, 128
    %5608 = vxpose.xlu0.b32.cont [2/16] 0.0, 128
    %5609 = vxpose.xlu0.b32.cont [3/16] 0.0, 128
    %5610 = vxpose.xlu0.b32.cont [4/16] 0.0, 128
    %5611 = vxpose.xlu0.b32.cont [5/16] 0.0, 128
    %5612 = vxpose.xlu0.b32.cont [6/16] 0.0, 128
    %5613 = vxpose.xlu0.b32.cont [7/16] 0.0, 128
    %5614 = vxpose.xlu0.b32.cont [8/16] 0.0, 128
    %5615 = vxpose.xlu0.b32.cont [9/16] 0.0, 128
    %5616 = vxpose.xlu0.b32.cont [10/16] 0.0, 128
    %5617 = vxpose.xlu0.b32.cont [11/16] 0.0, 128
    %5618 = vxpose.xlu0.b32.cont [12/16] 0.0, 128
    %5619 = vxpose.xlu0.b32.cont [13/16] 0.0, 128
    %5620 = vxpose.xlu0.b32.cont [14/16] 0.0, 128
    %5621 = vxpose.xlu0.b32.cont [15/16] 0.0, 128
    %5622 = vxpose.xlu0.b32.end [16/16] 0.0, 128
    %v5623 = vpop.trf.xlu0
    %v5624 = vpop.trf.xlu0
    %v5625 = vpop.trf.xlu0
    %v5626 = vpop.trf.xlu0
    %v5627 = vpop.trf.xlu0
    %v5628 = vpop.trf.xlu0
    %v5629 = vpop.trf.xlu0
    %v5630 = vpop.trf.xlu0
    %v5631 = vpop.trf.xlu0
    %v5632 = vpop.trf.xlu0
    %v5633 = vpop.trf.xlu0
    %v5634 = vpop.trf.xlu0
    %v5635 = vpop.trf.xlu0
    %v5636 = vpop.trf.xlu0
    %v5637 = vpop.trf.xlu0
    %v5638 = vpop.trf.xlu0
    %5639 = vxpose.xlu0.b32.start [1/16] %v2151, 128
    %5640 = vxpose.xlu0.b32.cont [2/16] 0.0, 128
    %5641 = vxpose.xlu0.b32.cont [3/16] 0.0, 128
    %5642 = vxpose.xlu0.b32.cont [4/16] 0.0, 128
    %5643 = vxpose.xlu0.b32.cont [5/16] 0.0, 128
    %5644 = vxpose.xlu0.b32.cont [6/16] 0.0, 128
    %5645 = vxpose.xlu0.b32.cont [7/16] 0.0, 128
    %5646 = vxpose.xlu0.b32.cont [8/16] 0.0, 128
    %5647 = vxpose.xlu0.b32.cont [9/16] 0.0, 128
    %5648 = vxpose.xlu0.b32.cont [10/16] 0.0, 128
    %5649 = vxpose.xlu0.b32.cont [11/16] 0.0, 128
    %5650 = vxpose.xlu0.b32.cont [12/16] 0.0, 128
    %5651 = vxpose.xlu0.b32.cont [13/16] 0.0, 128
    %5652 = vxpose.xlu0.b32.cont [14/16] 0.0, 128
    %5653 = vxpose.xlu0.b32.cont [15/16] 0.0, 128
    %5654 = vxpose.xlu0.b32.end [16/16] 0.0, 128
    %v5655 = vpop.trf.xlu0
    %v5656 = vpop.trf.xlu0
    %v5657 = vpop.trf.xlu0
    %v5658 = vpop.trf.xlu0
    %v5659 = vpop.trf.xlu0
    %v5660 = vpop.trf.xlu0
    %v5661 = vpop.trf.xlu0
    %v5662 = vpop.trf.xlu0
    %v5663 = vpop.trf.xlu0
    %v5664 = vpop.trf.xlu0
    %v5665 = vpop.trf.xlu0
    %v5666 = vpop.trf.xlu0
    %v5667 = vpop.trf.xlu0
    %v5668 = vpop.trf.xlu0
    %v5669 = vpop.trf.xlu0
    %v5670 = vpop.trf.xlu0
    %5671 = vxpose.xlu0.b32.start [1/16] %v2152, 128
    %5672 = vxpose.xlu0.b32.cont [2/16] 0.0, 128
    %5673 = vxpose.xlu0.b32.cont [3/16] 0.0, 128
    %5674 = vxpose.xlu0.b32.cont [4/16] 0.0, 128
    %5675 = vxpose.xlu0.b32.cont [5/16] 0.0, 128
    %5676 = vxpose.xlu0.b32.cont [6/16] 0.0, 128
    %5677 = vxpose.xlu0.b32.cont [7/16] 0.0, 128
    %5678 = vxpose.xlu0.b32.cont [8/16] 0.0, 128
    %5679 = vxpose.xlu0.b32.cont [9/16] 0.0, 128
    %5680 = vxpose.xlu0.b32.cont [10/16] 0.0, 128
    %5681 = vxpose.xlu0.b32.cont [11/16] 0.0, 128
    %5682 = vxpose.xlu0.b32.cont [12/16] 0.0, 128
    %5683 = vxpose.xlu0.b32.cont [13/16] 0.0, 128
    %5684 = vxpose.xlu0.b32.cont [14/16] 0.0, 128
    %5685 = vxpose.xlu0.b32.cont [15/16] 0.0, 128
    %5686 = vxpose.xlu0.b32.end [16/16] 0.0, 128
    %v5687 = vpop.trf.xlu0
    %v5688 = vpop.trf.xlu0
    %v5689 = vpop.trf.xlu0
    %v5690 = vpop.trf.xlu0
    %v5691 = vpop.trf.xlu0
    %v5692 = vpop.trf.xlu0
    %v5693 = vpop.trf.xlu0
    %v5694 = vpop.trf.xlu0
    %v5695 = vpop.trf.xlu0
    %v5696 = vpop.trf.xlu0
    %v5697 = vpop.trf.xlu0
    %v5698 = vpop.trf.xlu0
    %v5699 = vpop.trf.xlu0
    %v5700 = vpop.trf.xlu0
    %v5701 = vpop.trf.xlu0
    %v5702 = vpop.trf.xlu0
    %5703 = vxpose.xlu0.b32.start [1/16] %v2153, 128
    %5704 = vxpose.xlu0.b32.cont [2/16] 0.0, 128
    %5705 = vxpose.xlu0.b32.cont [3/16] 0.0, 128
    %5706 = vxpose.xlu0.b32.cont [4/16] 0.0, 128
    %5707 = vxpose.xlu0.b32.cont [5/16] 0.0, 128
    %5708 = vxpose.xlu0.b32.cont [6/16] 0.0, 128
    %5709 = vxpose.xlu0.b32.cont [7/16] 0.0, 128
    %5710 = vxpose.xlu0.b32.cont [8/16] 0.0, 128
    %5711 = vxpose.xlu0.b32.cont [9/16] 0.0, 128
    %5712 = vxpose.xlu0.b32.cont [10/16] 0.0, 128
    %5713 = vxpose.xlu0.b32.cont [11/16] 0.0, 128
    %5714 = vxpose.xlu0.b32.cont [12/16] 0.0, 128
    %5715 = vxpose.xlu0.b32.cont [13/16] 0.0, 128
    %5716 = vxpose.xlu0.b32.cont [14/16] 0.0, 128
    %5717 = vxpose.xlu0.b32.cont [15/16] 0.0, 128
    %5718 = vxpose.xlu0.b32.end [16/16] 0.0, 128
    %v5719 = vpop.trf.xlu0
    %v5720 = vpop.trf.xlu0
    %v5721 = vpop.trf.xlu0
    %v5722 = vpop.trf.xlu0
    %v5723 = vpop.trf.xlu0
    %v5724 = vpop.trf.xlu0
    %v5725 = vpop.trf.xlu0
    %v5726 = vpop.trf.xlu0
    %v5727 = vpop.trf.xlu0
    %v5728 = vpop.trf.xlu0
    %v5729 = vpop.trf.xlu0
    %v5730 = vpop.trf.xlu0
    %v5731 = vpop.trf.xlu0
    %v5732 = vpop.trf.xlu0
    %v5733 = vpop.trf.xlu0
    %v5734 = vpop.trf.xlu0
    %5735 = vxpose.xlu0.b32.start [1/16] %v2154, 128
    %5736 = vxpose.xlu0.b32.cont [2/16] 0.0, 128
    %5737 = vxpose.xlu0.b32.cont [3/16] 0.0, 128
    %5738 = vxpose.xlu0.b32.cont [4/16] 0.0, 128
    %5739 = vxpose.xlu0.b32.cont [5/16] 0.0, 128
    %5740 = vxpose.xlu0.b32.cont [6/16] 0.0, 128
    %5741 = vxpose.xlu0.b32.cont [7/16] 0.0, 128
    %5742 = vxpose.xlu0.b32.cont [8/16] 0.0, 128
    %5743 = vxpose.xlu0.b32.cont [9/16] 0.0, 128
    %5744 = vxpose.xlu0.b32.cont [10/16] 0.0, 128
    %5745 = vxpose.xlu0.b32.cont [11/16] 0.0, 128
    %5746 = vxpose.xlu0.b32.cont [12/16] 0.0, 128
    %5747 = vxpose.xlu0.b32.cont [13/16] 0.0, 128
    %5748 = vxpose.xlu0.b32.cont [14/16] 0.0, 128
    %5749 = vxpose.xlu0.b32.cont [15/16] 0.0, 128
    %5750 = vxpose.xlu0.b32.end [16/16] 0.0, 128
    %v5751 = vpop.trf.xlu0
    %v5752 = vpop.trf.xlu0
    %v5753 = vpop.trf.xlu0
    %v5754 = vpop.trf.xlu0
    %v5755 = vpop.trf.xlu0
    %v5756 = vpop.trf.xlu0
    %v5757 = vpop.trf.xlu0
    %v5758 = vpop.trf.xlu0
    %v5759 = vpop.trf.xlu0
    %v5760 = vpop.trf.xlu0
    %v5761 = vpop.trf.xlu0
    %v5762 = vpop.trf.xlu0
    %v5763 = vpop.trf.xlu0
    %v5764 = vpop.trf.xlu0
    %v5765 = vpop.trf.xlu0
    %v5766 = vpop.trf.xlu0
    %5767 = vxpose.xlu0.b32.start [1/16] %v2155, 128
    %5768 = vxpose.xlu0.b32.cont [2/16] 0.0, 128
    %5769 = vxpose.xlu0.b32.cont [3/16] 0.0, 128
    %5770 = vxpose.xlu0.b32.cont [4/16] 0.0, 128
    %5771 = vxpose.xlu0.b32.cont [5/16] 0.0, 128
    %5772 = vxpose.xlu0.b32.cont [6/16] 0.0, 128
    %5773 = vxpose.xlu0.b32.cont [7/16] 0.0, 128
    %5774 = vxpose.xlu0.b32.cont [8/16] 0.0, 128
    %5775 = vxpose.xlu0.b32.cont [9/16] 0.0, 128
    %5776 = vxpose.xlu0.b32.cont [10/16] 0.0, 128
    %5777 = vxpose.xlu0.b32.cont [11/16] 0.0, 128
    %5778 = vxpose.xlu0.b32.cont [12/16] 0.0, 128
    %5779 = vxpose.xlu0.b32.cont [13/16] 0.0, 128
    %5780 = vxpose.xlu0.b32.cont [14/16] 0.0, 128
    %5781 = vxpose.xlu0.b32.cont [15/16] 0.0, 128
    %5782 = vxpose.xlu0.b32.end [16/16] 0.0, 128
    %v5783 = vpop.trf.xlu0
    %v5784 = vpop.trf.xlu0
    %v5785 = vpop.trf.xlu0
    %v5786 = vpop.trf.xlu0
    %v5787 = vpop.trf.xlu0
    %v5788 = vpop.trf.xlu0
    %v5789 = vpop.trf.xlu0
    %v5790 = vpop.trf.xlu0
    %v5791 = vpop.trf.xlu0
    %v5792 = vpop.trf.xlu0
    %v5793 = vpop.trf.xlu0
    %v5794 = vpop.trf.xlu0
    %v5795 = vpop.trf.xlu0
    %v5796 = vpop.trf.xlu0
    %v5797 = vpop.trf.xlu0
    %v5798 = vpop.trf.xlu0
    %5799 = vxpose.xlu0.b32.start [1/16] %v2156, 128
    %5800 = vxpose.xlu0.b32.cont [2/16] 0.0, 128
    %5801 = vxpose.xlu0.b32.cont [3/16] 0.0, 128
    %5802 = vxpose.xlu0.b32.cont [4/16] 0.0, 128
    %5803 = vxpose.xlu0.b32.cont [5/16] 0.0, 128
    %5804 = vxpose.xlu0.b32.cont [6/16] 0.0, 128
    %5805 = vxpose.xlu0.b32.cont [7/16] 0.0, 128
    %5806 = vxpose.xlu0.b32.cont [8/16] 0.0, 128
    %5807 = vxpose.xlu0.b32.cont [9/16] 0.0, 128
    %5808 = vxpose.xlu0.b32.cont [10/16] 0.0, 128
    %5809 = vxpose.xlu0.b32.cont [11/16] 0.0, 128
    %5810 = vxpose.xlu0.b32.cont [12/16] 0.0, 128
    %5811 = vxpose.xlu0.b32.cont [13/16] 0.0, 128
    %5812 = vxpose.xlu0.b32.cont [14/16] 0.0, 128
    %5813 = vxpose.xlu0.b32.cont [15/16] 0.0, 128
    %5814 = vxpose.xlu0.b32.end [16/16] 0.0, 128
    %v5815 = vpop.trf.xlu0
    %v5816 = vpop.trf.xlu0
    %v5817 = vpop.trf.xlu0
    %v5818 = vpop.trf.xlu0
    %v5819 = vpop.trf.xlu0
    %v5820 = vpop.trf.xlu0
    %v5821 = vpop.trf.xlu0
    %v5822 = vpop.trf.xlu0
    %v5823 = vpop.trf.xlu0
    %v5824 = vpop.trf.xlu0
    %v5825 = vpop.trf.xlu0
    %v5826 = vpop.trf.xlu0
    %v5827 = vpop.trf.xlu0
    %v5828 = vpop.trf.xlu0
    %v5829 = vpop.trf.xlu0
    %v5830 = vpop.trf.xlu0
    %5831 = vxpose.xlu0.b32.start [1/16] %v2157, 128
    %5832 = vxpose.xlu0.b32.cont [2/16] 0.0, 128
    %5833 = vxpose.xlu0.b32.cont [3/16] 0.0, 128
    %5834 = vxpose.xlu0.b32.cont [4/16] 0.0, 128
    %5835 = vxpose.xlu0.b32.cont [5/16] 0.0, 128
    %5836 = vxpose.xlu0.b32.cont [6/16] 0.0, 128
    %5837 = vxpose.xlu0.b32.cont [7/16] 0.0, 128
    %5838 = vxpose.xlu0.b32.cont [8/16] 0.0, 128
    %5839 = vxpose.xlu0.b32.cont [9/16] 0.0, 128
    %5840 = vxpose.xlu0.b32.cont [10/16] 0.0, 128
    %5841 = vxpose.xlu0.b32.cont [11/16] 0.0, 128
    %5842 = vxpose.xlu0.b32.cont [12/16] 0.0, 128
    %5843 = vxpose.xlu0.b32.cont [13/16] 0.0, 128
    %5844 = vxpose.xlu0.b32.cont [14/16] 0.0, 128
    %5845 = vxpose.xlu0.b32.cont [15/16] 0.0, 128
    %5846 = vxpose.xlu0.b32.end [16/16] 0.0, 128
    %v5847 = vpop.trf.xlu0
    %v5848 = vpop.trf.xlu0
    %v5849 = vpop.trf.xlu0
    %v5850 = vpop.trf.xlu0
    %v5851 = vpop.trf.xlu0
    %v5852 = vpop.trf.xlu0
    %v5853 = vpop.trf.xlu0
    %v5854 = vpop.trf.xlu0
    %v5855 = vpop.trf.xlu0
    %v5856 = vpop.trf.xlu0
    %v5857 = vpop.trf.xlu0
    %v5858 = vpop.trf.xlu0
    %v5859 = vpop.trf.xlu0
    %v5860 = vpop.trf.xlu0
    %v5861 = vpop.trf.xlu0
    %v5862 = vpop.trf.xlu0
    %5863 = vxpose.xlu0.b32.start [1/16] %v2158, 128
    %5864 = vxpose.xlu0.b32.cont [2/16] 0.0, 128
    %5865 = vxpose.xlu0.b32.cont [3/16] 0.0, 128
    %5866 = vxpose.xlu0.b32.cont [4/16] 0.0, 128
    %5867 = vxpose.xlu0.b32.cont [5/16] 0.0, 128
    %5868 = vxpose.xlu0.b32.cont [6/16] 0.0, 128
    %5869 = vxpose.xlu0.b32.cont [7/16] 0.0, 128
    %5870 = vxpose.xlu0.b32.cont [8/16] 0.0, 128
    %5871 = vxpose.xlu0.b32.cont [9/16] 0.0, 128
    %5872 = vxpose.xlu0.b32.cont [10/16] 0.0, 128
    %5873 = vxpose.xlu0.b32.cont [11/16] 0.0, 128
    %5874 = vxpose.xlu0.b32.cont [12/16] 0.0, 128
    %5875 = vxpose.xlu0.b32.cont [13/16] 0.0, 128
    %5876 = vxpose.xlu0.b32.cont [14/16] 0.0, 128
    %5877 = vxpose.xlu0.b32.cont [15/16] 0.0, 128
    %5878 = vxpose.xlu0.b32.end [16/16] 0.0, 128
    %v5879 = vpop.trf.xlu0
    %v5880 = vpop.trf.xlu0
    %v5881 = vpop.trf.xlu0
    %v5882 = vpop.trf.xlu0
    %v5883 = vpop.trf.xlu0
    %v5884 = vpop.trf.xlu0
    %v5885 = vpop.trf.xlu0
    %v5886 = vpop.trf.xlu0
    %v5887 = vpop.trf.xlu0
    %v5888 = vpop.trf.xlu0
    %v5889 = vpop.trf.xlu0
    %v5890 = vpop.trf.xlu0
    %v5891 = vpop.trf.xlu0
    %v5892 = vpop.trf.xlu0
    %v5893 = vpop.trf.xlu0
    %v5894 = vpop.trf.xlu0
    %5895 = vxpose.xlu0.b32.start [1/16] %v2287, 128
    %5896 = vxpose.xlu0.b32.cont [2/16] 0.0, 128
    %5897 = vxpose.xlu0.b32.cont [3/16] 0.0, 128
    %5898 = vxpose.xlu0.b32.cont [4/16] 0.0, 128
    %5899 = vxpose.xlu0.b32.cont [5/16] 0.0, 128
    %5900 = vxpose.xlu0.b32.cont [6/16] 0.0, 128
    %5901 = vxpose.xlu0.b32.cont [7/16] 0.0, 128
    %5902 = vxpose.xlu0.b32.cont [8/16] 0.0, 128
    %5903 = vxpose.xlu0.b32.cont [9/16] 0.0, 128
    %5904 = vxpose.xlu0.b32.cont [10/16] 0.0, 128
    %5905 = vxpose.xlu0.b32.cont [11/16] 0.0, 128
    %5906 = vxpose.xlu0.b32.cont [12/16] 0.0, 128
    %5907 = vxpose.xlu0.b32.cont [13/16] 0.0, 128
    %5908 = vxpose.xlu0.b32.cont [14/16] 0.0, 128
    %5909 = vxpose.xlu0.b32.cont [15/16] 0.0, 128
    %5910 = vxpose.xlu0.b32.end [16/16] 0.0, 128
    %v5911 = vpop.trf.xlu0
    %v5912 = vpop.trf.xlu0
    %v5913 = vpop.trf.xlu0
    %v5914 = vpop.trf.xlu0
    %v5915 = vpop.trf.xlu0
    %v5916 = vpop.trf.xlu0
    %v5917 = vpop.trf.xlu0
    %v5918 = vpop.trf.xlu0
    %v5919 = vpop.trf.xlu0
    %v5920 = vpop.trf.xlu0
    %v5921 = vpop.trf.xlu0
    %v5922 = vpop.trf.xlu0
    %v5923 = vpop.trf.xlu0
    %v5924 = vpop.trf.xlu0
    %v5925 = vpop.trf.xlu0
    %v5926 = vpop.trf.xlu0
    %5927 = vxpose.xlu0.b32.start [1/16] %v2288, 128
    %5928 = vxpose.xlu0.b32.cont [2/16] 0.0, 128
    %5929 = vxpose.xlu0.b32.cont [3/16] 0.0, 128
    %5930 = vxpose.xlu0.b32.cont [4/16] 0.0, 128
    %5931 = vxpose.xlu0.b32.cont [5/16] 0.0, 128
    %5932 = vxpose.xlu0.b32.cont [6/16] 0.0, 128
    %5933 = vxpose.xlu0.b32.cont [7/16] 0.0, 128
    %5934 = vxpose.xlu0.b32.cont [8/16] 0.0, 128
    %5935 = vxpose.xlu0.b32.cont [9/16] 0.0, 128
    %5936 = vxpose.xlu0.b32.cont [10/16] 0.0, 128
    %5937 = vxpose.xlu0.b32.cont [11/16] 0.0, 128
    %5938 = vxpose.xlu0.b32.cont [12/16] 0.0, 128
    %5939 = vxpose.xlu0.b32.cont [13/16] 0.0, 128
    %5940 = vxpose.xlu0.b32.cont [14/16] 0.0, 128
    %5941 = vxpose.xlu0.b32.cont [15/16] 0.0, 128
    %5942 = vxpose.xlu0.b32.end [16/16] 0.0, 128
    %v5943 = vpop.trf.xlu0
    %v5944 = vpop.trf.xlu0
    %v5945 = vpop.trf.xlu0
    %v5946 = vpop.trf.xlu0
    %v5947 = vpop.trf.xlu0
    %v5948 = vpop.trf.xlu0
    %v5949 = vpop.trf.xlu0
    %v5950 = vpop.trf.xlu0
    %v5951 = vpop.trf.xlu0
    %v5952 = vpop.trf.xlu0
    %v5953 = vpop.trf.xlu0
    %v5954 = vpop.trf.xlu0
    %v5955 = vpop.trf.xlu0
    %v5956 = vpop.trf.xlu0
    %v5957 = vpop.trf.xlu0
    %v5958 = vpop.trf.xlu0
    %5959 = vxpose.xlu0.b32.start [1/16] %v2289, 128
    %5960 = vxpose.xlu0.b32.cont [2/16] 0.0, 128
    %5961 = vxpose.xlu0.b32.cont [3/16] 0.0, 128
    %5962 = vxpose.xlu0.b32.cont [4/16] 0.0, 128
    %5963 = vxpose.xlu0.b32.cont [5/16] 0.0, 128
    %5964 = vxpose.xlu0.b32.cont [6/16] 0.0, 128
    %5965 = vxpose.xlu0.b32.cont [7/16] 0.0, 128
    %5966 = vxpose.xlu0.b32.cont [8/16] 0.0, 128
    %5967 = vxpose.xlu0.b32.cont [9/16] 0.0, 128
    %5968 = vxpose.xlu0.b32.cont [10/16] 0.0, 128
    %5969 = vxpose.xlu0.b32.cont [11/16] 0.0, 128
    %5970 = vxpose.xlu0.b32.cont [12/16] 0.0, 128
    %5971 = vxpose.xlu0.b32.cont [13/16] 0.0, 128
    %5972 = vxpose.xlu0.b32.cont [14/16] 0.0, 128
    %5973 = vxpose.xlu0.b32.cont [15/16] 0.0, 128
    %5974 = vxpose.xlu0.b32.end [16/16] 0.0, 128
    %v5975 = vpop.trf.xlu0
    %v5976 = vpop.trf.xlu0
    %v5977 = vpop.trf.xlu0
    %v5978 = vpop.trf.xlu0
    %v5979 = vpop.trf.xlu0
    %v5980 = vpop.trf.xlu0
    %v5981 = vpop.trf.xlu0
    %v5982 = vpop.trf.xlu0
    %v5983 = vpop.trf.xlu0
    %v5984 = vpop.trf.xlu0
    %v5985 = vpop.trf.xlu0
    %v5986 = vpop.trf.xlu0
    %v5987 = vpop.trf.xlu0
    %v5988 = vpop.trf.xlu0
    %v5989 = vpop.trf.xlu0
    %v5990 = vpop.trf.xlu0
    %5991 = vxpose.xlu0.b32.start [1/16] %v2290, 128
    %5992 = vxpose.xlu0.b32.cont [2/16] 0.0, 128
    %5993 = vxpose.xlu0.b32.cont [3/16] 0.0, 128
    %5994 = vxpose.xlu0.b32.cont [4/16] 0.0, 128
    %5995 = vxpose.xlu0.b32.cont [5/16] 0.0, 128
    %5996 = vxpose.xlu0.b32.cont [6/16] 0.0, 128
    %5997 = vxpose.xlu0.b32.cont [7/16] 0.0, 128
    %5998 = vxpose.xlu0.b32.cont [8/16] 0.0, 128
    %5999 = vxpose.xlu0.b32.cont [9/16] 0.0, 128
    %6000 = vxpose.xlu0.b32.cont [10/16] 0.0, 128
    %6001 = vxpose.xlu0.b32.cont [11/16] 0.0, 128
    %6002 = vxpose.xlu0.b32.cont [12/16] 0.0, 128
    %6003 = vxpose.xlu0.b32.cont [13/16] 0.0, 128
    %6004 = vxpose.xlu0.b32.cont [14/16] 0.0, 128
    %6005 = vxpose.xlu0.b32.cont [15/16] 0.0, 128
    %6006 = vxpose.xlu0.b32.end [16/16] 0.0, 128
    %v6007 = vpop.trf.xlu0
    %v6008 = vpop.trf.xlu0
    %v6009 = vpop.trf.xlu0
    %v6010 = vpop.trf.xlu0
    %v6011 = vpop.trf.xlu0
    %v6012 = vpop.trf.xlu0
    %v6013 = vpop.trf.xlu0
    %v6014 = vpop.trf.xlu0
    %v6015 = vpop.trf.xlu0
    %v6016 = vpop.trf.xlu0
    %v6017 = vpop.trf.xlu0
    %v6018 = vpop.trf.xlu0
    %v6019 = vpop.trf.xlu0
    %v6020 = vpop.trf.xlu0
    %v6021 = vpop.trf.xlu0
    %v6022 = vpop.trf.xlu0
    %6023 = vxpose.xlu0.b32.start [1/16] %v2291, 128
    %6024 = vxpose.xlu0.b32.cont [2/16] 0.0, 128
    %6025 = vxpose.xlu0.b32.cont [3/16] 0.0, 128
    %6026 = vxpose.xlu0.b32.cont [4/16] 0.0, 128
    %6027 = vxpose.xlu0.b32.cont [5/16] 0.0, 128
    %6028 = vxpose.xlu0.b32.cont [6/16] 0.0, 128
    %6029 = vxpose.xlu0.b32.cont [7/16] 0.0, 128
    %6030 = vxpose.xlu0.b32.cont [8/16] 0.0, 128
    %6031 = vxpose.xlu0.b32.cont [9/16] 0.0, 128
    %6032 = vxpose.xlu0.b32.cont [10/16] 0.0, 128
    %6033 = vxpose.xlu0.b32.cont [11/16] 0.0, 128
    %6034 = vxpose.xlu0.b32.cont [12/16] 0.0, 128
    %6035 = vxpose.xlu0.b32.cont [13/16] 0.0, 128
    %6036 = vxpose.xlu0.b32.cont [14/16] 0.0, 128
    %6037 = vxpose.xlu0.b32.cont [15/16] 0.0, 128
    %6038 = vxpose.xlu0.b32.end [16/16] 0.0, 128
    %v6039 = vpop.trf.xlu0
    %v6040 = vpop.trf.xlu0
    %v6041 = vpop.trf.xlu0
    %v6042 = vpop.trf.xlu0
    %v6043 = vpop.trf.xlu0
    %v6044 = vpop.trf.xlu0
    %v6045 = vpop.trf.xlu0
    %v6046 = vpop.trf.xlu0
    %v6047 = vpop.trf.xlu0
    %v6048 = vpop.trf.xlu0
    %v6049 = vpop.trf.xlu0
    %v6050 = vpop.trf.xlu0
    %v6051 = vpop.trf.xlu0
    %v6052 = vpop.trf.xlu0
    %v6053 = vpop.trf.xlu0
    %v6054 = vpop.trf.xlu0
    %6055 = vxpose.xlu0.b32.start [1/16] %v2292, 128
    %6056 = vxpose.xlu0.b32.cont [2/16] 0.0, 128
    %6057 = vxpose.xlu0.b32.cont [3/16] 0.0, 128
    %6058 = vxpose.xlu0.b32.cont [4/16] 0.0, 128
    %6059 = vxpose.xlu0.b32.cont [5/16] 0.0, 128
    %6060 = vxpose.xlu0.b32.cont [6/16] 0.0, 128
    %6061 = vxpose.xlu0.b32.cont [7/16] 0.0, 128
    %6062 = vxpose.xlu0.b32.cont [8/16] 0.0, 128
    %6063 = vxpose.xlu0.b32.cont [9/16] 0.0, 128
    %6064 = vxpose.xlu0.b32.cont [10/16] 0.0, 128
    %6065 = vxpose.xlu0.b32.cont [11/16] 0.0, 128
    %6066 = vxpose.xlu0.b32.cont [12/16] 0.0, 128
    %6067 = vxpose.xlu0.b32.cont [13/16] 0.0, 128
    %6068 = vxpose.xlu0.b32.cont [14/16] 0.0, 128
    %6069 = vxpose.xlu0.b32.cont [15/16] 0.0, 128
    %6070 = vxpose.xlu0.b32.end [16/16] 0.0, 128
    %v6071 = vpop.trf.xlu0
    %v6072 = vpop.trf.xlu0
    %v6073 = vpop.trf.xlu0
    %v6074 = vpop.trf.xlu0
    %v6075 = vpop.trf.xlu0
    %v6076 = vpop.trf.xlu0
    %v6077 = vpop.trf.xlu0
    %v6078 = vpop.trf.xlu0
    %v6079 = vpop.trf.xlu0
    %v6080 = vpop.trf.xlu0
    %v6081 = vpop.trf.xlu0
    %v6082 = vpop.trf.xlu0
    %v6083 = vpop.trf.xlu0
    %v6084 = vpop.trf.xlu0
    %v6085 = vpop.trf.xlu0
    %v6086 = vpop.trf.xlu0
    %6087 = vxpose.xlu0.b32.start [1/16] %v2293, 128
    %6088 = vxpose.xlu0.b32.cont [2/16] 0.0, 128
    %6089 = vxpose.xlu0.b32.cont [3/16] 0.0, 128
    %6090 = vxpose.xlu0.b32.cont [4/16] 0.0, 128
    %6091 = vxpose.xlu0.b32.cont [5/16] 0.0, 128
    %6092 = vxpose.xlu0.b32.cont [6/16] 0.0, 128
    %6093 = vxpose.xlu0.b32.cont [7/16] 0.0, 128
    %6094 = vxpose.xlu0.b32.cont [8/16] 0.0, 128
    %6095 = vxpose.xlu0.b32.cont [9/16] 0.0, 128
    %6096 = vxpose.xlu0.b32.cont [10/16] 0.0, 128
    %6097 = vxpose.xlu0.b32.cont [11/16] 0.0, 128
    %6098 = vxpose.xlu0.b32.cont [12/16] 0.0, 128
    %6099 = vxpose.xlu0.b32.cont [13/16] 0.0, 128
    %6100 = vxpose.xlu0.b32.cont [14/16] 0.0, 128
    %6101 = vxpose.xlu0.b32.cont [15/16] 0.0, 128
    %6102 = vxpose.xlu0.b32.end [16/16] 0.0, 128
    %v6103 = vpop.trf.xlu0
    %v6104 = vpop.trf.xlu0
    %v6105 = vpop.trf.xlu0
    %v6106 = vpop.trf.xlu0
    %v6107 = vpop.trf.xlu0
    %v6108 = vpop.trf.xlu0
    %v6109 = vpop.trf.xlu0
    %v6110 = vpop.trf.xlu0
    %v6111 = vpop.trf.xlu0
    %v6112 = vpop.trf.xlu0
    %v6113 = vpop.trf.xlu0
    %v6114 = vpop.trf.xlu0
    %v6115 = vpop.trf.xlu0
    %v6116 = vpop.trf.xlu0
    %v6117 = vpop.trf.xlu0
    %v6118 = vpop.trf.xlu0
    %6119 = vxpose.xlu0.b32.start [1/16] %v2294, 128
    %6120 = vxpose.xlu0.b32.cont [2/16] 0.0, 128
    %6121 = vxpose.xlu0.b32.cont [3/16] 0.0, 128
    %6122 = vxpose.xlu0.b32.cont [4/16] 0.0, 128
    %6123 = vxpose.xlu0.b32.cont [5/16] 0.0, 128
    %6124 = vxpose.xlu0.b32.cont [6/16] 0.0, 128
    %6125 = vxpose.xlu0.b32.cont [7/16] 0.0, 128
    %6126 = vxpose.xlu0.b32.cont [8/16] 0.0, 128
    %6127 = vxpose.xlu0.b32.cont [9/16] 0.0, 128
    %6128 = vxpose.xlu0.b32.cont [10/16] 0.0, 128
    %6129 = vxpose.xlu0.b32.cont [11/16] 0.0, 128
    %6130 = vxpose.xlu0.b32.cont [12/16] 0.0, 128
    %6131 = vxpose.xlu0.b32.cont [13/16] 0.0, 128
    %6132 = vxpose.xlu0.b32.cont [14/16] 0.0, 128
    %6133 = vxpose.xlu0.b32.cont [15/16] 0.0, 128
    %6134 = vxpose.xlu0.b32.end [16/16] 0.0, 128
    %v6135 = vpop.trf.xlu0
    %v6136 = vpop.trf.xlu0
    %v6137 = vpop.trf.xlu0
    %v6138 = vpop.trf.xlu0
    %v6139 = vpop.trf.xlu0
    %v6140 = vpop.trf.xlu0
    %v6141 = vpop.trf.xlu0
    %v6142 = vpop.trf.xlu0
    %v6143 = vpop.trf.xlu0
    %v6144 = vpop.trf.xlu0
    %v6145 = vpop.trf.xlu0
    %v6146 = vpop.trf.xlu0
    %v6147 = vpop.trf.xlu0
    %v6148 = vpop.trf.xlu0
    %v6149 = vpop.trf.xlu0
    %v6150 = vpop.trf.xlu0
    %6151 = vxpose.xlu0.b32.start [1/16] %v2423, 128
    %6152 = vxpose.xlu0.b32.cont [2/16] 0.0, 128
    %6153 = vxpose.xlu0.b32.cont [3/16] 0.0, 128
    %6154 = vxpose.xlu0.b32.cont [4/16] 0.0, 128
    %6155 = vxpose.xlu0.b32.cont [5/16] 0.0, 128
    %6156 = vxpose.xlu0.b32.cont [6/16] 0.0, 128
    %6157 = vxpose.xlu0.b32.cont [7/16] 0.0, 128
    %6158 = vxpose.xlu0.b32.cont [8/16] 0.0, 128
    %6159 = vxpose.xlu0.b32.cont [9/16] 0.0, 128
    %6160 = vxpose.xlu0.b32.cont [10/16] 0.0, 128
    %6161 = vxpose.xlu0.b32.cont [11/16] 0.0, 128
    %6162 = vxpose.xlu0.b32.cont [12/16] 0.0, 128
    %6163 = vxpose.xlu0.b32.cont [13/16] 0.0, 128
    %6164 = vxpose.xlu0.b32.cont [14/16] 0.0, 128
    %6165 = vxpose.xlu0.b32.cont [15/16] 0.0, 128
    %6166 = vxpose.xlu0.b32.end [16/16] 0.0, 128
    %v6167 = vpop.trf.xlu0
    %v6168 = vpop.trf.xlu0
    %v6169 = vpop.trf.xlu0
    %v6170 = vpop.trf.xlu0
    %v6171 = vpop.trf.xlu0
    %v6172 = vpop.trf.xlu0
    %v6173 = vpop.trf.xlu0
    %v6174 = vpop.trf.xlu0
    %v6175 = vpop.trf.xlu0
    %v6176 = vpop.trf.xlu0
    %v6177 = vpop.trf.xlu0
    %v6178 = vpop.trf.xlu0
    %v6179 = vpop.trf.xlu0
    %v6180 = vpop.trf.xlu0
    %v6181 = vpop.trf.xlu0
    %v6182 = vpop.trf.xlu0
    %6183 = vxpose.xlu0.b32.start [1/16] %v2424, 128
    %6184 = vxpose.xlu0.b32.cont [2/16] 0.0, 128
    %6185 = vxpose.xlu0.b32.cont [3/16] 0.0, 128
    %6186 = vxpose.xlu0.b32.cont [4/16] 0.0, 128
    %6187 = vxpose.xlu0.b32.cont [5/16] 0.0, 128
    %6188 = vxpose.xlu0.b32.cont [6/16] 0.0, 128
    %6189 = vxpose.xlu0.b32.cont [7/16] 0.0, 128
    %6190 = vxpose.xlu0.b32.cont [8/16] 0.0, 128
    %6191 = vxpose.xlu0.b32.cont [9/16] 0.0, 128
    %6192 = vxpose.xlu0.b32.cont [10/16] 0.0, 128
    %6193 = vxpose.xlu0.b32.cont [11/16] 0.0, 128
    %6194 = vxpose.xlu0.b32.cont [12/16] 0.0, 128
    %6195 = vxpose.xlu0.b32.cont [13/16] 0.0, 128
    %6196 = vxpose.xlu0.b32.cont [14/16] 0.0, 128
    %6197 = vxpose.xlu0.b32.cont [15/16] 0.0, 128
    %6198 = vxpose.xlu0.b32.end [16/16] 0.0, 128
    %v6199 = vpop.trf.xlu0
    %v6200 = vpop.trf.xlu0
    %v6201 = vpop.trf.xlu0
    %v6202 = vpop.trf.xlu0
    %v6203 = vpop.trf.xlu0
    %v6204 = vpop.trf.xlu0
    %v6205 = vpop.trf.xlu0
    %v6206 = vpop.trf.xlu0
    %v6207 = vpop.trf.xlu0
    %v6208 = vpop.trf.xlu0
    %v6209 = vpop.trf.xlu0
    %v6210 = vpop.trf.xlu0
    %v6211 = vpop.trf.xlu0
    %v6212 = vpop.trf.xlu0
    %v6213 = vpop.trf.xlu0
    %v6214 = vpop.trf.xlu0
    %6215 = vxpose.xlu0.b32.start [1/16] %v2425, 128
    %6216 = vxpose.xlu0.b32.cont [2/16] 0.0, 128
    %6217 = vxpose.xlu0.b32.cont [3/16] 0.0, 128
    %6218 = vxpose.xlu0.b32.cont [4/16] 0.0, 128
    %6219 = vxpose.xlu0.b32.cont [5/16] 0.0, 128
    %6220 = vxpose.xlu0.b32.cont [6/16] 0.0, 128
    %6221 = vxpose.xlu0.b32.cont [7/16] 0.0, 128
    %6222 = vxpose.xlu0.b32.cont [8/16] 0.0, 128
    %6223 = vxpose.xlu0.b32.cont [9/16] 0.0, 128
    %6224 = vxpose.xlu0.b32.cont [10/16] 0.0, 128
    %6225 = vxpose.xlu0.b32.cont [11/16] 0.0, 128
    %6226 = vxpose.xlu0.b32.cont [12/16] 0.0, 128
    %6227 = vxpose.xlu0.b32.cont [13/16] 0.0, 128
    %6228 = vxpose.xlu0.b32.cont [14/16] 0.0, 128
    %6229 = vxpose.xlu0.b32.cont [15/16] 0.0, 128
    %6230 = vxpose.xlu0.b32.end [16/16] 0.0, 128
    %v6231 = vpop.trf.xlu0
    %v6232 = vpop.trf.xlu0
    %v6233 = vpop.trf.xlu0
    %v6234 = vpop.trf.xlu0
    %v6235 = vpop.trf.xlu0
    %v6236 = vpop.trf.xlu0
    %v6237 = vpop.trf.xlu0
    %v6238 = vpop.trf.xlu0
    %v6239 = vpop.trf.xlu0
    %v6240 = vpop.trf.xlu0
    %v6241 = vpop.trf.xlu0
    %v6242 = vpop.trf.xlu0
    %v6243 = vpop.trf.xlu0
    %v6244 = vpop.trf.xlu0
    %v6245 = vpop.trf.xlu0
    %v6246 = vpop.trf.xlu0
    %6247 = vxpose.xlu0.b32.start [1/16] %v2426, 128
    %6248 = vxpose.xlu0.b32.cont [2/16] 0.0, 128
    %6249 = vxpose.xlu0.b32.cont [3/16] 0.0, 128
    %6250 = vxpose.xlu0.b32.cont [4/16] 0.0, 128
    %6251 = vxpose.xlu0.b32.cont [5/16] 0.0, 128
    %6252 = vxpose.xlu0.b32.cont [6/16] 0.0, 128
    %6253 = vxpose.xlu0.b32.cont [7/16] 0.0, 128
    %6254 = vxpose.xlu0.b32.cont [8/16] 0.0, 128
    %6255 = vxpose.xlu0.b32.cont [9/16] 0.0, 128
    %6256 = vxpose.xlu0.b32.cont [10/16] 0.0, 128
    %6257 = vxpose.xlu0.b32.cont [11/16] 0.0, 128
    %6258 = vxpose.xlu0.b32.cont [12/16] 0.0, 128
    %6259 = vxpose.xlu0.b32.cont [13/16] 0.0, 128
    %6260 = vxpose.xlu0.b32.cont [14/16] 0.0, 128
    %6261 = vxpose.xlu0.b32.cont [15/16] 0.0, 128
    %6262 = vxpose.xlu0.b32.end [16/16] 0.0, 128
    %v6263 = vpop.trf.xlu0
    %v6264 = vpop.trf.xlu0
    %v6265 = vpop.trf.xlu0
    %v6266 = vpop.trf.xlu0
    %v6267 = vpop.trf.xlu0
    %v6268 = vpop.trf.xlu0
    %v6269 = vpop.trf.xlu0
    %v6270 = vpop.trf.xlu0
    %v6271 = vpop.trf.xlu0
    %v6272 = vpop.trf.xlu0
    %v6273 = vpop.trf.xlu0
    %v6274 = vpop.trf.xlu0
    %v6275 = vpop.trf.xlu0
    %v6276 = vpop.trf.xlu0
    %v6277 = vpop.trf.xlu0
    %v6278 = vpop.trf.xlu0
    %6279 = vxpose.xlu0.b32.start [1/16] %v2427, 128
    %6280 = vxpose.xlu0.b32.cont [2/16] 0.0, 128
    %6281 = vxpose.xlu0.b32.cont [3/16] 0.0, 128
    %6282 = vxpose.xlu0.b32.cont [4/16] 0.0, 128
    %6283 = vxpose.xlu0.b32.cont [5/16] 0.0, 128
    %6284 = vxpose.xlu0.b32.cont [6/16] 0.0, 128
    %6285 = vxpose.xlu0.b32.cont [7/16] 0.0, 128
    %6286 = vxpose.xlu0.b32.cont [8/16] 0.0, 128
    %6287 = vxpose.xlu0.b32.cont [9/16] 0.0, 128
    %6288 = vxpose.xlu0.b32.cont [10/16] 0.0, 128
    %6289 = vxpose.xlu0.b32.cont [11/16] 0.0, 128
    %6290 = vxpose.xlu0.b32.cont [12/16] 0.0, 128
    %6291 = vxpose.xlu0.b32.cont [13/16] 0.0, 128
    %6292 = vxpose.xlu0.b32.cont [14/16] 0.0, 128
    %6293 = vxpose.xlu0.b32.cont [15/16] 0.0, 128
    %6294 = vxpose.xlu0.b32.end [16/16] 0.0, 128
    %v6295 = vpop.trf.xlu0
    %v6296 = vpop.trf.xlu0
    %v6297 = vpop.trf.xlu0
    %v6298 = vpop.trf.xlu0
    %v6299 = vpop.trf.xlu0
    %v6300 = vpop.trf.xlu0
    %v6301 = vpop.trf.xlu0
    %v6302 = vpop.trf.xlu0
    %v6303 = vpop.trf.xlu0
    %v6304 = vpop.trf.xlu0
    %v6305 = vpop.trf.xlu0
    %v6306 = vpop.trf.xlu0
    %v6307 = vpop.trf.xlu0
    %v6308 = vpop.trf.xlu0
    %v6309 = vpop.trf.xlu0
    %v6310 = vpop.trf.xlu0
    %6311 = vxpose.xlu0.b32.start [1/16] %v2428, 128
    %6312 = vxpose.xlu0.b32.cont [2/16] 0.0, 128
    %6313 = vxpose.xlu0.b32.cont [3/16] 0.0, 128
    %6314 = vxpose.xlu0.b32.cont [4/16] 0.0, 128
    %6315 = vxpose.xlu0.b32.cont [5/16] 0.0, 128
    %6316 = vxpose.xlu0.b32.cont [6/16] 0.0, 128
    %6317 = vxpose.xlu0.b32.cont [7/16] 0.0, 128
    %6318 = vxpose.xlu0.b32.cont [8/16] 0.0, 128
    %6319 = vxpose.xlu0.b32.cont [9/16] 0.0, 128
    %6320 = vxpose.xlu0.b32.cont [10/16] 0.0, 128
    %6321 = vxpose.xlu0.b32.cont [11/16] 0.0, 128
    %6322 = vxpose.xlu0.b32.cont [12/16] 0.0, 128
    %6323 = vxpose.xlu0.b32.cont [13/16] 0.0, 128
    %6324 = vxpose.xlu0.b32.cont [14/16] 0.0, 128
    %6325 = vxpose.xlu0.b32.cont [15/16] 0.0, 128
    %6326 = vxpose.xlu0.b32.end [16/16] 0.0, 128
    %v6327 = vpop.trf.xlu0
    %v6328 = vpop.trf.xlu0
    %v6329 = vpop.trf.xlu0
    %v6330 = vpop.trf.xlu0
    %v6331 = vpop.trf.xlu0
    %v6332 = vpop.trf.xlu0
    %v6333 = vpop.trf.xlu0
    %v6334 = vpop.trf.xlu0
    %v6335 = vpop.trf.xlu0
    %v6336 = vpop.trf.xlu0
    %v6337 = vpop.trf.xlu0
    %v6338 = vpop.trf.xlu0
    %v6339 = vpop.trf.xlu0
    %v6340 = vpop.trf.xlu0
    %v6341 = vpop.trf.xlu0
    %v6342 = vpop.trf.xlu0
    %6343 = vxpose.xlu0.b32.start [1/16] %v2429, 128
    %6344 = vxpose.xlu0.b32.cont [2/16] 0.0, 128
    %6345 = vxpose.xlu0.b32.cont [3/16] 0.0, 128
    %6346 = vxpose.xlu0.b32.cont [4/16] 0.0, 128
    %6347 = vxpose.xlu0.b32.cont [5/16] 0.0, 128
    %6348 = vxpose.xlu0.b32.cont [6/16] 0.0, 128
    %6349 = vxpose.xlu0.b32.cont [7/16] 0.0, 128
    %6350 = vxpose.xlu0.b32.cont [8/16] 0.0, 128
    %6351 = vxpose.xlu0.b32.cont [9/16] 0.0, 128
    %6352 = vxpose.xlu0.b32.cont [10/16] 0.0, 128
    %6353 = vxpose.xlu0.b32.cont [11/16] 0.0, 128
    %6354 = vxpose.xlu0.b32.cont [12/16] 0.0, 128
    %6355 = vxpose.xlu0.b32.cont [13/16] 0.0, 128
    %6356 = vxpose.xlu0.b32.cont [14/16] 0.0, 128
    %6357 = vxpose.xlu0.b32.cont [15/16] 0.0, 128
    %6358 = vxpose.xlu0.b32.end [16/16] 0.0, 128
    %v6359 = vpop.trf.xlu0
    %v6360 = vpop.trf.xlu0
    %v6361 = vpop.trf.xlu0
    %v6362 = vpop.trf.xlu0
    %v6363 = vpop.trf.xlu0
    %v6364 = vpop.trf.xlu0
    %v6365 = vpop.trf.xlu0
    %v6366 = vpop.trf.xlu0
    %v6367 = vpop.trf.xlu0
    %v6368 = vpop.trf.xlu0
    %v6369 = vpop.trf.xlu0
    %v6370 = vpop.trf.xlu0
    %v6371 = vpop.trf.xlu0
    %v6372 = vpop.trf.xlu0
    %v6373 = vpop.trf.xlu0
    %v6374 = vpop.trf.xlu0
    %6375 = vxpose.xlu0.b32.start [1/16] %v2430, 128
    %6376 = vxpose.xlu0.b32.cont [2/16] 0.0, 128
    %6377 = vxpose.xlu0.b32.cont [3/16] 0.0, 128
    %6378 = vxpose.xlu0.b32.cont [4/16] 0.0, 128
    %6379 = vxpose.xlu0.b32.cont [5/16] 0.0, 128
    %6380 = vxpose.xlu0.b32.cont [6/16] 0.0, 128
    %6381 = vxpose.xlu0.b32.cont [7/16] 0.0, 128
    %6382 = vxpose.xlu0.b32.cont [8/16] 0.0, 128
    %6383 = vxpose.xlu0.b32.cont [9/16] 0.0, 128
    %6384 = vxpose.xlu0.b32.cont [10/16] 0.0, 128
    %6385 = vxpose.xlu0.b32.cont [11/16] 0.0, 128
    %6386 = vxpose.xlu0.b32.cont [12/16] 0.0, 128
    %6387 = vxpose.xlu0.b32.cont [13/16] 0.0, 128
    %6388 = vxpose.xlu0.b32.cont [14/16] 0.0, 128
    %6389 = vxpose.xlu0.b32.cont [15/16] 0.0, 128
    %6390 = vxpose.xlu0.b32.end [16/16] 0.0, 128
    %v6391 = vpop.trf.xlu0
    %v6392 = vpop.trf.xlu0
    %v6393 = vpop.trf.xlu0
    %v6394 = vpop.trf.xlu0
    %v6395 = vpop.trf.xlu0
    %v6396 = vpop.trf.xlu0
    %v6397 = vpop.trf.xlu0
    %v6398 = vpop.trf.xlu0
    %v6399 = vpop.trf.xlu0
    %v6400 = vpop.trf.xlu0
    %v6401 = vpop.trf.xlu0
    %v6402 = vpop.trf.xlu0
    %v6403 = vpop.trf.xlu0
    %v6404 = vpop.trf.xlu0
    %v6405 = vpop.trf.xlu0
    %v6406 = vpop.trf.xlu0
    %6407 = vxpose.xlu0.b32.start [1/16] %v2559, 128
    %6408 = vxpose.xlu0.b32.cont [2/16] 0.0, 128
    %6409 = vxpose.xlu0.b32.cont [3/16] 0.0, 128
    %6410 = vxpose.xlu0.b32.cont [4/16] 0.0, 128
    %6411 = vxpose.xlu0.b32.cont [5/16] 0.0, 128
    %6412 = vxpose.xlu0.b32.cont [6/16] 0.0, 128
    %6413 = vxpose.xlu0.b32.cont [7/16] 0.0, 128
    %6414 = vxpose.xlu0.b32.cont [8/16] 0.0, 128
    %6415 = vxpose.xlu0.b32.cont [9/16] 0.0, 128
    %6416 = vxpose.xlu0.b32.cont [10/16] 0.0, 128
    %6417 = vxpose.xlu0.b32.cont [11/16] 0.0, 128
    %6418 = vxpose.xlu0.b32.cont [12/16] 0.0, 128
    %6419 = vxpose.xlu0.b32.cont [13/16] 0.0, 128
    %6420 = vxpose.xlu0.b32.cont [14/16] 0.0, 128
    %6421 = vxpose.xlu0.b32.cont [15/16] 0.0, 128
    %6422 = vxpose.xlu0.b32.end [16/16] 0.0, 128
    %v6423 = vpop.trf.xlu0
    %v6424 = vpop.trf.xlu0
    %v6425 = vpop.trf.xlu0
    %v6426 = vpop.trf.xlu0
    %v6427 = vpop.trf.xlu0
    %v6428 = vpop.trf.xlu0
    %v6429 = vpop.trf.xlu0
    %v6430 = vpop.trf.xlu0
    %v6431 = vpop.trf.xlu0
    %v6432 = vpop.trf.xlu0
    %v6433 = vpop.trf.xlu0
    %v6434 = vpop.trf.xlu0
    %v6435 = vpop.trf.xlu0
    %v6436 = vpop.trf.xlu0
    %v6437 = vpop.trf.xlu0
    %v6438 = vpop.trf.xlu0
    %6439 = vxpose.xlu0.b32.start [1/16] %v2560, 128
    %6440 = vxpose.xlu0.b32.cont [2/16] 0.0, 128
    %6441 = vxpose.xlu0.b32.cont [3/16] 0.0, 128
    %6442 = vxpose.xlu0.b32.cont [4/16] 0.0, 128
    %6443 = vxpose.xlu0.b32.cont [5/16] 0.0, 128
    %6444 = vxpose.xlu0.b32.cont [6/16] 0.0, 128
    %6445 = vxpose.xlu0.b32.cont [7/16] 0.0, 128
    %6446 = vxpose.xlu0.b32.cont [8/16] 0.0, 128
    %6447 = vxpose.xlu0.b32.cont [9/16] 0.0, 128
    %6448 = vxpose.xlu0.b32.cont [10/16] 0.0, 128
    %6449 = vxpose.xlu0.b32.cont [11/16] 0.0, 128
    %6450 = vxpose.xlu0.b32.cont [12/16] 0.0, 128
    %6451 = vxpose.xlu0.b32.cont [13/16] 0.0, 128
    %6452 = vxpose.xlu0.b32.cont [14/16] 0.0, 128
    %6453 = vxpose.xlu0.b32.cont [15/16] 0.0, 128
    %6454 = vxpose.xlu0.b32.end [16/16] 0.0, 128
    %v6455 = vpop.trf.xlu0
    %v6456 = vpop.trf.xlu0
    %v6457 = vpop.trf.xlu0
    %v6458 = vpop.trf.xlu0
    %v6459 = vpop.trf.xlu0
    %v6460 = vpop.trf.xlu0
    %v6461 = vpop.trf.xlu0
    %v6462 = vpop.trf.xlu0
    %v6463 = vpop.trf.xlu0
    %v6464 = vpop.trf.xlu0
    %v6465 = vpop.trf.xlu0
    %v6466 = vpop.trf.xlu0
    %v6467 = vpop.trf.xlu0
    %v6468 = vpop.trf.xlu0
    %v6469 = vpop.trf.xlu0
    %v6470 = vpop.trf.xlu0
    %6471 = vxpose.xlu0.b32.start [1/16] %v2561, 128
    %6472 = vxpose.xlu0.b32.cont [2/16] 0.0, 128
    %6473 = vxpose.xlu0.b32.cont [3/16] 0.0, 128
    %6474 = vxpose.xlu0.b32.cont [4/16] 0.0, 128
    %6475 = vxpose.xlu0.b32.cont [5/16] 0.0, 128
    %6476 = vxpose.xlu0.b32.cont [6/16] 0.0, 128
    %6477 = vxpose.xlu0.b32.cont [7/16] 0.0, 128
    %6478 = vxpose.xlu0.b32.cont [8/16] 0.0, 128
    %6479 = vxpose.xlu0.b32.cont [9/16] 0.0, 128
    %6480 = vxpose.xlu0.b32.cont [10/16] 0.0, 128
    %6481 = vxpose.xlu0.b32.cont [11/16] 0.0, 128
    %6482 = vxpose.xlu0.b32.cont [12/16] 0.0, 128
    %6483 = vxpose.xlu0.b32.cont [13/16] 0.0, 128
    %6484 = vxpose.xlu0.b32.cont [14/16] 0.0, 128
    %6485 = vxpose.xlu0.b32.cont [15/16] 0.0, 128
    %6486 = vxpose.xlu0.b32.end [16/16] 0.0, 128
    %v6487 = vpop.trf.xlu0
    %v6488 = vpop.trf.xlu0
    %v6489 = vpop.trf.xlu0
    %v6490 = vpop.trf.xlu0
    %v6491 = vpop.trf.xlu0
    %v6492 = vpop.trf.xlu0
    %v6493 = vpop.trf.xlu0
    %v6494 = vpop.trf.xlu0
    %v6495 = vpop.trf.xlu0
    %v6496 = vpop.trf.xlu0
    %v6497 = vpop.trf.xlu0
    %v6498 = vpop.trf.xlu0
    %v6499 = vpop.trf.xlu0
    %v6500 = vpop.trf.xlu0
    %v6501 = vpop.trf.xlu0
    %v6502 = vpop.trf.xlu0
    %6503 = vxpose.xlu0.b32.start [1/16] %v2562, 128
    %6504 = vxpose.xlu0.b32.cont [2/16] 0.0, 128
    %6505 = vxpose.xlu0.b32.cont [3/16] 0.0, 128
    %6506 = vxpose.xlu0.b32.cont [4/16] 0.0, 128
    %6507 = vxpose.xlu0.b32.cont [5/16] 0.0, 128
    %6508 = vxpose.xlu0.b32.cont [6/16] 0.0, 128
    %6509 = vxpose.xlu0.b32.cont [7/16] 0.0, 128
    %6510 = vxpose.xlu0.b32.cont [8/16] 0.0, 128
    %6511 = vxpose.xlu0.b32.cont [9/16] 0.0, 128
    %6512 = vxpose.xlu0.b32.cont [10/16] 0.0, 128
    %6513 = vxpose.xlu0.b32.cont [11/16] 0.0, 128
    %6514 = vxpose.xlu0.b32.cont [12/16] 0.0, 128
    %6515 = vxpose.xlu0.b32.cont [13/16] 0.0, 128
    %6516 = vxpose.xlu0.b32.cont [14/16] 0.0, 128
    %6517 = vxpose.xlu0.b32.cont [15/16] 0.0, 128
    %6518 = vxpose.xlu0.b32.end [16/16] 0.0, 128
    %v6519 = vpop.trf.xlu0
    %v6520 = vpop.trf.xlu0
    %v6521 = vpop.trf.xlu0
    %v6522 = vpop.trf.xlu0
    %v6523 = vpop.trf.xlu0
    %v6524 = vpop.trf.xlu0
    %v6525 = vpop.trf.xlu0
    %v6526 = vpop.trf.xlu0
    %v6527 = vpop.trf.xlu0
    %v6528 = vpop.trf.xlu0
    %v6529 = vpop.trf.xlu0
    %v6530 = vpop.trf.xlu0
    %v6531 = vpop.trf.xlu0
    %v6532 = vpop.trf.xlu0
    %v6533 = vpop.trf.xlu0
    %v6534 = vpop.trf.xlu0
    %6535 = vxpose.xlu0.b32.start [1/16] %v2563, 128
    %6536 = vxpose.xlu0.b32.cont [2/16] 0.0, 128
    %6537 = vxpose.xlu0.b32.cont [3/16] 0.0, 128
    %6538 = vxpose.xlu0.b32.cont [4/16] 0.0, 128
    %6539 = vxpose.xlu0.b32.cont [5/16] 0.0, 128
    %6540 = vxpose.xlu0.b32.cont [6/16] 0.0, 128
    %6541 = vxpose.xlu0.b32.cont [7/16] 0.0, 128
    %6542 = vxpose.xlu0.b32.cont [8/16] 0.0, 128
    %6543 = vxpose.xlu0.b32.cont [9/16] 0.0, 128
    %6544 = vxpose.xlu0.b32.cont [10/16] 0.0, 128
    %6545 = vxpose.xlu0.b32.cont [11/16] 0.0, 128
    %6546 = vxpose.xlu0.b32.cont [12/16] 0.0, 128
    %6547 = vxpose.xlu0.b32.cont [13/16] 0.0, 128
    %6548 = vxpose.xlu0.b32.cont [14/16] 0.0, 128
    %6549 = vxpose.xlu0.b32.cont [15/16] 0.0, 128
    %6550 = vxpose.xlu0.b32.end [16/16] 0.0, 128
    %v6551 = vpop.trf.xlu0
    %v6552 = vpop.trf.xlu0
    %v6553 = vpop.trf.xlu0
    %v6554 = vpop.trf.xlu0
    %v6555 = vpop.trf.xlu0
    %v6556 = vpop.trf.xlu0
    %v6557 = vpop.trf.xlu0
    %v6558 = vpop.trf.xlu0
    %v6559 = vpop.trf.xlu0
    %v6560 = vpop.trf.xlu0
    %v6561 = vpop.trf.xlu0
    %v6562 = vpop.trf.xlu0
    %v6563 = vpop.trf.xlu0
    %v6564 = vpop.trf.xlu0
    %v6565 = vpop.trf.xlu0
    %v6566 = vpop.trf.xlu0
    %6567 = vxpose.xlu0.b32.start [1/16] %v2564, 128
    %6568 = vxpose.xlu0.b32.cont [2/16] 0.0, 128
    %6569 = vxpose.xlu0.b32.cont [3/16] 0.0, 128
    %6570 = vxpose.xlu0.b32.cont [4/16] 0.0, 128
    %6571 = vxpose.xlu0.b32.cont [5/16] 0.0, 128
    %6572 = vxpose.xlu0.b32.cont [6/16] 0.0, 128
    %6573 = vxpose.xlu0.b32.cont [7/16] 0.0, 128
    %6574 = vxpose.xlu0.b32.cont [8/16] 0.0, 128
    %6575 = vxpose.xlu0.b32.cont [9/16] 0.0, 128
    %6576 = vxpose.xlu0.b32.cont [10/16] 0.0, 128
    %6577 = vxpose.xlu0.b32.cont [11/16] 0.0, 128
    %6578 = vxpose.xlu0.b32.cont [12/16] 0.0, 128
    %6579 = vxpose.xlu0.b32.cont [13/16] 0.0, 128
    %6580 = vxpose.xlu0.b32.cont [14/16] 0.0, 128
    %6581 = vxpose.xlu0.b32.cont [15/16] 0.0, 128
    %6582 = vxpose.xlu0.b32.end [16/16] 0.0, 128
    %v6583 = vpop.trf.xlu0
    %v6584 = vpop.trf.xlu0
    %v6585 = vpop.trf.xlu0
    %v6586 = vpop.trf.xlu0
    %v6587 = vpop.trf.xlu0
    %v6588 = vpop.trf.xlu0
    %v6589 = vpop.trf.xlu0
    %v6590 = vpop.trf.xlu0
    %v6591 = vpop.trf.xlu0
    %v6592 = vpop.trf.xlu0
    %v6593 = vpop.trf.xlu0
    %v6594 = vpop.trf.xlu0
    %v6595 = vpop.trf.xlu0
    %v6596 = vpop.trf.xlu0
    %v6597 = vpop.trf.xlu0
    %v6598 = vpop.trf.xlu0
    %6599 = vxpose.xlu0.b32.start [1/16] %v2565, 128
    %6600 = vxpose.xlu0.b32.cont [2/16] 0.0, 128
    %6601 = vxpose.xlu0.b32.cont [3/16] 0.0, 128
    %6602 = vxpose.xlu0.b32.cont [4/16] 0.0, 128
    %6603 = vxpose.xlu0.b32.cont [5/16] 0.0, 128
    %6604 = vxpose.xlu0.b32.cont [6/16] 0.0, 128
    %6605 = vxpose.xlu0.b32.cont [7/16] 0.0, 128
    %6606 = vxpose.xlu0.b32.cont [8/16] 0.0, 128
    %6607 = vxpose.xlu0.b32.cont [9/16] 0.0, 128
    %6608 = vxpose.xlu0.b32.cont [10/16] 0.0, 128
    %6609 = vxpose.xlu0.b32.cont [11/16] 0.0, 128
    %6610 = vxpose.xlu0.b32.cont [12/16] 0.0, 128
    %6611 = vxpose.xlu0.b32.cont [13/16] 0.0, 128
    %6612 = vxpose.xlu0.b32.cont [14/16] 0.0, 128
    %6613 = vxpose.xlu0.b32.cont [15/16] 0.0, 128
    %6614 = vxpose.xlu0.b32.end [16/16] 0.0, 128
    %v6615 = vpop.trf.xlu0
    %v6616 = vpop.trf.xlu0
    %v6617 = vpop.trf.xlu0
    %v6618 = vpop.trf.xlu0
    %v6619 = vpop.trf.xlu0
    %v6620 = vpop.trf.xlu0
    %v6621 = vpop.trf.xlu0
    %v6622 = vpop.trf.xlu0
    %v6623 = vpop.trf.xlu0
    %v6624 = vpop.trf.xlu0
    %v6625 = vpop.trf.xlu0
    %v6626 = vpop.trf.xlu0
    %v6627 = vpop.trf.xlu0
    %v6628 = vpop.trf.xlu0
    %v6629 = vpop.trf.xlu0
    %v6630 = vpop.trf.xlu0
    %6631 = vxpose.xlu0.b32.start [1/16] %v2566, 128
    %6632 = vxpose.xlu0.b32.cont [2/16] 0.0, 128
    %6633 = vxpose.xlu0.b32.cont [3/16] 0.0, 128
    %6634 = vxpose.xlu0.b32.cont [4/16] 0.0, 128
    %6635 = vxpose.xlu0.b32.cont [5/16] 0.0, 128
    %6636 = vxpose.xlu0.b32.cont [6/16] 0.0, 128
    %6637 = vxpose.xlu0.b32.cont [7/16] 0.0, 128
    %6638 = vxpose.xlu0.b32.cont [8/16] 0.0, 128
    %6639 = vxpose.xlu0.b32.cont [9/16] 0.0, 128
    %6640 = vxpose.xlu0.b32.cont [10/16] 0.0, 128
    %6641 = vxpose.xlu0.b32.cont [11/16] 0.0, 128
    %6642 = vxpose.xlu0.b32.cont [12/16] 0.0, 128
    %6643 = vxpose.xlu0.b32.cont [13/16] 0.0, 128
    %6644 = vxpose.xlu0.b32.cont [14/16] 0.0, 128
    %6645 = vxpose.xlu0.b32.cont [15/16] 0.0, 128
    %6646 = vxpose.xlu0.b32.end [16/16] 0.0, 128
    %v6647 = vpop.trf.xlu0
    %v6648 = vpop.trf.xlu0
    %v6649 = vpop.trf.xlu0
    %v6650 = vpop.trf.xlu0
    %v6651 = vpop.trf.xlu0
    %v6652 = vpop.trf.xlu0
    %v6653 = vpop.trf.xlu0
    %v6654 = vpop.trf.xlu0
    %v6655 = vpop.trf.xlu0
    %v6656 = vpop.trf.xlu0
    %v6657 = vpop.trf.xlu0
    %v6658 = vpop.trf.xlu0
    %v6659 = vpop.trf.xlu0
    %v6660 = vpop.trf.xlu0
    %v6661 = vpop.trf.xlu0
    %v6662 = vpop.trf.xlu0
    %v6663 = vcombine.low %v2583, %v2711
    %v6665 = vunpack.c.l.s4 1983009808
    %v6666 = vunpack.c.0.s8 %v6665
    %v6667 = vlaneseq
    %v6668 = vshrl.u32 %v6667, 7
    %v6669 = vsub.s32 %v6666, %v6668
    %v6670 = vrot.slane %v6663, %v6669
    %v6671 = vcombine.low %v2647, %v2775
    %v6673 = vunpack.c.l.s4 1983009808
    %v6674 = vunpack.c.0.s8 %v6673
    %v6675 = vlaneseq
    %v6676 = vshrl.u32 %v6675, 7
    %v6677 = vsub.s32 %v6674, %v6676
    %v6678 = vrot.slane %v6671, %v6677
    %v6679 = vcombine.low %v2839, %v2967
    %v6681 = vunpack.c.l.s4 1983009808
    %v6682 = vunpack.c.0.s8 %v6681
    %v6683 = vlaneseq
    %v6684 = vshrl.u32 %v6683, 7
    %v6685 = vsub.s32 %v6682, %v6684
    %v6686 = vrot.slane %v6679, %v6685
    %v6687 = vcombine.low %v2903, %v3031
    %v6689 = vunpack.c.l.s4 1983009808
    %v6690 = vunpack.c.0.s8 %v6689
    %v6691 = vlaneseq
    %v6692 = vshrl.u32 %v6691, 7
    %v6693 = vsub.s32 %v6690, %v6692
    %v6694 = vrot.slane %v6687, %v6693
    %v6695 = vcombine.low %v6670, %v6678
    %v6697 = vunpack.c.l.s4 1934713408
    %v6698 = vunpack.c.0.s8 %v6697
    %v6699 = vlaneseq
    %v6700 = vshrl.u32 %v6699, 7
    %v6701 = vsub.s32 %v6698, %v6700
    %v6702 = vrot.slane %v6695, %v6701
    %v6703 = vcombine.low %v6686, %v6694
    %v6705 = vunpack.c.l.s4 1934713408
    %v6706 = vunpack.c.0.s8 %v6705
    %v6707 = vlaneseq
    %v6708 = vshrl.u32 %v6707, 7
    %v6709 = vsub.s32 %v6706, %v6708
    %v6710 = vrot.slane %v6703, %v6709
    %v6711 = vcombine.low %v6702, %v6710
    %v6712 = vcombine.high %v6702, %v6710
    %v6713 = vcombine.low %v2615, %v2743
    %v6715 = vunpack.c.l.s4 1983009808
    %v6716 = vunpack.c.0.s8 %v6715
    %v6717 = vlaneseq
    %v6718 = vshrl.u32 %v6717, 7
    %v6719 = vsub.s32 %v6716, %v6718
    %v6720 = vrot.slane %v6713, %v6719
    %v6721 = vcombine.low %v2679, %v2807
    %v6723 = vunpack.c.l.s4 1983009808
    %v6724 = vunpack.c.0.s8 %v6723
    %v6725 = vlaneseq
    %v6726 = vshrl.u32 %v6725, 7
    %v6727 = vsub.s32 %v6724, %v6726
    %v6728 = vrot.slane %v6721, %v6727
    %v6729 = vcombine.low %v2871, %v2999
    %v6731 = vunpack.c.l.s4 1983009808
    %v6732 = vunpack.c.0.s8 %v6731
    %v6733 = vlaneseq
    %v6734 = vshrl.u32 %v6733, 7
    %v6735 = vsub.s32 %v6732, %v6734
    %v6736 = vrot.slane %v6729, %v6735
    %v6737 = vcombine.low %v2935, %v3063
    %v6739 = vunpack.c.l.s4 1983009808
    %v6740 = vunpack.c.0.s8 %v6739
    %v6741 = vlaneseq
    %v6742 = vshrl.u32 %v6741, 7
    %v6743 = vsub.s32 %v6740, %v6742
    %v6744 = vrot.slane %v6737, %v6743
    %v6745 = vcombine.low %v6720, %v6728
    %v6747 = vunpack.c.l.s4 1934713408
    %v6748 = vunpack.c.0.s8 %v6747
    %v6749 = vlaneseq
    %v6750 = vshrl.u32 %v6749, 7
    %v6751 = vsub.s32 %v6748, %v6750
    %v6752 = vrot.slane %v6745, %v6751
    %v6753 = vcombine.low %v6736, %v6744
    %v6755 = vunpack.c.l.s4 1934713408
    %v6756 = vunpack.c.0.s8 %v6755
    %v6757 = vlaneseq
    %v6758 = vshrl.u32 %v6757, 7
    %v6759 = vsub.s32 %v6756, %v6758
    %v6760 = vrot.slane %v6753, %v6759
    %v6761 = vcombine.low %v6752, %v6760
    %v6762 = vcombine.high %v6752, %v6760
    %v6763 = vcombine.low %v3095, %v3223
    %v6765 = vunpack.c.l.s4 1983009808
    %v6766 = vunpack.c.0.s8 %v6765
    %v6767 = vlaneseq
    %v6768 = vshrl.u32 %v6767, 7
    %v6769 = vsub.s32 %v6766, %v6768
    %v6770 = vrot.slane %v6763, %v6769
    %v6771 = vcombine.low %v3159, %v3287
    %v6773 = vunpack.c.l.s4 1983009808
    %v6774 = vunpack.c.0.s8 %v6773
    %v6775 = vlaneseq
    %v6776 = vshrl.u32 %v6775, 7
    %v6777 = vsub.s32 %v6774, %v6776
    %v6778 = vrot.slane %v6771, %v6777
    %v6779 = vcombine.low %v3351, %v3479
    %v6781 = vunpack.c.l.s4 1983009808
    %v6782 = vunpack.c.0.s8 %v6781
    %v6783 = vlaneseq
    %v6784 = vshrl.u32 %v6783, 7
    %v6785 = vsub.s32 %v6782, %v6784
    %v6786 = vrot.slane %v6779, %v6785
    %v6787 = vcombine.low %v3415, %v3543
    %v6789 = vunpack.c.l.s4 1983009808
    %v6790 = vunpack.c.0.s8 %v6789
    %v6791 = vlaneseq
    %v6792 = vshrl.u32 %v6791, 7
    %v6793 = vsub.s32 %v6790, %v6792
    %v6794 = vrot.slane %v6787, %v6793
    %v6795 = vcombine.low %v6770, %v6778
    %v6797 = vunpack.c.l.s4 1934713408
    %v6798 = vunpack.c.0.s8 %v6797
    %v6799 = vlaneseq
    %v6800 = vshrl.u32 %v6799, 7
    %v6801 = vsub.s32 %v6798, %v6800
    %v6802 = vrot.slane %v6795, %v6801
    %v6803 = vcombine.low %v6786, %v6794
    %v6805 = vunpack.c.l.s4 1934713408
    %v6806 = vunpack.c.0.s8 %v6805
    %v6807 = vlaneseq
    %v6808 = vshrl.u32 %v6807, 7
    %v6809 = vsub.s32 %v6806, %v6808
    %v6810 = vrot.slane %v6803, %v6809
    %v6811 = vcombine.low %v6802, %v6810
    %v6812 = vcombine.high %v6802, %v6810
    %v6813 = vcombine.low %v3127, %v3255
    %v6815 = vunpack.c.l.s4 1983009808
    %v6816 = vunpack.c.0.s8 %v6815
    %v6817 = vlaneseq
    %v6818 = vshrl.u32 %v6817, 7
    %v6819 = vsub.s32 %v6816, %v6818
    %v6820 = vrot.slane %v6813, %v6819
    %v6821 = vcombine.low %v3191, %v3319
    %v6823 = vunpack.c.l.s4 1983009808
    %v6824 = vunpack.c.0.s8 %v6823
    %v6825 = vlaneseq
    %v6826 = vshrl.u32 %v6825, 7
    %v6827 = vsub.s32 %v6824, %v6826
    %v6828 = vrot.slane %v6821, %v6827
    %v6829 = vcombine.low %v3383, %v3511
    %v6831 = vunpack.c.l.s4 1983009808
    %v6832 = vunpack.c.0.s8 %v6831
    %v6833 = vlaneseq
    %v6834 = vshrl.u32 %v6833, 7
    %v6835 = vsub.s32 %v6832, %v6834
    %v6836 = vrot.slane %v6829, %v6835
    %v6837 = vcombine.low %v3447, %v3575
    %v6839 = vunpack.c.l.s4 1983009808
    %v6840 = vunpack.c.0.s8 %v6839
    %v6841 = vlaneseq
    %v6842 = vshrl.u32 %v6841, 7
    %v6843 = vsub.s32 %v6840, %v6842
    %v6844 = vrot.slane %v6837, %v6843
    %v6845 = vcombine.low %v6820, %v6828
    %v6847 = vunpack.c.l.s4 1934713408
    %v6848 = vunpack.c.0.s8 %v6847
    %v6849 = vlaneseq
    %v6850 = vshrl.u32 %v6849, 7
    %v6851 = vsub.s32 %v6848, %v6850
    %v6852 = vrot.slane %v6845, %v6851
    %v6853 = vcombine.low %v6836, %v6844
    %v6855 = vunpack.c.l.s4 1934713408
    %v6856 = vunpack.c.0.s8 %v6855
    %v6857 = vlaneseq
    %v6858 = vshrl.u32 %v6857, 7
    %v6859 = vsub.s32 %v6856, %v6858
    %v6860 = vrot.slane %v6853, %v6859
    %v6861 = vcombine.low %v6852, %v6860
    %v6862 = vcombine.high %v6852, %v6860
    %v6863 = vcombine.low %v3607, %v3735
    %v6865 = vunpack.c.l.s4 1983009808
    %v6866 = vunpack.c.0.s8 %v6865
    %v6867 = vlaneseq
    %v6868 = vshrl.u32 %v6867, 7
    %v6869 = vsub.s32 %v6866, %v6868
    %v6870 = vrot.slane %v6863, %v6869
    %v6871 = vcombine.low %v3671, %v3799
    %v6873 = vunpack.c.l.s4 1983009808
    %v6874 = vunpack.c.0.s8 %v6873
    %v6875 = vlaneseq
    %v6876 = vshrl.u32 %v6875, 7
    %v6877 = vsub.s32 %v6874, %v6876
    %v6878 = vrot.slane %v6871, %v6877
    %v6879 = vcombine.low %v3863, %v3991
    %v6881 = vunpack.c.l.s4 1983009808
    %v6882 = vunpack.c.0.s8 %v6881
    %v6883 = vlaneseq
    %v6884 = vshrl.u32 %v6883, 7
    %v6885 = vsub.s32 %v6882, %v6884
    %v6886 = vrot.slane %v6879, %v6885
    %v6887 = vcombine.low %v3927, %v4055
    %v6889 = vunpack.c.l.s4 1983009808
    %v6890 = vunpack.c.0.s8 %v6889
    %v6891 = vlaneseq
    %v6892 = vshrl.u32 %v6891, 7
    %v6893 = vsub.s32 %v6890, %v6892
    %v6894 = vrot.slane %v6887, %v6893
    %v6895 = vcombine.low %v6870, %v6878
    %v6897 = vunpack.c.l.s4 1934713408
    %v6898 = vunpack.c.0.s8 %v6897
    %v6899 = vlaneseq
    %v6900 = vshrl.u32 %v6899, 7
    %v6901 = vsub.s32 %v6898, %v6900
    %v6902 = vrot.slane %v6895, %v6901
    %v6903 = vcombine.low %v6886, %v6894
    %v6905 = vunpack.c.l.s4 1934713408
    %v6906 = vunpack.c.0.s8 %v6905
    %v6907 = vlaneseq
    %v6908 = vshrl.u32 %v6907, 7
    %v6909 = vsub.s32 %v6906, %v6908
    %v6910 = vrot.slane %v6903, %v6909
    %v6911 = vcombine.low %v6902, %v6910
    %v6912 = vcombine.high %v6902, %v6910
    %v6913 = vcombine.low %v3639, %v3767
    %v6915 = vunpack.c.l.s4 1983009808
    %v6916 = vunpack.c.0.s8 %v6915
    %v6917 = vlaneseq
    %v6918 = vshrl.u32 %v6917, 7
    %v6919 = vsub.s32 %v6916, %v6918
    %v6920 = vrot.slane %v6913, %v6919
    %v6921 = vcombine.low %v3703, %v3831
    %v6923 = vunpack.c.l.s4 1983009808
    %v6924 = vunpack.c.0.s8 %v6923
    %v6925 = vlaneseq
    %v6926 = vshrl.u32 %v6925, 7
    %v6927 = vsub.s32 %v6924, %v6926
    %v6928 = vrot.slane %v6921, %v6927
    %v6929 = vcombine.low %v3895, %v4023
    %v6931 = vunpack.c.l.s4 1983009808
    %v6932 = vunpack.c.0.s8 %v6931
    %v6933 = vlaneseq
    %v6934 = vshrl.u32 %v6933, 7
    %v6935 = vsub.s32 %v6932, %v6934
    %v6936 = vrot.slane %v6929, %v6935
    %v6937 = vcombine.low %v3959, %v4087
    %v6939 = vunpack.c.l.s4 1983009808
    %v6940 = vunpack.c.0.s8 %v6939
    %v6941 = vlaneseq
    %v6942 = vshrl.u32 %v6941, 7
    %v6943 = vsub.s32 %v6940, %v6942
    %v6944 = vrot.slane %v6937, %v6943
    %v6945 = vcombine.low %v6920, %v6928
    %v6947 = vunpack.c.l.s4 1934713408
    %v6948 = vunpack.c.0.s8 %v6947
    %v6949 = vlaneseq
    %v6950 = vshrl.u32 %v6949, 7
    %v6951 = vsub.s32 %v6948, %v6950
    %v6952 = vrot.slane %v6945, %v6951
    %v6953 = vcombine.low %v6936, %v6944
    %v6955 = vunpack.c.l.s4 1934713408
    %v6956 = vunpack.c.0.s8 %v6955
    %v6957 = vlaneseq
    %v6958 = vshrl.u32 %v6957, 7
    %v6959 = vsub.s32 %v6956, %v6958
    %v6960 = vrot.slane %v6953, %v6959
    %v6961 = vcombine.low %v6952, %v6960
    %v6962 = vcombine.high %v6952, %v6960
    %v6963 = vcombine.low %v4119, %v4247
    %v6965 = vunpack.c.l.s4 1983009808
    %v6966 = vunpack.c.0.s8 %v6965
    %v6967 = vlaneseq
    %v6968 = vshrl.u32 %v6967, 7
    %v6969 = vsub.s32 %v6966, %v6968
    %v6970 = vrot.slane %v6963, %v6969
    %v6971 = vcombine.low %v4183, %v4311
    %v6973 = vunpack.c.l.s4 1983009808
    %v6974 = vunpack.c.0.s8 %v6973
    %v6975 = vlaneseq
    %v6976 = vshrl.u32 %v6975, 7
    %v6977 = vsub.s32 %v6974, %v6976
    %v6978 = vrot.slane %v6971, %v6977
    %v6979 = vcombine.low %v4375, %v4503
    %v6981 = vunpack.c.l.s4 1983009808
    %v6982 = vunpack.c.0.s8 %v6981
    %v6983 = vlaneseq
    %v6984 = vshrl.u32 %v6983, 7
    %v6985 = vsub.s32 %v6982, %v6984
    %v6986 = vrot.slane %v6979, %v6985
    %v6987 = vcombine.low %v4439, %v4567
    %v6989 = vunpack.c.l.s4 1983009808
    %v6990 = vunpack.c.0.s8 %v6989
    %v6991 = vlaneseq
    %v6992 = vshrl.u32 %v6991, 7
    %v6993 = vsub.s32 %v6990, %v6992
    %v6994 = vrot.slane %v6987, %v6993
    %v6995 = vcombine.low %v6970, %v6978
    %v6997 = vunpack.c.l.s4 1934713408
    %v6998 = vunpack.c.0.s8 %v6997
    %v6999 = vlaneseq
    %v7000 = vshrl.u32 %v6999, 7
    %v7001 = vsub.s32 %v6998, %v7000
    %v7002 = vrot.slane %v6995, %v7001
    %v7003 = vcombine.low %v6986, %v6994
    %v7005 = vunpack.c.l.s4 1934713408
    %v7006 = vunpack.c.0.s8 %v7005
    %v7007 = vlaneseq
    %v7008 = vshrl.u32 %v7007, 7
    %v7009 = vsub.s32 %v7006, %v7008
    %v7010 = vrot.slane %v7003, %v7009
    %v7011 = vcombine.low %v7002, %v7010
    %v7012 = vcombine.high %v7002, %v7010
    %v7013 = vcombine.low %v4151, %v4279
    %v7015 = vunpack.c.l.s4 1983009808
    %v7016 = vunpack.c.0.s8 %v7015
    %v7017 = vlaneseq
    %v7018 = vshrl.u32 %v7017, 7
    %v7019 = vsub.s32 %v7016, %v7018
    %v7020 = vrot.slane %v7013, %v7019
    %v7021 = vcombine.low %v4215, %v4343
    %v7023 = vunpack.c.l.s4 1983009808
    %v7024 = vunpack.c.0.s8 %v7023
    %v7025 = vlaneseq
    %v7026 = vshrl.u32 %v7025, 7
    %v7027 = vsub.s32 %v7024, %v7026
    %v7028 = vrot.slane %v7021, %v7027
    %v7029 = vcombine.low %v4407, %v4535
    %v7031 = vunpack.c.l.s4 1983009808
    %v7032 = vunpack.c.0.s8 %v7031
    %v7033 = vlaneseq
    %v7034 = vshrl.u32 %v7033, 7
    %v7035 = vsub.s32 %v7032, %v7034
    %v7036 = vrot.slane %v7029, %v7035
    %v7037 = vcombine.low %v4471, %v4599
    %v7039 = vunpack.c.l.s4 1983009808
    %v7040 = vunpack.c.0.s8 %v7039
    %v7041 = vlaneseq
    %v7042 = vshrl.u32 %v7041, 7
    %v7043 = vsub.s32 %v7040, %v7042
    %v7044 = vrot.slane %v7037, %v7043
    %v7045 = vcombine.low %v7020, %v7028
    %v7047 = vunpack.c.l.s4 1934713408
    %v7048 = vunpack.c.0.s8 %v7047
    %v7049 = vlaneseq
    %v7050 = vshrl.u32 %v7049, 7
    %v7051 = vsub.s32 %v7048, %v7050
    %v7052 = vrot.slane %v7045, %v7051
    %v7053 = vcombine.low %v7036, %v7044
    %v7055 = vunpack.c.l.s4 1934713408
    %v7056 = vunpack.c.0.s8 %v7055
    %v7057 = vlaneseq
    %v7058 = vshrl.u32 %v7057, 7
    %v7059 = vsub.s32 %v7056, %v7058
    %v7060 = vrot.slane %v7053, %v7059
    %v7061 = vcombine.low %v7052, %v7060
    %v7062 = vcombine.high %v7052, %v7060
    %v7063 = vcombine.low %v4631, %v4759
    %v7065 = vunpack.c.l.s4 1983009808
    %v7066 = vunpack.c.0.s8 %v7065
    %v7067 = vlaneseq
    %v7068 = vshrl.u32 %v7067, 7
    %v7069 = vsub.s32 %v7066, %v7068
    %v7070 = vrot.slane %v7063, %v7069
    %v7071 = vcombine.low %v4695, %v4823
    %v7073 = vunpack.c.l.s4 1983009808
    %v7074 = vunpack.c.0.s8 %v7073
    %v7075 = vlaneseq
    %v7076 = vshrl.u32 %v7075, 7
    %v7077 = vsub.s32 %v7074, %v7076
    %v7078 = vrot.slane %v7071, %v7077
    %v7079 = vcombine.low %v4887, %v5015
    %v7081 = vunpack.c.l.s4 1983009808
    %v7082 = vunpack.c.0.s8 %v7081
    %v7083 = vlaneseq
    %v7084 = vshrl.u32 %v7083, 7
    %v7085 = vsub.s32 %v7082, %v7084
    %v7086 = vrot.slane %v7079, %v7085
    %v7087 = vcombine.low %v4951, %v5079
    %v7089 = vunpack.c.l.s4 1983009808
    %v7090 = vunpack.c.0.s8 %v7089
    %v7091 = vlaneseq
    %v7092 = vshrl.u32 %v7091, 7
    %v7093 = vsub.s32 %v7090, %v7092
    %v7094 = vrot.slane %v7087, %v7093
    %v7095 = vcombine.low %v7070, %v7078
    %v7097 = vunpack.c.l.s4 1934713408
    %v7098 = vunpack.c.0.s8 %v7097
    %v7099 = vlaneseq
    %v7100 = vshrl.u32 %v7099, 7
    %v7101 = vsub.s32 %v7098, %v7100
    %v7102 = vrot.slane %v7095, %v7101
    %v7103 = vcombine.low %v7086, %v7094
    %v7105 = vunpack.c.l.s4 1934713408
    %v7106 = vunpack.c.0.s8 %v7105
    %v7107 = vlaneseq
    %v7108 = vshrl.u32 %v7107, 7
    %v7109 = vsub.s32 %v7106, %v7108
    %v7110 = vrot.slane %v7103, %v7109
    %v7111 = vcombine.low %v7102, %v7110
    %v7112 = vcombine.high %v7102, %v7110
    %v7113 = vcombine.low %v4663, %v4791
    %v7115 = vunpack.c.l.s4 1983009808
    %v7116 = vunpack.c.0.s8 %v7115
    %v7117 = vlaneseq
    %v7118 = vshrl.u32 %v7117, 7
    %v7119 = vsub.s32 %v7116, %v7118
    %v7120 = vrot.slane %v7113, %v7119
    %v7121 = vcombine.low %v4727, %v4855
    %v7123 = vunpack.c.l.s4 1983009808
    %v7124 = vunpack.c.0.s8 %v7123
    %v7125 = vlaneseq
    %v7126 = vshrl.u32 %v7125, 7
    %v7127 = vsub.s32 %v7124, %v7126
    %v7128 = vrot.slane %v7121, %v7127
    %v7129 = vcombine.low %v4919, %v5047
    %v7131 = vunpack.c.l.s4 1983009808
    %v7132 = vunpack.c.0.s8 %v7131
    %v7133 = vlaneseq
    %v7134 = vshrl.u32 %v7133, 7
    %v7135 = vsub.s32 %v7132, %v7134
    %v7136 = vrot.slane %v7129, %v7135
    %v7137 = vcombine.low %v4983, %v5111
    %v7139 = vunpack.c.l.s4 1983009808
    %v7140 = vunpack.c.0.s8 %v7139
    %v7141 = vlaneseq
    %v7142 = vshrl.u32 %v7141, 7
    %v7143 = vsub.s32 %v7140, %v7142
    %v7144 = vrot.slane %v7137, %v7143
    %v7145 = vcombine.low %v7120, %v7128
    %v7147 = vunpack.c.l.s4 1934713408
    %v7148 = vunpack.c.0.s8 %v7147
    %v7149 = vlaneseq
    %v7150 = vshrl.u32 %v7149, 7
    %v7151 = vsub.s32 %v7148, %v7150
    %v7152 = vrot.slane %v7145, %v7151
    %v7153 = vcombine.low %v7136, %v7144
    %v7155 = vunpack.c.l.s4 1934713408
    %v7156 = vunpack.c.0.s8 %v7155
    %v7157 = vlaneseq
    %v7158 = vshrl.u32 %v7157, 7
    %v7159 = vsub.s32 %v7156, %v7158
    %v7160 = vrot.slane %v7153, %v7159
    %v7161 = vcombine.low %v7152, %v7160
    %v7162 = vcombine.high %v7152, %v7160
    %v7163 = vcombine.low %v5143, %v5271
    %v7165 = vunpack.c.l.s4 1983009808
    %v7166 = vunpack.c.0.s8 %v7165
    %v7167 = vlaneseq
    %v7168 = vshrl.u32 %v7167, 7
    %v7169 = vsub.s32 %v7166, %v7168
    %v7170 = vrot.slane %v7163, %v7169
    %v7171 = vcombine.low %v5207, %v5335
    %v7173 = vunpack.c.l.s4 1983009808
    %v7174 = vunpack.c.0.s8 %v7173
    %v7175 = vlaneseq
    %v7176 = vshrl.u32 %v7175, 7
    %v7177 = vsub.s32 %v7174, %v7176
    %v7178 = vrot.slane %v7171, %v7177
    %v7179 = vcombine.low %v5399, %v5527
    %v7181 = vunpack.c.l.s4 1983009808
    %v7182 = vunpack.c.0.s8 %v7181
    %v7183 = vlaneseq
    %v7184 = vshrl.u32 %v7183, 7
    %v7185 = vsub.s32 %v7182, %v7184
    %v7186 = vrot.slane %v7179, %v7185
    %v7187 = vcombine.low %v5463, %v5591
    %v7189 = vunpack.c.l.s4 1983009808
    %v7190 = vunpack.c.0.s8 %v7189
    %v7191 = vlaneseq
    %v7192 = vshrl.u32 %v7191, 7
    %v7193 = vsub.s32 %v7190, %v7192
    %v7194 = vrot.slane %v7187, %v7193
    %v7195 = vcombine.low %v7170, %v7178
    %v7197 = vunpack.c.l.s4 1934713408
    %v7198 = vunpack.c.0.s8 %v7197
    %v7199 = vlaneseq
    %v7200 = vshrl.u32 %v7199, 7
    %v7201 = vsub.s32 %v7198, %v7200
    %v7202 = vrot.slane %v7195, %v7201
    %v7203 = vcombine.low %v7186, %v7194
    %v7205 = vunpack.c.l.s4 1934713408
    %v7206 = vunpack.c.0.s8 %v7205
    %v7207 = vlaneseq
    %v7208 = vshrl.u32 %v7207, 7
    %v7209 = vsub.s32 %v7206, %v7208
    %v7210 = vrot.slane %v7203, %v7209
    %v7211 = vcombine.low %v7202, %v7210
    %v7212 = vcombine.high %v7202, %v7210
    %v7213 = vcombine.low %v5175, %v5303
    %v7215 = vunpack.c.l.s4 1983009808
    %v7216 = vunpack.c.0.s8 %v7215
    %v7217 = vlaneseq
    %v7218 = vshrl.u32 %v7217, 7
    %v7219 = vsub.s32 %v7216, %v7218
    %v7220 = vrot.slane %v7213, %v7219
    %v7221 = vcombine.low %v5239, %v5367
    %v7223 = vunpack.c.l.s4 1983009808
    %v7224 = vunpack.c.0.s8 %v7223
    %v7225 = vlaneseq
    %v7226 = vshrl.u32 %v7225, 7
    %v7227 = vsub.s32 %v7224, %v7226
    %v7228 = vrot.slane %v7221, %v7227
    %v7229 = vcombine.low %v5431, %v5559
    %v7231 = vunpack.c.l.s4 1983009808
    %v7232 = vunpack.c.0.s8 %v7231
    %v7233 = vlaneseq
    %v7234 = vshrl.u32 %v7233, 7
    %v7235 = vsub.s32 %v7232, %v7234
    %v7236 = vrot.slane %v7229, %v7235
    %v7237 = vcombine.low %v5495, %v5623
    %v7239 = vunpack.c.l.s4 1983009808
    %v7240 = vunpack.c.0.s8 %v7239
    %v7241 = vlaneseq
    %v7242 = vshrl.u32 %v7241, 7
    %v7243 = vsub.s32 %v7240, %v7242
    %v7244 = vrot.slane %v7237, %v7243
    %v7245 = vcombine.low %v7220, %v7228
    %v7247 = vunpack.c.l.s4 1934713408
    %v7248 = vunpack.c.0.s8 %v7247
    %v7249 = vlaneseq
    %v7250 = vshrl.u32 %v7249, 7
    %v7251 = vsub.s32 %v7248, %v7250
    %v7252 = vrot.slane %v7245, %v7251
    %v7253 = vcombine.low %v7236, %v7244
    %v7255 = vunpack.c.l.s4 1934713408
    %v7256 = vunpack.c.0.s8 %v7255
    %v7257 = vlaneseq
    %v7258 = vshrl.u32 %v7257, 7
    %v7259 = vsub.s32 %v7256, %v7258
    %v7260 = vrot.slane %v7253, %v7259
    %v7261 = vcombine.low %v7252, %v7260
    %v7262 = vcombine.high %v7252, %v7260
    %v7263 = vcombine.low %v5655, %v5783
    %v7265 = vunpack.c.l.s4 1983009808
    %v7266 = vunpack.c.0.s8 %v7265
    %v7267 = vlaneseq
    %v7268 = vshrl.u32 %v7267, 7
    %v7269 = vsub.s32 %v7266, %v7268
    %v7270 = vrot.slane %v7263, %v7269
    %v7271 = vcombine.low %v5719, %v5847
    %v7273 = vunpack.c.l.s4 1983009808
    %v7274 = vunpack.c.0.s8 %v7273
    %v7275 = vlaneseq
    %v7276 = vshrl.u32 %v7275, 7
    %v7277 = vsub.s32 %v7274, %v7276
    %v7278 = vrot.slane %v7271, %v7277
    %v7279 = vcombine.low %v5911, %v6039
    %v7281 = vunpack.c.l.s4 1983009808
    %v7282 = vunpack.c.0.s8 %v7281
    %v7283 = vlaneseq
    %v7284 = vshrl.u32 %v7283, 7
    %v7285 = vsub.s32 %v7282, %v7284
    %v7286 = vrot.slane %v7279, %v7285
    %v7287 = vcombine.low %v5975, %v6103
    %v7289 = vunpack.c.l.s4 1983009808
    %v7290 = vunpack.c.0.s8 %v7289
    %v7291 = vlaneseq
    %v7292 = vshrl.u32 %v7291, 7
    %v7293 = vsub.s32 %v7290, %v7292
    %v7294 = vrot.slane %v7287, %v7293
    %v7295 = vcombine.low %v7270, %v7278
    %v7297 = vunpack.c.l.s4 1934713408
    %v7298 = vunpack.c.0.s8 %v7297
    %v7299 = vlaneseq
    %v7300 = vshrl.u32 %v7299, 7
    %v7301 = vsub.s32 %v7298, %v7300
    %v7302 = vrot.slane %v7295, %v7301
    %v7303 = vcombine.low %v7286, %v7294
    %v7305 = vunpack.c.l.s4 1934713408
    %v7306 = vunpack.c.0.s8 %v7305
    %v7307 = vlaneseq
    %v7308 = vshrl.u32 %v7307, 7
    %v7309 = vsub.s32 %v7306, %v7308
    %v7310 = vrot.slane %v7303, %v7309
    %v7311 = vcombine.low %v7302, %v7310
    %v7312 = vcombine.high %v7302, %v7310
    %v7313 = vcombine.low %v5687, %v5815
    %v7315 = vunpack.c.l.s4 1983009808
    %v7316 = vunpack.c.0.s8 %v7315
    %v7317 = vlaneseq
    %v7318 = vshrl.u32 %v7317, 7
    %v7319 = vsub.s32 %v7316, %v7318
    %v7320 = vrot.slane %v7313, %v7319
    %v7321 = vcombine.low %v5751, %v5879
    %v7323 = vunpack.c.l.s4 1983009808
    %v7324 = vunpack.c.0.s8 %v7323
    %v7325 = vlaneseq
    %v7326 = vshrl.u32 %v7325, 7
    %v7327 = vsub.s32 %v7324, %v7326
    %v7328 = vrot.slane %v7321, %v7327
    %v7329 = vcombine.low %v5943, %v6071
    %v7331 = vunpack.c.l.s4 1983009808
    %v7332 = vunpack.c.0.s8 %v7331
    %v7333 = vlaneseq
    %v7334 = vshrl.u32 %v7333, 7
    %v7335 = vsub.s32 %v7332, %v7334
    %v7336 = vrot.slane %v7329, %v7335
    %v7337 = vcombine.low %v6007, %v6135
    %v7339 = vunpack.c.l.s4 1983009808
    %v7340 = vunpack.c.0.s8 %v7339
    %v7341 = vlaneseq
    %v7342 = vshrl.u32 %v7341, 7
    %v7343 = vsub.s32 %v7340, %v7342
    %v7344 = vrot.slane %v7337, %v7343
    %v7345 = vcombine.low %v7320, %v7328
    %v7347 = vunpack.c.l.s4 1934713408
    %v7348 = vunpack.c.0.s8 %v7347
    %v7349 = vlaneseq
    %v7350 = vshrl.u32 %v7349, 7
    %v7351 = vsub.s32 %v7348, %v7350
    %v7352 = vrot.slane %v7345, %v7351
    %v7353 = vcombine.low %v7336, %v7344
    %v7355 = vunpack.c.l.s4 1934713408
    %v7356 = vunpack.c.0.s8 %v7355
    %v7357 = vlaneseq
    %v7358 = vshrl.u32 %v7357, 7
    %v7359 = vsub.s32 %v7356, %v7358
    %v7360 = vrot.slane %v7353, %v7359
    %v7361 = vcombine.low %v7352, %v7360
    %v7362 = vcombine.high %v7352, %v7360
    %v7363 = vcombine.low %v6167, %v6295
    %v7365 = vunpack.c.l.s4 1983009808
    %v7366 = vunpack.c.0.s8 %v7365
    %v7367 = vlaneseq
    %v7368 = vshrl.u32 %v7367, 7
    %v7369 = vsub.s32 %v7366, %v7368
    %v7370 = vrot.slane %v7363, %v7369
    %v7371 = vcombine.low %v6231, %v6359
    %v7373 = vunpack.c.l.s4 1983009808
    %v7374 = vunpack.c.0.s8 %v7373
    %v7375 = vlaneseq
    %v7376 = vshrl.u32 %v7375, 7
    %v7377 = vsub.s32 %v7374, %v7376
    %v7378 = vrot.slane %v7371, %v7377
    %v7379 = vcombine.low %v6423, %v6551
    %v7381 = vunpack.c.l.s4 1983009808
    %v7382 = vunpack.c.0.s8 %v7381
    %v7383 = vlaneseq
    %v7384 = vshrl.u32 %v7383, 7
    %v7385 = vsub.s32 %v7382, %v7384
    %v7386 = vrot.slane %v7379, %v7385
    %v7387 = vcombine.low %v6487, %v6615
    %v7389 = vunpack.c.l.s4 1983009808
    %v7390 = vunpack.c.0.s8 %v7389
    %v7391 = vlaneseq
    %v7392 = vshrl.u32 %v7391, 7
    %v7393 = vsub.s32 %v7390, %v7392
    %v7394 = vrot.slane %v7387, %v7393
    %v7395 = vcombine.low %v7370, %v7378
    %v7397 = vunpack.c.l.s4 1934713408
    %v7398 = vunpack.c.0.s8 %v7397
    %v7399 = vlaneseq
    %v7400 = vshrl.u32 %v7399, 7
    %v7401 = vsub.s32 %v7398, %v7400
    %v7402 = vrot.slane %v7395, %v7401
    %v7403 = vcombine.low %v7386, %v7394
    %v7405 = vunpack.c.l.s4 1934713408
    %v7406 = vunpack.c.0.s8 %v7405
    %v7407 = vlaneseq
    %v7408 = vshrl.u32 %v7407, 7
    %v7409 = vsub.s32 %v7406, %v7408
    %v7410 = vrot.slane %v7403, %v7409
    %v7411 = vcombine.low %v7402, %v7410
    %v7412 = vcombine.high %v7402, %v7410
    %v7413 = vcombine.low %v6199, %v6327
    %v7415 = vunpack.c.l.s4 1983009808
    %v7416 = vunpack.c.0.s8 %v7415
    %v7417 = vlaneseq
    %v7418 = vshrl.u32 %v7417, 7
    %v7419 = vsub.s32 %v7416, %v7418
    %v7420 = vrot.slane %v7413, %v7419
    %v7421 = vcombine.low %v6263, %v6391
    %v7423 = vunpack.c.l.s4 1983009808
    %v7424 = vunpack.c.0.s8 %v7423
    %v7425 = vlaneseq
    %v7426 = vshrl.u32 %v7425, 7
    %v7427 = vsub.s32 %v7424, %v7426
    %v7428 = vrot.slane %v7421, %v7427
    %v7429 = vcombine.low %v6455, %v6583
    %v7431 = vunpack.c.l.s4 1983009808
    %v7432 = vunpack.c.0.s8 %v7431
    %v7433 = vlaneseq
    %v7434 = vshrl.u32 %v7433, 7
    %v7435 = vsub.s32 %v7432, %v7434
    %v7436 = vrot.slane %v7429, %v7435
    %v7437 = vcombine.low %v6519, %v6647
    %v7439 = vunpack.c.l.s4 1983009808
    %v7440 = vunpack.c.0.s8 %v7439
    %v7441 = vlaneseq
    %v7442 = vshrl.u32 %v7441, 7
    %v7443 = vsub.s32 %v7440, %v7442
    %v7444 = vrot.slane %v7437, %v7443
    %v7445 = vcombine.low %v7420, %v7428
    %v7447 = vunpack.c.l.s4 1934713408
    %v7448 = vunpack.c.0.s8 %v7447
    %v7449 = vlaneseq
    %v7450 = vshrl.u32 %v7449, 7
    %v7451 = vsub.s32 %v7448, %v7450
    %v7452 = vrot.slane %v7445, %v7451
    %v7453 = vcombine.low %v7436, %v7444
    %v7455 = vunpack.c.l.s4 1934713408
    %v7456 = vunpack.c.0.s8 %v7455
    %v7457 = vlaneseq
    %v7458 = vshrl.u32 %v7457, 7
    %v7459 = vsub.s32 %v7456, %v7458
    %v7460 = vrot.slane %v7453, %v7459
    %v7461 = vcombine.low %v7452, %v7460
    %v7462 = vcombine.high %v7452, %v7460
    %v7463 = vcombine.low %v6711, %v6761
    %v7464 = vcombine.high %v6711, %v6761
    %v7466 = vunpack.c.l.s4 1983009808
    %v7467 = vunpack.c.0.s8 %v7466
    %v7468 = vlaneseq
    %v7469 = vshrl.u32 %v7468, 7
    %v7470 = vsub.s32 %v7467, %v7469
    %v7471 = vrot.slane %v7463, %v7470
    %v7473 = vunpack.c.l.s4 1983009808
    %v7474 = vunpack.c.0.s8 %v7473
    %v7475 = vlaneseq
    %v7476 = vshrl.u32 %v7475, 7
    %v7477 = vsub.s32 %v7474, %v7476
    %v7478 = vrot.slane %v7464, %v7477
    %v7479 = vcombine.low %v6712, %v6762
    %v7480 = vcombine.high %v6712, %v6762
    %v7482 = vunpack.c.l.s4 1983009808
    %v7483 = vunpack.c.0.s8 %v7482
    %v7484 = vlaneseq
    %v7485 = vshrl.u32 %v7484, 7
    %v7486 = vsub.s32 %v7483, %v7485
    %v7487 = vrot.slane %v7479, %v7486
    %v7489 = vunpack.c.l.s4 1983009808
    %v7490 = vunpack.c.0.s8 %v7489
    %v7491 = vlaneseq
    %v7492 = vshrl.u32 %v7491, 7
    %v7493 = vsub.s32 %v7490, %v7492
    %v7494 = vrot.slane %v7480, %v7493
    %v7495 = vcombine.low %v7471, %v7487
    %v7496 = vcombine.high %v7471, %v7487
    %v7498 = vunpack.c.l.s4 1934713408
    %v7499 = vunpack.c.0.s8 %v7498
    %v7500 = vlaneseq
    %v7501 = vshrl.u32 %v7500, 7
    %v7502 = vsub.s32 %v7499, %v7501
    %v7503 = vrot.slane %v7495, %v7502
    %v7505 = vunpack.c.l.s4 1934713408
    %v7506 = vunpack.c.0.s8 %v7505
    %v7507 = vlaneseq
    %v7508 = vshrl.u32 %v7507, 7
    %v7509 = vsub.s32 %v7506, %v7508
    %v7510 = vrot.slane %v7496, %v7509
    %v7511 = vcombine.low %v7478, %v7494
    %v7512 = vcombine.high %v7478, %v7494
    %v7514 = vunpack.c.l.s4 1934713408
    %v7515 = vunpack.c.0.s8 %v7514
    %v7516 = vlaneseq
    %v7517 = vshrl.u32 %v7516, 7
    %v7518 = vsub.s32 %v7515, %v7517
    %v7519 = vrot.slane %v7511, %v7518
    %v7521 = vunpack.c.l.s4 1934713408
    %v7522 = vunpack.c.0.s8 %v7521
    %v7523 = vlaneseq
    %v7524 = vshrl.u32 %v7523, 7
    %v7525 = vsub.s32 %v7522, %v7524
    %v7526 = vrot.slane %v7512, %v7525
    %v7527 = vcombine.high %v7503, 0.0
    %v7528 = vcombine.high %v7510, 0.0
    %v7529 = vcombine.high %v7519, 0.0
    %v7530 = vcombine.high %v7526, 0.0
    %v7531 = vcombine.low %v6811, %v6861
    %v7532 = vcombine.high %v6811, %v6861
    %v7534 = vunpack.c.l.s4 1983009808
    %v7535 = vunpack.c.0.s8 %v7534
    %v7536 = vlaneseq
    %v7537 = vshrl.u32 %v7536, 7
    %v7538 = vsub.s32 %v7535, %v7537
    %v7539 = vrot.slane %v7531, %v7538
    %v7541 = vunpack.c.l.s4 1983009808
    %v7542 = vunpack.c.0.s8 %v7541
    %v7543 = vlaneseq
    %v7544 = vshrl.u32 %v7543, 7
    %v7545 = vsub.s32 %v7542, %v7544
    %v7546 = vrot.slane %v7532, %v7545
    %v7547 = vcombine.low %v6812, %v6862
    %v7548 = vcombine.high %v6812, %v6862
    %v7550 = vunpack.c.l.s4 1983009808
    %v7551 = vunpack.c.0.s8 %v7550
    %v7552 = vlaneseq
    %v7553 = vshrl.u32 %v7552, 7
    %v7554 = vsub.s32 %v7551, %v7553
    %v7555 = vrot.slane %v7547, %v7554
    %v7557 = vunpack.c.l.s4 1983009808
    %v7558 = vunpack.c.0.s8 %v7557
    %v7559 = vlaneseq
    %v7560 = vshrl.u32 %v7559, 7
    %v7561 = vsub.s32 %v7558, %v7560
    %v7562 = vrot.slane %v7548, %v7561
    %v7563 = vcombine.low %v7539, %v7555
    %v7564 = vcombine.high %v7539, %v7555
    %v7566 = vunpack.c.l.s4 1934713408
    %v7567 = vunpack.c.0.s8 %v7566
    %v7568 = vlaneseq
    %v7569 = vshrl.u32 %v7568, 7
    %v7570 = vsub.s32 %v7567, %v7569
    %v7571 = vrot.slane %v7563, %v7570
    %v7573 = vunpack.c.l.s4 1934713408
    %v7574 = vunpack.c.0.s8 %v7573
    %v7575 = vlaneseq
    %v7576 = vshrl.u32 %v7575, 7
    %v7577 = vsub.s32 %v7574, %v7576
    %v7578 = vrot.slane %v7564, %v7577
    %v7579 = vcombine.low %v7546, %v7562
    %v7580 = vcombine.high %v7546, %v7562
    %v7582 = vunpack.c.l.s4 1934713408
    %v7583 = vunpack.c.0.s8 %v7582
    %v7584 = vlaneseq
    %v7585 = vshrl.u32 %v7584, 7
    %v7586 = vsub.s32 %v7583, %v7585
    %v7587 = vrot.slane %v7579, %v7586
    %v7589 = vunpack.c.l.s4 1934713408
    %v7590 = vunpack.c.0.s8 %v7589
    %v7591 = vlaneseq
    %v7592 = vshrl.u32 %v7591, 7
    %v7593 = vsub.s32 %v7590, %v7592
    %v7594 = vrot.slane %v7580, %v7593
    %v7595 = vcombine.high %v7571, 0.0
    %v7596 = vcombine.high %v7578, 0.0
    %v7597 = vcombine.high %v7587, 0.0
    %v7598 = vcombine.high %v7594, 0.0
    %v7599 = vcombine.low %v6911, %v6961
    %v7600 = vcombine.high %v6911, %v6961
    %v7602 = vunpack.c.l.s4 1983009808
    %v7603 = vunpack.c.0.s8 %v7602
    %v7604 = vlaneseq
    %v7605 = vshrl.u32 %v7604, 7
    %v7606 = vsub.s32 %v7603, %v7605
    %v7607 = vrot.slane %v7599, %v7606
    %v7609 = vunpack.c.l.s4 1983009808
    %v7610 = vunpack.c.0.s8 %v7609
    %v7611 = vlaneseq
    %v7612 = vshrl.u32 %v7611, 7
    %v7613 = vsub.s32 %v7610, %v7612
    %v7614 = vrot.slane %v7600, %v7613
    %v7615 = vcombine.low %v6912, %v6962
    %v7616 = vcombine.high %v6912, %v6962
    %v7618 = vunpack.c.l.s4 1983009808
    %v7619 = vunpack.c.0.s8 %v7618
    %v7620 = vlaneseq
    %v7621 = vshrl.u32 %v7620, 7
    %v7622 = vsub.s32 %v7619, %v7621
    %v7623 = vrot.slane %v7615, %v7622
    %v7625 = vunpack.c.l.s4 1983009808
    %v7626 = vunpack.c.0.s8 %v7625
    %v7627 = vlaneseq
    %v7628 = vshrl.u32 %v7627, 7
    %v7629 = vsub.s32 %v7626, %v7628
    %v7630 = vrot.slane %v7616, %v7629
    %v7631 = vcombine.low %v7607, %v7623
    %v7632 = vcombine.high %v7607, %v7623
    %v7634 = vunpack.c.l.s4 1934713408
    %v7635 = vunpack.c.0.s8 %v7634
    %v7636 = vlaneseq
    %v7637 = vshrl.u32 %v7636, 7
    %v7638 = vsub.s32 %v7635, %v7637
    %v7639 = vrot.slane %v7631, %v7638
    %v7641 = vunpack.c.l.s4 1934713408
    %v7642 = vunpack.c.0.s8 %v7641
    %v7643 = vlaneseq
    %v7644 = vshrl.u32 %v7643, 7
    %v7645 = vsub.s32 %v7642, %v7644
    %v7646 = vrot.slane %v7632, %v7645
    %v7647 = vcombine.low %v7614, %v7630
    %v7648 = vcombine.high %v7614, %v7630
    %v7650 = vunpack.c.l.s4 1934713408
    %v7651 = vunpack.c.0.s8 %v7650
    %v7652 = vlaneseq
    %v7653 = vshrl.u32 %v7652, 7
    %v7654 = vsub.s32 %v7651, %v7653
    %v7655 = vrot.slane %v7647, %v7654
    %v7657 = vunpack.c.l.s4 1934713408
    %v7658 = vunpack.c.0.s8 %v7657
    %v7659 = vlaneseq
    %v7660 = vshrl.u32 %v7659, 7
    %v7661 = vsub.s32 %v7658, %v7660
    %v7662 = vrot.slane %v7648, %v7661
    %v7663 = vcombine.high %v7639, 0.0
    %v7664 = vcombine.high %v7646, 0.0
    %v7665 = vcombine.high %v7655, 0.0
    %v7666 = vcombine.high %v7662, 0.0
    %v7667 = vcombine.low %v7011, %v7061
    %v7668 = vcombine.high %v7011, %v7061
    %v7670 = vunpack.c.l.s4 1983009808
    %v7671 = vunpack.c.0.s8 %v7670
    %v7672 = vlaneseq
    %v7673 = vshrl.u32 %v7672, 7
    %v7674 = vsub.s32 %v7671, %v7673
    %v7675 = vrot.slane %v7667, %v7674
    %v7677 = vunpack.c.l.s4 1983009808
    %v7678 = vunpack.c.0.s8 %v7677
    %v7679 = vlaneseq
    %v7680 = vshrl.u32 %v7679, 7
    %v7681 = vsub.s32 %v7678, %v7680
    %v7682 = vrot.slane %v7668, %v7681
    %v7683 = vcombine.low %v7012, %v7062
    %v7684 = vcombine.high %v7012, %v7062
    %v7686 = vunpack.c.l.s4 1983009808
    %v7687 = vunpack.c.0.s8 %v7686
    %v7688 = vlaneseq
    %v7689 = vshrl.u32 %v7688, 7
    %v7690 = vsub.s32 %v7687, %v7689
    %v7691 = vrot.slane %v7683, %v7690
    %v7693 = vunpack.c.l.s4 1983009808
    %v7694 = vunpack.c.0.s8 %v7693
    %v7695 = vlaneseq
    %v7696 = vshrl.u32 %v7695, 7
    %v7697 = vsub.s32 %v7694, %v7696
    %v7698 = vrot.slane %v7684, %v7697
    %v7699 = vcombine.low %v7675, %v7691
    %v7700 = vcombine.high %v7675, %v7691
    %v7702 = vunpack.c.l.s4 1934713408
    %v7703 = vunpack.c.0.s8 %v7702
    %v7704 = vlaneseq
    %v7705 = vshrl.u32 %v7704, 7
    %v7706 = vsub.s32 %v7703, %v7705
    %v7707 = vrot.slane %v7699, %v7706
    %v7709 = vunpack.c.l.s4 1934713408
    %v7710 = vunpack.c.0.s8 %v7709
    %v7711 = vlaneseq
    %v7712 = vshrl.u32 %v7711, 7
    %v7713 = vsub.s32 %v7710, %v7712
    %v7714 = vrot.slane %v7700, %v7713
    %v7715 = vcombine.low %v7682, %v7698
    %v7716 = vcombine.high %v7682, %v7698
    %v7718 = vunpack.c.l.s4 1934713408
    %v7719 = vunpack.c.0.s8 %v7718
    %v7720 = vlaneseq
    %v7721 = vshrl.u32 %v7720, 7
    %v7722 = vsub.s32 %v7719, %v7721
    %v7723 = vrot.slane %v7715, %v7722
    %v7725 = vunpack.c.l.s4 1934713408
    %v7726 = vunpack.c.0.s8 %v7725
    %v7727 = vlaneseq
    %v7728 = vshrl.u32 %v7727, 7
    %v7729 = vsub.s32 %v7726, %v7728
    %v7730 = vrot.slane %v7716, %v7729
    %v7731 = vcombine.high %v7707, 0.0
    %v7732 = vcombine.high %v7714, 0.0
    %v7733 = vcombine.high %v7723, 0.0
    %v7734 = vcombine.high %v7730, 0.0
    %v7735 = vcombine.low %v7111, %v7161
    %v7736 = vcombine.high %v7111, %v7161
    %v7738 = vunpack.c.l.s4 1983009808
    %v7739 = vunpack.c.0.s8 %v7738
    %v7740 = vlaneseq
    %v7741 = vshrl.u32 %v7740, 7
    %v7742 = vsub.s32 %v7739, %v7741
    %v7743 = vrot.slane %v7735, %v7742
    %v7745 = vunpack.c.l.s4 1983009808
    %v7746 = vunpack.c.0.s8 %v7745
    %v7747 = vlaneseq
    %v7748 = vshrl.u32 %v7747, 7
    %v7749 = vsub.s32 %v7746, %v7748
    %v7750 = vrot.slane %v7736, %v7749
    %v7751 = vcombine.low %v7112, %v7162
    %v7752 = vcombine.high %v7112, %v7162
    %v7754 = vunpack.c.l.s4 1983009808
    %v7755 = vunpack.c.0.s8 %v7754
    %v7756 = vlaneseq
    %v7757 = vshrl.u32 %v7756, 7
    %v7758 = vsub.s32 %v7755, %v7757
    %v7759 = vrot.slane %v7751, %v7758
    %v7761 = vunpack.c.l.s4 1983009808
    %v7762 = vunpack.c.0.s8 %v7761
    %v7763 = vlaneseq
    %v7764 = vshrl.u32 %v7763, 7
    %v7765 = vsub.s32 %v7762, %v7764
    %v7766 = vrot.slane %v7752, %v7765
    %v7767 = vcombine.low %v7743, %v7759
    %v7768 = vcombine.high %v7743, %v7759
    %v7770 = vunpack.c.l.s4 1934713408
    %v7771 = vunpack.c.0.s8 %v7770
    %v7772 = vlaneseq
    %v7773 = vshrl.u32 %v7772, 7
    %v7774 = vsub.s32 %v7771, %v7773
    %v7775 = vrot.slane %v7767, %v7774
    %v7777 = vunpack.c.l.s4 1934713408
    %v7778 = vunpack.c.0.s8 %v7777
    %v7779 = vlaneseq
    %v7780 = vshrl.u32 %v7779, 7
    %v7781 = vsub.s32 %v7778, %v7780
    %v7782 = vrot.slane %v7768, %v7781
    %v7783 = vcombine.low %v7750, %v7766
    %v7784 = vcombine.high %v7750, %v7766
    %v7786 = vunpack.c.l.s4 1934713408
    %v7787 = vunpack.c.0.s8 %v7786
    %v7788 = vlaneseq
    %v7789 = vshrl.u32 %v7788, 7
    %v7790 = vsub.s32 %v7787, %v7789
    %v7791 = vrot.slane %v7783, %v7790
    %v7793 = vunpack.c.l.s4 1934713408
    %v7794 = vunpack.c.0.s8 %v7793
    %v7795 = vlaneseq
    %v7796 = vshrl.u32 %v7795, 7
    %v7797 = vsub.s32 %v7794, %v7796
    %v7798 = vrot.slane %v7784, %v7797
    %v7799 = vcombine.high %v7775, 0.0
    %v7800 = vcombine.high %v7782, 0.0
    %v7801 = vcombine.high %v7791, 0.0
    %v7802 = vcombine.high %v7798, 0.0
    %v7803 = vcombine.low %v7211, %v7261
    %v7804 = vcombine.high %v7211, %v7261
    %v7806 = vunpack.c.l.s4 1983009808
    %v7807 = vunpack.c.0.s8 %v7806
    %v7808 = vlaneseq
    %v7809 = vshrl.u32 %v7808, 7
    %v7810 = vsub.s32 %v7807, %v7809
    %v7811 = vrot.slane %v7803, %v7810
    %v7813 = vunpack.c.l.s4 1983009808
    %v7814 = vunpack.c.0.s8 %v7813
    %v7815 = vlaneseq
    %v7816 = vshrl.u32 %v7815, 7
    %v7817 = vsub.s32 %v7814, %v7816
    %v7818 = vrot.slane %v7804, %v7817
    %v7819 = vcombine.low %v7212, %v7262
    %v7820 = vcombine.high %v7212, %v7262
    %v7822 = vunpack.c.l.s4 1983009808
    %v7823 = vunpack.c.0.s8 %v7822
    %v7824 = vlaneseq
    %v7825 = vshrl.u32 %v7824, 7
    %v7826 = vsub.s32 %v7823, %v7825
    %v7827 = vrot.slane %v7819, %v7826
    %v7829 = vunpack.c.l.s4 1983009808
    %v7830 = vunpack.c.0.s8 %v7829
    %v7831 = vlaneseq
    %v7832 = vshrl.u32 %v7831, 7
    %v7833 = vsub.s32 %v7830, %v7832
    %v7834 = vrot.slane %v7820, %v7833
    %v7835 = vcombine.low %v7811, %v7827
    %v7836 = vcombine.high %v7811, %v7827
    %v7838 = vunpack.c.l.s4 1934713408
    %v7839 = vunpack.c.0.s8 %v7838
    %v7840 = vlaneseq
    %v7841 = vshrl.u32 %v7840, 7
    %v7842 = vsub.s32 %v7839, %v7841
    %v7843 = vrot.slane %v7835, %v7842
    %v7845 = vunpack.c.l.s4 1934713408
    %v7846 = vunpack.c.0.s8 %v7845
    %v7847 = vlaneseq
    %v7848 = vshrl.u32 %v7847, 7
    %v7849 = vsub.s32 %v7846, %v7848
    %v7850 = vrot.slane %v7836, %v7849
    %v7851 = vcombine.low %v7818, %v7834
    %v7852 = vcombine.high %v7818, %v7834
    %v7854 = vunpack.c.l.s4 1934713408
    %v7855 = vunpack.c.0.s8 %v7854
    %v7856 = vlaneseq
    %v7857 = vshrl.u32 %v7856, 7
    %v7858 = vsub.s32 %v7855, %v7857
    %v7859 = vrot.slane %v7851, %v7858
    %v7861 = vunpack.c.l.s4 1934713408
    %v7862 = vunpack.c.0.s8 %v7861
    %v7863 = vlaneseq
    %v7864 = vshrl.u32 %v7863, 7
    %v7865 = vsub.s32 %v7862, %v7864
    %v7866 = vrot.slane %v7852, %v7865
    %v7867 = vcombine.high %v7843, 0.0
    %v7868 = vcombine.high %v7850, 0.0
    %v7869 = vcombine.high %v7859, 0.0
    %v7870 = vcombine.high %v7866, 0.0
    %v7871 = vcombine.low %v7311, %v7361
    %v7872 = vcombine.high %v7311, %v7361
    %v7874 = vunpack.c.l.s4 1983009808
    %v7875 = vunpack.c.0.s8 %v7874
    %v7876 = vlaneseq
    %v7877 = vshrl.u32 %v7876, 7
    %v7878 = vsub.s32 %v7875, %v7877
    %v7879 = vrot.slane %v7871, %v7878
    %v7881 = vunpack.c.l.s4 1983009808
    %v7882 = vunpack.c.0.s8 %v7881
    %v7883 = vlaneseq
    %v7884 = vshrl.u32 %v7883, 7
    %v7885 = vsub.s32 %v7882, %v7884
    %v7886 = vrot.slane %v7872, %v7885
    %v7887 = vcombine.low %v7312, %v7362
    %v7888 = vcombine.high %v7312, %v7362
    %v7890 = vunpack.c.l.s4 1983009808
    %v7891 = vunpack.c.0.s8 %v7890
    %v7892 = vlaneseq
    %v7893 = vshrl.u32 %v7892, 7
    %v7894 = vsub.s32 %v7891, %v7893
    %v7895 = vrot.slane %v7887, %v7894
    %v7897 = vunpack.c.l.s4 1983009808
    %v7898 = vunpack.c.0.s8 %v7897
    %v7899 = vlaneseq
    %v7900 = vshrl.u32 %v7899, 7
    %v7901 = vsub.s32 %v7898, %v7900
    %v7902 = vrot.slane %v7888, %v7901
    %v7903 = vcombine.low %v7879, %v7895
    %v7904 = vcombine.high %v7879, %v7895
    %v7906 = vunpack.c.l.s4 1934713408
    %v7907 = vunpack.c.0.s8 %v7906
    %v7908 = vlaneseq
    %v7909 = vshrl.u32 %v7908, 7
    %v7910 = vsub.s32 %v7907, %v7909
    %v7911 = vrot.slane %v7903, %v7910
    %v7913 = vunpack.c.l.s4 1934713408
    %v7914 = vunpack.c.0.s8 %v7913
    %v7915 = vlaneseq
    %v7916 = vshrl.u32 %v7915, 7
    %v7917 = vsub.s32 %v7914, %v7916
    %v7918 = vrot.slane %v7904, %v7917
    %v7919 = vcombine.low %v7886, %v7902
    %v7920 = vcombine.high %v7886, %v7902
    %v7922 = vunpack.c.l.s4 1934713408
    %v7923 = vunpack.c.0.s8 %v7922
    %v7924 = vlaneseq
    %v7925 = vshrl.u32 %v7924, 7
    %v7926 = vsub.s32 %v7923, %v7925
    %v7927 = vrot.slane %v7919, %v7926
    %v7929 = vunpack.c.l.s4 1934713408
    %v7930 = vunpack.c.0.s8 %v7929
    %v7931 = vlaneseq
    %v7932 = vshrl.u32 %v7931, 7
    %v7933 = vsub.s32 %v7930, %v7932
    %v7934 = vrot.slane %v7920, %v7933
    %v7935 = vcombine.high %v7911, 0.0
    %v7936 = vcombine.high %v7918, 0.0
    %v7937 = vcombine.high %v7927, 0.0
    %v7938 = vcombine.high %v7934, 0.0
    %v7939 = vcombine.low %v7411, %v7461
    %v7940 = vcombine.high %v7411, %v7461
    %v7942 = vunpack.c.l.s4 1983009808
    %v7943 = vunpack.c.0.s8 %v7942
    %v7944 = vlaneseq
    %v7945 = vshrl.u32 %v7944, 7
    %v7946 = vsub.s32 %v7943, %v7945
    %v7947 = vrot.slane %v7939, %v7946
    %v7949 = vunpack.c.l.s4 1983009808
    %v7950 = vunpack.c.0.s8 %v7949
    %v7951 = vlaneseq
    %v7952 = vshrl.u32 %v7951, 7
    %v7953 = vsub.s32 %v7950, %v7952
    %v7954 = vrot.slane %v7940, %v7953
    %v7955 = vcombine.low %v7412, %v7462
    %v7956 = vcombine.high %v7412, %v7462
    %v7958 = vunpack.c.l.s4 1983009808
    %v7959 = vunpack.c.0.s8 %v7958
    %v7960 = vlaneseq
    %v7961 = vshrl.u32 %v7960, 7
    %v7962 = vsub.s32 %v7959, %v7961
    %v7963 = vrot.slane %v7955, %v7962
    %v7965 = vunpack.c.l.s4 1983009808
    %v7966 = vunpack.c.0.s8 %v7965
    %v7967 = vlaneseq
    %v7968 = vshrl.u32 %v7967, 7
    %v7969 = vsub.s32 %v7966, %v7968
    %v7970 = vrot.slane %v7956, %v7969
    %v7971 = vcombine.low %v7947, %v7963
    %v7972 = vcombine.high %v7947, %v7963
    %v7974 = vunpack.c.l.s4 1934713408
    %v7975 = vunpack.c.0.s8 %v7974
    %v7976 = vlaneseq
    %v7977 = vshrl.u32 %v7976, 7
    %v7978 = vsub.s32 %v7975, %v7977
    %v7979 = vrot.slane %v7971, %v7978
    %v7981 = vunpack.c.l.s4 1934713408
    %v7982 = vunpack.c.0.s8 %v7981
    %v7983 = vlaneseq
    %v7984 = vshrl.u32 %v7983, 7
    %v7985 = vsub.s32 %v7982, %v7984
    %v7986 = vrot.slane %v7972, %v7985
    %v7987 = vcombine.low %v7954, %v7970
    %v7988 = vcombine.high %v7954, %v7970
    %v7990 = vunpack.c.l.s4 1934713408
    %v7991 = vunpack.c.0.s8 %v7990
    %v7992 = vlaneseq
    %v7993 = vshrl.u32 %v7992, 7
    %v7994 = vsub.s32 %v7991, %v7993
    %v7995 = vrot.slane %v7987, %v7994
    %v7997 = vunpack.c.l.s4 1934713408
    %v7998 = vunpack.c.0.s8 %v7997
    %v7999 = vlaneseq
    %v8000 = vshrl.u32 %v7999, 7
    %v8001 = vsub.s32 %v7998, %v8000
    %v8002 = vrot.slane %v7988, %v8001
    %v8003 = vcombine.high %v7979, 0.0
    %v8004 = vcombine.high %v7986, 0.0
    %v8005 = vcombine.high %v7995, 0.0
    %v8006 = vcombine.high %v8002, 0.0
    %8015 = vrot.lane.b32.xlu0 %v7527, 8
    %v8016 = vpop.permute.xlu0 %8015
    %8017 = vrot.lane.b32.xlu0 %v7595, 8
    %v8018 = vpop.permute.xlu0 %8017
    %8019 = vrot.lane.b32.xlu0 %v7663, 8
    %v8020 = vpop.permute.xlu0 %8019
    %8021 = vrot.lane.b32.xlu0 %v7731, 8
    %v8022 = vpop.permute.xlu0 %8021
    %8023 = vrot.lane.b32.xlu0 %v7799, 8
    %v8024 = vpop.permute.xlu0 %8023
    %8025 = vrot.lane.b32.xlu0 %v7867, 8
    %v8026 = vpop.permute.xlu0 %8025
    %8027 = vrot.lane.b32.xlu0 %v7935, 8
    %v8028 = vpop.permute.xlu0 %8027
    %8029 = vrot.lane.b32.xlu0 %v8003, 8
    %v8030 = vpop.permute.xlu0 %8029
    %8047 = vrot.lane.b32.xlu0 %v7510, 16
    %v8048 = vpop.permute.xlu0 %8047
    %8049 = vrot.lane.b32.xlu0 %v7578, 16
    %v8050 = vpop.permute.xlu0 %8049
    %8051 = vrot.lane.b32.xlu0 %v7646, 16
    %v8052 = vpop.permute.xlu0 %8051
    %8053 = vrot.lane.b32.xlu0 %v7714, 16
    %v8054 = vpop.permute.xlu0 %8053
    %8055 = vrot.lane.b32.xlu0 %v7782, 16
    %v8056 = vpop.permute.xlu0 %8055
    %8057 = vrot.lane.b32.xlu0 %v7850, 16
    %v8058 = vpop.permute.xlu0 %8057
    %8059 = vrot.lane.b32.xlu0 %v7918, 16
    %v8060 = vpop.permute.xlu0 %8059
    %8061 = vrot.lane.b32.xlu0 %v7986, 16
    %v8062 = vpop.permute.xlu0 %8061
    %8079 = vrot.lane.b32.xlu0 %v7528, 24
    %v8080 = vpop.permute.xlu0 %8079
    %8081 = vrot.lane.b32.xlu0 %v7596, 24
    %v8082 = vpop.permute.xlu0 %8081
    %8083 = vrot.lane.b32.xlu0 %v7664, 24
    %v8084 = vpop.permute.xlu0 %8083
    %8085 = vrot.lane.b32.xlu0 %v7732, 24
    %v8086 = vpop.permute.xlu0 %8085
    %8087 = vrot.lane.b32.xlu0 %v7800, 24
    %v8088 = vpop.permute.xlu0 %8087
    %8089 = vrot.lane.b32.xlu0 %v7868, 24
    %v8090 = vpop.permute.xlu0 %8089
    %8091 = vrot.lane.b32.xlu0 %v7936, 24
    %v8092 = vpop.permute.xlu0 %8091
    %8093 = vrot.lane.b32.xlu0 %v8004, 24
    %v8094 = vpop.permute.xlu0 %8093
    %8111 = vrot.lane.b32.xlu0 %v7519, 32
    %v8112 = vpop.permute.xlu0 %8111
    %8113 = vrot.lane.b32.xlu0 %v7587, 32
    %v8114 = vpop.permute.xlu0 %8113
    %8115 = vrot.lane.b32.xlu0 %v7655, 32
    %v8116 = vpop.permute.xlu0 %8115
    %8117 = vrot.lane.b32.xlu0 %v7723, 32
    %v8118 = vpop.permute.xlu0 %8117
    %8119 = vrot.lane.b32.xlu0 %v7791, 32
    %v8120 = vpop.permute.xlu0 %8119
    %8121 = vrot.lane.b32.xlu0 %v7859, 32
    %v8122 = vpop.permute.xlu0 %8121
    %8123 = vrot.lane.b32.xlu0 %v7927, 32
    %v8124 = vpop.permute.xlu0 %8123
    %8125 = vrot.lane.b32.xlu0 %v7995, 32
    %v8126 = vpop.permute.xlu0 %8125
    %8143 = vrot.lane.b32.xlu0 %v7529, 40
    %v8144 = vpop.permute.xlu0 %8143
    %8145 = vrot.lane.b32.xlu0 %v7597, 40
    %v8146 = vpop.permute.xlu0 %8145
    %8147 = vrot.lane.b32.xlu0 %v7665, 40
    %v8148 = vpop.permute.xlu0 %8147
    %8149 = vrot.lane.b32.xlu0 %v7733, 40
    %v8150 = vpop.permute.xlu0 %8149
    %8151 = vrot.lane.b32.xlu0 %v7801, 40
    %v8152 = vpop.permute.xlu0 %8151
    %8153 = vrot.lane.b32.xlu0 %v7869, 40
    %v8154 = vpop.permute.xlu0 %8153
    %8155 = vrot.lane.b32.xlu0 %v7937, 40
    %v8156 = vpop.permute.xlu0 %8155
    %8157 = vrot.lane.b32.xlu0 %v8005, 40
    %v8158 = vpop.permute.xlu0 %8157
    %8175 = vrot.lane.b32.xlu0 %v7526, 48
    %v8176 = vpop.permute.xlu0 %8175
    %8177 = vrot.lane.b32.xlu0 %v7594, 48
    %v8178 = vpop.permute.xlu0 %8177
    %8179 = vrot.lane.b32.xlu0 %v7662, 48
    %v8180 = vpop.permute.xlu0 %8179
    %8181 = vrot.lane.b32.xlu0 %v7730, 48
    %v8182 = vpop.permute.xlu0 %8181
    %8183 = vrot.lane.b32.xlu0 %v7798, 48
    %v8184 = vpop.permute.xlu0 %8183
    %8185 = vrot.lane.b32.xlu0 %v7866, 48
    %v8186 = vpop.permute.xlu0 %8185
    %8187 = vrot.lane.b32.xlu0 %v7934, 48
    %v8188 = vpop.permute.xlu0 %8187
    %8189 = vrot.lane.b32.xlu0 %v8002, 48
    %v8190 = vpop.permute.xlu0 %8189
    %8207 = vrot.lane.b32.xlu0 %v7530, 56
    %v8208 = vpop.permute.xlu0 %8207
    %8209 = vrot.lane.b32.xlu0 %v7598, 56
    %v8210 = vpop.permute.xlu0 %8209
    %8211 = vrot.lane.b32.xlu0 %v7666, 56
    %v8212 = vpop.permute.xlu0 %8211
    %8213 = vrot.lane.b32.xlu0 %v7734, 56
    %v8214 = vpop.permute.xlu0 %8213
    %8215 = vrot.lane.b32.xlu0 %v7802, 56
    %v8216 = vpop.permute.xlu0 %8215
    %8217 = vrot.lane.b32.xlu0 %v7870, 56
    %v8218 = vpop.permute.xlu0 %8217
    %8219 = vrot.lane.b32.xlu0 %v7938, 56
    %v8220 = vpop.permute.xlu0 %8219
    %8221 = vrot.lane.b32.xlu0 %v8006, 56
    %v8222 = vpop.permute.xlu0 %8221
    %vm8231 = vcmask 64512
    %v8232 = vsel %vm8231, %v7503, %v8016
    %v8233 = vsel %vm8231, %v7571, %v8018
    %v8234 = vsel %vm8231, %v7639, %v8020
    %v8235 = vsel %vm8231, %v7707, %v8022
    %v8236 = vsel %vm8231, %v7775, %v8024
    %v8237 = vsel %vm8231, %v7843, %v8026
    %v8238 = vsel %vm8231, %v7911, %v8028
    %v8239 = vsel %vm8231, %v7979, %v8030
    %vm8240 = vcmask 130048
    %v8241 = vsel %vm8240, %v8232, %v8048
    %v8242 = vsel %vm8240, %v8233, %v8050
    %v8243 = vsel %vm8240, %v8234, %v8052
    %v8244 = vsel %vm8240, %v8235, %v8054
    %v8245 = vsel %vm8240, %v8236, %v8056
    %v8246 = vsel %vm8240, %v8237, %v8058
    %v8247 = vsel %vm8240, %v8238, %v8060
    %v8248 = vsel %vm8240, %v8239, %v8062
    %vm8249 = vcmask 195584
    %v8250 = vsel %vm8249, %v8241, %v8080
    %v8251 = vsel %vm8249, %v8242, %v8082
    %v8252 = vsel %vm8249, %v8243, %v8084
    %v8253 = vsel %vm8249, %v8244, %v8086
    %v8254 = vsel %vm8249, %v8245, %v8088
    %v8255 = vsel %vm8249, %v8246, %v8090
    %v8256 = vsel %vm8249, %v8247, %v8092
    %v8257 = vsel %vm8249, %v8248, %v8094
    %vm8258 = vcmask 261120
    %v8259 = vsel %vm8258, %v8250, %v8112
    %v8260 = vsel %vm8258, %v8251, %v8114
    %v8261 = vsel %vm8258, %v8252, %v8116
    %v8262 = vsel %vm8258, %v8253, %v8118
    %v8263 = vsel %vm8258, %v8254, %v8120
    %v8264 = vsel %vm8258, %v8255, %v8122
    %v8265 = vsel %vm8258, %v8256, %v8124
    %v8266 = vsel %vm8258, %v8257, %v8126
    %vm8267 = vcmask 326656
    %v8268 = vsel %vm8267, %v8259, %v8144
    %v8269 = vsel %vm8267, %v8260, %v8146
    %v8270 = vsel %vm8267, %v8261, %v8148
    %v8271 = vsel %vm8267, %v8262, %v8150
    %v8272 = vsel %vm8267, %v8263, %v8152
    %v8273 = vsel %vm8267, %v8264, %v8154
    %v8274 = vsel %vm8267, %v8265, %v8156
    %v8275 = vsel %vm8267, %v8266, %v8158
    %vm8276 = vcmask 392192
    %v8277 = vsel %vm8276, %v8268, %v8176
    %v8278 = vsel %vm8276, %v8269, %v8178
    %v8279 = vsel %vm8276, %v8270, %v8180
    %v8280 = vsel %vm8276, %v8271, %v8182
    %v8281 = vsel %vm8276, %v8272, %v8184
    %v8282 = vsel %vm8276, %v8273, %v8186
    %v8283 = vsel %vm8276, %v8274, %v8188
    %v8284 = vsel %vm8276, %v8275, %v8190
    %vm8285 = vcmask 457728
    %v8286 = vsel %vm8285, %v8277, %v8208
    %v8287 = vsel %vm8285, %v8278, %v8210
    %v8288 = vsel %vm8285, %v8279, %v8212
    %v8289 = vsel %vm8285, %v8280, %v8214
    %v8290 = vsel %vm8285, %v8281, %v8216
    %v8291 = vsel %vm8285, %v8282, %v8218
    %v8292 = vsel %vm8285, %v8283, %v8220
    %v8293 = vsel %vm8285, %v8284, %v8222
    %vm8294 = vcmask 519168
    %8295 = vst.msk [vmem:[#allocation5] sm:$0xf] %vm8294, %v8286
    %8296 = vst.msk [vmem:[#allocation5 + $0x4] sm:$0xf] %vm8294, %v8287
    %8297 = vst.msk [vmem:[#allocation5 + $0x8] sm:$0xf] %vm8294, %v8288
    %8298 = vst.msk [vmem:[#allocation5 + $0xc] sm:$0xf] %vm8294, %v8289
    %8299 = vst.msk [vmem:[#allocation5 + $0x10] sm:$0xf] %vm8294, %v8290
    %8300 = vst.msk [vmem:[#allocation5 + $0x14] sm:$0xf] %vm8294, %v8291
    %8301 = vst.msk [vmem:[#allocation5 + $0x18] sm:$0xf] %vm8294, %v8292
    %8302 = vst.msk [vmem:[#allocation5 + $0x1c] sm:$0xf] %vm8294, %v8293
    // Predicated region
    $region10: #{tpu_custom_call.1} parent=1 // pred_check
      _
    $region11: #{tpu_custom_call.1} parent=1 // pred_check_branch
      %8304 = sbr.rel (0) target = $region13
    $region12: #{tpu_custom_call.1} parent=1 // pred_region
      %s8306 = ssub.s32 512, 512
      %8307 = vsyncadd [#allocation4], %s8306
      %s8308 = sshll.u32 [#allocation5], 4
      %s8309 = int_to_ptr.vmem [resolvable:$true] %s8308
      %8314 = dma.vmem_to_hbm [thread:$0]  %s8309, 512, %s1, [#allocation4], 64, 64, 4
    $region13: #{tpu_custom_call.1} parent=1 // pred_fallthru
      _
    // Predicated region
    $region14: #{tpu_custom_call.1} parent=1 // pred_check
      _
    $region15: #{tpu_custom_call.1} parent=1 // pred_check_branch
      %8316 = sbr.rel (0) target = $region17
    $region16: #{tpu_custom_call.1} parent=1 // pred_region
      %8317 = dma.done [#allocation4], 512
    $region17: #{tpu_custom_call.1} parent=1 // pred_fallthru
      _
    %8318 = vsyncpa [#allocation3], 1
    %8319 = vsyncpa [#allocation4], 1

</llo_original>
